<compile_context>
chip_gen: v7x
topology: tpu7x:2x2x1
jax: 0.10.0
libtpu: 0.0.40
codegen_flags: <defaults>
</compile_context>

<pallas_src>
import functools
import math

import jax
import jax.numpy as jnp
import numpy as np
from jax.experimental import pallas as pl
from jax.experimental.pallas import tpu as pltpu


# ---------------------------------------------------------------------------
# Pallas kernel
# ---------------------------------------------------------------------------
def _make_window_attn_kernel(num_heads: int, head_dim: int, compute_dtype):
    def kernel(xq_ref, xk_ref, xv_ref,
               wq_ref, bq_ref, wk_ref, bk_ref, wv_ref, bv_ref,
               wp_ref, bp_ref, bias_ref, o_ref):
        Bb, N_q, C = xq_ref.shape
        _, N_kv, _ = xk_ref.shape

        # Flatten windows into the matmul M dimension (N % 8 == 0 in practice,
        # so this reshape is layout-trivial).
        xq = xq_ref[...].reshape(Bb * N_q, C)
        xk = xk_ref[...].reshape(Bb * N_kv, C)
        xv = xv_ref[...].reshape(Bb * N_kv, C)

        # Linear projections: compute_dtype MXU matmuls, f32 accumulation,
        # f32 bias add.  qk scale is already folded into wq/bq.
        q = jnp.dot(xq, wq_ref[...], preferred_element_type=jnp.float32) + bq_ref[...]
        k = jnp.dot(xk, wk_ref[...], preferred_element_type=jnp.float32) + bk_ref[...]
        v = jnp.dot(xv, wv_ref[...], preferred_element_type=jnp.float32) + bv_ref[...]

        q3 = q.reshape(Bb, N_q, C)
        k3 = k.reshape(Bb, N_kv, C)
        v3 = v.reshape(Bb, N_kv, C)

        bias = bias_ref[...].astype(jnp.float32)   # (Bb or 1, H, N_q, N_kv)
        wp = wp_ref[...]                           # (C, C) in compute_dtype

        # Per-head attention, batched over the Bb windows; output projection
        # accumulated per head -> every add/store is full C lanes wide and no
        # scratch buffer is needed.
        out = jnp.zeros((Bb * N_q, C), jnp.float32)
        for h in range(num_heads):
            sl = slice(h * head_dim, (h + 1) * head_dim)
            qh = q3[:, :, sl].astype(compute_dtype)       # (Bb, N_q, d)
            kh = k3[:, :, sl].astype(compute_dtype)       # (Bb, N_kv, d)
            vh = v3[:, :, sl].astype(compute_dtype)       # (Bb, N_kv, d)

            s = jnp.einsum('bqd,bkd->bqk', qh, kh,
                           preferred_element_type=jnp.float32)   # (Bb, N_q, N_kv)
            s = s + bias[:, h]                                   # bcast if bias has 1 window

            # numerically stable softmax in f32; reciprocal on the EUP slot
            s = s - jnp.max(s, axis=-1, keepdims=True)
            p = jnp.exp(s)
            p = p * pl.reciprocal(jnp.sum(p, axis=-1, keepdims=True), approx=True)

            ctx = jnp.einsum('bqk,bkd->bqd', p.astype(compute_dtype), vh,
                             preferred_element_type=jnp.float32)  # (Bb, N_q, d)
            out = out + jnp.dot(
                ctx.reshape(Bb * N_q, head_dim).astype(compute_dtype),
                wp[sl, :], preferred_element_type=jnp.float32)

        out = out + bp_ref[...]
        o_ref[...] = out.reshape(Bb, N_q, C).astype(o_ref.dtype)

    return kernel


# ---------------------------------------------------------------------------
# Parameter construction / relative position index (glue, plain JAX / numpy)
# ---------------------------------------------------------------------------
def init_params(key, dim, window_size, num_heads):
    Wh, Ww = window_size
    num_rel = (2 * Wh - 1) * (2 * Ww - 1)
    ks = jax.random.split(key, 9)
    s = 0.02
    return {
        "rel_bias_table": jax.random.normal(ks[0], (num_rel, num_heads), jnp.float32) * s,
        # Linear weights stored already in (in_features, out_features) layout.
        "wq": jax.random.normal(ks[1], (dim, dim), jnp.float32) * s,
        "bq": jax.random.normal(ks[2], (1, dim), jnp.float32) * s,
        "wk": jax.random.normal(ks[3], (dim, dim), jnp.float32) * s,
        "bk": jax.random.normal(ks[4], (1, dim), jnp.float32) * s,
        "wv": jax.random.normal(ks[5], (dim, dim), jnp.float32) * s,
        "bv": jax.random.normal(ks[6], (1, dim), jnp.float32) * s,
        "wp": jax.random.normal(ks[7], (dim, dim), jnp.float32) * s,
        "bp": jax.random.normal(ks[8], (1, dim), jnp.float32) * s,
    }


def relative_position_index(window_size):
    Wh, Ww = window_size
    coords = np.stack(np.meshgrid(np.arange(Wh), np.arange(Ww), indexing="ij"))
    coords_flatten = coords.reshape(2, -1)                             # (2, Wh*Ww)
    rel = coords_flatten[:, :, None] - coords_flatten[:, None, :]      # (2, WW, WW)
    rel = rel.transpose(1, 2, 0)                                       # (WW, WW, 2)
    rel[:, :, 0] += Wh - 1
    rel[:, :, 1] += Ww - 1
    rel[:, :, 0] *= 2 * Ww - 1
    return jnp.asarray(rel.sum(-1), dtype=jnp.int32)                   # (WW, WW)


def build_bias(params, window_size, num_heads, n_contrast_q, n_contrast_kv, mask):
    """Additive bias at its natural period: (1 or nW, H, N_q, N_kv). Never
    tiled over B_ (de-duplicated in HBM; the kernel indexes it modularly)."""
    Wh, Ww = window_size
    WW = Wh * Ww
    idx = relative_position_index(window_size)                         # (WW, WW)
    bias = params["rel_bias_table"][idx.reshape(-1)]                   # (WW*WW, H)
    bias = bias.reshape(WW, WW, num_heads).transpose(2, 0, 1)          # (H, WW, WW)
    bias = jnp.tile(bias, (1, n_contrast_q, n_contrast_kv))            # (H, N_q, N_kv)
    if mask is None:
        return bias[None].astype(jnp.float32)                          # (1, H, N_q, N_kv)
    mask_t = jnp.tile(mask, (1, n_contrast_q, n_contrast_kv))          # (nW, N_q, N_kv)
    return (bias[None] + mask_t[:, None]).astype(jnp.float32)          # (nW, H, N_q, N_kv)


def _pick_block_windows(B_, N_q, target_rows=256, max_windows=8):
    """Largest divisor of B_ such that Bb*N_q ~ target MXU row count."""
    cap = max(1, min(max_windows, math.ceil(target_rows / max(N_q, 1))))
    cap = min(cap, B_)
    for bb in range(cap, 0, -1):
        if B_ % bb == 0:
            return bb
    return 1


# ---------------------------------------------------------------------------
# Wrapper
# ---------------------------------------------------------------------------
@functools.partial(jax.jit,
                   static_argnames=("window_size", "num_heads", "compute_dtype"))
def window_attention_pallas(params, x_q, x_k, x_v, window_size, num_heads,
                            mask=None, compute_dtype=jnp.bfloat16):
    B_, ncq, Wh, Ww, C = x_q.shape
    nckv = x_k.shape[1]
    N_q = ncq * Wh * Ww
    N_kv = nckv * Wh * Ww
    assert C % num_heads == 0
    head_dim = C // num_heads
    scale = head_dim ** (-0.5)

    xq_f = x_q.reshape(B_, N_q, C).astype(compute_dtype)
    xk_f = x_k.reshape(B_, N_kv, C).astype(compute_dtype)
    xv_f = x_v.reshape(B_, N_kv, C).astype(compute_dtype)

    # Fold the qk scale into the q projection once (constant-fold, no per-step
    # VPU multiply inside the kernel).  Matmul operands in compute_dtype,
    # additive biases stay f32 (added after the f32-accumulated dot).
    wq = (params["wq"] * scale).astype(compute_dtype)
    bq = (params["bq"] * scale).astype(jnp.float32)
    wk = params["wk"].astype(compute_dtype)
    bk = params["bk"].astype(jnp.float32)
    wv = params["wv"].astype(compute_dtype)
    bv = params["bv"].astype(jnp.float32)
    wp = params["wp"].astype(compute_dtype)
    bp = params["bp"].astype(jnp.float32)

    # Windows per grid step (blocks are tiny here; re-derive target for a
    # 64 MiB-VMEM v7x budget if shapes grow).
    Bb = _pick_block_windows(B_, N_q)

    bias = build_bias(params, window_size, num_heads, ncq, nckv, mask)
    if bias.shape[0] == 1:                       # no mask: one shared bias block
        bias_block = (1, num_heads, N_q, N_kv)
        bias_index = lambda b: (0, 0, 0, 0)
    else:                                        # mask: window b_global uses b_global % nW
        nW = bias.shape[0]
        assert B_ % nW == 0, "num_windows must divide B_"
        period = math.lcm(Bb, nW)                # block pattern repeats with this period
        if period > nW:
            bias = jnp.tile(bias, (period // nW, 1, 1, 1))
        n_bias_blocks = period // Bb
        bias_block = (Bb, num_heads, N_q, N_kv)
        bias_index = lambda b: (b % n_bias_blocks, 0, 0, 0)

    kernel = _make_window_attn_kernel(num_heads, head_dim, compute_dtype)
    w2d = lambda b: (0, 0)  # noqa: E731  (weights/biases: constant index)

    out = pl.pallas_call(
        kernel,
        out_shape=jax.ShapeDtypeStruct((B_, N_q, C), jnp.float32),
        grid=(B_ // Bb,),
        in_specs=[
            pl.BlockSpec((Bb, N_q, C), lambda b: (b, 0, 0)),
            pl.BlockSpec((Bb, N_kv, C), lambda b: (b, 0, 0)),
            pl.BlockSpec((Bb, N_kv, C), lambda b: (b, 0, 0)),
            pl.BlockSpec((C, C), w2d), pl.BlockSpec((1, C), w2d),   # q
            pl.BlockSpec((C, C), w2d), pl.BlockSpec((1, C), w2d),   # k
            pl.BlockSpec((C, C), w2d), pl.BlockSpec((1, C), w2d),   # v
            pl.BlockSpec((C, C), w2d), pl.BlockSpec((1, C), w2d),   # proj
            pl.BlockSpec(bias_block, bias_index),
        ],
        out_specs=pl.BlockSpec((Bb, N_q, C), lambda b: (b, 0, 0)),
        compiler_params=pltpu.CompilerParams(
            dimension_semantics=("parallel",)),   # disjoint output blocks -> megacore on v7x
    )(xq_f, xk_f, xv_f, wq, bq, wk, bk, wv, bv, wp, bp, bias)

    x = out.reshape(B_, ncq, Wh, Ww, C)
    return x, None  # return_attention not supported (see TODO at top)


# ---------------------------------------------------------------------------
# Pure-JAX f32 reference (mirrors the torch forward) for correctness checking
# ---------------------------------------------------------------------------
def window_attention_ref(params, x_q, x_k, x_v, window_size, num_heads, mask=None):
    B_, ncq, Wh, Ww, C = x_q.shape
    nckv = x_k.shape[1]
    N_q, N_kv = ncq * Wh * Ww, nckv * Wh * Ww
    d = C // num_heads
    scale = d ** (-0.5)

    xq = x_q.reshape(B_, N_q, C)
    xk = x_k.reshape(B_, N_kv, C)
    xv = x_v.reshape(B_, N_kv, C)

    q = (xq @ params["wq"] + params["bq"]).reshape(B_, N_q, num_heads, d).transpose(0, 2, 1, 3)
    k = (xk @ params["wk"] + params["bk"]).reshape(B_, N_kv, num_heads, d).transpose(0, 2, 1, 3)
    v = (xv @ params["wv"] + params["bv"]).reshape(B_, N_kv, num_heads, d).transpose(0, 2, 1, 3)

    attn = (q * scale) @ jnp.swapaxes(k, -2, -1)                       # (B_, H, N_q, N_kv)
    bias = build_bias(params, window_size, num_heads, ncq, nckv, mask)
    if mask is None:
        attn = attn + bias
    else:
        nW = mask.shape[0]
        attn = (attn.reshape(B_ // nW, nW, num_heads, N_q, N_kv)
                + bias[None]).reshape(B_, num_heads, N_q, N_kv)
    attn = jax.nn.softmax(attn, axis=-1)

    x = (attn @ v).transpose(0, 2, 1, 3).reshape(B_, N_q, C)
    x = x @ params["wp"] + params["bp"]
    return x.reshape(B_, ncq, Wh, Ww, C)


# ---------------------------------------------------------------------------
if __name__ == "__main__":
    key = jax.random.PRNGKey(0)

    dim = 32
    num_heads = 4
    window_size = (4, 4)
    Wh, Ww = window_size
    n_contrast_q, n_contrast_kv = 2, 2
    nW = 4           # number of windows in the mask
    B = 4
    B_ = B * nW      # num_windows * batch = 16

    kp, kq, kk, kv, km = jax.random.split(key, 5)
    params = init_params(kp, dim, window_size, num_heads)

    x_q = jax.random.normal(kq, (B_, n_contrast_q, Wh, Ww, dim), jnp.float32)
    x_k = jax.random.normal(kk, (B_, n_contrast_kv, Wh, Ww, dim), jnp.float32)
    x_v = jax.random.normal(kv, (B_, n_contrast_kv, Wh, Ww, dim), jnp.float32)

    # shifted-window style additive mask (0 / -100), shape (nW, Wh*Ww, Wh*Ww)
    mask = jnp.where(
        jax.random.bernoulli(km, 0.2, (nW, Wh * Ww, Wh * Ww)),
        jnp.float32(-100.0), jnp.float32(0.0))

    for m in (None, mask):
        ref = window_attention_ref(params, x_q, x_k, x_v, window_size,
                                   num_heads, mask=m)

        # f32 compute path (tight check)
        o32, _ = window_attention_pallas(params, x_q, x_k, x_v, window_size,
                                         num_heads, mask=m,
                                         compute_dtype=jnp.float32)
        o32 = jax.block_until_ready(o32)
        assert o32.shape == (B_, n_contrast_q, Wh, Ww, dim)
        np.testing.assert_allclose(np.asarray(o32), np.asarray(ref),
                                   rtol=5e-3, atol=1e-3)

        # bf16 compute path (MXU-native on v5e/v6e/v7x) — looser tolerance
        o16, _ = window_attention_pallas(params, x_q, x_k, x_v, window_size,
                                         num_heads, mask=m,
                                         compute_dtype=jnp.bfloat16)
        o16 = jax.block_until_ready(o16)
        np.testing.assert_allclose(np.asarray(o16), np.asarray(ref),
                                   rtol=3e-2, atol=3e-3)

    print("KERNEL_OK")
</pallas_src>

<mosaic_0001>
module attributes {stable_mosaic.version = 11 : i64} {
  func.func @kernel(%arg0: i32, %arg1: memref<8x32x32xf32, #tpu.memory_space<vmem>>, %arg2: memref<8x32x32xf32, #tpu.memory_space<vmem>>, %arg3: memref<8x32x32xf32, #tpu.memory_space<vmem>>, %arg4: memref<32x32xf32, #tpu.memory_space<vmem>>, %arg5: memref<1x32xf32, #tpu.memory_space<vmem>>, %arg6: memref<32x32xf32, #tpu.memory_space<vmem>>, %arg7: memref<1x32xf32, #tpu.memory_space<vmem>>, %arg8: memref<32x32xf32, #tpu.memory_space<vmem>>, %arg9: memref<1x32xf32, #tpu.memory_space<vmem>>, %arg10: memref<32x32xf32, #tpu.memory_space<vmem>>, %arg11: memref<1x32xf32, #tpu.memory_space<vmem>>, %arg12: memref<1x4x32x32xf32, #tpu.memory_space<vmem>>, %arg13: memref<8x32x32xf32, #tpu.memory_space<vmem>>) attributes {dimension_semantics = [#tpu.dimension_semantics<parallel>], iteration_bounds = array<i64: 2>, scalar_prefetch = 0 : i64, scratch_operands = 0 : i64, tpu.core_type = #tpu.core_type<tc>, window_params = [{transform_indices = @transform_0, window_bounds = array<i64: 8, 32, 32>}, {transform_indices = @transform_1, window_bounds = array<i64: 8, 32, 32>}, {transform_indices = @transform_2, window_bounds = array<i64: 8, 32, 32>}, {pipeline_mode = #tpu.pipeline_mode<synchronous>, transform_indices = @transform_3, window_bounds = array<i64: 32, 32>}, {pipeline_mode = #tpu.pipeline_mode<synchronous>, transform_indices = @transform_4, window_bounds = array<i64: 1, 32>}, {pipeline_mode = #tpu.pipeline_mode<synchronous>, transform_indices = @transform_5, window_bounds = array<i64: 32, 32>}, {pipeline_mode = #tpu.pipeline_mode<synchronous>, transform_indices = @transform_6, window_bounds = array<i64: 1, 32>}, {pipeline_mode = #tpu.pipeline_mode<synchronous>, transform_indices = @transform_7, window_bounds = array<i64: 32, 32>}, {pipeline_mode = #tpu.pipeline_mode<synchronous>, transform_indices = @transform_8, window_bounds = array<i64: 1, 32>}, {pipeline_mode = #tpu.pipeline_mode<synchronous>, transform_indices = @transform_9, window_bounds = array<i64: 32, 32>}, {pipeline_mode = #tpu.pipeline_mode<synchronous>, transform_indices = @transform_10, window_bounds = array<i64: 1, 32>}, {pipeline_mode = #tpu.pipeline_mode<synchronous>, transform_indices = @transform_11, window_bounds = array<i64: 1, 4, 32, 32>}, {transform_indices = @transform_12, window_bounds = array<i64: 8, 32, 32>}]} {
    %c0 = arith.constant 0 : index
    %c0_0 = arith.constant 0 : index
    %c0_1 = arith.constant 0 : index
    %0 = vector.load %arg1[%c0, %c0_0, %c0_1] : memref<8x32x32xf32, #tpu.memory_space<vmem>>, vector<8x32x32xf32>
    %1 = vector.shape_cast %0 : vector<8x32x32xf32> to vector<256x32xf32>
    %c0_2 = arith.constant 0 : index
    %c0_3 = arith.constant 0 : index
    %c0_4 = arith.constant 0 : index
    %2 = vector.load %arg2[%c0_2, %c0_3, %c0_4] : memref<8x32x32xf32, #tpu.memory_space<vmem>>, vector<8x32x32xf32>
    %3 = vector.shape_cast %2 : vector<8x32x32xf32> to vector<256x32xf32>
    %c0_5 = arith.constant 0 : index
    %c0_6 = arith.constant 0 : index
    %c0_7 = arith.constant 0 : index
    %4 = vector.load %arg3[%c0_5, %c0_6, %c0_7] : memref<8x32x32xf32, #tpu.memory_space<vmem>>, vector<8x32x32xf32>
    %5 = vector.shape_cast %4 : vector<8x32x32xf32> to vector<256x32xf32>
    %c0_8 = arith.constant 0 : index
    %c0_9 = arith.constant 0 : index
    %6 = vector.load %arg4[%c0_8, %c0_9] : memref<32x32xf32, #tpu.memory_space<vmem>>, vector<32x32xf32>
    %cst = arith.constant dense<0.000000e+00> : vector<256x32xf32>
    %7 = tpu.matmul %1, %6, %cst {dimension_numbers = #tpu.dot_dimension_numbers<[1], [0], [0], [1], [0, 0, 1, 1], [], []>} : vector<256x32xf32>, vector<32x32xf32>, vector<256x32xf32> -> vector<256x32xf32>
    %c0_10 = arith.constant 0 : index
    %c0_11 = arith.constant 0 : index
    %8 = vector.load %arg5[%c0_10, %c0_11] : memref<1x32xf32, #tpu.memory_space<vmem>>, vector<1x32xf32>
    %9 = vector.broadcast %8 : vector<1x32xf32> to vector<256x32xf32>
    %10 = arith.addf %7, %9 : vector<256x32xf32>
    %c0_12 = arith.constant 0 : index
    %c0_13 = arith.constant 0 : index
    %11 = vector.load %arg6[%c0_12, %c0_13] : memref<32x32xf32, #tpu.memory_space<vmem>>, vector<32x32xf32>
    %cst_14 = arith.constant dense<0.000000e+00> : vector<256x32xf32>
    %12 = tpu.matmul %3, %11, %cst_14 {dimension_numbers = #tpu.dot_dimension_numbers<[1], [0], [0], [1], [0, 0, 1, 1], [], []>} : vector<256x32xf32>, vector<32x32xf32>, vector<256x32xf32> -> vector<256x32xf32>
    %c0_15 = arith.constant 0 : index
    %c0_16 = arith.constant 0 : index
    %13 = vector.load %arg7[%c0_15, %c0_16] : memref<1x32xf32, #tpu.memory_space<vmem>>, vector<1x32xf32>
    %14 = vector.broadcast %13 : vector<1x32xf32> to vector<256x32xf32>
    %15 = arith.addf %12, %14 : vector<256x32xf32>
    %c0_17 = arith.constant 0 : index
    %c0_18 = arith.constant 0 : index
    %16 = vector.load %arg8[%c0_17, %c0_18] : memref<32x32xf32, #tpu.memory_space<vmem>>, vector<32x32xf32>
    %cst_19 = arith.constant dense<0.000000e+00> : vector<256x32xf32>
    %17 = tpu.matmul %5, %16, %cst_19 {dimension_numbers = #tpu.dot_dimension_numbers<[1], [0], [0], [1], [0, 0, 1, 1], [], []>} : vector<256x32xf32>, vector<32x32xf32>, vector<256x32xf32> -> vector<256x32xf32>
    %c0_20 = arith.constant 0 : index
    %c0_21 = arith.constant 0 : index
    %18 = vector.load %arg9[%c0_20, %c0_21] : memref<1x32xf32, #tpu.memory_space<vmem>>, vector<1x32xf32>
    %19 = vector.broadcast %18 : vector<1x32xf32> to vector<256x32xf32>
    %20 = arith.addf %17, %19 : vector<256x32xf32>
    %21 = vector.shape_cast %10 : vector<256x32xf32> to vector<8x32x32xf32>
    %22 = vector.shape_cast %15 : vector<256x32xf32> to vector<8x32x32xf32>
    %23 = vector.shape_cast %20 : vector<256x32xf32> to vector<8x32x32xf32>
    %c0_22 = arith.constant 0 : index
    %c0_23 = arith.constant 0 : index
    %c0_24 = arith.constant 0 : index
    %c0_25 = arith.constant 0 : index
    %24 = vector.load %arg12[%c0_22, %c0_23, %c0_24, %c0_25] : memref<1x4x32x32xf32, #tpu.memory_space<vmem>>, vector<1x4x32x32xf32>
    %c0_26 = arith.constant 0 : index
    %c0_27 = arith.constant 0 : index
    %25 = vector.load %arg10[%c0_26, %c0_27] : memref<32x32xf32, #tpu.memory_space<vmem>>, vector<32x32xf32>
    %cst_28 = arith.constant 0.000000e+00 : f32
    %26 = vector.broadcast %cst_28 : f32 to vector<256x32xf32>
    %27 = vector.extract_strided_slice %21 {offsets = [0, 0, 0], sizes = [8, 32, 8], strides = [1, 1, 1]} : vector<8x32x32xf32> to vector<8x32x8xf32>
    %28 = vector.extract_strided_slice %22 {offsets = [0, 0, 0], sizes = [8, 32, 8], strides = [1, 1, 1]} : vector<8x32x32xf32> to vector<8x32x8xf32>
    %29 = vector.extract_strided_slice %23 {offsets = [0, 0, 0], sizes = [8, 32, 8], strides = [1, 1, 1]} : vector<8x32x32xf32> to vector<8x32x8xf32>
    "tpu.trace_start"() <{level = 10 : i32, message = "bqd,bkd->bqk"}> : () -> ()
    %cst_29 = arith.constant dense<0.000000e+00> : vector<8x32x32xf32>
    %30 = tpu.matmul %27, %28, %cst_29 {dimension_numbers = #tpu.dot_dimension_numbers<[2], [2], [1], [1], [0, 0, 0, 1, 1, 1], [0], [0]>} : vector<8x32x8xf32>, vector<8x32x8xf32>, vector<8x32x32xf32> -> vector<8x32x32xf32>
    "tpu.trace_stop"() : () -> ()
    %31 = vector.extract_strided_slice %24 {offsets = [0, 0, 0, 0], sizes = [1, 1, 32, 32], strides = [1, 1, 1, 1]} : vector<1x4x32x32xf32> to vector<1x1x32x32xf32>
    %32 = vector.shape_cast %31 : vector<1x1x32x32xf32> to vector<1x32x32xf32>
    %33 = vector.broadcast %32 : vector<1x32x32xf32> to vector<8x32x32xf32>
    %34 = arith.addf %30, %33 : vector<8x32x32xf32>
    %cst_30 = arith.constant dense<0xFF800000> : vector<8x32xf32>
    %35 = vector.multi_reduction <maximumf>, %34, %cst_30 [2] : vector<8x32x32xf32> to vector<8x32xf32>
    %36 = vector.shape_cast %35 : vector<8x32xf32> to vector<8x32x1xf32>
    %37 = vector.broadcast %36 : vector<8x32x1xf32> to vector<8x32x32xf32>
    %38 = arith.subf %34, %37 : vector<8x32x32xf32>
    %39 = math.exp %38 : vector<8x32x32xf32>
    %cst_31 = arith.constant dense<0.000000e+00> : vector<8x32xf32>
    %40 = vector.multi_reduction <add>, %39, %cst_31 [2] : vector<8x32x32xf32> to vector<8x32xf32>
    %41 = vector.shape_cast %40 : vector<8x32xf32> to vector<8x32x1xf32>
    %42 = tpu.reciprocal %41 {approx = true} : vector<8x32x1xf32> -> vector<8x32x1xf32>
    %43 = vector.broadcast %42 : vector<8x32x1xf32> to vector<8x32x32xf32>
    %44 = arith.mulf %39, %43 : vector<8x32x32xf32>
    "tpu.trace_start"() <{level = 10 : i32, message = "bqk,bkd->bqd"}> : () -> ()
    %cst_32 = arith.constant dense<0.000000e+00> : vector<8x32x8xf32>
    %45 = tpu.matmul %44, %29, %cst_32 {dimension_numbers = #tpu.dot_dimension_numbers<[2], [1], [1], [2], [0, 0, 0, 1, 1, 2], [0], [0]>} : vector<8x32x32xf32>, vector<8x32x8xf32>, vector<8x32x8xf32> -> vector<8x32x8xf32>
    "tpu.trace_stop"() : () -> ()
    %46 = vector.shape_cast %45 : vector<8x32x8xf32> to vector<256x8xf32>
    %47 = vector.extract_strided_slice %25 {offsets = [0, 0], sizes = [8, 32], strides = [1, 1]} : vector<32x32xf32> to vector<8x32xf32>
    %cst_33 = arith.constant dense<0.000000e+00> : vector<256x32xf32>
    %48 = tpu.matmul %46, %47, %cst_33 {dimension_numbers = #tpu.dot_dimension_numbers<[1], [0], [0], [1], [0, 0, 1, 1], [], []>} : vector<256x8xf32>, vector<8x32xf32>, vector<256x32xf32> -> vector<256x32xf32>
    %49 = arith.addf %26, %48 : vector<256x32xf32>
    %50 = vector.extract_strided_slice %21 {offsets = [0, 0, 8], sizes = [8, 32, 8], strides = [1, 1, 1]} : vector<8x32x32xf32> to vector<8x32x8xf32>
    %51 = vector.extract_strided_slice %22 {offsets = [0, 0, 8], sizes = [8, 32, 8], strides = [1, 1, 1]} : vector<8x32x32xf32> to vector<8x32x8xf32>
    %52 = vector.extract_strided_slice %23 {offsets = [0, 0, 8], sizes = [8, 32, 8], strides = [1, 1, 1]} : vector<8x32x32xf32> to vector<8x32x8xf32>
    "tpu.trace_start"() <{level = 10 : i32, message = "bqd,bkd->bqk"}> : () -> ()
    %cst_34 = arith.constant dense<0.000000e+00> : vector<8x32x32xf32>
    %53 = tpu.matmul %50, %51, %cst_34 {dimension_numbers = #tpu.dot_dimension_numbers<[2], [2], [1], [1], [0, 0, 0, 1, 1, 1], [0], [0]>} : vector<8x32x8xf32>, vector<8x32x8xf32>, vector<8x32x32xf32> -> vector<8x32x32xf32>
    "tpu.trace_stop"() : () -> ()
    %54 = vector.extract_strided_slice %24 {offsets = [0, 1, 0, 0], sizes = [1, 1, 32, 32], strides = [1, 1, 1, 1]} : vector<1x4x32x32xf32> to vector<1x1x32x32xf32>
    %55 = vector.shape_cast %54 : vector<1x1x32x32xf32> to vector<1x32x32xf32>
    %56 = vector.broadcast %55 : vector<1x32x32xf32> to vector<8x32x32xf32>
    %57 = arith.addf %53, %56 : vector<8x32x32xf32>
    %cst_35 = arith.constant dense<0xFF800000> : vector<8x32xf32>
    %58 = vector.multi_reduction <maximumf>, %57, %cst_35 [2] : vector<8x32x32xf32> to vector<8x32xf32>
    %59 = vector.shape_cast %58 : vector<8x32xf32> to vector<8x32x1xf32>
    %60 = vector.broadcast %59 : vector<8x32x1xf32> to vector<8x32x32xf32>
    %61 = arith.subf %57, %60 : vector<8x32x32xf32>
    %62 = math.exp %61 : vector<8x32x32xf32>
    %cst_36 = arith.constant dense<0.000000e+00> : vector<8x32xf32>
    %63 = vector.multi_reduction <add>, %62, %cst_36 [2] : vector<8x32x32xf32> to vector<8x32xf32>
    %64 = vector.shape_cast %63 : vector<8x32xf32> to vector<8x32x1xf32>
    %65 = tpu.reciprocal %64 {approx = true} : vector<8x32x1xf32> -> vector<8x32x1xf32>
    %66 = vector.broadcast %65 : vector<8x32x1xf32> to vector<8x32x32xf32>
    %67 = arith.mulf %62, %66 : vector<8x32x32xf32>
    "tpu.trace_start"() <{level = 10 : i32, message = "bqk,bkd->bqd"}> : () -> ()
    %cst_37 = arith.constant dense<0.000000e+00> : vector<8x32x8xf32>
    %68 = tpu.matmul %67, %52, %cst_37 {dimension_numbers = #tpu.dot_dimension_numbers<[2], [1], [1], [2], [0, 0, 0, 1, 1, 2], [0], [0]>} : vector<8x32x32xf32>, vector<8x32x8xf32>, vector<8x32x8xf32> -> vector<8x32x8xf32>
    "tpu.trace_stop"() : () -> ()
    %69 = vector.shape_cast %68 : vector<8x32x8xf32> to vector<256x8xf32>
    %70 = vector.extract_strided_slice %25 {offsets = [8, 0], sizes = [8, 32], strides = [1, 1]} : vector<32x32xf32> to vector<8x32xf32>
    %cst_38 = arith.constant dense<0.000000e+00> : vector<256x32xf32>
    %71 = tpu.matmul %69, %70, %cst_38 {dimension_numbers = #tpu.dot_dimension_numbers<[1], [0], [0], [1], [0, 0, 1, 1], [], []>} : vector<256x8xf32>, vector<8x32xf32>, vector<256x32xf32> -> vector<256x32xf32>
    %72 = arith.addf %49, %71 : vector<256x32xf32>
    %73 = vector.extract_strided_slice %21 {offsets = [0, 0, 16], sizes = [8, 32, 8], strides = [1, 1, 1]} : vector<8x32x32xf32> to vector<8x32x8xf32>
    %74 = vector.extract_strided_slice %22 {offsets = [0, 0, 16], sizes = [8, 32, 8], strides = [1, 1, 1]} : vector<8x32x32xf32> to vector<8x32x8xf32>
    %75 = vector.extract_strided_slice %23 {offsets = [0, 0, 16], sizes = [8, 32, 8], strides = [1, 1, 1]} : vector<8x32x32xf32> to vector<8x32x8xf32>
    "tpu.trace_start"() <{level = 10 : i32, message = "bqd,bkd->bqk"}> : () -> ()
    %cst_39 = arith.constant dense<0.000000e+00> : vector<8x32x32xf32>
    %76 = tpu.matmul %73, %74, %cst_39 {dimension_numbers = #tpu.dot_dimension_numbers<[2], [2], [1], [1], [0, 0, 0, 1, 1, 1], [0], [0]>} : vector<8x32x8xf32>, vector<8x32x8xf32>, vector<8x32x32xf32> -> vector<8x32x32xf32>
    "tpu.trace_stop"() : () -> ()
    %77 = vector.extract_strided_slice %24 {offsets = [0, 2, 0, 0], sizes = [1, 1, 32, 32], strides = [1, 1, 1, 1]} : vector<1x4x32x32xf32> to vector<1x1x32x32xf32>
    %78 = vector.shape_cast %77 : vector<1x1x32x32xf32> to vector<1x32x32xf32>
    %79 = vector.broadcast %78 : vector<1x32x32xf32> to vector<8x32x32xf32>
    %80 = arith.addf %76, %79 : vector<8x32x32xf32>
    %cst_40 = arith.constant dense<0xFF800000> : vector<8x32xf32>
    %81 = vector.multi_reduction <maximumf>, %80, %cst_40 [2] : vector<8x32x32xf32> to vector<8x32xf32>
    %82 = vector.shape_cast %81 : vector<8x32xf32> to vector<8x32x1xf32>
    %83 = vector.broadcast %82 : vector<8x32x1xf32> to vector<8x32x32xf32>
    %84 = arith.subf %80, %83 : vector<8x32x32xf32>
    %85 = math.exp %84 : vector<8x32x32xf32>
    %cst_41 = arith.constant dense<0.000000e+00> : vector<8x32xf32>
    %86 = vector.multi_reduction <add>, %85, %cst_41 [2] : vector<8x32x32xf32> to vector<8x32xf32>
    %87 = vector.shape_cast %86 : vector<8x32xf32> to vector<8x32x1xf32>
    %88 = tpu.reciprocal %87 {approx = true} : vector<8x32x1xf32> -> vector<8x32x1xf32>
    %89 = vector.broadcast %88 : vector<8x32x1xf32> to vector<8x32x32xf32>
    %90 = arith.mulf %85, %89 : vector<8x32x32xf32>
    "tpu.trace_start"() <{level = 10 : i32, message = "bqk,bkd->bqd"}> : () -> ()
    %cst_42 = arith.constant dense<0.000000e+00> : vector<8x32x8xf32>
    %91 = tpu.matmul %90, %75, %cst_42 {dimension_numbers = #tpu.dot_dimension_numbers<[2], [1], [1], [2], [0, 0, 0, 1, 1, 2], [0], [0]>} : vector<8x32x32xf32>, vector<8x32x8xf32>, vector<8x32x8xf32> -> vector<8x32x8xf32>
    "tpu.trace_stop"() : () -> ()
    %92 = vector.shape_cast %91 : vector<8x32x8xf32> to vector<256x8xf32>
    %93 = vector.extract_strided_slice %25 {offsets = [16, 0], sizes = [8, 32], strides = [1, 1]} : vector<32x32xf32> to vector<8x32xf32>
    %cst_43 = arith.constant dense<0.000000e+00> : vector<256x32xf32>
    %94 = tpu.matmul %92, %93, %cst_43 {dimension_numbers = #tpu.dot_dimension_numbers<[1], [0], [0], [1], [0, 0, 1, 1], [], []>} : vector<256x8xf32>, vector<8x32xf32>, vector<256x32xf32> -> vector<256x32xf32>
    %95 = arith.addf %72, %94 : vector<256x32xf32>
    %96 = vector.extract_strided_slice %21 {offsets = [0, 0, 24], sizes = [8, 32, 8], strides = [1, 1, 1]} : vector<8x32x32xf32> to vector<8x32x8xf32>
    %97 = vector.extract_strided_slice %22 {offsets = [0, 0, 24], sizes = [8, 32, 8], strides = [1, 1, 1]} : vector<8x32x32xf32> to vector<8x32x8xf32>
    %98 = vector.extract_strided_slice %23 {offsets = [0, 0, 24], sizes = [8, 32, 8], strides = [1, 1, 1]} : vector<8x32x32xf32> to vector<8x32x8xf32>
    "tpu.trace_start"() <{level = 10 : i32, message = "bqd,bkd->bqk"}> : () -> ()
    %cst_44 = arith.constant dense<0.000000e+00> : vector<8x32x32xf32>
    %99 = tpu.matmul %96, %97, %cst_44 {dimension_numbers = #tpu.dot_dimension_numbers<[2], [2], [1], [1], [0, 0, 0, 1, 1, 1], [0], [0]>} : vector<8x32x8xf32>, vector<8x32x8xf32>, vector<8x32x32xf32> -> vector<8x32x32xf32>
    "tpu.trace_stop"() : () -> ()
    %100 = vector.extract_strided_slice %24 {offsets = [0, 3, 0, 0], sizes = [1, 1, 32, 32], strides = [1, 1, 1, 1]} : vector<1x4x32x32xf32> to vector<1x1x32x32xf32>
    %101 = vector.shape_cast %100 : vector<1x1x32x32xf32> to vector<1x32x32xf32>
    %102 = vector.broadcast %101 : vector<1x32x32xf32> to vector<8x32x32xf32>
    %103 = arith.addf %99, %102 : vector<8x32x32xf32>
    %cst_45 = arith.constant dense<0xFF800000> : vector<8x32xf32>
    %104 = vector.multi_reduction <maximumf>, %103, %cst_45 [2] : vector<8x32x32xf32> to vector<8x32xf32>
    %105 = vector.shape_cast %104 : vector<8x32xf32> to vector<8x32x1xf32>
    %106 = vector.broadcast %105 : vector<8x32x1xf32> to vector<8x32x32xf32>
    %107 = arith.subf %103, %106 : vector<8x32x32xf32>
    %108 = math.exp %107 : vector<8x32x32xf32>
    %cst_46 = arith.constant dense<0.000000e+00> : vector<8x32xf32>
    %109 = vector.multi_reduction <add>, %108, %cst_46 [2] : vector<8x32x32xf32> to vector<8x32xf32>
    %110 = vector.shape_cast %109 : vector<8x32xf32> to vector<8x32x1xf32>
    %111 = tpu.reciprocal %110 {approx = true} : vector<8x32x1xf32> -> vector<8x32x1xf32>
    %112 = vector.broadcast %111 : vector<8x32x1xf32> to vector<8x32x32xf32>
    %113 = arith.mulf %108, %112 : vector<8x32x32xf32>
    "tpu.trace_start"() <{level = 10 : i32, message = "bqk,bkd->bqd"}> : () -> ()
    %cst_47 = arith.constant dense<0.000000e+00> : vector<8x32x8xf32>
    %114 = tpu.matmul %113, %98, %cst_47 {dimension_numbers = #tpu.dot_dimension_numbers<[2], [1], [1], [2], [0, 0, 0, 1, 1, 2], [0], [0]>} : vector<8x32x32xf32>, vector<8x32x8xf32>, vector<8x32x8xf32> -> vector<8x32x8xf32>
    "tpu.trace_stop"() : () -> ()
    %115 = vector.shape_cast %114 : vector<8x32x8xf32> to vector<256x8xf32>
    %116 = vector.extract_strided_slice %25 {offsets = [24, 0], sizes = [8, 32], strides = [1, 1]} : vector<32x32xf32> to vector<8x32xf32>
    %cst_48 = arith.constant dense<0.000000e+00> : vector<256x32xf32>
    %117 = tpu.matmul %115, %116, %cst_48 {dimension_numbers = #tpu.dot_dimension_numbers<[1], [0], [0], [1], [0, 0, 1, 1], [], []>} : vector<256x8xf32>, vector<8x32xf32>, vector<256x32xf32> -> vector<256x32xf32>
    %118 = arith.addf %95, %117 : vector<256x32xf32>
    %c0_49 = arith.constant 0 : index
    %c0_50 = arith.constant 0 : index
    %119 = vector.load %arg11[%c0_49, %c0_50] : memref<1x32xf32, #tpu.memory_space<vmem>>, vector<1x32xf32>
    %120 = vector.broadcast %119 : vector<1x32xf32> to vector<256x32xf32>
    %121 = arith.addf %118, %120 : vector<256x32xf32>
    %122 = vector.shape_cast %121 : vector<256x32xf32> to vector<8x32x32xf32>
    %c0_51 = arith.constant 0 : index
    %c0_52 = arith.constant 0 : index
    %c0_53 = arith.constant 0 : index
    %123 = vector.load %arg13[%c0_51, %c0_52, %c0_53] : memref<8x32x32xf32, #tpu.memory_space<vmem>>, vector<8x32x32xf32>
    tpu.vector_store %arg13[%c0_51, %c0_52, %c0_53], %122 {strides = array<i32>} : memref<8x32x32xf32, #tpu.memory_space<vmem>>, vector<8x32x32xf32>,
    return
  }
  func.func @transform_0(%arg0: i32) -> (i32, i32, i32) {
    %c0_i32 = arith.constant 0 : i32
    %c0_i32_0 = arith.constant 0 : i32
    %c0_i32_1 = arith.constant 0 : i32
    return %arg0, %c0_i32, %c0_i32_0 : i32, i32, i32
  }
  func.func @transform_1(%arg0: i32) -> (i32, i32, i32) {
    %c0_i32 = arith.constant 0 : i32
    %c0_i32_0 = arith.constant 0 : i32
    %c0_i32_1 = arith.constant 0 : i32
    return %arg0, %c0_i32, %c0_i32_0 : i32, i32, i32
  }
  func.func @transform_2(%arg0: i32) -> (i32, i32, i32) {
    %c0_i32 = arith.constant 0 : i32
    %c0_i32_0 = arith.constant 0 : i32
    %c0_i32_1 = arith.constant 0 : i32
    return %arg0, %c0_i32, %c0_i32_0 : i32, i32, i32
  }
  func.func @transform_3(%arg0: i32) -> (i32, i32) {
    %c0_i32 = arith.constant 0 : i32
    %c0_i32_0 = arith.constant 0 : i32
    %c0_i32_1 = arith.constant 0 : i32
    return %c0_i32, %c0_i32_0 : i32, i32
  }
  func.func @transform_4(%arg0: i32) -> (i32, i32) {
    %c0_i32 = arith.constant 0 : i32
    %c0_i32_0 = arith.constant 0 : i32
    %c0_i32_1 = arith.constant 0 : i32
    return %c0_i32, %c0_i32_0 : i32, i32
  }
  func.func @transform_5(%arg0: i32) -> (i32, i32) {
    %c0_i32 = arith.constant 0 : i32
    %c0_i32_0 = arith.constant 0 : i32
    %c0_i32_1 = arith.constant 0 : i32
    return %c0_i32, %c0_i32_0 : i32, i32
  }
  func.func @transform_6(%arg0: i32) -> (i32, i32) {
    %c0_i32 = arith.constant 0 : i32
    %c0_i32_0 = arith.constant 0 : i32
    %c0_i32_1 = arith.constant 0 : i32
    return %c0_i32, %c0_i32_0 : i32, i32
  }
  func.func @transform_7(%arg0: i32) -> (i32, i32) {
    %c0_i32 = arith.constant 0 : i32
    %c0_i32_0 = arith.constant 0 : i32
    %c0_i32_1 = arith.constant 0 : i32
    return %c0_i32, %c0_i32_0 : i32, i32
  }
  func.func @transform_8(%arg0: i32) -> (i32, i32) {
    %c0_i32 = arith.constant 0 : i32
    %c0_i32_0 = arith.constant 0 : i32
    %c0_i32_1 = arith.constant 0 : i32
    return %c0_i32, %c0_i32_0 : i32, i32
  }
  func.func @transform_9(%arg0: i32) -> (i32, i32) {
    %c0_i32 = arith.constant 0 : i32
    %c0_i32_0 = arith.constant 0 : i32
    %c0_i32_1 = arith.constant 0 : i32
    return %c0_i32, %c0_i32_0 : i32, i32
  }
  func.func @transform_10(%arg0: i32) -> (i32, i32) {
    %c0_i32 = arith.constant 0 : i32
    %c0_i32_0 = arith.constant 0 : i32
    %c0_i32_1 = arith.constant 0 : i32
    return %c0_i32, %c0_i32_0 : i32, i32
  }
  func.func @transform_11(%arg0: i32) -> (i32, i32, i32, i32) {
    %c0_i32 = arith.constant 0 : i32
    %c0_i32_0 = arith.constant 0 : i32
    %c0_i32_1 = arith.constant 0 : i32
    %c0_i32_2 = arith.constant 0 : i32
    %c0_i32_3 = arith.constant 0 : i32
    return %c0_i32, %c0_i32_0, %c0_i32_1, %c0_i32_2 : i32, i32, i32, i32
  }
  func.func @transform_12(%arg0: i32) -> (i32, i32, i32) {
    %c0_i32 = arith.constant 0 : i32
    %c0_i32_0 = arith.constant 0 : i32
    %c0_i32_1 = arith.constant 0 : i32
    return %arg0, %c0_i32, %c0_i32_0 : i32, i32, i32
  }
}

</mosaic_0001>

<llo_original>
// kernel: window_attention_pallas.1
$region0: #{window_attention_pallas.1}
  #allocation0 [shape = 'u32[]', space=smem, size = 0x4, offset = 0x4, fixed_abs, tag = 'smem constant byte address 0x4 - core index']
  #allocation1 [shape = 'u32[144,128]{1,0:T(1,128)}', space=vmem, size = 0x12000, scoped, tag = 'internal scratch']
  %s0 = inlined_call_operand.vmem [shape: f32[16,32,32], index: 0, kind: input, shape index: {}]
  %s1 = inlined_call_operand.vmem [shape: f32[16,32,32], index: 1, kind: input, shape index: {}]
  %s2 = inlined_call_operand.vmem [shape: f32[16,32,32], index: 2, kind: input, shape index: {}]
  %s3 = inlined_call_operand.vmem [shape: f32[32,32], index: 3, kind: input, shape index: {}]
  %s4 = inlined_call_operand.vmem [shape: f32[1,32], index: 4, kind: input, shape index: {}]
  %s5 = inlined_call_operand.vmem [shape: f32[32,32], index: 5, kind: input, shape index: {}]
  %s6 = inlined_call_operand.vmem [shape: f32[1,32], index: 6, kind: input, shape index: {}]
  %s7 = inlined_call_operand.vmem [shape: f32[32,32], index: 7, kind: input, shape index: {}]
  %s8 = inlined_call_operand.vmem [shape: f32[1,32], index: 8, kind: input, shape index: {}]
  %s9 = inlined_call_operand.vmem [shape: f32[32,32], index: 9, kind: input, shape index: {}]
  %s10 = inlined_call_operand.vmem [shape: f32[1,32], index: 10, kind: input, shape index: {}]
  %s11 = inlined_call_operand.vmem [shape: f32[1,4,32,32], index: 11, kind: input, shape index: {}]
  %s12 = inlined_call_operand.hbm [shape: f32[16,32,32], index: 12, kind: output, shape index: {}]
  %s13 = sld [smem:[#allocation0]]
  $region81: #{window_attention_pallas.1} parent=0
    _
  %s15 = ssub.s32 1, %s13
  %s16 = scalar_select 0, %s15, %s13
  $region1: #{window_attention_pallas.1} parent=0
    #allocation2 [shape = 'u8[262144]{0}', space=vmem, size = 0x40000, scoped, tag = 'output window, operand 0']
    #allocation3 [shape = 's32[2]{0}', space=sflag, size = 0x8, scoped, tag = 'scoped memory for window_attention_pallas.1']
    %17 = vsyncpa [#allocation3], 0
    %s18 = scalar_lea.sflag [#allocation3], 1
    %19 = vsyncpa %s18, 0
    loop: start=0, step=1, limit=4
    $region2: #{window_attention_pallas.1} parent=1 // loop_pre_header
      _
    $region3: #{window_attention_pallas.1} parent=1 // loop_header
      %s21 = sphi 0, %s25
      %p22 = scmp.ge.s32.totalorder %s21, 4
      %s31 = sphi 0, %s33
      %s34 = sphi 0, %s31
      %s35 = sphi 0, %s34
      %s51 = sphi 0, %s35
      %s57 = sphi 0, %s59
      %s60 = sphi 0, %s57
      %s61 = sphi 0, %s60
      %s77 = sphi 0, %s61
      %s83 = sphi 0, %s85
      %s86 = sphi 0, %s83
      %s87 = sphi 0, %s86
      %s103 = sphi 0, %s87
      %s107 = sphi 0, %s107
      %s109 = sphi 0, %s107
      %s110 = sphi 0, %s109
      %s124 = sphi 0, %s110
      %s128 = sphi 0, %s128
      %s130 = sphi 0, %s128
      %s131 = sphi 0, %s130
      %s145 = sphi 0, %s131
      %s149 = sphi 0, %s149
      %s151 = sphi 0, %s149
      %s152 = sphi 0, %s151
      %s166 = sphi 0, %s152
      %s170 = sphi 0, %s170
      %s172 = sphi 0, %s170
      %s173 = sphi 0, %s172
      %s187 = sphi 0, %s173
      %s191 = sphi 0, %s191
      %s193 = sphi 0, %s191
      %s194 = sphi 0, %s193
      %s208 = sphi 0, %s194
      %s212 = sphi 0, %s212
      %s214 = sphi 0, %s212
      %s215 = sphi 0, %s214
      %s229 = sphi 0, %s215
      %s233 = sphi 0, %s233
      %s235 = sphi 0, %s233
      %s236 = sphi 0, %s235
      %s250 = sphi 0, %s236
      %s254 = sphi 0, %s254
      %s256 = sphi 0, %s254
      %s257 = sphi 0, %s256
      %s271 = sphi 0, %s257
      %s275 = sphi 0, %s275
      %s277 = sphi 0, %s275
      %s278 = sphi 0, %s277
      %s292 = sphi 0, %s278
      %s298 = sphi 0, %s300
      %s301 = sphi 0, %s298
      %s302 = sphi 0, %s301
      %s318 = sphi 0, %s302
    $region4: #{window_attention_pallas.1} parent=1 // loop_header_branch
      %24 = sbr.rel (%p22) target = $region8
    $region5: #{window_attention_pallas.1} parent=1 // loop_body
      %s26 = ssub.s32 %s21, 1
      %s27 = ssub.s32 %s21, 2
      %s28 = sadd.s32 %s21, 1
      %s29 = ssub.s32 %s21, %s28
      %p30 = scmp.eq.s32.totalorder %s29, 0
      %s32 = sadd.s32 %s31, 1
      %s33 = scalar_select %p30, %s31, %s32
      %p36 = pneg %p30
      %p37 = scmp.eq.s32.totalorder %s21, 1
      %p38 = por %p36, %p37
      %p39 = scmp.ne.s32.totalorder %s31, %s34
      %p40 = scmp.eq.s32.totalorder %s21, 0
      %p41 = por %p39, %p40
      %p42 = scmp.ne.s32.totalorder %s31, %s34
      %p43 = scmp.eq.s32.totalorder %s26, 1
      %p44 = por %p42, %p43
      %p45 = scmp.ne.s32.totalorder %s34, %s35
      %p46 = scmp.eq.s32.totalorder %s26, 0
      %p47 = por %p45, %p46
      %p48 = scmp.ne.s32.totalorder %s34, %s35
      %p49 = scmp.eq.s32.totalorder %s27, 1
      %p50 = por %p48, %p49
      %p52 = scmp.ne.s32.totalorder %s35, %s51
      %p53 = scmp.eq.s32.totalorder %s27, 0
      %p54 = por %p52, %p53
      %s55 = ssub.s32 %s21, %s28
      %p56 = scmp.eq.s32.totalorder %s55, 0
      %s58 = sadd.s32 %s57, 1
      %s59 = scalar_select %p56, %s57, %s58
      %p62 = pneg %p56
      %p63 = scmp.eq.s32.totalorder %s21, 1
      %p64 = por %p62, %p63
      %p65 = scmp.ne.s32.totalorder %s57, %s60
      %p66 = scmp.eq.s32.totalorder %s21, 0
      %p67 = por %p65, %p66
      %p68 = scmp.ne.s32.totalorder %s57, %s60
      %p69 = scmp.eq.s32.totalorder %s26, 1
      %p70 = por %p68, %p69
      %p71 = scmp.ne.s32.totalorder %s60, %s61
      %p72 = scmp.eq.s32.totalorder %s26, 0
      %p73 = por %p71, %p72
      %p74 = scmp.ne.s32.totalorder %s60, %s61
      %p75 = scmp.eq.s32.totalorder %s27, 1
      %p76 = por %p74, %p75
      %p78 = scmp.ne.s32.totalorder %s61, %s77
      %p79 = scmp.eq.s32.totalorder %s27, 0
      %p80 = por %p78, %p79
      %s81 = ssub.s32 %s21, %s28
      %p82 = scmp.eq.s32.totalorder %s81, 0
      %s84 = sadd.s32 %s83, 1
      %s85 = scalar_select %p82, %s83, %s84
      %p88 = pneg %p82
      %p89 = scmp.eq.s32.totalorder %s21, 1
      %p90 = por %p88, %p89
      %p91 = scmp.ne.s32.totalorder %s83, %s86
      %p92 = scmp.eq.s32.totalorder %s21, 0
      %p93 = por %p91, %p92
      %p94 = scmp.ne.s32.totalorder %s83, %s86
      %p95 = scmp.eq.s32.totalorder %s26, 1
      %p96 = por %p94, %p95
      %p97 = scmp.ne.s32.totalorder %s86, %s87
      %p98 = scmp.eq.s32.totalorder %s26, 0
      %p99 = por %p97, %p98
      %p100 = scmp.ne.s32.totalorder %s86, %s87
      %p101 = scmp.eq.s32.totalorder %s27, 1
      %p102 = por %p100, %p101
      %p104 = scmp.ne.s32.totalorder %s87, %s103
      %p105 = scmp.eq.s32.totalorder %s27, 0
      %p106 = por %p104, %p105
      %s108 = sadd.s32 %s107, 1
      %p111 = scmp.eq.s32.totalorder %s21, 1
      %p112 = scmp.ne.s32.totalorder %s107, %s109
      %p113 = scmp.eq.s32.totalorder %s21, 0
      %p114 = por %p112, %p113
      %p115 = scmp.ne.s32.totalorder %s107, %s109
      %p116 = scmp.eq.s32.totalorder %s26, 1
      %p117 = por %p115, %p116
      %p118 = scmp.ne.s32.totalorder %s109, %s110
      %p119 = scmp.eq.s32.totalorder %s26, 0
      %p120 = por %p118, %p119
      %p121 = scmp.ne.s32.totalorder %s109, %s110
      %p122 = scmp.eq.s32.totalorder %s27, 1
      %p123 = por %p121, %p122
      %p125 = scmp.ne.s32.totalorder %s110, %s124
      %p126 = scmp.eq.s32.totalorder %s27, 0
      %p127 = por %p125, %p126
      %s129 = sadd.s32 %s128, 1
      %p132 = scmp.eq.s32.totalorder %s21, 1
      %p133 = scmp.ne.s32.totalorder %s128, %s130
      %p134 = scmp.eq.s32.totalorder %s21, 0
      %p135 = por %p133, %p134
      %p136 = scmp.ne.s32.totalorder %s128, %s130
      %p137 = scmp.eq.s32.totalorder %s26, 1
      %p138 = por %p136, %p137
      %p139 = scmp.ne.s32.totalorder %s130, %s131
      %p140 = scmp.eq.s32.totalorder %s26, 0
      %p141 = por %p139, %p140
      %p142 = scmp.ne.s32.totalorder %s130, %s131
      %p143 = scmp.eq.s32.totalorder %s27, 1
      %p144 = por %p142, %p143
      %p146 = scmp.ne.s32.totalorder %s131, %s145
      %p147 = scmp.eq.s32.totalorder %s27, 0
      %p148 = por %p146, %p147
      %s150 = sadd.s32 %s149, 1
      %p153 = scmp.eq.s32.totalorder %s21, 1
      %p154 = scmp.ne.s32.totalorder %s149, %s151
      %p155 = scmp.eq.s32.totalorder %s21, 0
      %p156 = por %p154, %p155
      %p157 = scmp.ne.s32.totalorder %s149, %s151
      %p158 = scmp.eq.s32.totalorder %s26, 1
      %p159 = por %p157, %p158
      %p160 = scmp.ne.s32.totalorder %s151, %s152
      %p161 = scmp.eq.s32.totalorder %s26, 0
      %p162 = por %p160, %p161
      %p163 = scmp.ne.s32.totalorder %s151, %s152
      %p164 = scmp.eq.s32.totalorder %s27, 1
      %p165 = por %p163, %p164
      %p167 = scmp.ne.s32.totalorder %s152, %s166
      %p168 = scmp.eq.s32.totalorder %s27, 0
      %p169 = por %p167, %p168
      %s171 = sadd.s32 %s170, 1
      %p174 = scmp.eq.s32.totalorder %s21, 1
      %p175 = scmp.ne.s32.totalorder %s170, %s172
      %p176 = scmp.eq.s32.totalorder %s21, 0
      %p177 = por %p175, %p176
      %p178 = scmp.ne.s32.totalorder %s170, %s172
      %p179 = scmp.eq.s32.totalorder %s26, 1
      %p180 = por %p178, %p179
      %p181 = scmp.ne.s32.totalorder %s172, %s173
      %p182 = scmp.eq.s32.totalorder %s26, 0
      %p183 = por %p181, %p182
      %p184 = scmp.ne.s32.totalorder %s172, %s173
      %p185 = scmp.eq.s32.totalorder %s27, 1
      %p186 = por %p184, %p185
      %p188 = scmp.ne.s32.totalorder %s173, %s187
      %p189 = scmp.eq.s32.totalorder %s27, 0
      %p190 = por %p188, %p189
      %s192 = sadd.s32 %s191, 1
      %p195 = scmp.eq.s32.totalorder %s21, 1
      %p196 = scmp.ne.s32.totalorder %s191, %s193
      %p197 = scmp.eq.s32.totalorder %s21, 0
      %p198 = por %p196, %p197
      %p199 = scmp.ne.s32.totalorder %s191, %s193
      %p200 = scmp.eq.s32.totalorder %s26, 1
      %p201 = por %p199, %p200
      %p202 = scmp.ne.s32.totalorder %s193, %s194
      %p203 = scmp.eq.s32.totalorder %s26, 0
      %p204 = por %p202, %p203
      %p205 = scmp.ne.s32.totalorder %s193, %s194
      %p206 = scmp.eq.s32.totalorder %s27, 1
      %p207 = por %p205, %p206
      %p209 = scmp.ne.s32.totalorder %s194, %s208
      %p210 = scmp.eq.s32.totalorder %s27, 0
      %p211 = por %p209, %p210
      %s213 = sadd.s32 %s212, 1
      %p216 = scmp.eq.s32.totalorder %s21, 1
      %p217 = scmp.ne.s32.totalorder %s212, %s214
      %p218 = scmp.eq.s32.totalorder %s21, 0
      %p219 = por %p217, %p218
      %p220 = scmp.ne.s32.totalorder %s212, %s214
      %p221 = scmp.eq.s32.totalorder %s26, 1
      %p222 = por %p220, %p221
      %p223 = scmp.ne.s32.totalorder %s214, %s215
      %p224 = scmp.eq.s32.totalorder %s26, 0
      %p225 = por %p223, %p224
      %p226 = scmp.ne.s32.totalorder %s214, %s215
      %p227 = scmp.eq.s32.totalorder %s27, 1
      %p228 = por %p226, %p227
      %p230 = scmp.ne.s32.totalorder %s215, %s229
      %p231 = scmp.eq.s32.totalorder %s27, 0
      %p232 = por %p230, %p231
      %s234 = sadd.s32 %s233, 1
      %p237 = scmp.eq.s32.totalorder %s21, 1
      %p238 = scmp.ne.s32.totalorder %s233, %s235
      %p239 = scmp.eq.s32.totalorder %s21, 0
      %p240 = por %p238, %p239
      %p241 = scmp.ne.s32.totalorder %s233, %s235
      %p242 = scmp.eq.s32.totalorder %s26, 1
      %p243 = por %p241, %p242
      %p244 = scmp.ne.s32.totalorder %s235, %s236
      %p245 = scmp.eq.s32.totalorder %s26, 0
      %p246 = por %p244, %p245
      %p247 = scmp.ne.s32.totalorder %s235, %s236
      %p248 = scmp.eq.s32.totalorder %s27, 1
      %p249 = por %p247, %p248
      %p251 = scmp.ne.s32.totalorder %s236, %s250
      %p252 = scmp.eq.s32.totalorder %s27, 0
      %p253 = por %p251, %p252
      %s255 = sadd.s32 %s254, 1
      %p258 = scmp.eq.s32.totalorder %s21, 1
      %p259 = scmp.ne.s32.totalorder %s254, %s256
      %p260 = scmp.eq.s32.totalorder %s21, 0
      %p261 = por %p259, %p260
      %p262 = scmp.ne.s32.totalorder %s254, %s256
      %p263 = scmp.eq.s32.totalorder %s26, 1
      %p264 = por %p262, %p263
      %p265 = scmp.ne.s32.totalorder %s256, %s257
      %p266 = scmp.eq.s32.totalorder %s26, 0
      %p267 = por %p265, %p266
      %p268 = scmp.ne.s32.totalorder %s256, %s257
      %p269 = scmp.eq.s32.totalorder %s27, 1
      %p270 = por %p268, %p269
      %p272 = scmp.ne.s32.totalorder %s257, %s271
      %p273 = scmp.eq.s32.totalorder %s27, 0
      %p274 = por %p272, %p273
      %s276 = sadd.s32 %s275, 1
      %p279 = scmp.eq.s32.totalorder %s21, 1
      %p280 = scmp.ne.s32.totalorder %s275, %s277
      %p281 = scmp.eq.s32.totalorder %s21, 0
      %p282 = por %p280, %p281
      %p283 = scmp.ne.s32.totalorder %s275, %s277
      %p284 = scmp.eq.s32.totalorder %s26, 1
      %p285 = por %p283, %p284
      %p286 = scmp.ne.s32.totalorder %s277, %s278
      %p287 = scmp.eq.s32.totalorder %s26, 0
      %p288 = por %p286, %p287
      %p289 = scmp.ne.s32.totalorder %s277, %s278
      %p290 = scmp.eq.s32.totalorder %s27, 1
      %p291 = por %p289, %p290
      %p293 = scmp.ne.s32.totalorder %s278, %s292
      %p294 = scmp.eq.s32.totalorder %s27, 0
      %p295 = por %p293, %p294
      %s296 = ssub.s32 %s21, %s28
      %p297 = scmp.eq.s32.totalorder %s296, 0
      %s299 = sadd.s32 %s298, 1
      %s300 = scalar_select %p297, %s298, %s299
      %p303 = pneg %p297
      %p304 = scmp.eq.s32.totalorder %s21, 1
      %p305 = por %p303, %p304
      %p306 = scmp.ne.s32.totalorder %s298, %s301
      %p307 = scmp.eq.s32.totalorder %s21, 0
      %p308 = por %p306, %p307
      %p309 = scmp.ne.s32.totalorder %s298, %s301
      %p310 = scmp.eq.s32.totalorder %s26, 1
      %p311 = por %p309, %p310
      %p312 = scmp.ne.s32.totalorder %s301, %s302
      %p313 = scmp.eq.s32.totalorder %s26, 0
      %p314 = por %p312, %p313
      %p315 = scmp.ne.s32.totalorder %s301, %s302
      %p316 = scmp.eq.s32.totalorder %s27, 1
      %p317 = por %p315, %p316
      %p319 = scmp.ne.s32.totalorder %s302, %s318
      %p320 = scmp.eq.s32.totalorder %s27, 0
      %p321 = por %p319, %p320
      %p322 = scmp.le.s32.totalorder 1, %s21
      %p323 = scmp.lt.s32.totalorder %s21, 3
      %p324 = pnand %p322, %p323
      %p325 = pneg %p324
      // Predicated region
      $region9: #{window_attention_pallas.1} parent=5 // pred_check
        _
      $region10: #{window_attention_pallas.1} parent=5 // pred_check_branch
        %327 = sbr.rel (%p324) target = $region12
      $region11: #{window_attention_pallas.1} parent=5 // pred_region
        %s328 = ssub.s32 %s21, 1
        // Predicated region
        $region13: #{window_attention_pallas.1} parent=11 // pred_check
          %p329 = pneg %p120
        $region14: #{window_attention_pallas.1} parent=11 // pred_check_branch
          %331 = sbr.rel (%p329) target = $region16
        $region15: #{window_attention_pallas.1} parent=11 // pred_region
          _
        $region16: #{window_attention_pallas.1} parent=11 // pred_fallthru
          _
        // Predicated region
        $region17: #{window_attention_pallas.1} parent=11 // pred_check
          %p332 = pneg %p141
        $region18: #{window_attention_pallas.1} parent=11 // pred_check_branch
          %334 = sbr.rel (%p332) target = $region20
        $region19: #{window_attention_pallas.1} parent=11 // pred_region
          _
        $region20: #{window_attention_pallas.1} parent=11 // pred_fallthru
          _
        // Predicated region
        $region21: #{window_attention_pallas.1} parent=11 // pred_check
          %p335 = pneg %p162
        $region22: #{window_attention_pallas.1} parent=11 // pred_check_branch
          %337 = sbr.rel (%p335) target = $region24
        $region23: #{window_attention_pallas.1} parent=11 // pred_region
          _
        $region24: #{window_attention_pallas.1} parent=11 // pred_fallthru
          _
        // Predicated region
        $region25: #{window_attention_pallas.1} parent=11 // pred_check
          %p338 = pneg %p183
        $region26: #{window_attention_pallas.1} parent=11 // pred_check_branch
          %340 = sbr.rel (%p338) target = $region28
        $region27: #{window_attention_pallas.1} parent=11 // pred_region
          _
        $region28: #{window_attention_pallas.1} parent=11 // pred_fallthru
          _
        // Predicated region
        $region29: #{window_attention_pallas.1} parent=11 // pred_check
          %p341 = pneg %p204
        $region30: #{window_attention_pallas.1} parent=11 // pred_check_branch
          %343 = sbr.rel (%p341) target = $region32
        $region31: #{window_attention_pallas.1} parent=11 // pred_region
          _
        $region32: #{window_attention_pallas.1} parent=11 // pred_fallthru
          _
        // Predicated region
        $region33: #{window_attention_pallas.1} parent=11 // pred_check
          %p344 = pneg %p225
        $region34: #{window_attention_pallas.1} parent=11 // pred_check_branch
          %346 = sbr.rel (%p344) target = $region36
        $region35: #{window_attention_pallas.1} parent=11 // pred_region
          _
        $region36: #{window_attention_pallas.1} parent=11 // pred_fallthru
          _
        // Predicated region
        $region37: #{window_attention_pallas.1} parent=11 // pred_check
          %p347 = pneg %p246
        $region38: #{window_attention_pallas.1} parent=11 // pred_check_branch
          %349 = sbr.rel (%p347) target = $region40
        $region39: #{window_attention_pallas.1} parent=11 // pred_region
          _
        $region40: #{window_attention_pallas.1} parent=11 // pred_fallthru
          _
        // Predicated region
        $region41: #{window_attention_pallas.1} parent=11 // pred_check
          %p350 = pneg %p267
        $region42: #{window_attention_pallas.1} parent=11 // pred_check_branch
          %352 = sbr.rel (%p350) target = $region44
        $region43: #{window_attention_pallas.1} parent=11 // pred_region
          _
        $region44: #{window_attention_pallas.1} parent=11 // pred_fallthru
          _
        // Predicated region
        $region45: #{window_attention_pallas.1} parent=11 // pred_check
          %p353 = pneg %p288
        $region46: #{window_attention_pallas.1} parent=11 // pred_check_branch
          %355 = sbr.rel (%p353) target = $region48
        $region47: #{window_attention_pallas.1} parent=11 // pred_region
          _
        $region48: #{window_attention_pallas.1} parent=11 // pred_fallthru
          _
      $region12: #{window_attention_pallas.1} parent=5 // pred_fallthru
        _
      %p356 = scmp.lt.s32.totalorder %s21, 2
      // Predicated region
      $region49: #{window_attention_pallas.1} parent=5 // pred_check
        %p357 = pneg %p356
      $region50: #{window_attention_pallas.1} parent=5 // pred_check_branch
        %359 = sbr.rel (%p357) target = $region52
      $region51: #{window_attention_pallas.1} parent=5 // pred_region
        // Predicated region
        $region53: #{window_attention_pallas.1} parent=51 // pred_check
          %p360 = pneg %p41
        $region54: #{window_attention_pallas.1} parent=51 // pred_check_branch
          %362 = sbr.rel (%p360) target = $region56
        $region55: #{window_attention_pallas.1} parent=51 // pred_region
          %s363 = smul.u32 8, %s21
          %p364 = scmp.lt.s32.totalorder %s363, 15
          %s365 = scalar_select %p364, %s363, 15
          %s366 = smul.addr %s365, 4
          %s367 = smul.addr %s366, 8
          %s368 = scalar_lea.vmem %s0, %s367
          %s369 = smul.u32 8, %s21
        $region56: #{window_attention_pallas.1} parent=51 // pred_fallthru
          _
        // Predicated region
        $region57: #{window_attention_pallas.1} parent=51 // pred_check
          %p370 = pneg %p67
        $region58: #{window_attention_pallas.1} parent=51 // pred_check_branch
          %372 = sbr.rel (%p370) target = $region60
        $region59: #{window_attention_pallas.1} parent=51 // pred_region
          %s373 = smul.u32 8, %s21
          %p374 = scmp.lt.s32.totalorder %s373, 15
          %s375 = scalar_select %p374, %s373, 15
          %s376 = smul.addr %s375, 4
          %s377 = smul.addr %s376, 8
          %s378 = scalar_lea.vmem %s1, %s377
          %s379 = smul.u32 8, %s21
        $region60: #{window_attention_pallas.1} parent=51 // pred_fallthru
          _
        // Predicated region
        $region61: #{window_attention_pallas.1} parent=51 // pred_check
          %p380 = pneg %p93
        $region62: #{window_attention_pallas.1} parent=51 // pred_check_branch
          %382 = sbr.rel (%p380) target = $region64
        $region63: #{window_attention_pallas.1} parent=51 // pred_region
          %s383 = smul.u32 8, %s21
          %p384 = scmp.lt.s32.totalorder %s383, 15
          %s385 = scalar_select %p384, %s383, 15
          %s386 = smul.addr %s385, 4
          %s387 = smul.addr %s386, 8
          %s388 = scalar_lea.vmem %s2, %s387
          %s389 = smul.u32 8, %s21
        $region64: #{window_attention_pallas.1} parent=51 // pred_fallthru
          _
      $region52: #{window_attention_pallas.1} parent=5 // pred_fallthru
        _
      %p390 = scmp.le.s32.totalorder 1, %s21
      %p391 = scmp.lt.s32.totalorder %s21, 3
      %p392 = pnand %p390, %p391
      %p393 = pneg %p392
      // Predicated region
      $region65: #{window_attention_pallas.1} parent=5 // pred_check
        _
      $region66: #{window_attention_pallas.1} parent=5 // pred_check_branch
        %395 = sbr.rel (%p392) target = $region68
      $region67: #{window_attention_pallas.1} parent=5 // pred_region
        %s396 = ssub.s32 %s21, 1
        %s397 = smul.u32 8, %s26
        %p398 = scmp.lt.s32.totalorder %s397, 15
        %s399 = scalar_select %p398, %s397, 15
        %s400 = smul.addr %s399, 4
        %s401 = smul.addr %s400, 8
        %s402 = scalar_lea.vmem %s0, %s401
        %p403 = pneg %p47
        %p404 = pneg %p44
        %s405 = smul.u32 8, %s26
        %p406 = scmp.lt.s32.totalorder %s405, 15
        %s407 = scalar_select %p406, %s405, 15
        %s408 = smul.addr %s407, 4
        %s409 = smul.addr %s408, 8
        %s410 = scalar_lea.vmem %s1, %s409
        %p411 = pneg %p73
        %p412 = pneg %p70
        %s413 = smul.u32 8, %s26
        %p414 = scmp.lt.s32.totalorder %s413, 15
        %s415 = scalar_select %p414, %s413, 15
        %s416 = smul.addr %s415, 4
        %s417 = smul.addr %s416, 8
        %s418 = scalar_lea.vmem %s2, %s417
        %p419 = pneg %p99
        %p420 = pneg %p96
        %p421 = pneg %p120
        %p422 = pneg %p117
        %p423 = pneg %p141
        %p424 = pneg %p138
        %p425 = pneg %p162
        %p426 = pneg %p159
        %p427 = pneg %p183
        %p428 = pneg %p180
        %p429 = pneg %p204
        %p430 = pneg %p201
        %p431 = pneg %p225
        %p432 = pneg %p222
        %p433 = pneg %p246
        %p434 = pneg %p243
        %p435 = pneg %p267
        %p436 = pneg %p264
        %p437 = pneg %p288
        %p438 = pneg %p285
        %p439 = pneg %p314
        %p440 = pneg %p311
        %s441 = sand.u32 %s301, 1
        %s442 = scalar_lea.sflag [#allocation3], %s441
        %s443 = sand.u32 %s301, 1
        %s444 = smul.addr %s443, 256
        %s445 = scalar_lea.vmem [#allocation2], %s444
        %s446 = smul.u32 8, %s26
        %p447 = scmp.lt.s32.totalorder %s446, 15
        %s448 = scalar_select %p447, %s446, 15
        %s449 = smul.addr %s448, 4
        %s450 = smul.addr %s449, 8
        %s451 = scalar_lea.vmem %s0, %s450
        %s452 = smul.u32 8, %s26
        %s453 = smul.u32 8, %s26
        %p454 = scmp.lt.s32.totalorder %s453, 15
        %s455 = scalar_select %p454, %s453, 15
        %s456 = smul.addr %s455, 4
        %s457 = smul.addr %s456, 8
        %s458 = scalar_lea.vmem %s1, %s457
        %s459 = smul.u32 8, %s26
        %s460 = smul.u32 8, %s26
        %p461 = scmp.lt.s32.totalorder %s460, 15
        %s462 = scalar_select %p461, %s460, 15
        %s463 = smul.addr %s462, 4
        %s464 = smul.addr %s463, 8
        %s465 = scalar_lea.vmem %s2, %s464
        %s466 = smul.u32 8, %s26
        %s467 = smul.u32 8, %s26
        %v468 = vld [vmem:[%s451] sm:$0xff]
        %v469 = vld [vmem:[%s451 + $0x8] sm:$0xff]
        %v470 = vld [vmem:[%s451 + $0x10] sm:$0xff]
        %v471 = vld [vmem:[%s451 + $0x18] sm:$0xff]
        %v472 = vld [vmem:[%s451 + $0x20] sm:$0xff]
        %v473 = vld [vmem:[%s451 + $0x28] sm:$0xff]
        %v474 = vld [vmem:[%s451 + $0x30] sm:$0xff]
        %v475 = vld [vmem:[%s451 + $0x38] sm:$0xff]
        %v476 = vld [vmem:[%s451 + $0x40] sm:$0xff]
        %v477 = vld [vmem:[%s451 + $0x48] sm:$0xff]
        %v478 = vld [vmem:[%s451 + $0x50] sm:$0xff]
        %v479 = vld [vmem:[%s451 + $0x58] sm:$0xff]
        %v480 = vld [vmem:[%s451 + $0x60] sm:$0xff]
        %v481 = vld [vmem:[%s451 + $0x68] sm:$0xff]
        %v482 = vld [vmem:[%s451 + $0x70] sm:$0xff]
        %v483 = vld [vmem:[%s451 + $0x78] sm:$0xff]
        %v484 = vld [vmem:[%s451 + $0x80] sm:$0xff]
        %v485 = vld [vmem:[%s451 + $0x88] sm:$0xff]
        %v486 = vld [vmem:[%s451 + $0x90] sm:$0xff]
        %v487 = vld [vmem:[%s451 + $0x98] sm:$0xff]
        %v488 = vld [vmem:[%s451 + $0xa0] sm:$0xff]
        %v489 = vld [vmem:[%s451 + $0xa8] sm:$0xff]
        %v490 = vld [vmem:[%s451 + $0xb0] sm:$0xff]
        %v491 = vld [vmem:[%s451 + $0xb8] sm:$0xff]
        %v492 = vld [vmem:[%s451 + $0xc0] sm:$0xff]
        %v493 = vld [vmem:[%s451 + $0xc8] sm:$0xff]
        %v494 = vld [vmem:[%s451 + $0xd0] sm:$0xff]
        %v495 = vld [vmem:[%s451 + $0xd8] sm:$0xff]
        %v496 = vld [vmem:[%s451 + $0xe0] sm:$0xff]
        %v497 = vld [vmem:[%s451 + $0xe8] sm:$0xff]
        %v498 = vld [vmem:[%s451 + $0xf0] sm:$0xff]
        %v499 = vld [vmem:[%s451 + $0xf8] sm:$0xff]
        %v500 = vld [vmem:[%s458] sm:$0xff]
        %v501 = vld [vmem:[%s458 + $0x8] sm:$0xff]
        %v502 = vld [vmem:[%s458 + $0x10] sm:$0xff]
        %v503 = vld [vmem:[%s458 + $0x18] sm:$0xff]
        %v504 = vld [vmem:[%s458 + $0x20] sm:$0xff]
        %v505 = vld [vmem:[%s458 + $0x28] sm:$0xff]
        %v506 = vld [vmem:[%s458 + $0x30] sm:$0xff]
        %v507 = vld [vmem:[%s458 + $0x38] sm:$0xff]
        %v508 = vld [vmem:[%s458 + $0x40] sm:$0xff]
        %v509 = vld [vmem:[%s458 + $0x48] sm:$0xff]
        %v510 = vld [vmem:[%s458 + $0x50] sm:$0xff]
        %v511 = vld [vmem:[%s458 + $0x58] sm:$0xff]
        %v512 = vld [vmem:[%s458 + $0x60] sm:$0xff]
        %v513 = vld [vmem:[%s458 + $0x68] sm:$0xff]
        %v514 = vld [vmem:[%s458 + $0x70] sm:$0xff]
        %v515 = vld [vmem:[%s458 + $0x78] sm:$0xff]
        %v516 = vld [vmem:[%s458 + $0x80] sm:$0xff]
        %v517 = vld [vmem:[%s458 + $0x88] sm:$0xff]
        %v518 = vld [vmem:[%s458 + $0x90] sm:$0xff]
        %v519 = vld [vmem:[%s458 + $0x98] sm:$0xff]
        %v520 = vld [vmem:[%s458 + $0xa0] sm:$0xff]
        %v521 = vld [vmem:[%s458 + $0xa8] sm:$0xff]
        %v522 = vld [vmem:[%s458 + $0xb0] sm:$0xff]
        %v523 = vld [vmem:[%s458 + $0xb8] sm:$0xff]
        %v524 = vld [vmem:[%s458 + $0xc0] sm:$0xff]
        %v525 = vld [vmem:[%s458 + $0xc8] sm:$0xff]
        %v526 = vld [vmem:[%s458 + $0xd0] sm:$0xff]
        %v527 = vld [vmem:[%s458 + $0xd8] sm:$0xff]
        %v528 = vld [vmem:[%s458 + $0xe0] sm:$0xff]
        %v529 = vld [vmem:[%s458 + $0xe8] sm:$0xff]
        %v530 = vld [vmem:[%s458 + $0xf0] sm:$0xff]
        %v531 = vld [vmem:[%s458 + $0xf8] sm:$0xff]
        %v532 = vld [vmem:[%s465] sm:$0xff]
        %v533 = vld [vmem:[%s465 + $0x8] sm:$0xff]
        %v534 = vld [vmem:[%s465 + $0x10] sm:$0xff]
        %v535 = vld [vmem:[%s465 + $0x18] sm:$0xff]
        %v536 = vld [vmem:[%s465 + $0x20] sm:$0xff]
        %v537 = vld [vmem:[%s465 + $0x28] sm:$0xff]
        %v538 = vld [vmem:[%s465 + $0x30] sm:$0xff]
        %v539 = vld [vmem:[%s465 + $0x38] sm:$0xff]
        %v540 = vld [vmem:[%s465 + $0x40] sm:$0xff]
        %v541 = vld [vmem:[%s465 + $0x48] sm:$0xff]
        %v542 = vld [vmem:[%s465 + $0x50] sm:$0xff]
        %v543 = vld [vmem:[%s465 + $0x58] sm:$0xff]
        %v544 = vld [vmem:[%s465 + $0x60] sm:$0xff]
        %v545 = vld [vmem:[%s465 + $0x68] sm:$0xff]
        %v546 = vld [vmem:[%s465 + $0x70] sm:$0xff]
        %v547 = vld [vmem:[%s465 + $0x78] sm:$0xff]
        %v548 = vld [vmem:[%s465 + $0x80] sm:$0xff]
        %v549 = vld [vmem:[%s465 + $0x88] sm:$0xff]
        %v550 = vld [vmem:[%s465 + $0x90] sm:$0xff]
        %v551 = vld [vmem:[%s465 + $0x98] sm:$0xff]
        %v552 = vld [vmem:[%s465 + $0xa0] sm:$0xff]
        %v553 = vld [vmem:[%s465 + $0xa8] sm:$0xff]
        %v554 = vld [vmem:[%s465 + $0xb0] sm:$0xff]
        %v555 = vld [vmem:[%s465 + $0xb8] sm:$0xff]
        %v556 = vld [vmem:[%s465 + $0xc0] sm:$0xff]
        %v557 = vld [vmem:[%s465 + $0xc8] sm:$0xff]
        %v558 = vld [vmem:[%s465 + $0xd0] sm:$0xff]
        %v559 = vld [vmem:[%s465 + $0xd8] sm:$0xff]
        %v560 = vld [vmem:[%s465 + $0xe0] sm:$0xff]
        %v561 = vld [vmem:[%s465 + $0xe8] sm:$0xff]
        %v562 = vld [vmem:[%s465 + $0xf0] sm:$0xff]
        %v563 = vld [vmem:[%s465 + $0xf8] sm:$0xff]
        %v564 = vld [vmem:[%s3] sm:$0xff]
        %v565 = vld [vmem:[%s3 + $0x8] sm:$0xff]
        %v566 = vld [vmem:[%s3 + $0x10] sm:$0xff]
        %v567 = vld [vmem:[%s3 + $0x18] sm:$0xff]
        %v568 = vld [vmem:[%s4] sm:$0x1]
        %v570 = vlaneseq
        %v571 = vshrl.u32 %v570, 7
        %v572 = vsub.s32 0, %v571
        %v573 = vrot.slane %v568, %v572
        %vm575 = vcmask 261120
        %v577 = vsel %vm575, %v468, 0
        %v580 = vsel %vm575, %v469, 0
        %v583 = vsel %vm575, %v470, 0
        %v586 = vsel %vm575, %v471, 0
        %v589 = vsel %vm575, %v472, 0
        %v592 = vsel %vm575, %v473, 0
        %v595 = vsel %vm575, %v474, 0
        %v598 = vsel %vm575, %v475, 0
        %v601 = vsel %vm575, %v476, 0
        %v604 = vsel %vm575, %v477, 0
        %v607 = vsel %vm575, %v478, 0
        %v610 = vsel %vm575, %v479, 0
        %v613 = vsel %vm575, %v480, 0
        %v616 = vsel %vm575, %v481, 0
        %v619 = vsel %vm575, %v482, 0
        %v622 = vsel %vm575, %v483, 0
        %v625 = vsel %vm575, %v484, 0
        %v628 = vsel %vm575, %v485, 0
        %v631 = vsel %vm575, %v486, 0
        %v634 = vsel %vm575, %v487, 0
        %v637 = vsel %vm575, %v488, 0
        %v640 = vsel %vm575, %v489, 0
        %v643 = vsel %vm575, %v490, 0
        %v646 = vsel %vm575, %v491, 0
        %v649 = vsel %vm575, %v492, 0
        %v652 = vsel %vm575, %v493, 0
        %v655 = vsel %vm575, %v494, 0
        %v658 = vsel %vm575, %v495, 0
        %v661 = vsel %vm575, %v496, 0
        %v664 = vsel %vm575, %v497, 0
        %v667 = vsel %vm575, %v498, 0
        %v670 = vsel %vm575, %v499, 0
        %672 = vmatprep.subr.mxu0 0.0
        %673 = vmatpush1.msra.mxu0 %v564
        %674 = vmatprep.subr.mxu0 0.0
        %675 = vmatpush1.msra.mxu0 %v565
        %676 = vmatprep.subr.mxu0 0.0
        %677 = vmatpush1.msra.mxu0 %v566
        %678 = vmatprep.subr.mxu0 0.0
        %679 = vmatpush1.msra.mxu0 %v567
        %680 = vmatprep.subr.mxu0 0.0
        %681 = vmatpush1.msra.mxu0 0.0
        %682 = vmatprep.subr.mxu0 0.0
        %683 = vmatpush1.msra.mxu0 0.0
        %684 = vmatprep.subr.mxu0 0.0
        %685 = vmatpush1.msra.mxu0 0.0
        %686 = vmatprep.subr.mxu0 0.0
        %687 = vmatpush1.msra.mxu0 0.0
        %688 = vmatprep.subr.mxu0 0.0
        %689 = vmatpush1.msra.mxu0 0.0
        %690 = vmatprep.subr.mxu0 0.0
        %691 = vmatpush1.msra.mxu0 0.0
        %692 = vmatprep.subr.mxu0 0.0
        %693 = vmatpush1.msra.mxu0 0.0
        %694 = vmatprep.subr.mxu0 0.0
        %695 = vmatpush1.msra.mxu0 0.0
        %696 = vmatprep.subr.mxu0 0.0
        %697 = vmatpush1.msra.mxu0 0.0
        %698 = vmatprep.subr.mxu0 0.0
        %699 = vmatpush1.msra.mxu0 0.0
        %700 = vmatprep.subr.mxu0 0.0
        %701 = vmatpush1.msra.mxu0 0.0
        %702 = vmatprep.subr.mxu0 0.0
        %703 = vmatpush1.msra.mxu0 0.0
        %704 = vmatprep.subr.mxu0 0.0
        %705 = vmatpush1.msra.mxu0 0.0
        %706 = vmatprep.subr.mxu0 0.0
        %707 = vmatpush1.msra.mxu0 0.0
        %708 = vmatprep.subr.mxu0 0.0
        %709 = vmatpush1.msra.mxu0 0.0
        %710 = vmatprep.subr.mxu0 0.0
        %711 = vmatpush1.msra.mxu0 0.0
        %712 = vmatprep.subr.mxu0 0.0
        %713 = vmatpush1.msra.mxu0 0.0
        %714 = vmatprep.subr.mxu0 0.0
        %715 = vmatpush1.msra.mxu0 0.0
        %716 = vmatprep.subr.mxu0 0.0
        %717 = vmatpush1.msra.mxu0 0.0
        %718 = vmatprep.subr.mxu0 0.0
        %719 = vmatpush1.msra.mxu0 0.0
        %720 = vmatprep.subr.mxu0 0.0
        %721 = vmatpush1.msra.mxu0 0.0
        %722 = vmatprep.subr.mxu0 0.0
        %723 = vmatpush1.msra.mxu0 0.0
        %724 = vmatprep.subr.mxu0 0.0
        %725 = vmatpush1.msra.mxu0 0.0
        %726 = vmatprep.subr.mxu0 0.0
        %727 = vmatpush1.msra.mxu0 0.0
        %728 = vmatprep.subr.mxu0 0.0
        %729 = vmatpush1.msra.mxu0 0.0
        %730 = vmatprep.subr.mxu0 0.0
        %731 = vmatpush1.msra.mxu0 0.0
        %732 = vmatprep.subr.mxu0 0.0
        %733 = vmatpush1.msra.mxu0 0.0
        %734 = vmatprep.subr.mxu0 0.0
        %735 = vmatpush1.msra.mxu0 0.0
        %736 = vmatprep.mubr.f32.mxu0 0.0
        %737 = vmatmul.mubr.f32.gmra.mrb[0].mxu0 %v577
        %v738 = vpop.f32.mrb[0].mxu0
        %v739 = vadd.f32 %v573, %v738
        %v740 = vpop.f32.mrb[0].mxu0
        %741 = vmatprep.mubr.f32.mxu0 0.0
        %742 = vmatmul.mubr.f32.gmra.mrb[0].mxu0 %v580
        %v743 = vpop.f32.mrb[0].mxu0
        %v744 = vadd.f32 %v573, %v743
        %v745 = vpop.f32.mrb[0].mxu0
        %746 = vmatprep.mubr.f32.mxu0 0.0
        %747 = vmatmul.mubr.f32.gmra.mrb[0].mxu0 %v583
        %v748 = vpop.f32.mrb[0].mxu0
        %v749 = vadd.f32 %v573, %v748
        %v750 = vpop.f32.mrb[0].mxu0
        %751 = vmatprep.mubr.f32.mxu0 0.0
        %752 = vmatmul.mubr.f32.gmra.mrb[0].mxu0 %v586
        %v753 = vpop.f32.mrb[0].mxu0
        %v754 = vadd.f32 %v573, %v753
        %v755 = vpop.f32.mrb[0].mxu0
        %756 = vmatprep.mubr.f32.mxu0 0.0
        %757 = vmatmul.mubr.f32.gmra.mrb[0].mxu0 %v589
        %v758 = vpop.f32.mrb[0].mxu0
        %v759 = vadd.f32 %v573, %v758
        %v760 = vpop.f32.mrb[0].mxu0
        %761 = vmatprep.mubr.f32.mxu0 0.0
        %762 = vmatmul.mubr.f32.gmra.mrb[0].mxu0 %v592
        %v763 = vpop.f32.mrb[0].mxu0
        %v764 = vadd.f32 %v573, %v763
        %v765 = vpop.f32.mrb[0].mxu0
        %766 = vmatprep.mubr.f32.mxu0 0.0
        %767 = vmatmul.mubr.f32.gmra.mrb[0].mxu0 %v595
        %v768 = vpop.f32.mrb[0].mxu0
        %v769 = vadd.f32 %v573, %v768
        %v770 = vpop.f32.mrb[0].mxu0
        %771 = vmatprep.mubr.f32.mxu0 0.0
        %772 = vmatmul.mubr.f32.gmra.mrb[0].mxu0 %v598
        %v773 = vpop.f32.mrb[0].mxu0
        %v774 = vadd.f32 %v573, %v773
        %v775 = vpop.f32.mrb[0].mxu0
        %776 = vmatprep.mubr.f32.mxu0 0.0
        %777 = vmatmul.mubr.f32.gmra.mrb[0].mxu0 %v601
        %v778 = vpop.f32.mrb[0].mxu0
        %v779 = vadd.f32 %v573, %v778
        %v780 = vpop.f32.mrb[0].mxu0
        %781 = vmatprep.mubr.f32.mxu0 0.0
        %782 = vmatmul.mubr.f32.gmra.mrb[0].mxu0 %v604
        %v783 = vpop.f32.mrb[0].mxu0
        %v784 = vadd.f32 %v573, %v783
        %v785 = vpop.f32.mrb[0].mxu0
        %786 = vmatprep.mubr.f32.mxu0 0.0
        %787 = vmatmul.mubr.f32.gmra.mrb[0].mxu0 %v607
        %v788 = vpop.f32.mrb[0].mxu0
        %v789 = vadd.f32 %v573, %v788
        %v790 = vpop.f32.mrb[0].mxu0
        %791 = vmatprep.mubr.f32.mxu0 0.0
        %792 = vmatmul.mubr.f32.gmra.mrb[0].mxu0 %v610
        %v793 = vpop.f32.mrb[0].mxu0
        %v794 = vadd.f32 %v573, %v793
        %v795 = vpop.f32.mrb[0].mxu0
        %796 = vmatprep.mubr.f32.mxu0 0.0
        %797 = vmatmul.mubr.f32.gmra.mrb[0].mxu0 %v613
        %v798 = vpop.f32.mrb[0].mxu0
        %v799 = vadd.f32 %v573, %v798
        %v800 = vpop.f32.mrb[0].mxu0
        %801 = vmatprep.mubr.f32.mxu0 0.0
        %802 = vmatmul.mubr.f32.gmra.mrb[0].mxu0 %v616
        %v803 = vpop.f32.mrb[0].mxu0
        %v804 = vadd.f32 %v573, %v803
        %v805 = vpop.f32.mrb[0].mxu0
        %806 = vmatprep.mubr.f32.mxu0 0.0
        %807 = vmatmul.mubr.f32.gmra.mrb[0].mxu0 %v619
        %v808 = vpop.f32.mrb[0].mxu0
        %v809 = vadd.f32 %v573, %v808
        %v810 = vpop.f32.mrb[0].mxu0
        %811 = vmatprep.mubr.f32.mxu0 0.0
        %812 = vmatmul.mubr.f32.gmra.mrb[0].mxu0 %v622
        %v813 = vpop.f32.mrb[0].mxu0
        %v814 = vadd.f32 %v573, %v813
        %v815 = vpop.f32.mrb[0].mxu0
        %816 = vmatprep.mubr.f32.mxu0 0.0
        %817 = vmatmul.mubr.f32.gmra.mrb[0].mxu0 %v625
        %v818 = vpop.f32.mrb[0].mxu0
        %v819 = vadd.f32 %v573, %v818
        %v820 = vpop.f32.mrb[0].mxu0
        %821 = vmatprep.mubr.f32.mxu0 0.0
        %822 = vmatmul.mubr.f32.gmra.mrb[0].mxu0 %v628
        %v823 = vpop.f32.mrb[0].mxu0
        %v824 = vadd.f32 %v573, %v823
        %v825 = vpop.f32.mrb[0].mxu0
        %826 = vmatprep.mubr.f32.mxu0 0.0
        %827 = vmatmul.mubr.f32.gmra.mrb[0].mxu0 %v631
        %v828 = vpop.f32.mrb[0].mxu0
        %v829 = vadd.f32 %v573, %v828
        %v830 = vpop.f32.mrb[0].mxu0
        %831 = vmatprep.mubr.f32.mxu0 0.0
        %832 = vmatmul.mubr.f32.gmra.mrb[0].mxu0 %v634
        %v833 = vpop.f32.mrb[0].mxu0
        %v834 = vadd.f32 %v573, %v833
        %v835 = vpop.f32.mrb[0].mxu0
        %836 = vmatprep.mubr.f32.mxu0 0.0
        %837 = vmatmul.mubr.f32.gmra.mrb[0].mxu0 %v637
        %v838 = vpop.f32.mrb[0].mxu0
        %v839 = vadd.f32 %v573, %v838
        %v840 = vpop.f32.mrb[0].mxu0
        %841 = vmatprep.mubr.f32.mxu0 0.0
        %842 = vmatmul.mubr.f32.gmra.mrb[0].mxu0 %v640
        %v843 = vpop.f32.mrb[0].mxu0
        %v844 = vadd.f32 %v573, %v843
        %v845 = vpop.f32.mrb[0].mxu0
        %846 = vmatprep.mubr.f32.mxu0 0.0
        %847 = vmatmul.mubr.f32.gmra.mrb[0].mxu0 %v643
        %v848 = vpop.f32.mrb[0].mxu0
        %v849 = vadd.f32 %v573, %v848
        %v850 = vpop.f32.mrb[0].mxu0
        %851 = vmatprep.mubr.f32.mxu0 0.0
        %852 = vmatmul.mubr.f32.gmra.mrb[0].mxu0 %v646
        %v853 = vpop.f32.mrb[0].mxu0
        %v854 = vadd.f32 %v573, %v853
        %v855 = vpop.f32.mrb[0].mxu0
        %856 = vmatprep.mubr.f32.mxu0 0.0
        %857 = vmatmul.mubr.f32.gmra.mrb[0].mxu0 %v649
        %v858 = vpop.f32.mrb[0].mxu0
        %v859 = vadd.f32 %v573, %v858
        %v860 = vpop.f32.mrb[0].mxu0
        %861 = vmatprep.mubr.f32.mxu0 0.0
        %862 = vmatmul.mubr.f32.gmra.mrb[0].mxu0 %v652
        %v863 = vpop.f32.mrb[0].mxu0
        %v864 = vadd.f32 %v573, %v863
        %v865 = vpop.f32.mrb[0].mxu0
        %866 = vmatprep.mubr.f32.mxu0 0.0
        %867 = vmatmul.mubr.f32.gmra.mrb[0].mxu0 %v655
        %v868 = vpop.f32.mrb[0].mxu0
        %v869 = vadd.f32 %v573, %v868
        %v870 = vpop.f32.mrb[0].mxu0
        %871 = vmatprep.mubr.f32.mxu0 0.0
        %872 = vmatmul.mubr.f32.gmra.mrb[0].mxu0 %v658
        %v873 = vpop.f32.mrb[0].mxu0
        %v874 = vadd.f32 %v573, %v873
        %v875 = vpop.f32.mrb[0].mxu0
        %876 = vmatprep.mubr.f32.mxu0 0.0
        %877 = vmatmul.mubr.f32.gmra.mrb[0].mxu0 %v661
        %v878 = vpop.f32.mrb[0].mxu0
        %v879 = vadd.f32 %v573, %v878
        %v880 = vpop.f32.mrb[0].mxu0
        %881 = vmatprep.mubr.f32.mxu0 0.0
        %882 = vmatmul.mubr.f32.gmra.mrb[0].mxu0 %v664
        %v883 = vpop.f32.mrb[0].mxu0
        %v884 = vadd.f32 %v573, %v883
        %v885 = vpop.f32.mrb[0].mxu0
        %886 = vmatprep.mubr.f32.mxu0 0.0
        %887 = vmatmul.mubr.f32.gmra.mrb[0].mxu0 %v667
        %v888 = vpop.f32.mrb[0].mxu0
        %v889 = vadd.f32 %v573, %v888
        %v890 = vpop.f32.mrb[0].mxu0
        %891 = vmatprep.mubr.f32.mxu0 0.0
        %892 = vmatmul.mubr.f32.gmra.mrb[0].mxu0 %v670
        %v893 = vpop.f32.mrb[0].mxu0
        %v894 = vadd.f32 %v573, %v893
        %v895 = vpop.f32.mrb[0].mxu0
        %896 = vdwg.mxu0
        %v897 = vld [vmem:[%s5] sm:$0xff]
        %v898 = vld [vmem:[%s5 + $0x8] sm:$0xff]
        %v899 = vld [vmem:[%s5 + $0x10] sm:$0xff]
        %v900 = vld [vmem:[%s5 + $0x18] sm:$0xff]
        %v901 = vld [vmem:[%s6] sm:$0x1]
        %v903 = vlaneseq
        %v904 = vshrl.u32 %v903, 7
        %v905 = vsub.s32 0, %v904
        %v906 = vrot.slane %v901, %v905
        %v909 = vsel %vm575, %v500, 0
        %v912 = vsel %vm575, %v501, 0
        %v915 = vsel %vm575, %v502, 0
        %v918 = vsel %vm575, %v503, 0
        %v921 = vsel %vm575, %v504, 0
        %v924 = vsel %vm575, %v505, 0
        %v927 = vsel %vm575, %v506, 0
        %v930 = vsel %vm575, %v507, 0
        %v933 = vsel %vm575, %v508, 0
        %v936 = vsel %vm575, %v509, 0
        %v939 = vsel %vm575, %v510, 0
        %v942 = vsel %vm575, %v511, 0
        %v945 = vsel %vm575, %v512, 0
        %v948 = vsel %vm575, %v513, 0
        %v951 = vsel %vm575, %v514, 0
        %v954 = vsel %vm575, %v515, 0
        %v957 = vsel %vm575, %v516, 0
        %v960 = vsel %vm575, %v517, 0
        %v963 = vsel %vm575, %v518, 0
        %v966 = vsel %vm575, %v519, 0
        %v969 = vsel %vm575, %v520, 0
        %v972 = vsel %vm575, %v521, 0
        %v975 = vsel %vm575, %v522, 0
        %v978 = vsel %vm575, %v523, 0
        %v981 = vsel %vm575, %v524, 0
        %v984 = vsel %vm575, %v525, 0
        %v987 = vsel %vm575, %v526, 0
        %v990 = vsel %vm575, %v527, 0
        %v993 = vsel %vm575, %v528, 0
        %v996 = vsel %vm575, %v529, 0
        %v999 = vsel %vm575, %v530, 0
        %v1002 = vsel %vm575, %v531, 0
        %1004 = vmatprep.subr.mxu0 0.0
        %1005 = vmatpush1.msra.mxu0 %v897
        %1006 = vmatprep.subr.mxu0 0.0
        %1007 = vmatpush1.msra.mxu0 %v898
        %1008 = vmatprep.subr.mxu0 0.0
        %1009 = vmatpush1.msra.mxu0 %v899
        %1010 = vmatprep.subr.mxu0 0.0
        %1011 = vmatpush1.msra.mxu0 %v900
        %1012 = vmatprep.subr.mxu0 0.0
        %1013 = vmatpush1.msra.mxu0 0.0
        %1014 = vmatprep.subr.mxu0 0.0
        %1015 = vmatpush1.msra.mxu0 0.0
        %1016 = vmatprep.subr.mxu0 0.0
        %1017 = vmatpush1.msra.mxu0 0.0
        %1018 = vmatprep.subr.mxu0 0.0
        %1019 = vmatpush1.msra.mxu0 0.0
        %1020 = vmatprep.subr.mxu0 0.0
        %1021 = vmatpush1.msra.mxu0 0.0
        %1022 = vmatprep.subr.mxu0 0.0
        %1023 = vmatpush1.msra.mxu0 0.0
        %1024 = vmatprep.subr.mxu0 0.0
        %1025 = vmatpush1.msra.mxu0 0.0
        %1026 = vmatprep.subr.mxu0 0.0
        %1027 = vmatpush1.msra.mxu0 0.0
        %1028 = vmatprep.subr.mxu0 0.0
        %1029 = vmatpush1.msra.mxu0 0.0
        %1030 = vmatprep.subr.mxu0 0.0
        %1031 = vmatpush1.msra.mxu0 0.0
        %1032 = vmatprep.subr.mxu0 0.0
        %1033 = vmatpush1.msra.mxu0 0.0
        %1034 = vmatprep.subr.mxu0 0.0
        %1035 = vmatpush1.msra.mxu0 0.0
        %1036 = vmatprep.subr.mxu0 0.0
        %1037 = vmatpush1.msra.mxu0 0.0
        %1038 = vmatprep.subr.mxu0 0.0
        %1039 = vmatpush1.msra.mxu0 0.0
        %1040 = vmatprep.subr.mxu0 0.0
        %1041 = vmatpush1.msra.mxu0 0.0
        %1042 = vmatprep.subr.mxu0 0.0
        %1043 = vmatpush1.msra.mxu0 0.0
        %1044 = vmatprep.subr.mxu0 0.0
        %1045 = vmatpush1.msra.mxu0 0.0
        %1046 = vmatprep.subr.mxu0 0.0
        %1047 = vmatpush1.msra.mxu0 0.0
        %1048 = vmatprep.subr.mxu0 0.0
        %1049 = vmatpush1.msra.mxu0 0.0
        %1050 = vmatprep.subr.mxu0 0.0
        %1051 = vmatpush1.msra.mxu0 0.0
        %1052 = vmatprep.subr.mxu0 0.0
        %1053 = vmatpush1.msra.mxu0 0.0
        %1054 = vmatprep.subr.mxu0 0.0
        %1055 = vmatpush1.msra.mxu0 0.0
        %1056 = vmatprep.subr.mxu0 0.0
        %1057 = vmatpush1.msra.mxu0 0.0
        %1058 = vmatprep.subr.mxu0 0.0
        %1059 = vmatpush1.msra.mxu0 0.0
        %1060 = vmatprep.subr.mxu0 0.0
        %1061 = vmatpush1.msra.mxu0 0.0
        %1062 = vmatprep.subr.mxu0 0.0
        %1063 = vmatpush1.msra.mxu0 0.0
        %1064 = vmatprep.subr.mxu0 0.0
        %1065 = vmatpush1.msra.mxu0 0.0
        %1066 = vmatprep.subr.mxu0 0.0
        %1067 = vmatpush1.msra.mxu0 0.0
        %1068 = vmatprep.mubr.f32.mxu0 0.0
        %1069 = vmatmul.mubr.f32.gmra.mrb[0].mxu0 %v909
        %v1070 = vpop.f32.mrb[0].mxu0
        %v1071 = vadd.f32 %v906, %v1070
        %v1072 = vpop.f32.mrb[0].mxu0
        %1073 = vmatprep.mubr.f32.mxu0 0.0
        %1074 = vmatmul.mubr.f32.gmra.mrb[0].mxu0 %v912
        %v1075 = vpop.f32.mrb[0].mxu0
        %v1076 = vadd.f32 %v906, %v1075
        %v1077 = vpop.f32.mrb[0].mxu0
        %1078 = vmatprep.mubr.f32.mxu0 0.0
        %1079 = vmatmul.mubr.f32.gmra.mrb[0].mxu0 %v915
        %v1080 = vpop.f32.mrb[0].mxu0
        %v1081 = vadd.f32 %v906, %v1080
        %v1082 = vpop.f32.mrb[0].mxu0
        %1083 = vmatprep.mubr.f32.mxu0 0.0
        %1084 = vmatmul.mubr.f32.gmra.mrb[0].mxu0 %v918
        %v1085 = vpop.f32.mrb[0].mxu0
        %v1086 = vadd.f32 %v906, %v1085
        %v1087 = vpop.f32.mrb[0].mxu0
        %1088 = vmatprep.mubr.f32.mxu0 0.0
        %1089 = vmatmul.mubr.f32.gmra.mrb[0].mxu0 %v921
        %v1090 = vpop.f32.mrb[0].mxu0
        %v1091 = vadd.f32 %v906, %v1090
        %v1092 = vpop.f32.mrb[0].mxu0
        %1093 = vmatprep.mubr.f32.mxu0 0.0
        %1094 = vmatmul.mubr.f32.gmra.mrb[0].mxu0 %v924
        %v1095 = vpop.f32.mrb[0].mxu0
        %v1096 = vadd.f32 %v906, %v1095
        %v1097 = vpop.f32.mrb[0].mxu0
        %1098 = vmatprep.mubr.f32.mxu0 0.0
        %1099 = vmatmul.mubr.f32.gmra.mrb[0].mxu0 %v927
        %v1100 = vpop.f32.mrb[0].mxu0
        %v1101 = vadd.f32 %v906, %v1100
        %v1102 = vpop.f32.mrb[0].mxu0
        %1103 = vmatprep.mubr.f32.mxu0 0.0
        %1104 = vmatmul.mubr.f32.gmra.mrb[0].mxu0 %v930
        %v1105 = vpop.f32.mrb[0].mxu0
        %v1106 = vadd.f32 %v906, %v1105
        %v1107 = vpop.f32.mrb[0].mxu0
        %1108 = vmatprep.mubr.f32.mxu0 0.0
        %1109 = vmatmul.mubr.f32.gmra.mrb[0].mxu0 %v933
        %v1110 = vpop.f32.mrb[0].mxu0
        %v1111 = vadd.f32 %v906, %v1110
        %v1112 = vpop.f32.mrb[0].mxu0
        %1113 = vmatprep.mubr.f32.mxu0 0.0
        %1114 = vmatmul.mubr.f32.gmra.mrb[0].mxu0 %v936
        %v1115 = vpop.f32.mrb[0].mxu0
        %v1116 = vadd.f32 %v906, %v1115
        %v1117 = vpop.f32.mrb[0].mxu0
        %1118 = vmatprep.mubr.f32.mxu0 0.0
        %1119 = vmatmul.mubr.f32.gmra.mrb[0].mxu0 %v939
        %v1120 = vpop.f32.mrb[0].mxu0
        %v1121 = vadd.f32 %v906, %v1120
        %v1122 = vpop.f32.mrb[0].mxu0
        %1123 = vmatprep.mubr.f32.mxu0 0.0
        %1124 = vmatmul.mubr.f32.gmra.mrb[0].mxu0 %v942
        %v1125 = vpop.f32.mrb[0].mxu0
        %v1126 = vadd.f32 %v906, %v1125
        %v1127 = vpop.f32.mrb[0].mxu0
        %1128 = vmatprep.mubr.f32.mxu0 0.0
        %1129 = vmatmul.mubr.f32.gmra.mrb[0].mxu0 %v945
        %v1130 = vpop.f32.mrb[0].mxu0
        %v1131 = vadd.f32 %v906, %v1130
        %v1132 = vpop.f32.mrb[0].mxu0
        %1133 = vmatprep.mubr.f32.mxu0 0.0
        %1134 = vmatmul.mubr.f32.gmra.mrb[0].mxu0 %v948
        %v1135 = vpop.f32.mrb[0].mxu0
        %v1136 = vadd.f32 %v906, %v1135
        %v1137 = vpop.f32.mrb[0].mxu0
        %1138 = vmatprep.mubr.f32.mxu0 0.0
        %1139 = vmatmul.mubr.f32.gmra.mrb[0].mxu0 %v951
        %v1140 = vpop.f32.mrb[0].mxu0
        %v1141 = vadd.f32 %v906, %v1140
        %v1142 = vpop.f32.mrb[0].mxu0
        %1143 = vmatprep.mubr.f32.mxu0 0.0
        %1144 = vmatmul.mubr.f32.gmra.mrb[0].mxu0 %v954
        %v1145 = vpop.f32.mrb[0].mxu0
        %v1146 = vadd.f32 %v906, %v1145
        %v1147 = vpop.f32.mrb[0].mxu0
        %1148 = vmatprep.mubr.f32.mxu0 0.0
        %1149 = vmatmul.mubr.f32.gmra.mrb[0].mxu0 %v957
        %v1150 = vpop.f32.mrb[0].mxu0
        %v1151 = vadd.f32 %v906, %v1150
        %v1152 = vpop.f32.mrb[0].mxu0
        %1153 = vmatprep.mubr.f32.mxu0 0.0
        %1154 = vmatmul.mubr.f32.gmra.mrb[0].mxu0 %v960
        %v1155 = vpop.f32.mrb[0].mxu0
        %v1156 = vadd.f32 %v906, %v1155
        %v1157 = vpop.f32.mrb[0].mxu0
        %1158 = vmatprep.mubr.f32.mxu0 0.0
        %1159 = vmatmul.mubr.f32.gmra.mrb[0].mxu0 %v963
        %v1160 = vpop.f32.mrb[0].mxu0
        %v1161 = vadd.f32 %v906, %v1160
        %v1162 = vpop.f32.mrb[0].mxu0
        %1163 = vmatprep.mubr.f32.mxu0 0.0
        %1164 = vmatmul.mubr.f32.gmra.mrb[0].mxu0 %v966
        %v1165 = vpop.f32.mrb[0].mxu0
        %v1166 = vadd.f32 %v906, %v1165
        %v1167 = vpop.f32.mrb[0].mxu0
        %1168 = vmatprep.mubr.f32.mxu0 0.0
        %1169 = vmatmul.mubr.f32.gmra.mrb[0].mxu0 %v969
        %v1170 = vpop.f32.mrb[0].mxu0
        %v1171 = vadd.f32 %v906, %v1170
        %v1172 = vpop.f32.mrb[0].mxu0
        %1173 = vmatprep.mubr.f32.mxu0 0.0
        %1174 = vmatmul.mubr.f32.gmra.mrb[0].mxu0 %v972
        %v1175 = vpop.f32.mrb[0].mxu0
        %v1176 = vadd.f32 %v906, %v1175
        %v1177 = vpop.f32.mrb[0].mxu0
        %1178 = vmatprep.mubr.f32.mxu0 0.0
        %1179 = vmatmul.mubr.f32.gmra.mrb[0].mxu0 %v975
        %v1180 = vpop.f32.mrb[0].mxu0
        %v1181 = vadd.f32 %v906, %v1180
        %v1182 = vpop.f32.mrb[0].mxu0
        %1183 = vmatprep.mubr.f32.mxu0 0.0
        %1184 = vmatmul.mubr.f32.gmra.mrb[0].mxu0 %v978
        %v1185 = vpop.f32.mrb[0].mxu0
        %v1186 = vadd.f32 %v906, %v1185
        %v1187 = vpop.f32.mrb[0].mxu0
        %1188 = vmatprep.mubr.f32.mxu0 0.0
        %1189 = vmatmul.mubr.f32.gmra.mrb[0].mxu0 %v981
        %v1190 = vpop.f32.mrb[0].mxu0
        %v1191 = vadd.f32 %v906, %v1190
        %v1192 = vpop.f32.mrb[0].mxu0
        %1193 = vmatprep.mubr.f32.mxu0 0.0
        %1194 = vmatmul.mubr.f32.gmra.mrb[0].mxu0 %v984
        %v1195 = vpop.f32.mrb[0].mxu0
        %v1196 = vadd.f32 %v906, %v1195
        %v1197 = vpop.f32.mrb[0].mxu0
        %1198 = vmatprep.mubr.f32.mxu0 0.0
        %1199 = vmatmul.mubr.f32.gmra.mrb[0].mxu0 %v987
        %v1200 = vpop.f32.mrb[0].mxu0
        %v1201 = vadd.f32 %v906, %v1200
        %v1202 = vpop.f32.mrb[0].mxu0
        %1203 = vmatprep.mubr.f32.mxu0 0.0
        %1204 = vmatmul.mubr.f32.gmra.mrb[0].mxu0 %v990
        %v1205 = vpop.f32.mrb[0].mxu0
        %v1206 = vadd.f32 %v906, %v1205
        %v1207 = vpop.f32.mrb[0].mxu0
        %1208 = vmatprep.mubr.f32.mxu0 0.0
        %1209 = vmatmul.mubr.f32.gmra.mrb[0].mxu0 %v993
        %v1210 = vpop.f32.mrb[0].mxu0
        %v1211 = vadd.f32 %v906, %v1210
        %v1212 = vpop.f32.mrb[0].mxu0
        %1213 = vmatprep.mubr.f32.mxu0 0.0
        %1214 = vmatmul.mubr.f32.gmra.mrb[0].mxu0 %v996
        %v1215 = vpop.f32.mrb[0].mxu0
        %v1216 = vadd.f32 %v906, %v1215
        %v1217 = vpop.f32.mrb[0].mxu0
        %1218 = vmatprep.mubr.f32.mxu0 0.0
        %1219 = vmatmul.mubr.f32.gmra.mrb[0].mxu0 %v999
        %v1220 = vpop.f32.mrb[0].mxu0
        %v1221 = vadd.f32 %v906, %v1220
        %v1222 = vpop.f32.mrb[0].mxu0
        %1223 = vmatprep.mubr.f32.mxu0 0.0
        %1224 = vmatmul.mubr.f32.gmra.mrb[0].mxu0 %v1002
        %v1225 = vpop.f32.mrb[0].mxu0
        %v1226 = vadd.f32 %v906, %v1225
        %v1227 = vpop.f32.mrb[0].mxu0
        %1228 = vdwg.mxu0
        %v1229 = vld [vmem:[%s7] sm:$0xff]
        %v1230 = vld [vmem:[%s7 + $0x8] sm:$0xff]
        %v1231 = vld [vmem:[%s7 + $0x10] sm:$0xff]
        %v1232 = vld [vmem:[%s7 + $0x18] sm:$0xff]
        %v1233 = vld [vmem:[%s8] sm:$0x1]
        %v1235 = vlaneseq
        %v1236 = vshrl.u32 %v1235, 7
        %v1237 = vsub.s32 0, %v1236
        %v1238 = vrot.slane %v1233, %v1237
        %v1241 = vsel %vm575, %v532, 0
        %v1244 = vsel %vm575, %v533, 0
        %v1247 = vsel %vm575, %v534, 0
        %v1250 = vsel %vm575, %v535, 0
        %v1253 = vsel %vm575, %v536, 0
        %v1256 = vsel %vm575, %v537, 0
        %v1259 = vsel %vm575, %v538, 0
        %v1262 = vsel %vm575, %v539, 0
        %v1265 = vsel %vm575, %v540, 0
        %v1268 = vsel %vm575, %v541, 0
        %v1271 = vsel %vm575, %v542, 0
        %v1274 = vsel %vm575, %v543, 0
        %v1277 = vsel %vm575, %v544, 0
        %v1280 = vsel %vm575, %v545, 0
        %v1283 = vsel %vm575, %v546, 0
        %v1286 = vsel %vm575, %v547, 0
        %v1289 = vsel %vm575, %v548, 0
        %v1292 = vsel %vm575, %v549, 0
        %v1295 = vsel %vm575, %v550, 0
        %v1298 = vsel %vm575, %v551, 0
        %v1301 = vsel %vm575, %v552, 0
        %v1304 = vsel %vm575, %v553, 0
        %v1307 = vsel %vm575, %v554, 0
        %v1310 = vsel %vm575, %v555, 0
        %v1313 = vsel %vm575, %v556, 0
        %v1316 = vsel %vm575, %v557, 0
        %v1319 = vsel %vm575, %v558, 0
        %v1322 = vsel %vm575, %v559, 0
        %v1325 = vsel %vm575, %v560, 0
        %v1328 = vsel %vm575, %v561, 0
        %v1331 = vsel %vm575, %v562, 0
        %v1334 = vsel %vm575, %v563, 0
        %1336 = vmatprep.subr.mxu0 0.0
        %1337 = vmatpush1.msra.mxu0 %v1229
        %1338 = vmatprep.subr.mxu0 0.0
        %1339 = vmatpush1.msra.mxu0 %v1230
        %1340 = vmatprep.subr.mxu0 0.0
        %1341 = vmatpush1.msra.mxu0 %v1231
        %1342 = vmatprep.subr.mxu0 0.0
        %1343 = vmatpush1.msra.mxu0 %v1232
        %1344 = vmatprep.subr.mxu0 0.0
        %1345 = vmatpush1.msra.mxu0 0.0
        %1346 = vmatprep.subr.mxu0 0.0
        %1347 = vmatpush1.msra.mxu0 0.0
        %1348 = vmatprep.subr.mxu0 0.0
        %1349 = vmatpush1.msra.mxu0 0.0
        %1350 = vmatprep.subr.mxu0 0.0
        %1351 = vmatpush1.msra.mxu0 0.0
        %1352 = vmatprep.subr.mxu0 0.0
        %1353 = vmatpush1.msra.mxu0 0.0
        %1354 = vmatprep.subr.mxu0 0.0
        %1355 = vmatpush1.msra.mxu0 0.0
        %1356 = vmatprep.subr.mxu0 0.0
        %1357 = vmatpush1.msra.mxu0 0.0
        %1358 = vmatprep.subr.mxu0 0.0
        %1359 = vmatpush1.msra.mxu0 0.0
        %1360 = vmatprep.subr.mxu0 0.0
        %1361 = vmatpush1.msra.mxu0 0.0
        %1362 = vmatprep.subr.mxu0 0.0
        %1363 = vmatpush1.msra.mxu0 0.0
        %1364 = vmatprep.subr.mxu0 0.0
        %1365 = vmatpush1.msra.mxu0 0.0
        %1366 = vmatprep.subr.mxu0 0.0
        %1367 = vmatpush1.msra.mxu0 0.0
        %1368 = vmatprep.subr.mxu0 0.0
        %1369 = vmatpush1.msra.mxu0 0.0
        %1370 = vmatprep.subr.mxu0 0.0
        %1371 = vmatpush1.msra.mxu0 0.0
        %1372 = vmatprep.subr.mxu0 0.0
        %1373 = vmatpush1.msra.mxu0 0.0
        %1374 = vmatprep.subr.mxu0 0.0
        %1375 = vmatpush1.msra.mxu0 0.0
        %1376 = vmatprep.subr.mxu0 0.0
        %1377 = vmatpush1.msra.mxu0 0.0
        %1378 = vmatprep.subr.mxu0 0.0
        %1379 = vmatpush1.msra.mxu0 0.0
        %1380 = vmatprep.subr.mxu0 0.0
        %1381 = vmatpush1.msra.mxu0 0.0
        %1382 = vmatprep.subr.mxu0 0.0
        %1383 = vmatpush1.msra.mxu0 0.0
        %1384 = vmatprep.subr.mxu0 0.0
        %1385 = vmatpush1.msra.mxu0 0.0
        %1386 = vmatprep.subr.mxu0 0.0
        %1387 = vmatpush1.msra.mxu0 0.0
        %1388 = vmatprep.subr.mxu0 0.0
        %1389 = vmatpush1.msra.mxu0 0.0
        %1390 = vmatprep.subr.mxu0 0.0
        %1391 = vmatpush1.msra.mxu0 0.0
        %1392 = vmatprep.subr.mxu0 0.0
        %1393 = vmatpush1.msra.mxu0 0.0
        %1394 = vmatprep.subr.mxu0 0.0
        %1395 = vmatpush1.msra.mxu0 0.0
        %1396 = vmatprep.subr.mxu0 0.0
        %1397 = vmatpush1.msra.mxu0 0.0
        %1398 = vmatprep.subr.mxu0 0.0
        %1399 = vmatpush1.msra.mxu0 0.0
        %1400 = vmatprep.mubr.f32.mxu0 0.0
        %1401 = vmatmul.mubr.f32.gmra.mrb[0].mxu0 %v1241
        %v1402 = vpop.f32.mrb[0].mxu0
        %v1403 = vadd.f32 %v1238, %v1402
        %v1404 = vpop.f32.mrb[0].mxu0
        %1405 = vmatprep.mubr.f32.mxu0 0.0
        %1406 = vmatmul.mubr.f32.gmra.mrb[0].mxu0 %v1244
        %v1407 = vpop.f32.mrb[0].mxu0
        %v1408 = vadd.f32 %v1238, %v1407
        %v1409 = vpop.f32.mrb[0].mxu0
        %1410 = vmatprep.mubr.f32.mxu0 0.0
        %1411 = vmatmul.mubr.f32.gmra.mrb[0].mxu0 %v1247
        %v1412 = vpop.f32.mrb[0].mxu0
        %v1413 = vadd.f32 %v1238, %v1412
        %v1414 = vpop.f32.mrb[0].mxu0
        %1415 = vmatprep.mubr.f32.mxu0 0.0
        %1416 = vmatmul.mubr.f32.gmra.mrb[0].mxu0 %v1250
        %v1417 = vpop.f32.mrb[0].mxu0
        %v1418 = vadd.f32 %v1238, %v1417
        %v1419 = vpop.f32.mrb[0].mxu0
        %1420 = vmatprep.mubr.f32.mxu0 0.0
        %1421 = vmatmul.mubr.f32.gmra.mrb[0].mxu0 %v1253
        %v1422 = vpop.f32.mrb[0].mxu0
        %v1423 = vadd.f32 %v1238, %v1422
        %v1424 = vpop.f32.mrb[0].mxu0
        %1425 = vmatprep.mubr.f32.mxu0 0.0
        %1426 = vmatmul.mubr.f32.gmra.mrb[0].mxu0 %v1256
        %v1427 = vpop.f32.mrb[0].mxu0
        %v1428 = vadd.f32 %v1238, %v1427
        %v1429 = vpop.f32.mrb[0].mxu0
        %1430 = vmatprep.mubr.f32.mxu0 0.0
        %1431 = vmatmul.mubr.f32.gmra.mrb[0].mxu0 %v1259
        %v1432 = vpop.f32.mrb[0].mxu0
        %v1433 = vadd.f32 %v1238, %v1432
        %v1434 = vpop.f32.mrb[0].mxu0
        %1435 = vmatprep.mubr.f32.mxu0 0.0
        %1436 = vmatmul.mubr.f32.gmra.mrb[0].mxu0 %v1262
        %v1437 = vpop.f32.mrb[0].mxu0
        %v1438 = vadd.f32 %v1238, %v1437
        %v1439 = vpop.f32.mrb[0].mxu0
        %1440 = vmatprep.mubr.f32.mxu0 0.0
        %1441 = vmatmul.mubr.f32.gmra.mrb[0].mxu0 %v1265
        %v1442 = vpop.f32.mrb[0].mxu0
        %v1443 = vadd.f32 %v1238, %v1442
        %v1444 = vpop.f32.mrb[0].mxu0
        %1445 = vmatprep.mubr.f32.mxu0 0.0
        %1446 = vmatmul.mubr.f32.gmra.mrb[0].mxu0 %v1268
        %v1447 = vpop.f32.mrb[0].mxu0
        %v1448 = vadd.f32 %v1238, %v1447
        %v1449 = vpop.f32.mrb[0].mxu0
        %1450 = vmatprep.mubr.f32.mxu0 0.0
        %1451 = vmatmul.mubr.f32.gmra.mrb[0].mxu0 %v1271
        %v1452 = vpop.f32.mrb[0].mxu0
        %v1453 = vadd.f32 %v1238, %v1452
        %v1454 = vpop.f32.mrb[0].mxu0
        %1455 = vmatprep.mubr.f32.mxu0 0.0
        %1456 = vmatmul.mubr.f32.gmra.mrb[0].mxu0 %v1274
        %v1457 = vpop.f32.mrb[0].mxu0
        %v1458 = vadd.f32 %v1238, %v1457
        %v1459 = vpop.f32.mrb[0].mxu0
        %1460 = vmatprep.mubr.f32.mxu0 0.0
        %1461 = vmatmul.mubr.f32.gmra.mrb[0].mxu0 %v1277
        %v1462 = vpop.f32.mrb[0].mxu0
        %v1463 = vadd.f32 %v1238, %v1462
        %v1464 = vpop.f32.mrb[0].mxu0
        %1465 = vmatprep.mubr.f32.mxu0 0.0
        %1466 = vmatmul.mubr.f32.gmra.mrb[0].mxu0 %v1280
        %v1467 = vpop.f32.mrb[0].mxu0
        %v1468 = vadd.f32 %v1238, %v1467
        %v1469 = vpop.f32.mrb[0].mxu0
        %1470 = vmatprep.mubr.f32.mxu0 0.0
        %1471 = vmatmul.mubr.f32.gmra.mrb[0].mxu0 %v1283
        %v1472 = vpop.f32.mrb[0].mxu0
        %v1473 = vadd.f32 %v1238, %v1472
        %v1474 = vpop.f32.mrb[0].mxu0
        %1475 = vmatprep.mubr.f32.mxu0 0.0
        %1476 = vmatmul.mubr.f32.gmra.mrb[0].mxu0 %v1286
        %v1477 = vpop.f32.mrb[0].mxu0
        %v1478 = vadd.f32 %v1238, %v1477
        %v1479 = vpop.f32.mrb[0].mxu0
        %1480 = vmatprep.mubr.f32.mxu0 0.0
        %1481 = vmatmul.mubr.f32.gmra.mrb[0].mxu0 %v1289
        %v1482 = vpop.f32.mrb[0].mxu0
        %v1483 = vadd.f32 %v1238, %v1482
        %v1484 = vpop.f32.mrb[0].mxu0
        %1485 = vmatprep.mubr.f32.mxu0 0.0
        %1486 = vmatmul.mubr.f32.gmra.mrb[0].mxu0 %v1292
        %v1487 = vpop.f32.mrb[0].mxu0
        %v1488 = vadd.f32 %v1238, %v1487
        %v1489 = vpop.f32.mrb[0].mxu0
        %1490 = vmatprep.mubr.f32.mxu0 0.0
        %1491 = vmatmul.mubr.f32.gmra.mrb[0].mxu0 %v1295
        %v1492 = vpop.f32.mrb[0].mxu0
        %v1493 = vadd.f32 %v1238, %v1492
        %v1494 = vpop.f32.mrb[0].mxu0
        %1495 = vmatprep.mubr.f32.mxu0 0.0
        %1496 = vmatmul.mubr.f32.gmra.mrb[0].mxu0 %v1298
        %v1497 = vpop.f32.mrb[0].mxu0
        %v1498 = vadd.f32 %v1238, %v1497
        %v1499 = vpop.f32.mrb[0].mxu0
        %1500 = vmatprep.mubr.f32.mxu0 0.0
        %1501 = vmatmul.mubr.f32.gmra.mrb[0].mxu0 %v1301
        %v1502 = vpop.f32.mrb[0].mxu0
        %v1503 = vadd.f32 %v1238, %v1502
        %v1504 = vpop.f32.mrb[0].mxu0
        %1505 = vmatprep.mubr.f32.mxu0 0.0
        %1506 = vmatmul.mubr.f32.gmra.mrb[0].mxu0 %v1304
        %v1507 = vpop.f32.mrb[0].mxu0
        %v1508 = vadd.f32 %v1238, %v1507
        %v1509 = vpop.f32.mrb[0].mxu0
        %1510 = vmatprep.mubr.f32.mxu0 0.0
        %1511 = vmatmul.mubr.f32.gmra.mrb[0].mxu0 %v1307
        %v1512 = vpop.f32.mrb[0].mxu0
        %v1513 = vadd.f32 %v1238, %v1512
        %v1514 = vpop.f32.mrb[0].mxu0
        %1515 = vmatprep.mubr.f32.mxu0 0.0
        %1516 = vmatmul.mubr.f32.gmra.mrb[0].mxu0 %v1310
        %v1517 = vpop.f32.mrb[0].mxu0
        %v1518 = vadd.f32 %v1238, %v1517
        %v1519 = vpop.f32.mrb[0].mxu0
        %1520 = vmatprep.mubr.f32.mxu0 0.0
        %1521 = vmatmul.mubr.f32.gmra.mrb[0].mxu0 %v1313
        %v1522 = vpop.f32.mrb[0].mxu0
        %v1523 = vadd.f32 %v1238, %v1522
        %v1524 = vpop.f32.mrb[0].mxu0
        %1525 = vmatprep.mubr.f32.mxu0 0.0
        %1526 = vmatmul.mubr.f32.gmra.mrb[0].mxu0 %v1316
        %v1527 = vpop.f32.mrb[0].mxu0
        %v1528 = vadd.f32 %v1238, %v1527
        %v1529 = vpop.f32.mrb[0].mxu0
        %1530 = vmatprep.mubr.f32.mxu0 0.0
        %1531 = vmatmul.mubr.f32.gmra.mrb[0].mxu0 %v1319
        %v1532 = vpop.f32.mrb[0].mxu0
        %v1533 = vadd.f32 %v1238, %v1532
        %v1534 = vpop.f32.mrb[0].mxu0
        %1535 = vmatprep.mubr.f32.mxu0 0.0
        %1536 = vmatmul.mubr.f32.gmra.mrb[0].mxu0 %v1322
        %v1537 = vpop.f32.mrb[0].mxu0
        %v1538 = vadd.f32 %v1238, %v1537
        %v1539 = vpop.f32.mrb[0].mxu0
        %1540 = vmatprep.mubr.f32.mxu0 0.0
        %1541 = vmatmul.mubr.f32.gmra.mrb[0].mxu0 %v1325
        %v1542 = vpop.f32.mrb[0].mxu0
        %v1543 = vadd.f32 %v1238, %v1542
        %v1544 = vpop.f32.mrb[0].mxu0
        %1545 = vmatprep.mubr.f32.mxu0 0.0
        %1546 = vmatmul.mubr.f32.gmra.mrb[0].mxu0 %v1328
        %v1547 = vpop.f32.mrb[0].mxu0
        %v1548 = vadd.f32 %v1238, %v1547
        %v1549 = vpop.f32.mrb[0].mxu0
        %1550 = vmatprep.mubr.f32.mxu0 0.0
        %1551 = vmatmul.mubr.f32.gmra.mrb[0].mxu0 %v1331
        %v1552 = vpop.f32.mrb[0].mxu0
        %v1553 = vadd.f32 %v1238, %v1552
        %v1554 = vpop.f32.mrb[0].mxu0
        %1555 = vmatprep.mubr.f32.mxu0 0.0
        %1556 = vmatmul.mubr.f32.gmra.mrb[0].mxu0 %v1334
        %v1557 = vpop.f32.mrb[0].mxu0
        %v1558 = vadd.f32 %v1238, %v1557
        %v1559 = vpop.f32.mrb[0].mxu0
        %1560 = vdwg.mxu0
        %v1561 = vld [vmem:[%s11] sm:$0xff]
        %v1562 = vld [vmem:[%s11 + $0x8] sm:$0xff]
        %v1563 = vld [vmem:[%s11 + $0x10] sm:$0xff]
        %v1564 = vld [vmem:[%s11 + $0x18] sm:$0xff]
        %v1565 = vld [vmem:[%s11 + $0x20] sm:$0xff]
        %v1566 = vld [vmem:[%s11 + $0x28] sm:$0xff]
        %v1567 = vld [vmem:[%s11 + $0x30] sm:$0xff]
        %v1568 = vld [vmem:[%s11 + $0x38] sm:$0xff]
        %v1569 = vld [vmem:[%s11 + $0x40] sm:$0xff]
        %v1570 = vld [vmem:[%s11 + $0x48] sm:$0xff]
        %v1571 = vld [vmem:[%s11 + $0x50] sm:$0xff]
        %v1572 = vld [vmem:[%s11 + $0x58] sm:$0xff]
        %v1573 = vld [vmem:[%s11 + $0x60] sm:$0xff]
        %v1574 = vld [vmem:[%s11 + $0x68] sm:$0xff]
        %v1575 = vld [vmem:[%s11 + $0x70] sm:$0xff]
        %v1576 = vld [vmem:[%s11 + $0x78] sm:$0xff]
        %v1577 = vld [vmem:[%s9] sm:$0xff]
        %v1578 = vld [vmem:[%s9 + $0x8] sm:$0xff]
        %v1579 = vld [vmem:[%s9 + $0x10] sm:$0xff]
        %v1580 = vld [vmem:[%s9 + $0x18] sm:$0xff]
        %vm1581 = vcmask 64512
        %v1583 = vsel %vm1581, %v739, 0
        %v1586 = vsel %vm1581, %v744, 0
        %v1589 = vsel %vm1581, %v749, 0
        %v1592 = vsel %vm1581, %v754, 0
        %v1595 = vsel %vm1581, %v1071, 0
        %v1598 = vsel %vm1581, %v1076, 0
        %v1601 = vsel %vm1581, %v1081, 0
        %v1604 = vsel %vm1581, %v1086, 0
        %1606 = vmatprep.subr.mxu0 0.0
        %1607 = vmatpush1.xpose.msra.mxu0 %v1595
        %1608 = vmatprep.subr.mxu0 0.0
        %1609 = vmatpush1.xpose.msra.mxu0 %v1598
        %1610 = vmatprep.subr.mxu0 0.0
        %1611 = vmatpush1.xpose.msra.mxu0 %v1601
        %1612 = vmatprep.subr.mxu0 0.0
        %1613 = vmatpush1.xpose.msra.mxu0 %v1604
        %1614 = vmatprep.subr.mxu0 0.0
        %1615 = vmatpush1.xpose.msra.mxu0 0.0
        %1616 = vmatprep.subr.mxu0 0.0
        %1617 = vmatpush1.xpose.msra.mxu0 0.0
        %1618 = vmatprep.subr.mxu0 0.0
        %1619 = vmatpush1.xpose.msra.mxu0 0.0
        %1620 = vmatprep.subr.mxu0 0.0
        %1621 = vmatpush1.xpose.msra.mxu0 0.0
        %1622 = vmatprep.subr.mxu0 0.0
        %1623 = vmatpush1.xpose.msra.mxu0 0.0
        %1624 = vmatprep.subr.mxu0 0.0
        %1625 = vmatpush1.xpose.msra.mxu0 0.0
        %1626 = vmatprep.subr.mxu0 0.0
        %1627 = vmatpush1.xpose.msra.mxu0 0.0
        %1628 = vmatprep.subr.mxu0 0.0
        %1629 = vmatpush1.xpose.msra.mxu0 0.0
        %1630 = vmatprep.subr.mxu0 0.0
        %1631 = vmatpush1.xpose.msra.mxu0 0.0
        %1632 = vmatprep.subr.mxu0 0.0
        %1633 = vmatpush1.xpose.msra.mxu0 0.0
        %1634 = vmatprep.subr.mxu0 0.0
        %1635 = vmatpush1.xpose.msra.mxu0 0.0
        %1636 = vmatprep.subr.mxu0 0.0
        %1637 = vmatpush1.xpose.msra.mxu0 0.0
        %1638 = vmatprep.subr.mxu0 0.0
        %1639 = vmatpush1.xpose.msra.mxu0 0.0
        %1640 = vmatprep.subr.mxu0 0.0
        %1641 = vmatpush1.xpose.msra.mxu0 0.0
        %1642 = vmatprep.subr.mxu0 0.0
        %1643 = vmatpush1.xpose.msra.mxu0 0.0
        %1644 = vmatprep.subr.mxu0 0.0
        %1645 = vmatpush1.xpose.msra.mxu0 0.0
        %1646 = vmatprep.subr.mxu0 0.0
        %1647 = vmatpush1.xpose.msra.mxu0 0.0
        %1648 = vmatprep.subr.mxu0 0.0
        %1649 = vmatpush1.xpose.msra.mxu0 0.0
        %1650 = vmatprep.subr.mxu0 0.0
        %1651 = vmatpush1.xpose.msra.mxu0 0.0
        %1652 = vmatprep.subr.mxu0 0.0
        %1653 = vmatpush1.xpose.msra.mxu0 0.0
        %1654 = vmatprep.subr.mxu0 0.0
        %1655 = vmatpush1.xpose.msra.mxu0 0.0
        %1656 = vmatprep.subr.mxu0 0.0
        %1657 = vmatpush1.xpose.msra.mxu0 0.0
        %1658 = vmatprep.subr.mxu0 0.0
        %1659 = vmatpush1.xpose.msra.mxu0 0.0
        %1660 = vmatprep.subr.mxu0 0.0
        %1661 = vmatpush1.xpose.msra.mxu0 0.0
        %1662 = vmatprep.subr.mxu0 0.0
        %1663 = vmatpush1.xpose.msra.mxu0 0.0
        %1664 = vmatprep.subr.mxu0 0.0
        %1665 = vmatpush1.xpose.msra.mxu0 0.0
        %1666 = vmatprep.subr.mxu0 0.0
        %1667 = vmatpush1.xpose.msra.mxu0 0.0
        %1668 = vmatprep.subr.mxu0 0.0
        %1669 = vmatpush1.xpose.msra.mxu0 0.0
        %1670 = vmatprep.mubr.f32.mxu0 0.0
        %1671 = vmatmul.mubr.f32.gmra.mrb[0].mxu0 %v1583
        %v1672 = vpop.f32.mrb[0].mxu0
        %v1673 = vadd.f32 %v1561, %v1672
        %v1674 = vpop.f32.mrb[0].mxu0
        %1675 = vmatprep.mubr.f32.mxu0 0.0
        %1676 = vmatmul.mubr.f32.gmra.mrb[0].mxu0 %v1586
        %v1677 = vpop.f32.mrb[0].mxu0
        %v1678 = vadd.f32 %v1562, %v1677
        %v1679 = vpop.f32.mrb[0].mxu0
        %1680 = vmatprep.mubr.f32.mxu0 0.0
        %1681 = vmatmul.mubr.f32.gmra.mrb[0].mxu0 %v1589
        %v1682 = vpop.f32.mrb[0].mxu0
        %v1683 = vadd.f32 %v1563, %v1682
        %v1684 = vpop.f32.mrb[0].mxu0
        %1685 = vmatprep.mubr.f32.mxu0 0.0
        %1686 = vmatmul.mubr.f32.gmra.mrb[0].mxu0 %v1592
        %v1687 = vpop.f32.mrb[0].mxu0
        %v1688 = vadd.f32 %v1564, %v1687
        %v1689 = vpop.f32.mrb[0].mxu0
        %1690 = vdwg.mxu0
        %v1692 = vsel %vm1581, %v759, 0
        %v1695 = vsel %vm1581, %v764, 0
        %v1698 = vsel %vm1581, %v769, 0
        %v1701 = vsel %vm1581, %v774, 0
        %v1704 = vsel %vm1581, %v1091, 0
        %v1707 = vsel %vm1581, %v1096, 0
        %v1710 = vsel %vm1581, %v1101, 0
        %v1713 = vsel %vm1581, %v1106, 0
        %1715 = vmatprep.subr.mxu0 0.0
        %1716 = vmatpush1.xpose.msra.mxu0 %v1704
        %1717 = vmatprep.subr.mxu0 0.0
        %1718 = vmatpush1.xpose.msra.mxu0 %v1707
        %1719 = vmatprep.subr.mxu0 0.0
        %1720 = vmatpush1.xpose.msra.mxu0 %v1710
        %1721 = vmatprep.subr.mxu0 0.0
        %1722 = vmatpush1.xpose.msra.mxu0 %v1713
        %1723 = vmatprep.subr.mxu0 0.0
        %1724 = vmatpush1.xpose.msra.mxu0 0.0
        %1725 = vmatprep.subr.mxu0 0.0
        %1726 = vmatpush1.xpose.msra.mxu0 0.0
        %1727 = vmatprep.subr.mxu0 0.0
        %1728 = vmatpush1.xpose.msra.mxu0 0.0
        %1729 = vmatprep.subr.mxu0 0.0
        %1730 = vmatpush1.xpose.msra.mxu0 0.0
        %1731 = vmatprep.subr.mxu0 0.0
        %1732 = vmatpush1.xpose.msra.mxu0 0.0
        %1733 = vmatprep.subr.mxu0 0.0
        %1734 = vmatpush1.xpose.msra.mxu0 0.0
        %1735 = vmatprep.subr.mxu0 0.0
        %1736 = vmatpush1.xpose.msra.mxu0 0.0
        %1737 = vmatprep.subr.mxu0 0.0
        %1738 = vmatpush1.xpose.msra.mxu0 0.0
        %1739 = vmatprep.subr.mxu0 0.0
        %1740 = vmatpush1.xpose.msra.mxu0 0.0
        %1741 = vmatprep.subr.mxu0 0.0
        %1742 = vmatpush1.xpose.msra.mxu0 0.0
        %1743 = vmatprep.subr.mxu0 0.0
        %1744 = vmatpush1.xpose.msra.mxu0 0.0
        %1745 = vmatprep.subr.mxu0 0.0
        %1746 = vmatpush1.xpose.msra.mxu0 0.0
        %1747 = vmatprep.subr.mxu0 0.0
        %1748 = vmatpush1.xpose.msra.mxu0 0.0
        %1749 = vmatprep.subr.mxu0 0.0
        %1750 = vmatpush1.xpose.msra.mxu0 0.0
        %1751 = vmatprep.subr.mxu0 0.0
        %1752 = vmatpush1.xpose.msra.mxu0 0.0
        %1753 = vmatprep.subr.mxu0 0.0
        %1754 = vmatpush1.xpose.msra.mxu0 0.0
        %1755 = vmatprep.subr.mxu0 0.0
        %1756 = vmatpush1.xpose.msra.mxu0 0.0
        %1757 = vmatprep.subr.mxu0 0.0
        %1758 = vmatpush1.xpose.msra.mxu0 0.0
        %1759 = vmatprep.subr.mxu0 0.0
        %1760 = vmatpush1.xpose.msra.mxu0 0.0
        %1761 = vmatprep.subr.mxu0 0.0
        %1762 = vmatpush1.xpose.msra.mxu0 0.0
        %1763 = vmatprep.subr.mxu0 0.0
        %1764 = vmatpush1.xpose.msra.mxu0 0.0
        %1765 = vmatprep.subr.mxu0 0.0
        %1766 = vmatpush1.xpose.msra.mxu0 0.0
        %1767 = vmatprep.subr.mxu0 0.0
        %1768 = vmatpush1.xpose.msra.mxu0 0.0
        %1769 = vmatprep.subr.mxu0 0.0
        %1770 = vmatpush1.xpose.msra.mxu0 0.0
        %1771 = vmatprep.subr.mxu0 0.0
        %1772 = vmatpush1.xpose.msra.mxu0 0.0
        %1773 = vmatprep.subr.mxu0 0.0
        %1774 = vmatpush1.xpose.msra.mxu0 0.0
        %1775 = vmatprep.subr.mxu0 0.0
        %1776 = vmatpush1.xpose.msra.mxu0 0.0
        %1777 = vmatprep.subr.mxu0 0.0
        %1778 = vmatpush1.xpose.msra.mxu0 0.0
        %1779 = vmatprep.mubr.f32.mxu0 0.0
        %1780 = vmatmul.mubr.f32.gmra.mrb[0].mxu0 %v1692
        %v1781 = vpop.f32.mrb[0].mxu0
        %v1782 = vadd.f32 %v1561, %v1781
        %v1783 = vpop.f32.mrb[0].mxu0
        %1784 = vmatprep.mubr.f32.mxu0 0.0
        %1785 = vmatmul.mubr.f32.gmra.mrb[0].mxu0 %v1695
        %v1786 = vpop.f32.mrb[0].mxu0
        %v1787 = vadd.f32 %v1562, %v1786
        %v1788 = vpop.f32.mrb[0].mxu0
        %1789 = vmatprep.mubr.f32.mxu0 0.0
        %1790 = vmatmul.mubr.f32.gmra.mrb[0].mxu0 %v1698
        %v1791 = vpop.f32.mrb[0].mxu0
        %v1792 = vadd.f32 %v1563, %v1791
        %v1793 = vpop.f32.mrb[0].mxu0
        %1794 = vmatprep.mubr.f32.mxu0 0.0
        %1795 = vmatmul.mubr.f32.gmra.mrb[0].mxu0 %v1701
        %v1796 = vpop.f32.mrb[0].mxu0
        %v1797 = vadd.f32 %v1564, %v1796
        %v1798 = vpop.f32.mrb[0].mxu0
        %1799 = vdwg.mxu0
        %v1801 = vsel %vm1581, %v779, 0
        %v1804 = vsel %vm1581, %v784, 0
        %v1807 = vsel %vm1581, %v789, 0
        %v1810 = vsel %vm1581, %v794, 0
        %v1813 = vsel %vm1581, %v1111, 0
        %v1816 = vsel %vm1581, %v1116, 0
        %v1819 = vsel %vm1581, %v1121, 0
        %v1822 = vsel %vm1581, %v1126, 0
        %1824 = vmatprep.subr.mxu0 0.0
        %1825 = vmatpush1.xpose.msra.mxu0 %v1813
        %1826 = vmatprep.subr.mxu0 0.0
        %1827 = vmatpush1.xpose.msra.mxu0 %v1816
        %1828 = vmatprep.subr.mxu0 0.0
        %1829 = vmatpush1.xpose.msra.mxu0 %v1819
        %1830 = vmatprep.subr.mxu0 0.0
        %1831 = vmatpush1.xpose.msra.mxu0 %v1822
        %1832 = vmatprep.subr.mxu0 0.0
        %1833 = vmatpush1.xpose.msra.mxu0 0.0
        %1834 = vmatprep.subr.mxu0 0.0
        %1835 = vmatpush1.xpose.msra.mxu0 0.0
        %1836 = vmatprep.subr.mxu0 0.0
        %1837 = vmatpush1.xpose.msra.mxu0 0.0
        %1838 = vmatprep.subr.mxu0 0.0
        %1839 = vmatpush1.xpose.msra.mxu0 0.0
        %1840 = vmatprep.subr.mxu0 0.0
        %1841 = vmatpush1.xpose.msra.mxu0 0.0
        %1842 = vmatprep.subr.mxu0 0.0
        %1843 = vmatpush1.xpose.msra.mxu0 0.0
        %1844 = vmatprep.subr.mxu0 0.0
        %1845 = vmatpush1.xpose.msra.mxu0 0.0
        %1846 = vmatprep.subr.mxu0 0.0
        %1847 = vmatpush1.xpose.msra.mxu0 0.0
        %1848 = vmatprep.subr.mxu0 0.0
        %1849 = vmatpush1.xpose.msra.mxu0 0.0
        %1850 = vmatprep.subr.mxu0 0.0
        %1851 = vmatpush1.xpose.msra.mxu0 0.0
        %1852 = vmatprep.subr.mxu0 0.0
        %1853 = vmatpush1.xpose.msra.mxu0 0.0
        %1854 = vmatprep.subr.mxu0 0.0
        %1855 = vmatpush1.xpose.msra.mxu0 0.0
        %1856 = vmatprep.subr.mxu0 0.0
        %1857 = vmatpush1.xpose.msra.mxu0 0.0
        %1858 = vmatprep.subr.mxu0 0.0
        %1859 = vmatpush1.xpose.msra.mxu0 0.0
        %1860 = vmatprep.subr.mxu0 0.0
        %1861 = vmatpush1.xpose.msra.mxu0 0.0
        %1862 = vmatprep.subr.mxu0 0.0
        %1863 = vmatpush1.xpose.msra.mxu0 0.0
        %1864 = vmatprep.subr.mxu0 0.0
        %1865 = vmatpush1.xpose.msra.mxu0 0.0
        %1866 = vmatprep.subr.mxu0 0.0
        %1867 = vmatpush1.xpose.msra.mxu0 0.0
        %1868 = vmatprep.subr.mxu0 0.0
        %1869 = vmatpush1.xpose.msra.mxu0 0.0
        %1870 = vmatprep.subr.mxu0 0.0
        %1871 = vmatpush1.xpose.msra.mxu0 0.0
        %1872 = vmatprep.subr.mxu0 0.0
        %1873 = vmatpush1.xpose.msra.mxu0 0.0
        %1874 = vmatprep.subr.mxu0 0.0
        %1875 = vmatpush1.xpose.msra.mxu0 0.0
        %1876 = vmatprep.subr.mxu0 0.0
        %1877 = vmatpush1.xpose.msra.mxu0 0.0
        %1878 = vmatprep.subr.mxu0 0.0
        %1879 = vmatpush1.xpose.msra.mxu0 0.0
        %1880 = vmatprep.subr.mxu0 0.0
        %1881 = vmatpush1.xpose.msra.mxu0 0.0
        %1882 = vmatprep.subr.mxu0 0.0
        %1883 = vmatpush1.xpose.msra.mxu0 0.0
        %1884 = vmatprep.subr.mxu0 0.0
        %1885 = vmatpush1.xpose.msra.mxu0 0.0
        %1886 = vmatprep.subr.mxu0 0.0
        %1887 = vmatpush1.xpose.msra.mxu0 0.0
        %1888 = vmatprep.mubr.f32.mxu0 0.0
        %1889 = vmatmul.mubr.f32.gmra.mrb[0].mxu0 %v1801
        %v1890 = vpop.f32.mrb[0].mxu0
        %v1891 = vadd.f32 %v1561, %v1890
        %v1892 = vpop.f32.mrb[0].mxu0
        %1893 = vmatprep.mubr.f32.mxu0 0.0
        %1894 = vmatmul.mubr.f32.gmra.mrb[0].mxu0 %v1804
        %v1895 = vpop.f32.mrb[0].mxu0
        %v1896 = vadd.f32 %v1562, %v1895
        %v1897 = vpop.f32.mrb[0].mxu0
        %1898 = vmatprep.mubr.f32.mxu0 0.0
        %1899 = vmatmul.mubr.f32.gmra.mrb[0].mxu0 %v1807
        %v1900 = vpop.f32.mrb[0].mxu0
        %v1901 = vadd.f32 %v1563, %v1900
        %v1902 = vpop.f32.mrb[0].mxu0
        %1903 = vmatprep.mubr.f32.mxu0 0.0
        %1904 = vmatmul.mubr.f32.gmra.mrb[0].mxu0 %v1810
        %v1905 = vpop.f32.mrb[0].mxu0
        %v1906 = vadd.f32 %v1564, %v1905
        %v1907 = vpop.f32.mrb[0].mxu0
        %1908 = vdwg.mxu0
        %v1910 = vsel %vm1581, %v799, 0
        %v1913 = vsel %vm1581, %v804, 0
        %v1916 = vsel %vm1581, %v809, 0
        %v1919 = vsel %vm1581, %v814, 0
        %v1922 = vsel %vm1581, %v1131, 0
        %v1925 = vsel %vm1581, %v1136, 0
        %v1928 = vsel %vm1581, %v1141, 0
        %v1931 = vsel %vm1581, %v1146, 0
        %1933 = vmatprep.subr.mxu0 0.0
        %1934 = vmatpush1.xpose.msra.mxu0 %v1922
        %1935 = vmatprep.subr.mxu0 0.0
        %1936 = vmatpush1.xpose.msra.mxu0 %v1925
        %1937 = vmatprep.subr.mxu0 0.0
        %1938 = vmatpush1.xpose.msra.mxu0 %v1928
        %1939 = vmatprep.subr.mxu0 0.0
        %1940 = vmatpush1.xpose.msra.mxu0 %v1931
        %1941 = vmatprep.subr.mxu0 0.0
        %1942 = vmatpush1.xpose.msra.mxu0 0.0
        %1943 = vmatprep.subr.mxu0 0.0
        %1944 = vmatpush1.xpose.msra.mxu0 0.0
        %1945 = vmatprep.subr.mxu0 0.0
        %1946 = vmatpush1.xpose.msra.mxu0 0.0
        %1947 = vmatprep.subr.mxu0 0.0
        %1948 = vmatpush1.xpose.msra.mxu0 0.0
        %1949 = vmatprep.subr.mxu0 0.0
        %1950 = vmatpush1.xpose.msra.mxu0 0.0
        %1951 = vmatprep.subr.mxu0 0.0
        %1952 = vmatpush1.xpose.msra.mxu0 0.0
        %1953 = vmatprep.subr.mxu0 0.0
        %1954 = vmatpush1.xpose.msra.mxu0 0.0
        %1955 = vmatprep.subr.mxu0 0.0
        %1956 = vmatpush1.xpose.msra.mxu0 0.0
        %1957 = vmatprep.subr.mxu0 0.0
        %1958 = vmatpush1.xpose.msra.mxu0 0.0
        %1959 = vmatprep.subr.mxu0 0.0
        %1960 = vmatpush1.xpose.msra.mxu0 0.0
        %1961 = vmatprep.subr.mxu0 0.0
        %1962 = vmatpush1.xpose.msra.mxu0 0.0
        %1963 = vmatprep.subr.mxu0 0.0
        %1964 = vmatpush1.xpose.msra.mxu0 0.0
        %1965 = vmatprep.subr.mxu0 0.0
        %1966 = vmatpush1.xpose.msra.mxu0 0.0
        %1967 = vmatprep.subr.mxu0 0.0
        %1968 = vmatpush1.xpose.msra.mxu0 0.0
        %1969 = vmatprep.subr.mxu0 0.0
        %1970 = vmatpush1.xpose.msra.mxu0 0.0
        %1971 = vmatprep.subr.mxu0 0.0
        %1972 = vmatpush1.xpose.msra.mxu0 0.0
        %1973 = vmatprep.subr.mxu0 0.0
        %1974 = vmatpush1.xpose.msra.mxu0 0.0
        %1975 = vmatprep.subr.mxu0 0.0
        %1976 = vmatpush1.xpose.msra.mxu0 0.0
        %1977 = vmatprep.subr.mxu0 0.0
        %1978 = vmatpush1.xpose.msra.mxu0 0.0
        %1979 = vmatprep.subr.mxu0 0.0
        %1980 = vmatpush1.xpose.msra.mxu0 0.0
        %1981 = vmatprep.subr.mxu0 0.0
        %1982 = vmatpush1.xpose.msra.mxu0 0.0
        %1983 = vmatprep.subr.mxu0 0.0
        %1984 = vmatpush1.xpose.msra.mxu0 0.0
        %1985 = vmatprep.subr.mxu0 0.0
        %1986 = vmatpush1.xpose.msra.mxu0 0.0
        %1987 = vmatprep.subr.mxu0 0.0
        %1988 = vmatpush1.xpose.msra.mxu0 0.0
        %1989 = vmatprep.subr.mxu0 0.0
        %1990 = vmatpush1.xpose.msra.mxu0 0.0
        %1991 = vmatprep.subr.mxu0 0.0
        %1992 = vmatpush1.xpose.msra.mxu0 0.0
        %1993 = vmatprep.subr.mxu0 0.0
        %1994 = vmatpush1.xpose.msra.mxu0 0.0
        %1995 = vmatprep.subr.mxu0 0.0
        %1996 = vmatpush1.xpose.msra.mxu0 0.0
        %1997 = vmatprep.mubr.f32.mxu0 0.0
        %1998 = vmatmul.mubr.f32.gmra.mrb[0].mxu0 %v1910
        %v1999 = vpop.f32.mrb[0].mxu0
        %v2000 = vadd.f32 %v1561, %v1999
        %v2001 = vpop.f32.mrb[0].mxu0
        %2002 = vmatprep.mubr.f32.mxu0 0.0
        %2003 = vmatmul.mubr.f32.gmra.mrb[0].mxu0 %v1913
        %v2004 = vpop.f32.mrb[0].mxu0
        %v2005 = vadd.f32 %v1562, %v2004
        %v2006 = vpop.f32.mrb[0].mxu0
        %2007 = vmatprep.mubr.f32.mxu0 0.0
        %2008 = vmatmul.mubr.f32.gmra.mrb[0].mxu0 %v1916
        %v2009 = vpop.f32.mrb[0].mxu0
        %v2010 = vadd.f32 %v1563, %v2009
        %v2011 = vpop.f32.mrb[0].mxu0
        %2012 = vmatprep.mubr.f32.mxu0 0.0
        %2013 = vmatmul.mubr.f32.gmra.mrb[0].mxu0 %v1919
        %v2014 = vpop.f32.mrb[0].mxu0
        %v2015 = vadd.f32 %v1564, %v2014
        %v2016 = vpop.f32.mrb[0].mxu0
        %2017 = vdwg.mxu0
        %v2019 = vsel %vm1581, %v819, 0
        %v2022 = vsel %vm1581, %v824, 0
        %v2025 = vsel %vm1581, %v829, 0
        %v2028 = vsel %vm1581, %v834, 0
        %v2031 = vsel %vm1581, %v1151, 0
        %v2034 = vsel %vm1581, %v1156, 0
        %v2037 = vsel %vm1581, %v1161, 0
        %v2040 = vsel %vm1581, %v1166, 0
        %2042 = vmatprep.subr.mxu0 0.0
        %2043 = vmatpush1.xpose.msra.mxu0 %v2031
        %2044 = vmatprep.subr.mxu0 0.0
        %2045 = vmatpush1.xpose.msra.mxu0 %v2034
        %2046 = vmatprep.subr.mxu0 0.0
        %2047 = vmatpush1.xpose.msra.mxu0 %v2037
        %2048 = vmatprep.subr.mxu0 0.0
        %2049 = vmatpush1.xpose.msra.mxu0 %v2040
        %2050 = vmatprep.subr.mxu0 0.0
        %2051 = vmatpush1.xpose.msra.mxu0 0.0
        %2052 = vmatprep.subr.mxu0 0.0
        %2053 = vmatpush1.xpose.msra.mxu0 0.0
        %2054 = vmatprep.subr.mxu0 0.0
        %2055 = vmatpush1.xpose.msra.mxu0 0.0
        %2056 = vmatprep.subr.mxu0 0.0
        %2057 = vmatpush1.xpose.msra.mxu0 0.0
        %2058 = vmatprep.subr.mxu0 0.0
        %2059 = vmatpush1.xpose.msra.mxu0 0.0
        %2060 = vmatprep.subr.mxu0 0.0
        %2061 = vmatpush1.xpose.msra.mxu0 0.0
        %2062 = vmatprep.subr.mxu0 0.0
        %2063 = vmatpush1.xpose.msra.mxu0 0.0
        %2064 = vmatprep.subr.mxu0 0.0
        %2065 = vmatpush1.xpose.msra.mxu0 0.0
        %2066 = vmatprep.subr.mxu0 0.0
        %2067 = vmatpush1.xpose.msra.mxu0 0.0
        %2068 = vmatprep.subr.mxu0 0.0
        %2069 = vmatpush1.xpose.msra.mxu0 0.0
        %2070 = vmatprep.subr.mxu0 0.0
        %2071 = vmatpush1.xpose.msra.mxu0 0.0
        %2072 = vmatprep.subr.mxu0 0.0
        %2073 = vmatpush1.xpose.msra.mxu0 0.0
        %2074 = vmatprep.subr.mxu0 0.0
        %2075 = vmatpush1.xpose.msra.mxu0 0.0
        %2076 = vmatprep.subr.mxu0 0.0
        %2077 = vmatpush1.xpose.msra.mxu0 0.0
        %2078 = vmatprep.subr.mxu0 0.0
        %2079 = vmatpush1.xpose.msra.mxu0 0.0
        %2080 = vmatprep.subr.mxu0 0.0
        %2081 = vmatpush1.xpose.msra.mxu0 0.0
        %2082 = vmatprep.subr.mxu0 0.0
        %2083 = vmatpush1.xpose.msra.mxu0 0.0
        %2084 = vmatprep.subr.mxu0 0.0
        %2085 = vmatpush1.xpose.msra.mxu0 0.0
        %2086 = vmatprep.subr.mxu0 0.0
        %2087 = vmatpush1.xpose.msra.mxu0 0.0
        %2088 = vmatprep.subr.mxu0 0.0
        %2089 = vmatpush1.xpose.msra.mxu0 0.0
        %2090 = vmatprep.subr.mxu0 0.0
        %2091 = vmatpush1.xpose.msra.mxu0 0.0
        %2092 = vmatprep.subr.mxu0 0.0
        %2093 = vmatpush1.xpose.msra.mxu0 0.0
        %2094 = vmatprep.subr.mxu0 0.0
        %2095 = vmatpush1.xpose.msra.mxu0 0.0
        %2096 = vmatprep.subr.mxu0 0.0
        %2097 = vmatpush1.xpose.msra.mxu0 0.0
        %2098 = vmatprep.subr.mxu0 0.0
        %2099 = vmatpush1.xpose.msra.mxu0 0.0
        %2100 = vmatprep.subr.mxu0 0.0
        %2101 = vmatpush1.xpose.msra.mxu0 0.0
        %2102 = vmatprep.subr.mxu0 0.0
        %2103 = vmatpush1.xpose.msra.mxu0 0.0
        %2104 = vmatprep.subr.mxu0 0.0
        %2105 = vmatpush1.xpose.msra.mxu0 0.0
        %2106 = vmatprep.mubr.f32.mxu0 0.0
        %2107 = vmatmul.mubr.f32.gmra.mrb[0].mxu0 %v2019
        %v2108 = vpop.f32.mrb[0].mxu0
        %v2109 = vadd.f32 %v1561, %v2108
        %v2110 = vpop.f32.mrb[0].mxu0
        %2111 = vmatprep.mubr.f32.mxu0 0.0
        %2112 = vmatmul.mubr.f32.gmra.mrb[0].mxu0 %v2022
        %v2113 = vpop.f32.mrb[0].mxu0
        %v2114 = vadd.f32 %v1562, %v2113
        %v2115 = vpop.f32.mrb[0].mxu0
        %2116 = vmatprep.mubr.f32.mxu0 0.0
        %2117 = vmatmul.mubr.f32.gmra.mrb[0].mxu0 %v2025
        %v2118 = vpop.f32.mrb[0].mxu0
        %v2119 = vadd.f32 %v1563, %v2118
        %v2120 = vpop.f32.mrb[0].mxu0
        %2121 = vmatprep.mubr.f32.mxu0 0.0
        %2122 = vmatmul.mubr.f32.gmra.mrb[0].mxu0 %v2028
        %v2123 = vpop.f32.mrb[0].mxu0
        %v2124 = vadd.f32 %v1564, %v2123
        %v2125 = vpop.f32.mrb[0].mxu0
        %2126 = vdwg.mxu0
        %v2128 = vsel %vm1581, %v839, 0
        %v2131 = vsel %vm1581, %v844, 0
        %v2134 = vsel %vm1581, %v849, 0
        %v2137 = vsel %vm1581, %v854, 0
        %v2140 = vsel %vm1581, %v1171, 0
        %v2143 = vsel %vm1581, %v1176, 0
        %v2146 = vsel %vm1581, %v1181, 0
        %v2149 = vsel %vm1581, %v1186, 0
        %2151 = vmatprep.subr.mxu0 0.0
        %2152 = vmatpush1.xpose.msra.mxu0 %v2140
        %2153 = vmatprep.subr.mxu0 0.0
        %2154 = vmatpush1.xpose.msra.mxu0 %v2143
        %2155 = vmatprep.subr.mxu0 0.0
        %2156 = vmatpush1.xpose.msra.mxu0 %v2146
        %2157 = vmatprep.subr.mxu0 0.0
        %2158 = vmatpush1.xpose.msra.mxu0 %v2149
        %2159 = vmatprep.subr.mxu0 0.0
        %2160 = vmatpush1.xpose.msra.mxu0 0.0
        %2161 = vmatprep.subr.mxu0 0.0
        %2162 = vmatpush1.xpose.msra.mxu0 0.0
        %2163 = vmatprep.subr.mxu0 0.0
        %2164 = vmatpush1.xpose.msra.mxu0 0.0
        %2165 = vmatprep.subr.mxu0 0.0
        %2166 = vmatpush1.xpose.msra.mxu0 0.0
        %2167 = vmatprep.subr.mxu0 0.0
        %2168 = vmatpush1.xpose.msra.mxu0 0.0
        %2169 = vmatprep.subr.mxu0 0.0
        %2170 = vmatpush1.xpose.msra.mxu0 0.0
        %2171 = vmatprep.subr.mxu0 0.0
        %2172 = vmatpush1.xpose.msra.mxu0 0.0
        %2173 = vmatprep.subr.mxu0 0.0
        %2174 = vmatpush1.xpose.msra.mxu0 0.0
        %2175 = vmatprep.subr.mxu0 0.0
        %2176 = vmatpush1.xpose.msra.mxu0 0.0
        %2177 = vmatprep.subr.mxu0 0.0
        %2178 = vmatpush1.xpose.msra.mxu0 0.0
        %2179 = vmatprep.subr.mxu0 0.0
        %2180 = vmatpush1.xpose.msra.mxu0 0.0
        %2181 = vmatprep.subr.mxu0 0.0
        %2182 = vmatpush1.xpose.msra.mxu0 0.0
        %2183 = vmatprep.subr.mxu0 0.0
        %2184 = vmatpush1.xpose.msra.mxu0 0.0
        %2185 = vmatprep.subr.mxu0 0.0
        %2186 = vmatpush1.xpose.msra.mxu0 0.0
        %2187 = vmatprep.subr.mxu0 0.0
        %2188 = vmatpush1.xpose.msra.mxu0 0.0
        %2189 = vmatprep.subr.mxu0 0.0
        %2190 = vmatpush1.xpose.msra.mxu0 0.0
        %2191 = vmatprep.subr.mxu0 0.0
        %2192 = vmatpush1.xpose.msra.mxu0 0.0
        %2193 = vmatprep.subr.mxu0 0.0
        %2194 = vmatpush1.xpose.msra.mxu0 0.0
        %2195 = vmatprep.subr.mxu0 0.0
        %2196 = vmatpush1.xpose.msra.mxu0 0.0
        %2197 = vmatprep.subr.mxu0 0.0
        %2198 = vmatpush1.xpose.msra.mxu0 0.0
        %2199 = vmatprep.subr.mxu0 0.0
        %2200 = vmatpush1.xpose.msra.mxu0 0.0
        %2201 = vmatprep.subr.mxu0 0.0
        %2202 = vmatpush1.xpose.msra.mxu0 0.0
        %2203 = vmatprep.subr.mxu0 0.0
        %2204 = vmatpush1.xpose.msra.mxu0 0.0
        %2205 = vmatprep.subr.mxu0 0.0
        %2206 = vmatpush1.xpose.msra.mxu0 0.0
        %2207 = vmatprep.subr.mxu0 0.0
        %2208 = vmatpush1.xpose.msra.mxu0 0.0
        %2209 = vmatprep.subr.mxu0 0.0
        %2210 = vmatpush1.xpose.msra.mxu0 0.0
        %2211 = vmatprep.subr.mxu0 0.0
        %2212 = vmatpush1.xpose.msra.mxu0 0.0
        %2213 = vmatprep.subr.mxu0 0.0
        %2214 = vmatpush1.xpose.msra.mxu0 0.0
        %2215 = vmatprep.mubr.f32.mxu0 0.0
        %2216 = vmatmul.mubr.f32.gmra.mrb[0].mxu0 %v2128
        %v2217 = vpop.f32.mrb[0].mxu0
        %v2218 = vadd.f32 %v1561, %v2217
        %v2219 = vpop.f32.mrb[0].mxu0
        %2220 = vmatprep.mubr.f32.mxu0 0.0
        %2221 = vmatmul.mubr.f32.gmra.mrb[0].mxu0 %v2131
        %v2222 = vpop.f32.mrb[0].mxu0
        %v2223 = vadd.f32 %v1562, %v2222
        %v2224 = vpop.f32.mrb[0].mxu0
        %2225 = vmatprep.mubr.f32.mxu0 0.0
        %2226 = vmatmul.mubr.f32.gmra.mrb[0].mxu0 %v2134
        %v2227 = vpop.f32.mrb[0].mxu0
        %v2228 = vadd.f32 %v1563, %v2227
        %v2229 = vpop.f32.mrb[0].mxu0
        %2230 = vmatprep.mubr.f32.mxu0 0.0
        %2231 = vmatmul.mubr.f32.gmra.mrb[0].mxu0 %v2137
        %v2232 = vpop.f32.mrb[0].mxu0
        %v2233 = vadd.f32 %v1564, %v2232
        %v2234 = vpop.f32.mrb[0].mxu0
        %2235 = vdwg.mxu0
        %v2237 = vsel %vm1581, %v859, 0
        %v2240 = vsel %vm1581, %v864, 0
        %v2243 = vsel %vm1581, %v869, 0
        %v2246 = vsel %vm1581, %v874, 0
        %v2249 = vsel %vm1581, %v1191, 0
        %v2252 = vsel %vm1581, %v1196, 0
        %v2255 = vsel %vm1581, %v1201, 0
        %v2258 = vsel %vm1581, %v1206, 0
        %2260 = vmatprep.subr.mxu0 0.0
        %2261 = vmatpush1.xpose.msra.mxu0 %v2249
        %2262 = vmatprep.subr.mxu0 0.0
        %2263 = vmatpush1.xpose.msra.mxu0 %v2252
        %2264 = vmatprep.subr.mxu0 0.0
        %2265 = vmatpush1.xpose.msra.mxu0 %v2255
        %2266 = vmatprep.subr.mxu0 0.0
        %2267 = vmatpush1.xpose.msra.mxu0 %v2258
        %2268 = vmatprep.subr.mxu0 0.0
        %2269 = vmatpush1.xpose.msra.mxu0 0.0
        %2270 = vmatprep.subr.mxu0 0.0
        %2271 = vmatpush1.xpose.msra.mxu0 0.0
        %2272 = vmatprep.subr.mxu0 0.0
        %2273 = vmatpush1.xpose.msra.mxu0 0.0
        %2274 = vmatprep.subr.mxu0 0.0
        %2275 = vmatpush1.xpose.msra.mxu0 0.0
        %2276 = vmatprep.subr.mxu0 0.0
        %2277 = vmatpush1.xpose.msra.mxu0 0.0
        %2278 = vmatprep.subr.mxu0 0.0
        %2279 = vmatpush1.xpose.msra.mxu0 0.0
        %2280 = vmatprep.subr.mxu0 0.0
        %2281 = vmatpush1.xpose.msra.mxu0 0.0
        %2282 = vmatprep.subr.mxu0 0.0
        %2283 = vmatpush1.xpose.msra.mxu0 0.0
        %2284 = vmatprep.subr.mxu0 0.0
        %2285 = vmatpush1.xpose.msra.mxu0 0.0
        %2286 = vmatprep.subr.mxu0 0.0
        %2287 = vmatpush1.xpose.msra.mxu0 0.0
        %2288 = vmatprep.subr.mxu0 0.0
        %2289 = vmatpush1.xpose.msra.mxu0 0.0
        %2290 = vmatprep.subr.mxu0 0.0
        %2291 = vmatpush1.xpose.msra.mxu0 0.0
        %2292 = vmatprep.subr.mxu0 0.0
        %2293 = vmatpush1.xpose.msra.mxu0 0.0
        %2294 = vmatprep.subr.mxu0 0.0
        %2295 = vmatpush1.xpose.msra.mxu0 0.0
        %2296 = vmatprep.subr.mxu0 0.0
        %2297 = vmatpush1.xpose.msra.mxu0 0.0
        %2298 = vmatprep.subr.mxu0 0.0
        %2299 = vmatpush1.xpose.msra.mxu0 0.0
        %2300 = vmatprep.subr.mxu0 0.0
        %2301 = vmatpush1.xpose.msra.mxu0 0.0
        %2302 = vmatprep.subr.mxu0 0.0
        %2303 = vmatpush1.xpose.msra.mxu0 0.0
        %2304 = vmatprep.subr.mxu0 0.0
        %2305 = vmatpush1.xpose.msra.mxu0 0.0
        %2306 = vmatprep.subr.mxu0 0.0
        %2307 = vmatpush1.xpose.msra.mxu0 0.0
        %2308 = vmatprep.subr.mxu0 0.0
        %2309 = vmatpush1.xpose.msra.mxu0 0.0
        %2310 = vmatprep.subr.mxu0 0.0
        %2311 = vmatpush1.xpose.msra.mxu0 0.0
        %2312 = vmatprep.subr.mxu0 0.0
        %2313 = vmatpush1.xpose.msra.mxu0 0.0
        %2314 = vmatprep.subr.mxu0 0.0
        %2315 = vmatpush1.xpose.msra.mxu0 0.0
        %2316 = vmatprep.subr.mxu0 0.0
        %2317 = vmatpush1.xpose.msra.mxu0 0.0
        %2318 = vmatprep.subr.mxu0 0.0
        %2319 = vmatpush1.xpose.msra.mxu0 0.0
        %2320 = vmatprep.subr.mxu0 0.0
        %2321 = vmatpush1.xpose.msra.mxu0 0.0
        %2322 = vmatprep.subr.mxu0 0.0
        %2323 = vmatpush1.xpose.msra.mxu0 0.0
        %2324 = vmatprep.mubr.f32.mxu0 0.0
        %2325 = vmatmul.mubr.f32.gmra.mrb[0].mxu0 %v2237
        %v2326 = vpop.f32.mrb[0].mxu0
        %v2327 = vadd.f32 %v1561, %v2326
        %v2328 = vpop.f32.mrb[0].mxu0
        %2329 = vmatprep.mubr.f32.mxu0 0.0
        %2330 = vmatmul.mubr.f32.gmra.mrb[0].mxu0 %v2240
        %v2331 = vpop.f32.mrb[0].mxu0
        %v2332 = vadd.f32 %v1562, %v2331
        %v2333 = vpop.f32.mrb[0].mxu0
        %2334 = vmatprep.mubr.f32.mxu0 0.0
        %2335 = vmatmul.mubr.f32.gmra.mrb[0].mxu0 %v2243
        %v2336 = vpop.f32.mrb[0].mxu0
        %v2337 = vadd.f32 %v1563, %v2336
        %v2338 = vpop.f32.mrb[0].mxu0
        %2339 = vmatprep.mubr.f32.mxu0 0.0
        %2340 = vmatmul.mubr.f32.gmra.mrb[0].mxu0 %v2246
        %v2341 = vpop.f32.mrb[0].mxu0
        %v2342 = vadd.f32 %v1564, %v2341
        %v2343 = vpop.f32.mrb[0].mxu0
        %2344 = vdwg.mxu0
        %v2346 = vsel %vm1581, %v879, 0
        %v2349 = vsel %vm1581, %v884, 0
        %v2352 = vsel %vm1581, %v889, 0
        %v2355 = vsel %vm1581, %v894, 0
        %v2358 = vsel %vm1581, %v1211, 0
        %v2361 = vsel %vm1581, %v1216, 0
        %v2364 = vsel %vm1581, %v1221, 0
        %v2367 = vsel %vm1581, %v1226, 0
        %2369 = vmatprep.subr.mxu0 0.0
        %2370 = vmatpush1.xpose.msra.mxu0 %v2358
        %2371 = vmatprep.subr.mxu0 0.0
        %2372 = vmatpush1.xpose.msra.mxu0 %v2361
        %2373 = vmatprep.subr.mxu0 0.0
        %2374 = vmatpush1.xpose.msra.mxu0 %v2364
        %2375 = vmatprep.subr.mxu0 0.0
        %2376 = vmatpush1.xpose.msra.mxu0 %v2367
        %2377 = vmatprep.subr.mxu0 0.0
        %2378 = vmatpush1.xpose.msra.mxu0 0.0
        %2379 = vmatprep.subr.mxu0 0.0
        %2380 = vmatpush1.xpose.msra.mxu0 0.0
        %2381 = vmatprep.subr.mxu0 0.0
        %2382 = vmatpush1.xpose.msra.mxu0 0.0
        %2383 = vmatprep.subr.mxu0 0.0
        %2384 = vmatpush1.xpose.msra.mxu0 0.0
        %2385 = vmatprep.subr.mxu0 0.0
        %2386 = vmatpush1.xpose.msra.mxu0 0.0
        %2387 = vmatprep.subr.mxu0 0.0
        %2388 = vmatpush1.xpose.msra.mxu0 0.0
        %2389 = vmatprep.subr.mxu0 0.0
        %2390 = vmatpush1.xpose.msra.mxu0 0.0
        %2391 = vmatprep.subr.mxu0 0.0
        %2392 = vmatpush1.xpose.msra.mxu0 0.0
        %2393 = vmatprep.subr.mxu0 0.0
        %2394 = vmatpush1.xpose.msra.mxu0 0.0
        %2395 = vmatprep.subr.mxu0 0.0
        %2396 = vmatpush1.xpose.msra.mxu0 0.0
        %2397 = vmatprep.subr.mxu0 0.0
        %2398 = vmatpush1.xpose.msra.mxu0 0.0
        %2399 = vmatprep.subr.mxu0 0.0
        %2400 = vmatpush1.xpose.msra.mxu0 0.0
        %2401 = vmatprep.subr.mxu0 0.0
        %2402 = vmatpush1.xpose.msra.mxu0 0.0
        %2403 = vmatprep.subr.mxu0 0.0
        %2404 = vmatpush1.xpose.msra.mxu0 0.0
        %2405 = vmatprep.subr.mxu0 0.0
        %2406 = vmatpush1.xpose.msra.mxu0 0.0
        %2407 = vmatprep.subr.mxu0 0.0
        %2408 = vmatpush1.xpose.msra.mxu0 0.0
        %2409 = vmatprep.subr.mxu0 0.0
        %2410 = vmatpush1.xpose.msra.mxu0 0.0
        %2411 = vmatprep.subr.mxu0 0.0
        %2412 = vmatpush1.xpose.msra.mxu0 0.0
        %2413 = vmatprep.subr.mxu0 0.0
        %2414 = vmatpush1.xpose.msra.mxu0 0.0
        %2415 = vmatprep.subr.mxu0 0.0
        %2416 = vmatpush1.xpose.msra.mxu0 0.0
        %2417 = vmatprep.subr.mxu0 0.0
        %2418 = vmatpush1.xpose.msra.mxu0 0.0
        %2419 = vmatprep.subr.mxu0 0.0
        %2420 = vmatpush1.xpose.msra.mxu0 0.0
        %2421 = vmatprep.subr.mxu0 0.0
        %2422 = vmatpush1.xpose.msra.mxu0 0.0
        %2423 = vmatprep.subr.mxu0 0.0
        %2424 = vmatpush1.xpose.msra.mxu0 0.0
        %2425 = vmatprep.subr.mxu0 0.0
        %2426 = vmatpush1.xpose.msra.mxu0 0.0
        %2427 = vmatprep.subr.mxu0 0.0
        %2428 = vmatpush1.xpose.msra.mxu0 0.0
        %2429 = vmatprep.subr.mxu0 0.0
        %2430 = vmatpush1.xpose.msra.mxu0 0.0
        %2431 = vmatprep.subr.mxu0 0.0
        %2432 = vmatpush1.xpose.msra.mxu0 0.0
        %2433 = vmatprep.mubr.f32.mxu0 0.0
        %2434 = vmatmul.mubr.f32.gmra.mrb[0].mxu0 %v2346
        %v2435 = vpop.f32.mrb[0].mxu0
        %v2436 = vadd.f32 %v1561, %v2435
        %v2437 = vpop.f32.mrb[0].mxu0
        %2438 = vmatprep.mubr.f32.mxu0 0.0
        %2439 = vmatmul.mubr.f32.gmra.mrb[0].mxu0 %v2349
        %v2440 = vpop.f32.mrb[0].mxu0
        %v2441 = vadd.f32 %v1562, %v2440
        %v2442 = vpop.f32.mrb[0].mxu0
        %2443 = vmatprep.mubr.f32.mxu0 0.0
        %2444 = vmatmul.mubr.f32.gmra.mrb[0].mxu0 %v2352
        %v2445 = vpop.f32.mrb[0].mxu0
        %v2446 = vadd.f32 %v1563, %v2445
        %v2447 = vpop.f32.mrb[0].mxu0
        %2448 = vmatprep.mubr.f32.mxu0 0.0
        %2449 = vmatmul.mubr.f32.gmra.mrb[0].mxu0 %v2355
        %v2450 = vpop.f32.mrb[0].mxu0
        %v2451 = vadd.f32 %v1564, %v2450
        %v2452 = vpop.f32.mrb[0].mxu0
        %2453 = vdwg.mxu0
        %v2454 = vsel %vm575, %v1673, -inf
        %2455 = vmax.xlane.f32.xlu0 %v2454
        %v2456 = vpop.xlane.xlu0 %2455
        %v2457 = vsel %vm575, %v1678, -inf
        %2458 = vmax.xlane.f32.xlu0 %v2457
        %v2459 = vpop.xlane.xlu0 %2458
        %v2460 = vsel %vm575, %v1683, -inf
        %2461 = vmax.xlane.f32.xlu0 %v2460
        %v2462 = vpop.xlane.xlu0 %2461
        %v2463 = vsel %vm575, %v1688, -inf
        %2464 = vmax.xlane.f32.xlu0 %v2463
        %v2465 = vpop.xlane.xlu0 %2464
        %v2466 = vsel %vm575, %v1782, -inf
        %2467 = vmax.xlane.f32.xlu0 %v2466
        %v2468 = vpop.xlane.xlu0 %2467
        %v2469 = vsel %vm575, %v1787, -inf
        %2470 = vmax.xlane.f32.xlu0 %v2469
        %v2471 = vpop.xlane.xlu0 %2470
        %v2472 = vsel %vm575, %v1792, -inf
        %2473 = vmax.xlane.f32.xlu0 %v2472
        %v2474 = vpop.xlane.xlu0 %2473
        %v2475 = vsel %vm575, %v1797, -inf
        %2476 = vmax.xlane.f32.xlu0 %v2475
        %v2477 = vpop.xlane.xlu0 %2476
        %v2478 = vsel %vm575, %v1891, -inf
        %2479 = vmax.xlane.f32.xlu0 %v2478
        %v2480 = vpop.xlane.xlu0 %2479
        %v2481 = vsel %vm575, %v1896, -inf
        %2482 = vmax.xlane.f32.xlu0 %v2481
        %v2483 = vpop.xlane.xlu0 %2482
        %v2484 = vsel %vm575, %v1901, -inf
        %2485 = vmax.xlane.f32.xlu0 %v2484
        %v2486 = vpop.xlane.xlu0 %2485
        %v2487 = vsel %vm575, %v1906, -inf
        %2488 = vmax.xlane.f32.xlu0 %v2487
        %v2489 = vpop.xlane.xlu0 %2488
        %v2490 = vsel %vm575, %v2000, -inf
        %2491 = vmax.xlane.f32.xlu0 %v2490
        %v2492 = vpop.xlane.xlu0 %2491
        %v2493 = vsel %vm575, %v2005, -inf
        %2494 = vmax.xlane.f32.xlu0 %v2493
        %v2495 = vpop.xlane.xlu0 %2494
        %v2496 = vsel %vm575, %v2010, -inf
        %2497 = vmax.xlane.f32.xlu0 %v2496
        %v2498 = vpop.xlane.xlu0 %2497
        %v2499 = vsel %vm575, %v2015, -inf
        %2500 = vmax.xlane.f32.xlu0 %v2499
        %v2501 = vpop.xlane.xlu0 %2500
        %v2502 = vsel %vm575, %v2109, -inf
        %2503 = vmax.xlane.f32.xlu0 %v2502
        %v2504 = vpop.xlane.xlu0 %2503
        %v2505 = vsel %vm575, %v2114, -inf
        %2506 = vmax.xlane.f32.xlu0 %v2505
        %v2507 = vpop.xlane.xlu0 %2506
        %v2508 = vsel %vm575, %v2119, -inf
        %2509 = vmax.xlane.f32.xlu0 %v2508
        %v2510 = vpop.xlane.xlu0 %2509
        %v2511 = vsel %vm575, %v2124, -inf
        %2512 = vmax.xlane.f32.xlu0 %v2511
        %v2513 = vpop.xlane.xlu0 %2512
        %v2514 = vsel %vm575, %v2218, -inf
        %2515 = vmax.xlane.f32.xlu0 %v2514
        %v2516 = vpop.xlane.xlu0 %2515
        %v2517 = vsel %vm575, %v2223, -inf
        %2518 = vmax.xlane.f32.xlu0 %v2517
        %v2519 = vpop.xlane.xlu0 %2518
        %v2520 = vsel %vm575, %v2228, -inf
        %2521 = vmax.xlane.f32.xlu0 %v2520
        %v2522 = vpop.xlane.xlu0 %2521
        %v2523 = vsel %vm575, %v2233, -inf
        %2524 = vmax.xlane.f32.xlu0 %v2523
        %v2525 = vpop.xlane.xlu0 %2524
        %v2526 = vsel %vm575, %v2327, -inf
        %2527 = vmax.xlane.f32.xlu0 %v2526
        %v2528 = vpop.xlane.xlu0 %2527
        %v2529 = vsel %vm575, %v2332, -inf
        %2530 = vmax.xlane.f32.xlu0 %v2529
        %v2531 = vpop.xlane.xlu0 %2530
        %v2532 = vsel %vm575, %v2337, -inf
        %2533 = vmax.xlane.f32.xlu0 %v2532
        %v2534 = vpop.xlane.xlu0 %2533
        %v2535 = vsel %vm575, %v2342, -inf
        %2536 = vmax.xlane.f32.xlu0 %v2535
        %v2537 = vpop.xlane.xlu0 %2536
        %v2538 = vsel %vm575, %v2436, -inf
        %2539 = vmax.xlane.f32.xlu0 %v2538
        %v2540 = vpop.xlane.xlu0 %2539
        %v2541 = vsel %vm575, %v2441, -inf
        %2542 = vmax.xlane.f32.xlu0 %v2541
        %v2543 = vpop.xlane.xlu0 %2542
        %v2544 = vsel %vm575, %v2446, -inf
        %2545 = vmax.xlane.f32.xlu0 %v2544
        %v2546 = vpop.xlane.xlu0 %2545
        %v2547 = vsel %vm575, %v2451, -inf
        %2548 = vmax.xlane.f32.xlu0 %v2547
        %v2549 = vpop.xlane.xlu0 %2548
        %v2550 = vsub.f32 %v1673, %v2456
        %v2551 = vsub.f32 %v1678, %v2459
        %v2552 = vsub.f32 %v1683, %v2462
        %v2553 = vsub.f32 %v1688, %v2465
        %v2554 = vsub.f32 %v1782, %v2468
        %v2555 = vsub.f32 %v1787, %v2471
        %v2556 = vsub.f32 %v1792, %v2474
        %v2557 = vsub.f32 %v1797, %v2477
        %v2558 = vsub.f32 %v1891, %v2480
        %v2559 = vsub.f32 %v1896, %v2483
        %v2560 = vsub.f32 %v1901, %v2486
        %v2561 = vsub.f32 %v1906, %v2489
        %v2562 = vsub.f32 %v2000, %v2492
        %v2563 = vsub.f32 %v2005, %v2495
        %v2564 = vsub.f32 %v2010, %v2498
        %v2565 = vsub.f32 %v2015, %v2501
        %v2566 = vsub.f32 %v2109, %v2504
        %v2567 = vsub.f32 %v2114, %v2507
        %v2568 = vsub.f32 %v2119, %v2510
        %v2569 = vsub.f32 %v2124, %v2513
        %v2570 = vsub.f32 %v2218, %v2516
        %v2571 = vsub.f32 %v2223, %v2519
        %v2572 = vsub.f32 %v2228, %v2522
        %v2573 = vsub.f32 %v2233, %v2525
        %v2574 = vsub.f32 %v2327, %v2528
        %v2575 = vsub.f32 %v2332, %v2531
        %v2576 = vsub.f32 %v2337, %v2534
        %v2577 = vsub.f32 %v2342, %v2537
        %v2578 = vsub.f32 %v2436, %v2540
        %v2579 = vsub.f32 %v2441, %v2543
        %v2580 = vsub.f32 %v2446, %v2546
        %v2581 = vsub.f32 %v2451, %v2549
        %v2582 = vmul.f32 %v2550, 1.442695
        %v2583 = vpow.pop %v2582
        %v2584 = vmul.f32 %v2551, 1.442695
        %v2585 = vpow.pop %v2584
        %v2586 = vmul.f32 %v2552, 1.442695
        %v2587 = vpow.pop %v2586
        %v2588 = vmul.f32 %v2553, 1.442695
        %v2589 = vpow.pop %v2588
        %v2590 = vmul.f32 %v2554, 1.442695
        %v2591 = vpow.pop %v2590
        %v2592 = vmul.f32 %v2555, 1.442695
        %v2593 = vpow.pop %v2592
        %v2594 = vmul.f32 %v2556, 1.442695
        %v2595 = vpow.pop %v2594
        %v2596 = vmul.f32 %v2557, 1.442695
        %v2597 = vpow.pop %v2596
        %v2598 = vmul.f32 %v2558, 1.442695
        %v2599 = vpow.pop %v2598
        %v2600 = vmul.f32 %v2559, 1.442695
        %v2601 = vpow.pop %v2600
        %v2602 = vmul.f32 %v2560, 1.442695
        %v2603 = vpow.pop %v2602
        %v2604 = vmul.f32 %v2561, 1.442695
        %v2605 = vpow.pop %v2604
        %v2606 = vmul.f32 %v2562, 1.442695
        %v2607 = vpow.pop %v2606
        %v2608 = vmul.f32 %v2563, 1.442695
        %v2609 = vpow.pop %v2608
        %v2610 = vmul.f32 %v2564, 1.442695
        %v2611 = vpow.pop %v2610
        %v2612 = vmul.f32 %v2565, 1.442695
        %v2613 = vpow.pop %v2612
        %v2614 = vmul.f32 %v2566, 1.442695
        %v2615 = vpow.pop %v2614
        %v2616 = vmul.f32 %v2567, 1.442695
        %v2617 = vpow.pop %v2616
        %v2618 = vmul.f32 %v2568, 1.442695
        %v2619 = vpow.pop %v2618
        %v2620 = vmul.f32 %v2569, 1.442695
        %v2621 = vpow.pop %v2620
        %v2622 = vmul.f32 %v2570, 1.442695
        %v2623 = vpow.pop %v2622
        %v2624 = vmul.f32 %v2571, 1.442695
        %v2625 = vpow.pop %v2624
        %v2626 = vmul.f32 %v2572, 1.442695
        %v2627 = vpow.pop %v2626
        %v2628 = vmul.f32 %v2573, 1.442695
        %v2629 = vpow.pop %v2628
        %v2630 = vmul.f32 %v2574, 1.442695
        %v2631 = vpow.pop %v2630
        %v2632 = vmul.f32 %v2575, 1.442695
        %v2633 = vpow.pop %v2632
        %v2634 = vmul.f32 %v2576, 1.442695
        %v2635 = vpow.pop %v2634
        %v2636 = vmul.f32 %v2577, 1.442695
        %v2637 = vpow.pop %v2636
        %v2638 = vmul.f32 %v2578, 1.442695
        %v2639 = vpow.pop %v2638
        %v2640 = vmul.f32 %v2579, 1.442695
        %v2641 = vpow.pop %v2640
        %v2642 = vmul.f32 %v2580, 1.442695
        %v2643 = vpow.pop %v2642
        %v2644 = vmul.f32 %v2581, 1.442695
        %v2645 = vpow.pop %v2644
        %v2646 = vsel %vm575, %v2583, 0.0
        %2647 = vadd.xlane.f32.xlu0 %v2646
        %v2648 = vpop.xlane.xlu0 %2647
        %v2649 = vsel %vm575, %v2585, 0.0
        %2650 = vadd.xlane.f32.xlu0 %v2649
        %v2651 = vpop.xlane.xlu0 %2650
        %v2652 = vsel %vm575, %v2587, 0.0
        %2653 = vadd.xlane.f32.xlu0 %v2652
        %v2654 = vpop.xlane.xlu0 %2653
        %v2655 = vsel %vm575, %v2589, 0.0
        %2656 = vadd.xlane.f32.xlu0 %v2655
        %v2657 = vpop.xlane.xlu0 %2656
        %v2658 = vsel %vm575, %v2591, 0.0
        %2659 = vadd.xlane.f32.xlu0 %v2658
        %v2660 = vpop.xlane.xlu0 %2659
        %v2661 = vsel %vm575, %v2593, 0.0
        %2662 = vadd.xlane.f32.xlu0 %v2661
        %v2663 = vpop.xlane.xlu0 %2662
        %v2664 = vsel %vm575, %v2595, 0.0
        %2665 = vadd.xlane.f32.xlu0 %v2664
        %v2666 = vpop.xlane.xlu0 %2665
        %v2667 = vsel %vm575, %v2597, 0.0
        %2668 = vadd.xlane.f32.xlu0 %v2667
        %v2669 = vpop.xlane.xlu0 %2668
        %v2670 = vsel %vm575, %v2599, 0.0
        %2671 = vadd.xlane.f32.xlu0 %v2670
        %v2672 = vpop.xlane.xlu0 %2671
        %v2673 = vsel %vm575, %v2601, 0.0
        %2674 = vadd.xlane.f32.xlu0 %v2673
        %v2675 = vpop.xlane.xlu0 %2674
        %v2676 = vsel %vm575, %v2603, 0.0
        %2677 = vadd.xlane.f32.xlu0 %v2676
        %v2678 = vpop.xlane.xlu0 %2677
        %v2679 = vsel %vm575, %v2605, 0.0
        %2680 = vadd.xlane.f32.xlu0 %v2679
        %v2681 = vpop.xlane.xlu0 %2680
        %v2682 = vsel %vm575, %v2607, 0.0
        %2683 = vadd.xlane.f32.xlu0 %v2682
        %v2684 = vpop.xlane.xlu0 %2683
        %v2685 = vsel %vm575, %v2609, 0.0
        %2686 = vadd.xlane.f32.xlu0 %v2685
        %v2687 = vpop.xlane.xlu0 %2686
        %v2688 = vsel %vm575, %v2611, 0.0
        %2689 = vadd.xlane.f32.xlu0 %v2688
        %v2690 = vpop.xlane.xlu0 %2689
        %v2691 = vsel %vm575, %v2613, 0.0
        %2692 = vadd.xlane.f32.xlu0 %v2691
        %v2693 = vpop.xlane.xlu0 %2692
        %v2694 = vsel %vm575, %v2615, 0.0
        %2695 = vadd.xlane.f32.xlu0 %v2694
        %v2696 = vpop.xlane.xlu0 %2695
        %v2697 = vsel %vm575, %v2617, 0.0
        %2698 = vadd.xlane.f32.xlu0 %v2697
        %v2699 = vpop.xlane.xlu0 %2698
        %v2700 = vsel %vm575, %v2619, 0.0
        %2701 = vadd.xlane.f32.xlu0 %v2700
        %v2702 = vpop.xlane.xlu0 %2701
        %v2703 = vsel %vm575, %v2621, 0.0
        %2704 = vadd.xlane.f32.xlu0 %v2703
        %v2705 = vpop.xlane.xlu0 %2704
        %v2706 = vsel %vm575, %v2623, 0.0
        %2707 = vadd.xlane.f32.xlu0 %v2706
        %v2708 = vpop.xlane.xlu0 %2707
        %v2709 = vsel %vm575, %v2625, 0.0
        %2710 = vadd.xlane.f32.xlu0 %v2709
        %v2711 = vpop.xlane.xlu0 %2710
        %v2712 = vsel %vm575, %v2627, 0.0
        %2713 = vadd.xlane.f32.xlu0 %v2712
        %v2714 = vpop.xlane.xlu0 %2713
        %v2715 = vsel %vm575, %v2629, 0.0
        %2716 = vadd.xlane.f32.xlu0 %v2715
        %v2717 = vpop.xlane.xlu0 %2716
        %v2718 = vsel %vm575, %v2631, 0.0
        %2719 = vadd.xlane.f32.xlu0 %v2718
        %v2720 = vpop.xlane.xlu0 %2719
        %v2721 = vsel %vm575, %v2633, 0.0
        %2722 = vadd.xlane.f32.xlu0 %v2721
        %v2723 = vpop.xlane.xlu0 %2722
        %v2724 = vsel %vm575, %v2635, 0.0
        %2725 = vadd.xlane.f32.xlu0 %v2724
        %v2726 = vpop.xlane.xlu0 %2725
        %v2727 = vsel %vm575, %v2637, 0.0
        %2728 = vadd.xlane.f32.xlu0 %v2727
        %v2729 = vpop.xlane.xlu0 %2728
        %v2730 = vsel %vm575, %v2639, 0.0
        %2731 = vadd.xlane.f32.xlu0 %v2730
        %v2732 = vpop.xlane.xlu0 %2731
        %v2733 = vsel %vm575, %v2641, 0.0
        %2734 = vadd.xlane.f32.xlu0 %v2733
        %v2735 = vpop.xlane.xlu0 %2734
        %v2736 = vsel %vm575, %v2643, 0.0
        %2737 = vadd.xlane.f32.xlu0 %v2736
        %v2738 = vpop.xlane.xlu0 %2737
        %v2739 = vsel %vm575, %v2645, 0.0
        %2740 = vadd.xlane.f32.xlu0 %v2739
        %v2741 = vpop.xlane.xlu0 %2740
        %v2742 = vrcp.pop %v2648
        %v2743 = vrcp.pop %v2651
        %v2744 = vrcp.pop %v2654
        %v2745 = vrcp.pop %v2657
        %v2746 = vrcp.pop %v2660
        %v2747 = vrcp.pop %v2663
        %v2748 = vrcp.pop %v2666
        %v2749 = vrcp.pop %v2669
        %v2750 = vrcp.pop %v2672
        %v2751 = vrcp.pop %v2675
        %v2752 = vrcp.pop %v2678
        %v2753 = vrcp.pop %v2681
        %v2754 = vrcp.pop %v2684
        %v2755 = vrcp.pop %v2687
        %v2756 = vrcp.pop %v2690
        %v2757 = vrcp.pop %v2693
        %v2758 = vrcp.pop %v2696
        %v2759 = vrcp.pop %v2699
        %v2760 = vrcp.pop %v2702
        %v2761 = vrcp.pop %v2705
        %v2762 = vrcp.pop %v2708
        %v2763 = vrcp.pop %v2711
        %v2764 = vrcp.pop %v2714
        %v2765 = vrcp.pop %v2717
        %v2766 = vrcp.pop %v2720
        %v2767 = vrcp.pop %v2723
        %v2768 = vrcp.pop %v2726
        %v2769 = vrcp.pop %v2729
        %v2770 = vrcp.pop %v2732
        %v2771 = vrcp.pop %v2735
        %v2772 = vrcp.pop %v2738
        %v2773 = vrcp.pop %v2741
        %v2774 = vmul.f32 %v2583, %v2742
        %v2775 = vmul.f32 %v2585, %v2743
        %v2776 = vmul.f32 %v2587, %v2744
        %v2777 = vmul.f32 %v2589, %v2745
        %v2778 = vmul.f32 %v2591, %v2746
        %v2779 = vmul.f32 %v2593, %v2747
        %v2780 = vmul.f32 %v2595, %v2748
        %v2781 = vmul.f32 %v2597, %v2749
        %v2782 = vmul.f32 %v2599, %v2750
        %v2783 = vmul.f32 %v2601, %v2751
        %v2784 = vmul.f32 %v2603, %v2752
        %v2785 = vmul.f32 %v2605, %v2753
        %v2786 = vmul.f32 %v2607, %v2754
        %v2787 = vmul.f32 %v2609, %v2755
        %v2788 = vmul.f32 %v2611, %v2756
        %v2789 = vmul.f32 %v2613, %v2757
        %v2790 = vmul.f32 %v2615, %v2758
        %v2791 = vmul.f32 %v2617, %v2759
        %v2792 = vmul.f32 %v2619, %v2760
        %v2793 = vmul.f32 %v2621, %v2761
        %v2794 = vmul.f32 %v2623, %v2762
        %v2795 = vmul.f32 %v2625, %v2763
        %v2796 = vmul.f32 %v2627, %v2764
        %v2797 = vmul.f32 %v2629, %v2765
        %v2798 = vmul.f32 %v2631, %v2766
        %v2799 = vmul.f32 %v2633, %v2767
        %v2800 = vmul.f32 %v2635, %v2768
        %v2801 = vmul.f32 %v2637, %v2769
        %v2802 = vmul.f32 %v2639, %v2770
        %v2803 = vmul.f32 %v2641, %v2771
        %v2804 = vmul.f32 %v2643, %v2772
        %v2805 = vmul.f32 %v2645, %v2773
        %v2807 = vsel %vm575, %v2774, 0
        %v2810 = vsel %vm575, %v2775, 0
        %v2813 = vsel %vm575, %v2776, 0
        %v2816 = vsel %vm575, %v2777, 0
        %2818 = vmatprep.subr.mxu0 0.0
        %2819 = vmatpush1.msra.mxu0 %v1403
        %2820 = vmatprep.subr.mxu0 0.0
        %2821 = vmatpush1.msra.mxu0 %v1408
        %2822 = vmatprep.subr.mxu0 0.0
        %2823 = vmatpush1.msra.mxu0 %v1413
        %2824 = vmatprep.subr.mxu0 0.0
        %2825 = vmatpush1.msra.mxu0 %v1418
        %2826 = vmatprep.subr.mxu0 0.0
        %2827 = vmatpush1.msra.mxu0 0.0
        %2828 = vmatprep.subr.mxu0 0.0
        %2829 = vmatpush1.msra.mxu0 0.0
        %2830 = vmatprep.subr.mxu0 0.0
        %2831 = vmatpush1.msra.mxu0 0.0
        %2832 = vmatprep.subr.mxu0 0.0
        %2833 = vmatpush1.msra.mxu0 0.0
        %2834 = vmatprep.subr.mxu0 0.0
        %2835 = vmatpush1.msra.mxu0 0.0
        %2836 = vmatprep.subr.mxu0 0.0
        %2837 = vmatpush1.msra.mxu0 0.0
        %2838 = vmatprep.subr.mxu0 0.0
        %2839 = vmatpush1.msra.mxu0 0.0
        %2840 = vmatprep.subr.mxu0 0.0
        %2841 = vmatpush1.msra.mxu0 0.0
        %2842 = vmatprep.subr.mxu0 0.0
        %2843 = vmatpush1.msra.mxu0 0.0
        %2844 = vmatprep.subr.mxu0 0.0
        %2845 = vmatpush1.msra.mxu0 0.0
        %2846 = vmatprep.subr.mxu0 0.0
        %2847 = vmatpush1.msra.mxu0 0.0
        %2848 = vmatprep.subr.mxu0 0.0
        %2849 = vmatpush1.msra.mxu0 0.0
        %2850 = vmatprep.subr.mxu0 0.0
        %2851 = vmatpush1.msra.mxu0 0.0
        %2852 = vmatprep.subr.mxu0 0.0
        %2853 = vmatpush1.msra.mxu0 0.0
        %2854 = vmatprep.subr.mxu0 0.0
        %2855 = vmatpush1.msra.mxu0 0.0
        %2856 = vmatprep.subr.mxu0 0.0
        %2857 = vmatpush1.msra.mxu0 0.0
        %2858 = vmatprep.subr.mxu0 0.0
        %2859 = vmatpush1.msra.mxu0 0.0
        %2860 = vmatprep.subr.mxu0 0.0
        %2861 = vmatpush1.msra.mxu0 0.0
        %2862 = vmatprep.subr.mxu0 0.0
        %2863 = vmatpush1.msra.mxu0 0.0
        %2864 = vmatprep.subr.mxu0 0.0
        %2865 = vmatpush1.msra.mxu0 0.0
        %2866 = vmatprep.subr.mxu0 0.0
        %2867 = vmatpush1.msra.mxu0 0.0
        %2868 = vmatprep.subr.mxu0 0.0
        %2869 = vmatpush1.msra.mxu0 0.0
        %2870 = vmatprep.subr.mxu0 0.0
        %2871 = vmatpush1.msra.mxu0 0.0
        %2872 = vmatprep.subr.mxu0 0.0
        %2873 = vmatpush1.msra.mxu0 0.0
        %2874 = vmatprep.subr.mxu0 0.0
        %2875 = vmatpush1.msra.mxu0 0.0
        %2876 = vmatprep.subr.mxu0 0.0
        %2877 = vmatpush1.msra.mxu0 0.0
        %2878 = vmatprep.subr.mxu0 0.0
        %2879 = vmatpush1.msra.mxu0 0.0
        %2880 = vmatprep.subr.mxu0 0.0
        %2881 = vmatpush1.msra.mxu0 0.0
        %2882 = vmatprep.mubr.f32.mxu0 0.0
        %2883 = vmatmul.mubr.f32.gmra.mrb[0].mxu0 %v2807
        %v2884 = vpop.f32.mrb[0].mxu0
        %v2885 = vadd.f32 0.0, %v2884
        %v2886 = vpop.f32.mrb[0].mxu0
        %2887 = vmatprep.mubr.f32.mxu0 0.0
        %2888 = vmatmul.mubr.f32.gmra.mrb[0].mxu0 %v2810
        %v2889 = vpop.f32.mrb[0].mxu0
        %v2890 = vadd.f32 0.0, %v2889
        %v2891 = vpop.f32.mrb[0].mxu0
        %2892 = vmatprep.mubr.f32.mxu0 0.0
        %2893 = vmatmul.mubr.f32.gmra.mrb[0].mxu0 %v2813
        %v2894 = vpop.f32.mrb[0].mxu0
        %v2895 = vadd.f32 0.0, %v2894
        %v2896 = vpop.f32.mrb[0].mxu0
        %2897 = vmatprep.mubr.f32.mxu0 0.0
        %2898 = vmatmul.mubr.f32.gmra.mrb[0].mxu0 %v2816
        %v2899 = vpop.f32.mrb[0].mxu0
        %v2900 = vadd.f32 0.0, %v2899
        %v2901 = vpop.f32.mrb[0].mxu0
        %2902 = vdwg.mxu0
        %v2904 = vsel %vm575, %v2778, 0
        %v2907 = vsel %vm575, %v2779, 0
        %v2910 = vsel %vm575, %v2780, 0
        %v2913 = vsel %vm575, %v2781, 0
        %2915 = vmatprep.subr.mxu0 0.0
        %2916 = vmatpush1.msra.mxu0 %v1423
        %2917 = vmatprep.subr.mxu0 0.0
        %2918 = vmatpush1.msra.mxu0 %v1428
        %2919 = vmatprep.subr.mxu0 0.0
        %2920 = vmatpush1.msra.mxu0 %v1433
        %2921 = vmatprep.subr.mxu0 0.0
        %2922 = vmatpush1.msra.mxu0 %v1438
        %2923 = vmatprep.subr.mxu0 0.0
        %2924 = vmatpush1.msra.mxu0 0.0
        %2925 = vmatprep.subr.mxu0 0.0
        %2926 = vmatpush1.msra.mxu0 0.0
        %2927 = vmatprep.subr.mxu0 0.0
        %2928 = vmatpush1.msra.mxu0 0.0
        %2929 = vmatprep.subr.mxu0 0.0
        %2930 = vmatpush1.msra.mxu0 0.0
        %2931 = vmatprep.subr.mxu0 0.0
        %2932 = vmatpush1.msra.mxu0 0.0
        %2933 = vmatprep.subr.mxu0 0.0
        %2934 = vmatpush1.msra.mxu0 0.0
        %2935 = vmatprep.subr.mxu0 0.0
        %2936 = vmatpush1.msra.mxu0 0.0
        %2937 = vmatprep.subr.mxu0 0.0
        %2938 = vmatpush1.msra.mxu0 0.0
        %2939 = vmatprep.subr.mxu0 0.0
        %2940 = vmatpush1.msra.mxu0 0.0
        %2941 = vmatprep.subr.mxu0 0.0
        %2942 = vmatpush1.msra.mxu0 0.0
        %2943 = vmatprep.subr.mxu0 0.0
        %2944 = vmatpush1.msra.mxu0 0.0
        %2945 = vmatprep.subr.mxu0 0.0
        %2946 = vmatpush1.msra.mxu0 0.0
        %2947 = vmatprep.subr.mxu0 0.0
        %2948 = vmatpush1.msra.mxu0 0.0
        %2949 = vmatprep.subr.mxu0 0.0
        %2950 = vmatpush1.msra.mxu0 0.0
        %2951 = vmatprep.subr.mxu0 0.0
        %2952 = vmatpush1.msra.mxu0 0.0
        %2953 = vmatprep.subr.mxu0 0.0
        %2954 = vmatpush1.msra.mxu0 0.0
        %2955 = vmatprep.subr.mxu0 0.0
        %2956 = vmatpush1.msra.mxu0 0.0
        %2957 = vmatprep.subr.mxu0 0.0
        %2958 = vmatpush1.msra.mxu0 0.0
        %2959 = vmatprep.subr.mxu0 0.0
        %2960 = vmatpush1.msra.mxu0 0.0
        %2961 = vmatprep.subr.mxu0 0.0
        %2962 = vmatpush1.msra.mxu0 0.0
        %2963 = vmatprep.subr.mxu0 0.0
        %2964 = vmatpush1.msra.mxu0 0.0
        %2965 = vmatprep.subr.mxu0 0.0
        %2966 = vmatpush1.msra.mxu0 0.0
        %2967 = vmatprep.subr.mxu0 0.0
        %2968 = vmatpush1.msra.mxu0 0.0
        %2969 = vmatprep.subr.mxu0 0.0
        %2970 = vmatpush1.msra.mxu0 0.0
        %2971 = vmatprep.subr.mxu0 0.0
        %2972 = vmatpush1.msra.mxu0 0.0
        %2973 = vmatprep.subr.mxu0 0.0
        %2974 = vmatpush1.msra.mxu0 0.0
        %2975 = vmatprep.subr.mxu0 0.0
        %2976 = vmatpush1.msra.mxu0 0.0
        %2977 = vmatprep.subr.mxu0 0.0
        %2978 = vmatpush1.msra.mxu0 0.0
        %2979 = vmatprep.mubr.f32.mxu0 0.0
        %2980 = vmatmul.mubr.f32.gmra.mrb[0].mxu0 %v2904
        %v2981 = vpop.f32.mrb[0].mxu0
        %v2982 = vadd.f32 0.0, %v2981
        %v2983 = vpop.f32.mrb[0].mxu0
        %2984 = vmatprep.mubr.f32.mxu0 0.0
        %2985 = vmatmul.mubr.f32.gmra.mrb[0].mxu0 %v2907
        %v2986 = vpop.f32.mrb[0].mxu0
        %v2987 = vadd.f32 0.0, %v2986
        %v2988 = vpop.f32.mrb[0].mxu0
        %2989 = vmatprep.mubr.f32.mxu0 0.0
        %2990 = vmatmul.mubr.f32.gmra.mrb[0].mxu0 %v2910
        %v2991 = vpop.f32.mrb[0].mxu0
        %v2992 = vadd.f32 0.0, %v2991
        %v2993 = vpop.f32.mrb[0].mxu0
        %2994 = vmatprep.mubr.f32.mxu0 0.0
        %2995 = vmatmul.mubr.f32.gmra.mrb[0].mxu0 %v2913
        %v2996 = vpop.f32.mrb[0].mxu0
        %v2997 = vadd.f32 0.0, %v2996
        %v2998 = vpop.f32.mrb[0].mxu0
        %2999 = vdwg.mxu0
        %v3001 = vsel %vm575, %v2782, 0
        %v3004 = vsel %vm575, %v2783, 0
        %v3007 = vsel %vm575, %v2784, 0
        %v3010 = vsel %vm575, %v2785, 0
        %3012 = vmatprep.subr.mxu0 0.0
        %3013 = vmatpush1.msra.mxu0 %v1443
        %3014 = vmatprep.subr.mxu0 0.0
        %3015 = vmatpush1.msra.mxu0 %v1448
        %3016 = vmatprep.subr.mxu0 0.0
        %3017 = vmatpush1.msra.mxu0 %v1453
        %3018 = vmatprep.subr.mxu0 0.0
        %3019 = vmatpush1.msra.mxu0 %v1458
        %3020 = vmatprep.subr.mxu0 0.0
        %3021 = vmatpush1.msra.mxu0 0.0
        %3022 = vmatprep.subr.mxu0 0.0
        %3023 = vmatpush1.msra.mxu0 0.0
        %3024 = vmatprep.subr.mxu0 0.0
        %3025 = vmatpush1.msra.mxu0 0.0
        %3026 = vmatprep.subr.mxu0 0.0
        %3027 = vmatpush1.msra.mxu0 0.0
        %3028 = vmatprep.subr.mxu0 0.0
        %3029 = vmatpush1.msra.mxu0 0.0
        %3030 = vmatprep.subr.mxu0 0.0
        %3031 = vmatpush1.msra.mxu0 0.0
        %3032 = vmatprep.subr.mxu0 0.0
        %3033 = vmatpush1.msra.mxu0 0.0
        %3034 = vmatprep.subr.mxu0 0.0
        %3035 = vmatpush1.msra.mxu0 0.0
        %3036 = vmatprep.subr.mxu0 0.0
        %3037 = vmatpush1.msra.mxu0 0.0
        %3038 = vmatprep.subr.mxu0 0.0
        %3039 = vmatpush1.msra.mxu0 0.0
        %3040 = vmatprep.subr.mxu0 0.0
        %3041 = vmatpush1.msra.mxu0 0.0
        %3042 = vmatprep.subr.mxu0 0.0
        %3043 = vmatpush1.msra.mxu0 0.0
        %3044 = vmatprep.subr.mxu0 0.0
        %3045 = vmatpush1.msra.mxu0 0.0
        %3046 = vmatprep.subr.mxu0 0.0
        %3047 = vmatpush1.msra.mxu0 0.0
        %3048 = vmatprep.subr.mxu0 0.0
        %3049 = vmatpush1.msra.mxu0 0.0
        %3050 = vmatprep.subr.mxu0 0.0
        %3051 = vmatpush1.msra.mxu0 0.0
        %3052 = vmatprep.subr.mxu0 0.0
        %3053 = vmatpush1.msra.mxu0 0.0
        %3054 = vmatprep.subr.mxu0 0.0
        %3055 = vmatpush1.msra.mxu0 0.0
        %3056 = vmatprep.subr.mxu0 0.0
        %3057 = vmatpush1.msra.mxu0 0.0
        %3058 = vmatprep.subr.mxu0 0.0
        %3059 = vmatpush1.msra.mxu0 0.0
        %3060 = vmatprep.subr.mxu0 0.0
        %3061 = vmatpush1.msra.mxu0 0.0
        %3062 = vmatprep.subr.mxu0 0.0
        %3063 = vmatpush1.msra.mxu0 0.0
        %3064 = vmatprep.subr.mxu0 0.0
        %3065 = vmatpush1.msra.mxu0 0.0
        %3066 = vmatprep.subr.mxu0 0.0
        %3067 = vmatpush1.msra.mxu0 0.0
        %3068 = vmatprep.subr.mxu0 0.0
        %3069 = vmatpush1.msra.mxu0 0.0
        %3070 = vmatprep.subr.mxu0 0.0
        %3071 = vmatpush1.msra.mxu0 0.0
        %3072 = vmatprep.subr.mxu0 0.0
        %3073 = vmatpush1.msra.mxu0 0.0
        %3074 = vmatprep.subr.mxu0 0.0
        %3075 = vmatpush1.msra.mxu0 0.0
        %3076 = vmatprep.mubr.f32.mxu0 0.0
        %3077 = vmatmul.mubr.f32.gmra.mrb[0].mxu0 %v3001
        %v3078 = vpop.f32.mrb[0].mxu0
        %v3079 = vadd.f32 0.0, %v3078
        %v3080 = vpop.f32.mrb[0].mxu0
        %3081 = vmatprep.mubr.f32.mxu0 0.0
        %3082 = vmatmul.mubr.f32.gmra.mrb[0].mxu0 %v3004
        %v3083 = vpop.f32.mrb[0].mxu0
        %v3084 = vadd.f32 0.0, %v3083
        %v3085 = vpop.f32.mrb[0].mxu0
        %3086 = vmatprep.mubr.f32.mxu0 0.0
        %3087 = vmatmul.mubr.f32.gmra.mrb[0].mxu0 %v3007
        %v3088 = vpop.f32.mrb[0].mxu0
        %v3089 = vadd.f32 0.0, %v3088
        %v3090 = vpop.f32.mrb[0].mxu0
        %3091 = vmatprep.mubr.f32.mxu0 0.0
        %3092 = vmatmul.mubr.f32.gmra.mrb[0].mxu0 %v3010
        %v3093 = vpop.f32.mrb[0].mxu0
        %v3094 = vadd.f32 0.0, %v3093
        %v3095 = vpop.f32.mrb[0].mxu0
        %3096 = vdwg.mxu0
        %v3098 = vsel %vm575, %v2786, 0
        %v3101 = vsel %vm575, %v2787, 0
        %v3104 = vsel %vm575, %v2788, 0
        %v3107 = vsel %vm575, %v2789, 0
        %3109 = vmatprep.subr.mxu0 0.0
        %3110 = vmatpush1.msra.mxu0 %v1463
        %3111 = vmatprep.subr.mxu0 0.0
        %3112 = vmatpush1.msra.mxu0 %v1468
        %3113 = vmatprep.subr.mxu0 0.0
        %3114 = vmatpush1.msra.mxu0 %v1473
        %3115 = vmatprep.subr.mxu0 0.0
        %3116 = vmatpush1.msra.mxu0 %v1478
        %3117 = vmatprep.subr.mxu0 0.0
        %3118 = vmatpush1.msra.mxu0 0.0
        %3119 = vmatprep.subr.mxu0 0.0
        %3120 = vmatpush1.msra.mxu0 0.0
        %3121 = vmatprep.subr.mxu0 0.0
        %3122 = vmatpush1.msra.mxu0 0.0
        %3123 = vmatprep.subr.mxu0 0.0
        %3124 = vmatpush1.msra.mxu0 0.0
        %3125 = vmatprep.subr.mxu0 0.0
        %3126 = vmatpush1.msra.mxu0 0.0
        %3127 = vmatprep.subr.mxu0 0.0
        %3128 = vmatpush1.msra.mxu0 0.0
        %3129 = vmatprep.subr.mxu0 0.0
        %3130 = vmatpush1.msra.mxu0 0.0
        %3131 = vmatprep.subr.mxu0 0.0
        %3132 = vmatpush1.msra.mxu0 0.0
        %3133 = vmatprep.subr.mxu0 0.0
        %3134 = vmatpush1.msra.mxu0 0.0
        %3135 = vmatprep.subr.mxu0 0.0
        %3136 = vmatpush1.msra.mxu0 0.0
        %3137 = vmatprep.subr.mxu0 0.0
        %3138 = vmatpush1.msra.mxu0 0.0
        %3139 = vmatprep.subr.mxu0 0.0
        %3140 = vmatpush1.msra.mxu0 0.0
        %3141 = vmatprep.subr.mxu0 0.0
        %3142 = vmatpush1.msra.mxu0 0.0
        %3143 = vmatprep.subr.mxu0 0.0
        %3144 = vmatpush1.msra.mxu0 0.0
        %3145 = vmatprep.subr.mxu0 0.0
        %3146 = vmatpush1.msra.mxu0 0.0
        %3147 = vmatprep.subr.mxu0 0.0
        %3148 = vmatpush1.msra.mxu0 0.0
        %3149 = vmatprep.subr.mxu0 0.0
        %3150 = vmatpush1.msra.mxu0 0.0
        %3151 = vmatprep.subr.mxu0 0.0
        %3152 = vmatpush1.msra.mxu0 0.0
        %3153 = vmatprep.subr.mxu0 0.0
        %3154 = vmatpush1.msra.mxu0 0.0
        %3155 = vmatprep.subr.mxu0 0.0
        %3156 = vmatpush1.msra.mxu0 0.0
        %3157 = vmatprep.subr.mxu0 0.0
        %3158 = vmatpush1.msra.mxu0 0.0
        %3159 = vmatprep.subr.mxu0 0.0
        %3160 = vmatpush1.msra.mxu0 0.0
        %3161 = vmatprep.subr.mxu0 0.0
        %3162 = vmatpush1.msra.mxu0 0.0
        %3163 = vmatprep.subr.mxu0 0.0
        %3164 = vmatpush1.msra.mxu0 0.0
        %3165 = vmatprep.subr.mxu0 0.0
        %3166 = vmatpush1.msra.mxu0 0.0
        %3167 = vmatprep.subr.mxu0 0.0
        %3168 = vmatpush1.msra.mxu0 0.0
        %3169 = vmatprep.subr.mxu0 0.0
        %3170 = vmatpush1.msra.mxu0 0.0
        %3171 = vmatprep.subr.mxu0 0.0
        %3172 = vmatpush1.msra.mxu0 0.0
        %3173 = vmatprep.mubr.f32.mxu0 0.0
        %3174 = vmatmul.mubr.f32.gmra.mrb[0].mxu0 %v3098
        %v3175 = vpop.f32.mrb[0].mxu0
        %v3176 = vadd.f32 0.0, %v3175
        %v3177 = vpop.f32.mrb[0].mxu0
        %3178 = vmatprep.mubr.f32.mxu0 0.0
        %3179 = vmatmul.mubr.f32.gmra.mrb[0].mxu0 %v3101
        %v3180 = vpop.f32.mrb[0].mxu0
        %v3181 = vadd.f32 0.0, %v3180
        %v3182 = vpop.f32.mrb[0].mxu0
        %3183 = vmatprep.mubr.f32.mxu0 0.0
        %3184 = vmatmul.mubr.f32.gmra.mrb[0].mxu0 %v3104
        %v3185 = vpop.f32.mrb[0].mxu0
        %v3186 = vadd.f32 0.0, %v3185
        %v3187 = vpop.f32.mrb[0].mxu0
        %3188 = vmatprep.mubr.f32.mxu0 0.0
        %3189 = vmatmul.mubr.f32.gmra.mrb[0].mxu0 %v3107
        %v3190 = vpop.f32.mrb[0].mxu0
        %v3191 = vadd.f32 0.0, %v3190
        %v3192 = vpop.f32.mrb[0].mxu0
        %3193 = vdwg.mxu0
        %v3195 = vsel %vm575, %v2790, 0
        %v3198 = vsel %vm575, %v2791, 0
        %v3201 = vsel %vm575, %v2792, 0
        %v3204 = vsel %vm575, %v2793, 0
        %3206 = vmatprep.subr.mxu0 0.0
        %3207 = vmatpush1.msra.mxu0 %v1483
        %3208 = vmatprep.subr.mxu0 0.0
        %3209 = vmatpush1.msra.mxu0 %v1488
        %3210 = vmatprep.subr.mxu0 0.0
        %3211 = vmatpush1.msra.mxu0 %v1493
        %3212 = vmatprep.subr.mxu0 0.0
        %3213 = vmatpush1.msra.mxu0 %v1498
        %3214 = vmatprep.subr.mxu0 0.0
        %3215 = vmatpush1.msra.mxu0 0.0
        %3216 = vmatprep.subr.mxu0 0.0
        %3217 = vmatpush1.msra.mxu0 0.0
        %3218 = vmatprep.subr.mxu0 0.0
        %3219 = vmatpush1.msra.mxu0 0.0
        %3220 = vmatprep.subr.mxu0 0.0
        %3221 = vmatpush1.msra.mxu0 0.0
        %3222 = vmatprep.subr.mxu0 0.0
        %3223 = vmatpush1.msra.mxu0 0.0
        %3224 = vmatprep.subr.mxu0 0.0
        %3225 = vmatpush1.msra.mxu0 0.0
        %3226 = vmatprep.subr.mxu0 0.0
        %3227 = vmatpush1.msra.mxu0 0.0
        %3228 = vmatprep.subr.mxu0 0.0
        %3229 = vmatpush1.msra.mxu0 0.0
        %3230 = vmatprep.subr.mxu0 0.0
        %3231 = vmatpush1.msra.mxu0 0.0
        %3232 = vmatprep.subr.mxu0 0.0
        %3233 = vmatpush1.msra.mxu0 0.0
        %3234 = vmatprep.subr.mxu0 0.0
        %3235 = vmatpush1.msra.mxu0 0.0
        %3236 = vmatprep.subr.mxu0 0.0
        %3237 = vmatpush1.msra.mxu0 0.0
        %3238 = vmatprep.subr.mxu0 0.0
        %3239 = vmatpush1.msra.mxu0 0.0
        %3240 = vmatprep.subr.mxu0 0.0
        %3241 = vmatpush1.msra.mxu0 0.0
        %3242 = vmatprep.subr.mxu0 0.0
        %3243 = vmatpush1.msra.mxu0 0.0
        %3244 = vmatprep.subr.mxu0 0.0
        %3245 = vmatpush1.msra.mxu0 0.0
        %3246 = vmatprep.subr.mxu0 0.0
        %3247 = vmatpush1.msra.mxu0 0.0
        %3248 = vmatprep.subr.mxu0 0.0
        %3249 = vmatpush1.msra.mxu0 0.0
        %3250 = vmatprep.subr.mxu0 0.0
        %3251 = vmatpush1.msra.mxu0 0.0
        %3252 = vmatprep.subr.mxu0 0.0
        %3253 = vmatpush1.msra.mxu0 0.0
        %3254 = vmatprep.subr.mxu0 0.0
        %3255 = vmatpush1.msra.mxu0 0.0
        %3256 = vmatprep.subr.mxu0 0.0
        %3257 = vmatpush1.msra.mxu0 0.0
        %3258 = vmatprep.subr.mxu0 0.0
        %3259 = vmatpush1.msra.mxu0 0.0
        %3260 = vmatprep.subr.mxu0 0.0
        %3261 = vmatpush1.msra.mxu0 0.0
        %3262 = vmatprep.subr.mxu0 0.0
        %3263 = vmatpush1.msra.mxu0 0.0
        %3264 = vmatprep.subr.mxu0 0.0
        %3265 = vmatpush1.msra.mxu0 0.0
        %3266 = vmatprep.subr.mxu0 0.0
        %3267 = vmatpush1.msra.mxu0 0.0
        %3268 = vmatprep.subr.mxu0 0.0
        %3269 = vmatpush1.msra.mxu0 0.0
        %3270 = vmatprep.mubr.f32.mxu0 0.0
        %3271 = vmatmul.mubr.f32.gmra.mrb[0].mxu0 %v3195
        %v3272 = vpop.f32.mrb[0].mxu0
        %v3273 = vadd.f32 0.0, %v3272
        %v3274 = vpop.f32.mrb[0].mxu0
        %3275 = vmatprep.mubr.f32.mxu0 0.0
        %3276 = vmatmul.mubr.f32.gmra.mrb[0].mxu0 %v3198
        %v3277 = vpop.f32.mrb[0].mxu0
        %v3278 = vadd.f32 0.0, %v3277
        %v3279 = vpop.f32.mrb[0].mxu0
        %3280 = vmatprep.mubr.f32.mxu0 0.0
        %3281 = vmatmul.mubr.f32.gmra.mrb[0].mxu0 %v3201
        %v3282 = vpop.f32.mrb[0].mxu0
        %v3283 = vadd.f32 0.0, %v3282
        %v3284 = vpop.f32.mrb[0].mxu0
        %3285 = vmatprep.mubr.f32.mxu0 0.0
        %3286 = vmatmul.mubr.f32.gmra.mrb[0].mxu0 %v3204
        %v3287 = vpop.f32.mrb[0].mxu0
        %v3288 = vadd.f32 0.0, %v3287
        %v3289 = vpop.f32.mrb[0].mxu0
        %3290 = vdwg.mxu0
        %v3292 = vsel %vm575, %v2794, 0
        %v3295 = vsel %vm575, %v2795, 0
        %v3298 = vsel %vm575, %v2796, 0
        %v3301 = vsel %vm575, %v2797, 0
        %3303 = vmatprep.subr.mxu0 0.0
        %3304 = vmatpush1.msra.mxu0 %v1503
        %3305 = vmatprep.subr.mxu0 0.0
        %3306 = vmatpush1.msra.mxu0 %v1508
        %3307 = vmatprep.subr.mxu0 0.0
        %3308 = vmatpush1.msra.mxu0 %v1513
        %3309 = vmatprep.subr.mxu0 0.0
        %3310 = vmatpush1.msra.mxu0 %v1518
        %3311 = vmatprep.subr.mxu0 0.0
        %3312 = vmatpush1.msra.mxu0 0.0
        %3313 = vmatprep.subr.mxu0 0.0
        %3314 = vmatpush1.msra.mxu0 0.0
        %3315 = vmatprep.subr.mxu0 0.0
        %3316 = vmatpush1.msra.mxu0 0.0
        %3317 = vmatprep.subr.mxu0 0.0
        %3318 = vmatpush1.msra.mxu0 0.0
        %3319 = vmatprep.subr.mxu0 0.0
        %3320 = vmatpush1.msra.mxu0 0.0
        %3321 = vmatprep.subr.mxu0 0.0
        %3322 = vmatpush1.msra.mxu0 0.0
        %3323 = vmatprep.subr.mxu0 0.0
        %3324 = vmatpush1.msra.mxu0 0.0
        %3325 = vmatprep.subr.mxu0 0.0
        %3326 = vmatpush1.msra.mxu0 0.0
        %3327 = vmatprep.subr.mxu0 0.0
        %3328 = vmatpush1.msra.mxu0 0.0
        %3329 = vmatprep.subr.mxu0 0.0
        %3330 = vmatpush1.msra.mxu0 0.0
        %3331 = vmatprep.subr.mxu0 0.0
        %3332 = vmatpush1.msra.mxu0 0.0
        %3333 = vmatprep.subr.mxu0 0.0
        %3334 = vmatpush1.msra.mxu0 0.0
        %3335 = vmatprep.subr.mxu0 0.0
        %3336 = vmatpush1.msra.mxu0 0.0
        %3337 = vmatprep.subr.mxu0 0.0
        %3338 = vmatpush1.msra.mxu0 0.0
        %3339 = vmatprep.subr.mxu0 0.0
        %3340 = vmatpush1.msra.mxu0 0.0
        %3341 = vmatprep.subr.mxu0 0.0
        %3342 = vmatpush1.msra.mxu0 0.0
        %3343 = vmatprep.subr.mxu0 0.0
        %3344 = vmatpush1.msra.mxu0 0.0
        %3345 = vmatprep.subr.mxu0 0.0
        %3346 = vmatpush1.msra.mxu0 0.0
        %3347 = vmatprep.subr.mxu0 0.0
        %3348 = vmatpush1.msra.mxu0 0.0
        %3349 = vmatprep.subr.mxu0 0.0
        %3350 = vmatpush1.msra.mxu0 0.0
        %3351 = vmatprep.subr.mxu0 0.0
        %3352 = vmatpush1.msra.mxu0 0.0
        %3353 = vmatprep.subr.mxu0 0.0
        %3354 = vmatpush1.msra.mxu0 0.0
        %3355 = vmatprep.subr.mxu0 0.0
        %3356 = vmatpush1.msra.mxu0 0.0
        %3357 = vmatprep.subr.mxu0 0.0
        %3358 = vmatpush1.msra.mxu0 0.0
        %3359 = vmatprep.subr.mxu0 0.0
        %3360 = vmatpush1.msra.mxu0 0.0
        %3361 = vmatprep.subr.mxu0 0.0
        %3362 = vmatpush1.msra.mxu0 0.0
        %3363 = vmatprep.subr.mxu0 0.0
        %3364 = vmatpush1.msra.mxu0 0.0
        %3365 = vmatprep.subr.mxu0 0.0
        %3366 = vmatpush1.msra.mxu0 0.0
        %3367 = vmatprep.mubr.f32.mxu0 0.0
        %3368 = vmatmul.mubr.f32.gmra.mrb[0].mxu0 %v3292
        %v3369 = vpop.f32.mrb[0].mxu0
        %v3370 = vadd.f32 0.0, %v3369
        %v3371 = vpop.f32.mrb[0].mxu0
        %3372 = vmatprep.mubr.f32.mxu0 0.0
        %3373 = vmatmul.mubr.f32.gmra.mrb[0].mxu0 %v3295
        %v3374 = vpop.f32.mrb[0].mxu0
        %v3375 = vadd.f32 0.0, %v3374
        %v3376 = vpop.f32.mrb[0].mxu0
        %3377 = vmatprep.mubr.f32.mxu0 0.0
        %3378 = vmatmul.mubr.f32.gmra.mrb[0].mxu0 %v3298
        %v3379 = vpop.f32.mrb[0].mxu0
        %v3380 = vadd.f32 0.0, %v3379
        %v3381 = vpop.f32.mrb[0].mxu0
        %3382 = vmatprep.mubr.f32.mxu0 0.0
        %3383 = vmatmul.mubr.f32.gmra.mrb[0].mxu0 %v3301
        %v3384 = vpop.f32.mrb[0].mxu0
        %v3385 = vadd.f32 0.0, %v3384
        %v3386 = vpop.f32.mrb[0].mxu0
        %3387 = vdwg.mxu0
        %v3389 = vsel %vm575, %v2798, 0
        %v3392 = vsel %vm575, %v2799, 0
        %v3395 = vsel %vm575, %v2800, 0
        %v3398 = vsel %vm575, %v2801, 0
        %3400 = vmatprep.subr.mxu0 0.0
        %3401 = vmatpush1.msra.mxu0 %v1523
        %3402 = vmatprep.subr.mxu0 0.0
        %3403 = vmatpush1.msra.mxu0 %v1528
        %3404 = vmatprep.subr.mxu0 0.0
        %3405 = vmatpush1.msra.mxu0 %v1533
        %3406 = vmatprep.subr.mxu0 0.0
        %3407 = vmatpush1.msra.mxu0 %v1538
        %3408 = vmatprep.subr.mxu0 0.0
        %3409 = vmatpush1.msra.mxu0 0.0
        %3410 = vmatprep.subr.mxu0 0.0
        %3411 = vmatpush1.msra.mxu0 0.0
        %3412 = vmatprep.subr.mxu0 0.0
        %3413 = vmatpush1.msra.mxu0 0.0
        %3414 = vmatprep.subr.mxu0 0.0
        %3415 = vmatpush1.msra.mxu0 0.0
        %3416 = vmatprep.subr.mxu0 0.0
        %3417 = vmatpush1.msra.mxu0 0.0
        %3418 = vmatprep.subr.mxu0 0.0
        %3419 = vmatpush1.msra.mxu0 0.0
        %3420 = vmatprep.subr.mxu0 0.0
        %3421 = vmatpush1.msra.mxu0 0.0
        %3422 = vmatprep.subr.mxu0 0.0
        %3423 = vmatpush1.msra.mxu0 0.0
        %3424 = vmatprep.subr.mxu0 0.0
        %3425 = vmatpush1.msra.mxu0 0.0
        %3426 = vmatprep.subr.mxu0 0.0
        %3427 = vmatpush1.msra.mxu0 0.0
        %3428 = vmatprep.subr.mxu0 0.0
        %3429 = vmatpush1.msra.mxu0 0.0
        %3430 = vmatprep.subr.mxu0 0.0
        %3431 = vmatpush1.msra.mxu0 0.0
        %3432 = vmatprep.subr.mxu0 0.0
        %3433 = vmatpush1.msra.mxu0 0.0
        %3434 = vmatprep.subr.mxu0 0.0
        %3435 = vmatpush1.msra.mxu0 0.0
        %3436 = vmatprep.subr.mxu0 0.0
        %3437 = vmatpush1.msra.mxu0 0.0
        %3438 = vmatprep.subr.mxu0 0.0
        %3439 = vmatpush1.msra.mxu0 0.0
        %3440 = vmatprep.subr.mxu0 0.0
        %3441 = vmatpush1.msra.mxu0 0.0
        %3442 = vmatprep.subr.mxu0 0.0
        %3443 = vmatpush1.msra.mxu0 0.0
        %3444 = vmatprep.subr.mxu0 0.0
        %3445 = vmatpush1.msra.mxu0 0.0
        %3446 = vmatprep.subr.mxu0 0.0
        %3447 = vmatpush1.msra.mxu0 0.0
        %3448 = vmatprep.subr.mxu0 0.0
        %3449 = vmatpush1.msra.mxu0 0.0
        %3450 = vmatprep.subr.mxu0 0.0
        %3451 = vmatpush1.msra.mxu0 0.0
        %3452 = vmatprep.subr.mxu0 0.0
        %3453 = vmatpush1.msra.mxu0 0.0
        %3454 = vmatprep.subr.mxu0 0.0
        %3455 = vmatpush1.msra.mxu0 0.0
        %3456 = vmatprep.subr.mxu0 0.0
        %3457 = vmatpush1.msra.mxu0 0.0
        %3458 = vmatprep.subr.mxu0 0.0
        %3459 = vmatpush1.msra.mxu0 0.0
        %3460 = vmatprep.subr.mxu0 0.0
        %3461 = vmatpush1.msra.mxu0 0.0
        %3462 = vmatprep.subr.mxu0 0.0
        %3463 = vmatpush1.msra.mxu0 0.0
        %3464 = vmatprep.mubr.f32.mxu0 0.0
        %3465 = vmatmul.mubr.f32.gmra.mrb[0].mxu0 %v3389
        %v3466 = vpop.f32.mrb[0].mxu0
        %v3467 = vadd.f32 0.0, %v3466
        %v3468 = vpop.f32.mrb[0].mxu0
        %3469 = vmatprep.mubr.f32.mxu0 0.0
        %3470 = vmatmul.mubr.f32.gmra.mrb[0].mxu0 %v3392
        %v3471 = vpop.f32.mrb[0].mxu0
        %v3472 = vadd.f32 0.0, %v3471
        %v3473 = vpop.f32.mrb[0].mxu0
        %3474 = vmatprep.mubr.f32.mxu0 0.0
        %3475 = vmatmul.mubr.f32.gmra.mrb[0].mxu0 %v3395
        %v3476 = vpop.f32.mrb[0].mxu0
        %v3477 = vadd.f32 0.0, %v3476
        %v3478 = vpop.f32.mrb[0].mxu0
        %3479 = vmatprep.mubr.f32.mxu0 0.0
        %3480 = vmatmul.mubr.f32.gmra.mrb[0].mxu0 %v3398
        %v3481 = vpop.f32.mrb[0].mxu0
        %v3482 = vadd.f32 0.0, %v3481
        %v3483 = vpop.f32.mrb[0].mxu0
        %3484 = vdwg.mxu0
        %v3486 = vsel %vm575, %v2802, 0
        %v3489 = vsel %vm575, %v2803, 0
        %v3492 = vsel %vm575, %v2804, 0
        %v3495 = vsel %vm575, %v2805, 0
        %3497 = vmatprep.subr.mxu0 0.0
        %3498 = vmatpush1.msra.mxu0 %v1543
        %3499 = vmatprep.subr.mxu0 0.0
        %3500 = vmatpush1.msra.mxu0 %v1548
        %3501 = vmatprep.subr.mxu0 0.0
        %3502 = vmatpush1.msra.mxu0 %v1553
        %3503 = vmatprep.subr.mxu0 0.0
        %3504 = vmatpush1.msra.mxu0 %v1558
        %3505 = vmatprep.subr.mxu0 0.0
        %3506 = vmatpush1.msra.mxu0 0.0
        %3507 = vmatprep.subr.mxu0 0.0
        %3508 = vmatpush1.msra.mxu0 0.0
        %3509 = vmatprep.subr.mxu0 0.0
        %3510 = vmatpush1.msra.mxu0 0.0
        %3511 = vmatprep.subr.mxu0 0.0
        %3512 = vmatpush1.msra.mxu0 0.0
        %3513 = vmatprep.subr.mxu0 0.0
        %3514 = vmatpush1.msra.mxu0 0.0
        %3515 = vmatprep.subr.mxu0 0.0
        %3516 = vmatpush1.msra.mxu0 0.0
        %3517 = vmatprep.subr.mxu0 0.0
        %3518 = vmatpush1.msra.mxu0 0.0
        %3519 = vmatprep.subr.mxu0 0.0
        %3520 = vmatpush1.msra.mxu0 0.0
        %3521 = vmatprep.subr.mxu0 0.0
        %3522 = vmatpush1.msra.mxu0 0.0
        %3523 = vmatprep.subr.mxu0 0.0
        %3524 = vmatpush1.msra.mxu0 0.0
        %3525 = vmatprep.subr.mxu0 0.0
        %3526 = vmatpush1.msra.mxu0 0.0
        %3527 = vmatprep.subr.mxu0 0.0
        %3528 = vmatpush1.msra.mxu0 0.0
        %3529 = vmatprep.subr.mxu0 0.0
        %3530 = vmatpush1.msra.mxu0 0.0
        %3531 = vmatprep.subr.mxu0 0.0
        %3532 = vmatpush1.msra.mxu0 0.0
        %3533 = vmatprep.subr.mxu0 0.0
        %3534 = vmatpush1.msra.mxu0 0.0
        %3535 = vmatprep.subr.mxu0 0.0
        %3536 = vmatpush1.msra.mxu0 0.0
        %3537 = vmatprep.subr.mxu0 0.0
        %3538 = vmatpush1.msra.mxu0 0.0
        %3539 = vmatprep.subr.mxu0 0.0
        %3540 = vmatpush1.msra.mxu0 0.0
        %3541 = vmatprep.subr.mxu0 0.0
        %3542 = vmatpush1.msra.mxu0 0.0
        %3543 = vmatprep.subr.mxu0 0.0
        %3544 = vmatpush1.msra.mxu0 0.0
        %3545 = vmatprep.subr.mxu0 0.0
        %3546 = vmatpush1.msra.mxu0 0.0
        %3547 = vmatprep.subr.mxu0 0.0
        %3548 = vmatpush1.msra.mxu0 0.0
        %3549 = vmatprep.subr.mxu0 0.0
        %3550 = vmatpush1.msra.mxu0 0.0
        %3551 = vmatprep.subr.mxu0 0.0
        %3552 = vmatpush1.msra.mxu0 0.0
        %3553 = vmatprep.subr.mxu0 0.0
        %3554 = vmatpush1.msra.mxu0 0.0
        %3555 = vmatprep.subr.mxu0 0.0
        %3556 = vmatpush1.msra.mxu0 0.0
        %3557 = vmatprep.subr.mxu0 0.0
        %3558 = vmatpush1.msra.mxu0 0.0
        %3559 = vmatprep.subr.mxu0 0.0
        %3560 = vmatpush1.msra.mxu0 0.0
        %3561 = vmatprep.mubr.f32.mxu0 0.0
        %3562 = vmatmul.mubr.f32.gmra.mrb[0].mxu0 %v3486
        %v3563 = vpop.f32.mrb[0].mxu0
        %v3564 = vadd.f32 0.0, %v3563
        %v3565 = vpop.f32.mrb[0].mxu0
        %3566 = vmatprep.mubr.f32.mxu0 0.0
        %3567 = vmatmul.mubr.f32.gmra.mrb[0].mxu0 %v3489
        %v3568 = vpop.f32.mrb[0].mxu0
        %v3569 = vadd.f32 0.0, %v3568
        %v3570 = vpop.f32.mrb[0].mxu0
        %3571 = vmatprep.mubr.f32.mxu0 0.0
        %3572 = vmatmul.mubr.f32.gmra.mrb[0].mxu0 %v3492
        %v3573 = vpop.f32.mrb[0].mxu0
        %v3574 = vadd.f32 0.0, %v3573
        %v3575 = vpop.f32.mrb[0].mxu0
        %3576 = vmatprep.mubr.f32.mxu0 0.0
        %3577 = vmatmul.mubr.f32.gmra.mrb[0].mxu0 %v3495
        %v3578 = vpop.f32.mrb[0].mxu0
        %v3579 = vadd.f32 0.0, %v3578
        %v3580 = vpop.f32.mrb[0].mxu0
        %3581 = vdwg.mxu0
        %3582 = vrot.lane.b32.xlu0 %v739, 120
        %v3583 = vpop.permute.xlu0 %3582
        %3584 = vrot.lane.b32.xlu0 %v744, 120
        %v3585 = vpop.permute.xlu0 %3584
        %3586 = vrot.lane.b32.xlu0 %v749, 120
        %v3587 = vpop.permute.xlu0 %3586
        %3588 = vrot.lane.b32.xlu0 %v754, 120
        %v3589 = vpop.permute.xlu0 %3588
        %3590 = vrot.lane.b32.xlu0 %v1071, 120
        %v3591 = vpop.permute.xlu0 %3590
        %3592 = vrot.lane.b32.xlu0 %v1076, 120
        %v3593 = vpop.permute.xlu0 %3592
        %3594 = vrot.lane.b32.xlu0 %v1081, 120
        %v3595 = vpop.permute.xlu0 %3594
        %3596 = vrot.lane.b32.xlu0 %v1086, 120
        %v3597 = vpop.permute.xlu0 %3596
        %v3598 = vsel %vm1581, %v3583, 0
        %v3600 = vsel %vm1581, %v3585, 0
        %v3602 = vsel %vm1581, %v3587, 0
        %v3604 = vsel %vm1581, %v3589, 0
        %v3606 = vsel %vm1581, %v3591, 0
        %v3608 = vsel %vm1581, %v3593, 0
        %v3610 = vsel %vm1581, %v3595, 0
        %v3612 = vsel %vm1581, %v3597, 0
        %3614 = vmatprep.subr.mxu0 0.0
        %3615 = vmatpush1.xpose.msra.mxu0 %v3606
        %3616 = vmatprep.subr.mxu0 0.0
        %3617 = vmatpush1.xpose.msra.mxu0 %v3608
        %3618 = vmatprep.subr.mxu0 0.0
        %3619 = vmatpush1.xpose.msra.mxu0 %v3610
        %3620 = vmatprep.subr.mxu0 0.0
        %3621 = vmatpush1.xpose.msra.mxu0 %v3612
        %3622 = vmatprep.subr.mxu0 0.0
        %3623 = vmatpush1.xpose.msra.mxu0 0.0
        %3624 = vmatprep.subr.mxu0 0.0
        %3625 = vmatpush1.xpose.msra.mxu0 0.0
        %3626 = vmatprep.subr.mxu0 0.0
        %3627 = vmatpush1.xpose.msra.mxu0 0.0
        %3628 = vmatprep.subr.mxu0 0.0
        %3629 = vmatpush1.xpose.msra.mxu0 0.0
        %3630 = vmatprep.subr.mxu0 0.0
        %3631 = vmatpush1.xpose.msra.mxu0 0.0
        %3632 = vmatprep.subr.mxu0 0.0
        %3633 = vmatpush1.xpose.msra.mxu0 0.0
        %3634 = vmatprep.subr.mxu0 0.0
        %3635 = vmatpush1.xpose.msra.mxu0 0.0
        %3636 = vmatprep.subr.mxu0 0.0
        %3637 = vmatpush1.xpose.msra.mxu0 0.0
        %3638 = vmatprep.subr.mxu0 0.0
        %3639 = vmatpush1.xpose.msra.mxu0 0.0
        %3640 = vmatprep.subr.mxu0 0.0
        %3641 = vmatpush1.xpose.msra.mxu0 0.0
        %3642 = vmatprep.subr.mxu0 0.0
        %3643 = vmatpush1.xpose.msra.mxu0 0.0
        %3644 = vmatprep.subr.mxu0 0.0
        %3645 = vmatpush1.xpose.msra.mxu0 0.0
        %3646 = vmatprep.subr.mxu0 0.0
        %3647 = vmatpush1.xpose.msra.mxu0 0.0
        %3648 = vmatprep.subr.mxu0 0.0
        %3649 = vmatpush1.xpose.msra.mxu0 0.0
        %3650 = vmatprep.subr.mxu0 0.0
        %3651 = vmatpush1.xpose.msra.mxu0 0.0
        %3652 = vmatprep.subr.mxu0 0.0
        %3653 = vmatpush1.xpose.msra.mxu0 0.0
        %3654 = vmatprep.subr.mxu0 0.0
        %3655 = vmatpush1.xpose.msra.mxu0 0.0
        %3656 = vmatprep.subr.mxu0 0.0
        %3657 = vmatpush1.xpose.msra.mxu0 0.0
        %3658 = vmatprep.subr.mxu0 0.0
        %3659 = vmatpush1.xpose.msra.mxu0 0.0
        %3660 = vmatprep.subr.mxu0 0.0
        %3661 = vmatpush1.xpose.msra.mxu0 0.0
        %3662 = vmatprep.subr.mxu0 0.0
        %3663 = vmatpush1.xpose.msra.mxu0 0.0
        %3664 = vmatprep.subr.mxu0 0.0
        %3665 = vmatpush1.xpose.msra.mxu0 0.0
        %3666 = vmatprep.subr.mxu0 0.0
        %3667 = vmatpush1.xpose.msra.mxu0 0.0
        %3668 = vmatprep.subr.mxu0 0.0
        %3669 = vmatpush1.xpose.msra.mxu0 0.0
        %3670 = vmatprep.subr.mxu0 0.0
        %3671 = vmatpush1.xpose.msra.mxu0 0.0
        %3672 = vmatprep.subr.mxu0 0.0
        %3673 = vmatpush1.xpose.msra.mxu0 0.0
        %3674 = vmatprep.subr.mxu0 0.0
        %3675 = vmatpush1.xpose.msra.mxu0 0.0
        %3676 = vmatprep.subr.mxu0 0.0
        %3677 = vmatpush1.xpose.msra.mxu0 0.0
        %3678 = vmatprep.mubr.f32.mxu0 0.0
        %3679 = vmatmul.mubr.f32.gmra.mrb[0].mxu0 %v3598
        %v3680 = vpop.f32.mrb[0].mxu0
        %v3681 = vadd.f32 %v1565, %v3680
        %v3682 = vpop.f32.mrb[0].mxu0
        %3683 = vmatprep.mubr.f32.mxu0 0.0
        %3684 = vmatmul.mubr.f32.gmra.mrb[0].mxu0 %v3600
        %v3685 = vpop.f32.mrb[0].mxu0
        %v3686 = vadd.f32 %v1566, %v3685
        %v3687 = vpop.f32.mrb[0].mxu0
        %3688 = vmatprep.mubr.f32.mxu0 0.0
        %3689 = vmatmul.mubr.f32.gmra.mrb[0].mxu0 %v3602
        %v3690 = vpop.f32.mrb[0].mxu0
        %v3691 = vadd.f32 %v1567, %v3690
        %v3692 = vpop.f32.mrb[0].mxu0
        %3693 = vmatprep.mubr.f32.mxu0 0.0
        %3694 = vmatmul.mubr.f32.gmra.mrb[0].mxu0 %v3604
        %v3695 = vpop.f32.mrb[0].mxu0
        %v3696 = vadd.f32 %v1568, %v3695
        %v3697 = vpop.f32.mrb[0].mxu0
        %3698 = vdwg.mxu0
        %3699 = vrot.lane.b32.xlu0 %v759, 120
        %v3700 = vpop.permute.xlu0 %3699
        %3701 = vrot.lane.b32.xlu0 %v764, 120
        %v3702 = vpop.permute.xlu0 %3701
        %3703 = vrot.lane.b32.xlu0 %v769, 120
        %v3704 = vpop.permute.xlu0 %3703
        %3705 = vrot.lane.b32.xlu0 %v774, 120
        %v3706 = vpop.permute.xlu0 %3705
        %3707 = vrot.lane.b32.xlu0 %v1091, 120
        %v3708 = vpop.permute.xlu0 %3707
        %3709 = vrot.lane.b32.xlu0 %v1096, 120
        %v3710 = vpop.permute.xlu0 %3709
        %3711 = vrot.lane.b32.xlu0 %v1101, 120
        %v3712 = vpop.permute.xlu0 %3711
        %3713 = vrot.lane.b32.xlu0 %v1106, 120
        %v3714 = vpop.permute.xlu0 %3713
        %v3715 = vsel %vm1581, %v3700, 0
        %v3717 = vsel %vm1581, %v3702, 0
        %v3719 = vsel %vm1581, %v3704, 0
        %v3721 = vsel %vm1581, %v3706, 0
        %v3723 = vsel %vm1581, %v3708, 0
        %v3725 = vsel %vm1581, %v3710, 0
        %v3727 = vsel %vm1581, %v3712, 0
        %v3729 = vsel %vm1581, %v3714, 0
        %3731 = vmatprep.subr.mxu0 0.0
        %3732 = vmatpush1.xpose.msra.mxu0 %v3723
        %3733 = vmatprep.subr.mxu0 0.0
        %3734 = vmatpush1.xpose.msra.mxu0 %v3725
        %3735 = vmatprep.subr.mxu0 0.0
        %3736 = vmatpush1.xpose.msra.mxu0 %v3727
        %3737 = vmatprep.subr.mxu0 0.0
        %3738 = vmatpush1.xpose.msra.mxu0 %v3729
        %3739 = vmatprep.subr.mxu0 0.0
        %3740 = vmatpush1.xpose.msra.mxu0 0.0
        %3741 = vmatprep.subr.mxu0 0.0
        %3742 = vmatpush1.xpose.msra.mxu0 0.0
        %3743 = vmatprep.subr.mxu0 0.0
        %3744 = vmatpush1.xpose.msra.mxu0 0.0
        %3745 = vmatprep.subr.mxu0 0.0
        %3746 = vmatpush1.xpose.msra.mxu0 0.0
        %3747 = vmatprep.subr.mxu0 0.0
        %3748 = vmatpush1.xpose.msra.mxu0 0.0
        %3749 = vmatprep.subr.mxu0 0.0
        %3750 = vmatpush1.xpose.msra.mxu0 0.0
        %3751 = vmatprep.subr.mxu0 0.0
        %3752 = vmatpush1.xpose.msra.mxu0 0.0
        %3753 = vmatprep.subr.mxu0 0.0
        %3754 = vmatpush1.xpose.msra.mxu0 0.0
        %3755 = vmatprep.subr.mxu0 0.0
        %3756 = vmatpush1.xpose.msra.mxu0 0.0
        %3757 = vmatprep.subr.mxu0 0.0
        %3758 = vmatpush1.xpose.msra.mxu0 0.0
        %3759 = vmatprep.subr.mxu0 0.0
        %3760 = vmatpush1.xpose.msra.mxu0 0.0
        %3761 = vmatprep.subr.mxu0 0.0
        %3762 = vmatpush1.xpose.msra.mxu0 0.0
        %3763 = vmatprep.subr.mxu0 0.0
        %3764 = vmatpush1.xpose.msra.mxu0 0.0
        %3765 = vmatprep.subr.mxu0 0.0
        %3766 = vmatpush1.xpose.msra.mxu0 0.0
        %3767 = vmatprep.subr.mxu0 0.0
        %3768 = vmatpush1.xpose.msra.mxu0 0.0
        %3769 = vmatprep.subr.mxu0 0.0
        %3770 = vmatpush1.xpose.msra.mxu0 0.0
        %3771 = vmatprep.subr.mxu0 0.0
        %3772 = vmatpush1.xpose.msra.mxu0 0.0
        %3773 = vmatprep.subr.mxu0 0.0
        %3774 = vmatpush1.xpose.msra.mxu0 0.0
        %3775 = vmatprep.subr.mxu0 0.0
        %3776 = vmatpush1.xpose.msra.mxu0 0.0
        %3777 = vmatprep.subr.mxu0 0.0
        %3778 = vmatpush1.xpose.msra.mxu0 0.0
        %3779 = vmatprep.subr.mxu0 0.0
        %3780 = vmatpush1.xpose.msra.mxu0 0.0
        %3781 = vmatprep.subr.mxu0 0.0
        %3782 = vmatpush1.xpose.msra.mxu0 0.0
        %3783 = vmatprep.subr.mxu0 0.0
        %3784 = vmatpush1.xpose.msra.mxu0 0.0
        %3785 = vmatprep.subr.mxu0 0.0
        %3786 = vmatpush1.xpose.msra.mxu0 0.0
        %3787 = vmatprep.subr.mxu0 0.0
        %3788 = vmatpush1.xpose.msra.mxu0 0.0
        %3789 = vmatprep.subr.mxu0 0.0
        %3790 = vmatpush1.xpose.msra.mxu0 0.0
        %3791 = vmatprep.subr.mxu0 0.0
        %3792 = vmatpush1.xpose.msra.mxu0 0.0
        %3793 = vmatprep.subr.mxu0 0.0
        %3794 = vmatpush1.xpose.msra.mxu0 0.0
        %3795 = vmatprep.mubr.f32.mxu0 0.0
        %3796 = vmatmul.mubr.f32.gmra.mrb[0].mxu0 %v3715
        %v3797 = vpop.f32.mrb[0].mxu0
        %v3798 = vadd.f32 %v1565, %v3797
        %v3799 = vpop.f32.mrb[0].mxu0
        %3800 = vmatprep.mubr.f32.mxu0 0.0
        %3801 = vmatmul.mubr.f32.gmra.mrb[0].mxu0 %v3717
        %v3802 = vpop.f32.mrb[0].mxu0
        %v3803 = vadd.f32 %v1566, %v3802
        %v3804 = vpop.f32.mrb[0].mxu0
        %3805 = vmatprep.mubr.f32.mxu0 0.0
        %3806 = vmatmul.mubr.f32.gmra.mrb[0].mxu0 %v3719
        %v3807 = vpop.f32.mrb[0].mxu0
        %v3808 = vadd.f32 %v1567, %v3807
        %v3809 = vpop.f32.mrb[0].mxu0
        %3810 = vmatprep.mubr.f32.mxu0 0.0
        %3811 = vmatmul.mubr.f32.gmra.mrb[0].mxu0 %v3721
        %v3812 = vpop.f32.mrb[0].mxu0
        %v3813 = vadd.f32 %v1568, %v3812
        %v3814 = vpop.f32.mrb[0].mxu0
        %3815 = vdwg.mxu0
        %3816 = vrot.lane.b32.xlu0 %v779, 120
        %v3817 = vpop.permute.xlu0 %3816
        %3818 = vrot.lane.b32.xlu0 %v784, 120
        %v3819 = vpop.permute.xlu0 %3818
        %3820 = vrot.lane.b32.xlu0 %v789, 120
        %v3821 = vpop.permute.xlu0 %3820
        %3822 = vrot.lane.b32.xlu0 %v794, 120
        %v3823 = vpop.permute.xlu0 %3822
        %3824 = vrot.lane.b32.xlu0 %v1111, 120
        %v3825 = vpop.permute.xlu0 %3824
        %3826 = vrot.lane.b32.xlu0 %v1116, 120
        %v3827 = vpop.permute.xlu0 %3826
        %3828 = vrot.lane.b32.xlu0 %v1121, 120
        %v3829 = vpop.permute.xlu0 %3828
        %3830 = vrot.lane.b32.xlu0 %v1126, 120
        %v3831 = vpop.permute.xlu0 %3830
        %v3832 = vsel %vm1581, %v3817, 0
        %v3834 = vsel %vm1581, %v3819, 0
        %v3836 = vsel %vm1581, %v3821, 0
        %v3838 = vsel %vm1581, %v3823, 0
        %v3840 = vsel %vm1581, %v3825, 0
        %v3842 = vsel %vm1581, %v3827, 0
        %v3844 = vsel %vm1581, %v3829, 0
        %v3846 = vsel %vm1581, %v3831, 0
        %3848 = vmatprep.subr.mxu0 0.0
        %3849 = vmatpush1.xpose.msra.mxu0 %v3840
        %3850 = vmatprep.subr.mxu0 0.0
        %3851 = vmatpush1.xpose.msra.mxu0 %v3842
        %3852 = vmatprep.subr.mxu0 0.0
        %3853 = vmatpush1.xpose.msra.mxu0 %v3844
        %3854 = vmatprep.subr.mxu0 0.0
        %3855 = vmatpush1.xpose.msra.mxu0 %v3846
        %3856 = vmatprep.subr.mxu0 0.0
        %3857 = vmatpush1.xpose.msra.mxu0 0.0
        %3858 = vmatprep.subr.mxu0 0.0
        %3859 = vmatpush1.xpose.msra.mxu0 0.0
        %3860 = vmatprep.subr.mxu0 0.0
        %3861 = vmatpush1.xpose.msra.mxu0 0.0
        %3862 = vmatprep.subr.mxu0 0.0
        %3863 = vmatpush1.xpose.msra.mxu0 0.0
        %3864 = vmatprep.subr.mxu0 0.0
        %3865 = vmatpush1.xpose.msra.mxu0 0.0
        %3866 = vmatprep.subr.mxu0 0.0
        %3867 = vmatpush1.xpose.msra.mxu0 0.0
        %3868 = vmatprep.subr.mxu0 0.0
        %3869 = vmatpush1.xpose.msra.mxu0 0.0
        %3870 = vmatprep.subr.mxu0 0.0
        %3871 = vmatpush1.xpose.msra.mxu0 0.0
        %3872 = vmatprep.subr.mxu0 0.0
        %3873 = vmatpush1.xpose.msra.mxu0 0.0
        %3874 = vmatprep.subr.mxu0 0.0
        %3875 = vmatpush1.xpose.msra.mxu0 0.0
        %3876 = vmatprep.subr.mxu0 0.0
        %3877 = vmatpush1.xpose.msra.mxu0 0.0
        %3878 = vmatprep.subr.mxu0 0.0
        %3879 = vmatpush1.xpose.msra.mxu0 0.0
        %3880 = vmatprep.subr.mxu0 0.0
        %3881 = vmatpush1.xpose.msra.mxu0 0.0
        %3882 = vmatprep.subr.mxu0 0.0
        %3883 = vmatpush1.xpose.msra.mxu0 0.0
        %3884 = vmatprep.subr.mxu0 0.0
        %3885 = vmatpush1.xpose.msra.mxu0 0.0
        %3886 = vmatprep.subr.mxu0 0.0
        %3887 = vmatpush1.xpose.msra.mxu0 0.0
        %3888 = vmatprep.subr.mxu0 0.0
        %3889 = vmatpush1.xpose.msra.mxu0 0.0
        %3890 = vmatprep.subr.mxu0 0.0
        %3891 = vmatpush1.xpose.msra.mxu0 0.0
        %3892 = vmatprep.subr.mxu0 0.0
        %3893 = vmatpush1.xpose.msra.mxu0 0.0
        %3894 = vmatprep.subr.mxu0 0.0
        %3895 = vmatpush1.xpose.msra.mxu0 0.0
        %3896 = vmatprep.subr.mxu0 0.0
        %3897 = vmatpush1.xpose.msra.mxu0 0.0
        %3898 = vmatprep.subr.mxu0 0.0
        %3899 = vmatpush1.xpose.msra.mxu0 0.0
        %3900 = vmatprep.subr.mxu0 0.0
        %3901 = vmatpush1.xpose.msra.mxu0 0.0
        %3902 = vmatprep.subr.mxu0 0.0
        %3903 = vmatpush1.xpose.msra.mxu0 0.0
        %3904 = vmatprep.subr.mxu0 0.0
        %3905 = vmatpush1.xpose.msra.mxu0 0.0
        %3906 = vmatprep.subr.mxu0 0.0
        %3907 = vmatpush1.xpose.msra.mxu0 0.0
        %3908 = vmatprep.subr.mxu0 0.0
        %3909 = vmatpush1.xpose.msra.mxu0 0.0
        %3910 = vmatprep.subr.mxu0 0.0
        %3911 = vmatpush1.xpose.msra.mxu0 0.0
        %3912 = vmatprep.mubr.f32.mxu0 0.0
        %3913 = vmatmul.mubr.f32.gmra.mrb[0].mxu0 %v3832
        %v3914 = vpop.f32.mrb[0].mxu0
        %v3915 = vadd.f32 %v1565, %v3914
        %v3916 = vpop.f32.mrb[0].mxu0
        %3917 = vmatprep.mubr.f32.mxu0 0.0
        %3918 = vmatmul.mubr.f32.gmra.mrb[0].mxu0 %v3834
        %v3919 = vpop.f32.mrb[0].mxu0
        %v3920 = vadd.f32 %v1566, %v3919
        %v3921 = vpop.f32.mrb[0].mxu0
        %3922 = vmatprep.mubr.f32.mxu0 0.0
        %3923 = vmatmul.mubr.f32.gmra.mrb[0].mxu0 %v3836
        %v3924 = vpop.f32.mrb[0].mxu0
        %v3925 = vadd.f32 %v1567, %v3924
        %v3926 = vpop.f32.mrb[0].mxu0
        %3927 = vmatprep.mubr.f32.mxu0 0.0
        %3928 = vmatmul.mubr.f32.gmra.mrb[0].mxu0 %v3838
        %v3929 = vpop.f32.mrb[0].mxu0
        %v3930 = vadd.f32 %v1568, %v3929
        %v3931 = vpop.f32.mrb[0].mxu0
        %3932 = vdwg.mxu0
        %3933 = vrot.lane.b32.xlu0 %v799, 120
        %v3934 = vpop.permute.xlu0 %3933
        %3935 = vrot.lane.b32.xlu0 %v804, 120
        %v3936 = vpop.permute.xlu0 %3935
        %3937 = vrot.lane.b32.xlu0 %v809, 120
        %v3938 = vpop.permute.xlu0 %3937
        %3939 = vrot.lane.b32.xlu0 %v814, 120
        %v3940 = vpop.permute.xlu0 %3939
        %3941 = vrot.lane.b32.xlu0 %v1131, 120
        %v3942 = vpop.permute.xlu0 %3941
        %3943 = vrot.lane.b32.xlu0 %v1136, 120
        %v3944 = vpop.permute.xlu0 %3943
        %3945 = vrot.lane.b32.xlu0 %v1141, 120
        %v3946 = vpop.permute.xlu0 %3945
        %3947 = vrot.lane.b32.xlu0 %v1146, 120
        %v3948 = vpop.permute.xlu0 %3947
        %v3949 = vsel %vm1581, %v3934, 0
        %v3951 = vsel %vm1581, %v3936, 0
        %v3953 = vsel %vm1581, %v3938, 0
        %v3955 = vsel %vm1581, %v3940, 0
        %v3957 = vsel %vm1581, %v3942, 0
        %v3959 = vsel %vm1581, %v3944, 0
        %v3961 = vsel %vm1581, %v3946, 0
        %v3963 = vsel %vm1581, %v3948, 0
        %3965 = vmatprep.subr.mxu0 0.0
        %3966 = vmatpush1.xpose.msra.mxu0 %v3957
        %3967 = vmatprep.subr.mxu0 0.0
        %3968 = vmatpush1.xpose.msra.mxu0 %v3959
        %3969 = vmatprep.subr.mxu0 0.0
        %3970 = vmatpush1.xpose.msra.mxu0 %v3961
        %3971 = vmatprep.subr.mxu0 0.0
        %3972 = vmatpush1.xpose.msra.mxu0 %v3963
        %3973 = vmatprep.subr.mxu0 0.0
        %3974 = vmatpush1.xpose.msra.mxu0 0.0
        %3975 = vmatprep.subr.mxu0 0.0
        %3976 = vmatpush1.xpose.msra.mxu0 0.0
        %3977 = vmatprep.subr.mxu0 0.0
        %3978 = vmatpush1.xpose.msra.mxu0 0.0
        %3979 = vmatprep.subr.mxu0 0.0
        %3980 = vmatpush1.xpose.msra.mxu0 0.0
        %3981 = vmatprep.subr.mxu0 0.0
        %3982 = vmatpush1.xpose.msra.mxu0 0.0
        %3983 = vmatprep.subr.mxu0 0.0
        %3984 = vmatpush1.xpose.msra.mxu0 0.0
        %3985 = vmatprep.subr.mxu0 0.0
        %3986 = vmatpush1.xpose.msra.mxu0 0.0
        %3987 = vmatprep.subr.mxu0 0.0
        %3988 = vmatpush1.xpose.msra.mxu0 0.0
        %3989 = vmatprep.subr.mxu0 0.0
        %3990 = vmatpush1.xpose.msra.mxu0 0.0
        %3991 = vmatprep.subr.mxu0 0.0
        %3992 = vmatpush1.xpose.msra.mxu0 0.0
        %3993 = vmatprep.subr.mxu0 0.0
        %3994 = vmatpush1.xpose.msra.mxu0 0.0
        %3995 = vmatprep.subr.mxu0 0.0
        %3996 = vmatpush1.xpose.msra.mxu0 0.0
        %3997 = vmatprep.subr.mxu0 0.0
        %3998 = vmatpush1.xpose.msra.mxu0 0.0
        %3999 = vmatprep.subr.mxu0 0.0
        %4000 = vmatpush1.xpose.msra.mxu0 0.0
        %4001 = vmatprep.subr.mxu0 0.0
        %4002 = vmatpush1.xpose.msra.mxu0 0.0
        %4003 = vmatprep.subr.mxu0 0.0
        %4004 = vmatpush1.xpose.msra.mxu0 0.0
        %4005 = vmatprep.subr.mxu0 0.0
        %4006 = vmatpush1.xpose.msra.mxu0 0.0
        %4007 = vmatprep.subr.mxu0 0.0
        %4008 = vmatpush1.xpose.msra.mxu0 0.0
        %4009 = vmatprep.subr.mxu0 0.0
        %4010 = vmatpush1.xpose.msra.mxu0 0.0
        %4011 = vmatprep.subr.mxu0 0.0
        %4012 = vmatpush1.xpose.msra.mxu0 0.0
        %4013 = vmatprep.subr.mxu0 0.0
        %4014 = vmatpush1.xpose.msra.mxu0 0.0
        %4015 = vmatprep.subr.mxu0 0.0
        %4016 = vmatpush1.xpose.msra.mxu0 0.0
        %4017 = vmatprep.subr.mxu0 0.0
        %4018 = vmatpush1.xpose.msra.mxu0 0.0
        %4019 = vmatprep.subr.mxu0 0.0
        %4020 = vmatpush1.xpose.msra.mxu0 0.0
        %4021 = vmatprep.subr.mxu0 0.0
        %4022 = vmatpush1.xpose.msra.mxu0 0.0
        %4023 = vmatprep.subr.mxu0 0.0
        %4024 = vmatpush1.xpose.msra.mxu0 0.0
        %4025 = vmatprep.subr.mxu0 0.0
        %4026 = vmatpush1.xpose.msra.mxu0 0.0
        %4027 = vmatprep.subr.mxu0 0.0
        %4028 = vmatpush1.xpose.msra.mxu0 0.0
        %4029 = vmatprep.mubr.f32.mxu0 0.0
        %4030 = vmatmul.mubr.f32.gmra.mrb[0].mxu0 %v3949
        %v4031 = vpop.f32.mrb[0].mxu0
        %v4032 = vadd.f32 %v1565, %v4031
        %v4033 = vpop.f32.mrb[0].mxu0
        %4034 = vmatprep.mubr.f32.mxu0 0.0
        %4035 = vmatmul.mubr.f32.gmra.mrb[0].mxu0 %v3951
        %v4036 = vpop.f32.mrb[0].mxu0
        %v4037 = vadd.f32 %v1566, %v4036
        %v4038 = vpop.f32.mrb[0].mxu0
        %4039 = vmatprep.mubr.f32.mxu0 0.0
        %4040 = vmatmul.mubr.f32.gmra.mrb[0].mxu0 %v3953
        %v4041 = vpop.f32.mrb[0].mxu0
        %v4042 = vadd.f32 %v1567, %v4041
        %v4043 = vpop.f32.mrb[0].mxu0
        %4044 = vmatprep.mubr.f32.mxu0 0.0
        %4045 = vmatmul.mubr.f32.gmra.mrb[0].mxu0 %v3955
        %v4046 = vpop.f32.mrb[0].mxu0
        %v4047 = vadd.f32 %v1568, %v4046
        %v4048 = vpop.f32.mrb[0].mxu0
        %4049 = vdwg.mxu0
        %4050 = vrot.lane.b32.xlu0 %v819, 120
        %v4051 = vpop.permute.xlu0 %4050
        %4052 = vrot.lane.b32.xlu0 %v824, 120
        %v4053 = vpop.permute.xlu0 %4052
        %4054 = vrot.lane.b32.xlu0 %v829, 120
        %v4055 = vpop.permute.xlu0 %4054
        %4056 = vrot.lane.b32.xlu0 %v834, 120
        %v4057 = vpop.permute.xlu0 %4056
        %4058 = vrot.lane.b32.xlu0 %v1151, 120
        %v4059 = vpop.permute.xlu0 %4058
        %4060 = vrot.lane.b32.xlu0 %v1156, 120
        %v4061 = vpop.permute.xlu0 %4060
        %4062 = vrot.lane.b32.xlu0 %v1161, 120
        %v4063 = vpop.permute.xlu0 %4062
        %4064 = vrot.lane.b32.xlu0 %v1166, 120
        %v4065 = vpop.permute.xlu0 %4064
        %v4066 = vsel %vm1581, %v4051, 0
        %v4068 = vsel %vm1581, %v4053, 0
        %v4070 = vsel %vm1581, %v4055, 0
        %v4072 = vsel %vm1581, %v4057, 0
        %v4074 = vsel %vm1581, %v4059, 0
        %v4076 = vsel %vm1581, %v4061, 0
        %v4078 = vsel %vm1581, %v4063, 0
        %v4080 = vsel %vm1581, %v4065, 0
        %4082 = vmatprep.subr.mxu0 0.0
        %4083 = vmatpush1.xpose.msra.mxu0 %v4074
        %4084 = vmatprep.subr.mxu0 0.0
        %4085 = vmatpush1.xpose.msra.mxu0 %v4076
        %4086 = vmatprep.subr.mxu0 0.0
        %4087 = vmatpush1.xpose.msra.mxu0 %v4078
        %4088 = vmatprep.subr.mxu0 0.0
        %4089 = vmatpush1.xpose.msra.mxu0 %v4080
        %4090 = vmatprep.subr.mxu0 0.0
        %4091 = vmatpush1.xpose.msra.mxu0 0.0
        %4092 = vmatprep.subr.mxu0 0.0
        %4093 = vmatpush1.xpose.msra.mxu0 0.0
        %4094 = vmatprep.subr.mxu0 0.0
        %4095 = vmatpush1.xpose.msra.mxu0 0.0
        %4096 = vmatprep.subr.mxu0 0.0
        %4097 = vmatpush1.xpose.msra.mxu0 0.0
        %4098 = vmatprep.subr.mxu0 0.0
        %4099 = vmatpush1.xpose.msra.mxu0 0.0
        %4100 = vmatprep.subr.mxu0 0.0
        %4101 = vmatpush1.xpose.msra.mxu0 0.0
        %4102 = vmatprep.subr.mxu0 0.0
        %4103 = vmatpush1.xpose.msra.mxu0 0.0
        %4104 = vmatprep.subr.mxu0 0.0
        %4105 = vmatpush1.xpose.msra.mxu0 0.0
        %4106 = vmatprep.subr.mxu0 0.0
        %4107 = vmatpush1.xpose.msra.mxu0 0.0
        %4108 = vmatprep.subr.mxu0 0.0
        %4109 = vmatpush1.xpose.msra.mxu0 0.0
        %4110 = vmatprep.subr.mxu0 0.0
        %4111 = vmatpush1.xpose.msra.mxu0 0.0
        %4112 = vmatprep.subr.mxu0 0.0
        %4113 = vmatpush1.xpose.msra.mxu0 0.0
        %4114 = vmatprep.subr.mxu0 0.0
        %4115 = vmatpush1.xpose.msra.mxu0 0.0
        %4116 = vmatprep.subr.mxu0 0.0
        %4117 = vmatpush1.xpose.msra.mxu0 0.0
        %4118 = vmatprep.subr.mxu0 0.0
        %4119 = vmatpush1.xpose.msra.mxu0 0.0
        %4120 = vmatprep.subr.mxu0 0.0
        %4121 = vmatpush1.xpose.msra.mxu0 0.0
        %4122 = vmatprep.subr.mxu0 0.0
        %4123 = vmatpush1.xpose.msra.mxu0 0.0
        %4124 = vmatprep.subr.mxu0 0.0
        %4125 = vmatpush1.xpose.msra.mxu0 0.0
        %4126 = vmatprep.subr.mxu0 0.0
        %4127 = vmatpush1.xpose.msra.mxu0 0.0
        %4128 = vmatprep.subr.mxu0 0.0
        %4129 = vmatpush1.xpose.msra.mxu0 0.0
        %4130 = vmatprep.subr.mxu0 0.0
        %4131 = vmatpush1.xpose.msra.mxu0 0.0
        %4132 = vmatprep.subr.mxu0 0.0
        %4133 = vmatpush1.xpose.msra.mxu0 0.0
        %4134 = vmatprep.subr.mxu0 0.0
        %4135 = vmatpush1.xpose.msra.mxu0 0.0
        %4136 = vmatprep.subr.mxu0 0.0
        %4137 = vmatpush1.xpose.msra.mxu0 0.0
        %4138 = vmatprep.subr.mxu0 0.0
        %4139 = vmatpush1.xpose.msra.mxu0 0.0
        %4140 = vmatprep.subr.mxu0 0.0
        %4141 = vmatpush1.xpose.msra.mxu0 0.0
        %4142 = vmatprep.subr.mxu0 0.0
        %4143 = vmatpush1.xpose.msra.mxu0 0.0
        %4144 = vmatprep.subr.mxu0 0.0
        %4145 = vmatpush1.xpose.msra.mxu0 0.0
        %4146 = vmatprep.mubr.f32.mxu0 0.0
        %4147 = vmatmul.mubr.f32.gmra.mrb[0].mxu0 %v4066
        %v4148 = vpop.f32.mrb[0].mxu0
        %v4149 = vadd.f32 %v1565, %v4148
        %v4150 = vpop.f32.mrb[0].mxu0
        %4151 = vmatprep.mubr.f32.mxu0 0.0
        %4152 = vmatmul.mubr.f32.gmra.mrb[0].mxu0 %v4068
        %v4153 = vpop.f32.mrb[0].mxu0
        %v4154 = vadd.f32 %v1566, %v4153
        %v4155 = vpop.f32.mrb[0].mxu0
        %4156 = vmatprep.mubr.f32.mxu0 0.0
        %4157 = vmatmul.mubr.f32.gmra.mrb[0].mxu0 %v4070
        %v4158 = vpop.f32.mrb[0].mxu0
        %v4159 = vadd.f32 %v1567, %v4158
        %v4160 = vpop.f32.mrb[0].mxu0
        %4161 = vmatprep.mubr.f32.mxu0 0.0
        %4162 = vmatmul.mubr.f32.gmra.mrb[0].mxu0 %v4072
        %v4163 = vpop.f32.mrb[0].mxu0
        %v4164 = vadd.f32 %v1568, %v4163
        %v4165 = vpop.f32.mrb[0].mxu0
        %4166 = vdwg.mxu0
        %4167 = vrot.lane.b32.xlu0 %v839, 120
        %v4168 = vpop.permute.xlu0 %4167
        %4169 = vrot.lane.b32.xlu0 %v844, 120
        %v4170 = vpop.permute.xlu0 %4169
        %4171 = vrot.lane.b32.xlu0 %v849, 120
        %v4172 = vpop.permute.xlu0 %4171
        %4173 = vrot.lane.b32.xlu0 %v854, 120
        %v4174 = vpop.permute.xlu0 %4173
        %4175 = vrot.lane.b32.xlu0 %v1171, 120
        %v4176 = vpop.permute.xlu0 %4175
        %4177 = vrot.lane.b32.xlu0 %v1176, 120
        %v4178 = vpop.permute.xlu0 %4177
        %4179 = vrot.lane.b32.xlu0 %v1181, 120
        %v4180 = vpop.permute.xlu0 %4179
        %4181 = vrot.lane.b32.xlu0 %v1186, 120
        %v4182 = vpop.permute.xlu0 %4181
        %v4183 = vsel %vm1581, %v4168, 0
        %v4185 = vsel %vm1581, %v4170, 0
        %v4187 = vsel %vm1581, %v4172, 0
        %v4189 = vsel %vm1581, %v4174, 0
        %v4191 = vsel %vm1581, %v4176, 0
        %v4193 = vsel %vm1581, %v4178, 0
        %v4195 = vsel %vm1581, %v4180, 0
        %v4197 = vsel %vm1581, %v4182, 0
        %4199 = vmatprep.subr.mxu0 0.0
        %4200 = vmatpush1.xpose.msra.mxu0 %v4191
        %4201 = vmatprep.subr.mxu0 0.0
        %4202 = vmatpush1.xpose.msra.mxu0 %v4193
        %4203 = vmatprep.subr.mxu0 0.0
        %4204 = vmatpush1.xpose.msra.mxu0 %v4195
        %4205 = vmatprep.subr.mxu0 0.0
        %4206 = vmatpush1.xpose.msra.mxu0 %v4197
        %4207 = vmatprep.subr.mxu0 0.0
        %4208 = vmatpush1.xpose.msra.mxu0 0.0
        %4209 = vmatprep.subr.mxu0 0.0
        %4210 = vmatpush1.xpose.msra.mxu0 0.0
        %4211 = vmatprep.subr.mxu0 0.0
        %4212 = vmatpush1.xpose.msra.mxu0 0.0
        %4213 = vmatprep.subr.mxu0 0.0
        %4214 = vmatpush1.xpose.msra.mxu0 0.0
        %4215 = vmatprep.subr.mxu0 0.0
        %4216 = vmatpush1.xpose.msra.mxu0 0.0
        %4217 = vmatprep.subr.mxu0 0.0
        %4218 = vmatpush1.xpose.msra.mxu0 0.0
        %4219 = vmatprep.subr.mxu0 0.0
        %4220 = vmatpush1.xpose.msra.mxu0 0.0
        %4221 = vmatprep.subr.mxu0 0.0
        %4222 = vmatpush1.xpose.msra.mxu0 0.0
        %4223 = vmatprep.subr.mxu0 0.0
        %4224 = vmatpush1.xpose.msra.mxu0 0.0
        %4225 = vmatprep.subr.mxu0 0.0
        %4226 = vmatpush1.xpose.msra.mxu0 0.0
        %4227 = vmatprep.subr.mxu0 0.0
        %4228 = vmatpush1.xpose.msra.mxu0 0.0
        %4229 = vmatprep.subr.mxu0 0.0
        %4230 = vmatpush1.xpose.msra.mxu0 0.0
        %4231 = vmatprep.subr.mxu0 0.0
        %4232 = vmatpush1.xpose.msra.mxu0 0.0
        %4233 = vmatprep.subr.mxu0 0.0
        %4234 = vmatpush1.xpose.msra.mxu0 0.0
        %4235 = vmatprep.subr.mxu0 0.0
        %4236 = vmatpush1.xpose.msra.mxu0 0.0
        %4237 = vmatprep.subr.mxu0 0.0
        %4238 = vmatpush1.xpose.msra.mxu0 0.0
        %4239 = vmatprep.subr.mxu0 0.0
        %4240 = vmatpush1.xpose.msra.mxu0 0.0
        %4241 = vmatprep.subr.mxu0 0.0
        %4242 = vmatpush1.xpose.msra.mxu0 0.0
        %4243 = vmatprep.subr.mxu0 0.0
        %4244 = vmatpush1.xpose.msra.mxu0 0.0
        %4245 = vmatprep.subr.mxu0 0.0
        %4246 = vmatpush1.xpose.msra.mxu0 0.0
        %4247 = vmatprep.subr.mxu0 0.0
        %4248 = vmatpush1.xpose.msra.mxu0 0.0
        %4249 = vmatprep.subr.mxu0 0.0
        %4250 = vmatpush1.xpose.msra.mxu0 0.0
        %4251 = vmatprep.subr.mxu0 0.0
        %4252 = vmatpush1.xpose.msra.mxu0 0.0
        %4253 = vmatprep.subr.mxu0 0.0
        %4254 = vmatpush1.xpose.msra.mxu0 0.0
        %4255 = vmatprep.subr.mxu0 0.0
        %4256 = vmatpush1.xpose.msra.mxu0 0.0
        %4257 = vmatprep.subr.mxu0 0.0
        %4258 = vmatpush1.xpose.msra.mxu0 0.0
        %4259 = vmatprep.subr.mxu0 0.0
        %4260 = vmatpush1.xpose.msra.mxu0 0.0
        %4261 = vmatprep.subr.mxu0 0.0
        %4262 = vmatpush1.xpose.msra.mxu0 0.0
        %4263 = vmatprep.mubr.f32.mxu0 0.0
        %4264 = vmatmul.mubr.f32.gmra.mrb[0].mxu0 %v4183
        %v4265 = vpop.f32.mrb[0].mxu0
        %v4266 = vadd.f32 %v1565, %v4265
        %v4267 = vpop.f32.mrb[0].mxu0
        %4268 = vmatprep.mubr.f32.mxu0 0.0
        %4269 = vmatmul.mubr.f32.gmra.mrb[0].mxu0 %v4185
        %v4270 = vpop.f32.mrb[0].mxu0
        %v4271 = vadd.f32 %v1566, %v4270
        %v4272 = vpop.f32.mrb[0].mxu0
        %4273 = vmatprep.mubr.f32.mxu0 0.0
        %4274 = vmatmul.mubr.f32.gmra.mrb[0].mxu0 %v4187
        %v4275 = vpop.f32.mrb[0].mxu0
        %v4276 = vadd.f32 %v1567, %v4275
        %v4277 = vpop.f32.mrb[0].mxu0
        %4278 = vmatprep.mubr.f32.mxu0 0.0
        %4279 = vmatmul.mubr.f32.gmra.mrb[0].mxu0 %v4189
        %v4280 = vpop.f32.mrb[0].mxu0
        %v4281 = vadd.f32 %v1568, %v4280
        %v4282 = vpop.f32.mrb[0].mxu0
        %4283 = vdwg.mxu0
        %4284 = vrot.lane.b32.xlu0 %v859, 120
        %v4285 = vpop.permute.xlu0 %4284
        %4286 = vrot.lane.b32.xlu0 %v864, 120
        %v4287 = vpop.permute.xlu0 %4286
        %4288 = vrot.lane.b32.xlu0 %v869, 120
        %v4289 = vpop.permute.xlu0 %4288
        %4290 = vrot.lane.b32.xlu0 %v874, 120
        %v4291 = vpop.permute.xlu0 %4290
        %4292 = vrot.lane.b32.xlu0 %v1191, 120
        %v4293 = vpop.permute.xlu0 %4292
        %4294 = vrot.lane.b32.xlu0 %v1196, 120
        %v4295 = vpop.permute.xlu0 %4294
        %4296 = vrot.lane.b32.xlu0 %v1201, 120
        %v4297 = vpop.permute.xlu0 %4296
        %4298 = vrot.lane.b32.xlu0 %v1206, 120
        %v4299 = vpop.permute.xlu0 %4298
        %v4300 = vsel %vm1581, %v4285, 0
        %v4302 = vsel %vm1581, %v4287, 0
        %v4304 = vsel %vm1581, %v4289, 0
        %v4306 = vsel %vm1581, %v4291, 0
        %v4308 = vsel %vm1581, %v4293, 0
        %v4310 = vsel %vm1581, %v4295, 0
        %v4312 = vsel %vm1581, %v4297, 0
        %v4314 = vsel %vm1581, %v4299, 0
        %4316 = vmatprep.subr.mxu0 0.0
        %4317 = vmatpush1.xpose.msra.mxu0 %v4308
        %4318 = vmatprep.subr.mxu0 0.0
        %4319 = vmatpush1.xpose.msra.mxu0 %v4310
        %4320 = vmatprep.subr.mxu0 0.0
        %4321 = vmatpush1.xpose.msra.mxu0 %v4312
        %4322 = vmatprep.subr.mxu0 0.0
        %4323 = vmatpush1.xpose.msra.mxu0 %v4314
        %4324 = vmatprep.subr.mxu0 0.0
        %4325 = vmatpush1.xpose.msra.mxu0 0.0
        %4326 = vmatprep.subr.mxu0 0.0
        %4327 = vmatpush1.xpose.msra.mxu0 0.0
        %4328 = vmatprep.subr.mxu0 0.0
        %4329 = vmatpush1.xpose.msra.mxu0 0.0
        %4330 = vmatprep.subr.mxu0 0.0
        %4331 = vmatpush1.xpose.msra.mxu0 0.0
        %4332 = vmatprep.subr.mxu0 0.0
        %4333 = vmatpush1.xpose.msra.mxu0 0.0
        %4334 = vmatprep.subr.mxu0 0.0
        %4335 = vmatpush1.xpose.msra.mxu0 0.0
        %4336 = vmatprep.subr.mxu0 0.0
        %4337 = vmatpush1.xpose.msra.mxu0 0.0
        %4338 = vmatprep.subr.mxu0 0.0
        %4339 = vmatpush1.xpose.msra.mxu0 0.0
        %4340 = vmatprep.subr.mxu0 0.0
        %4341 = vmatpush1.xpose.msra.mxu0 0.0
        %4342 = vmatprep.subr.mxu0 0.0
        %4343 = vmatpush1.xpose.msra.mxu0 0.0
        %4344 = vmatprep.subr.mxu0 0.0
        %4345 = vmatpush1.xpose.msra.mxu0 0.0
        %4346 = vmatprep.subr.mxu0 0.0
        %4347 = vmatpush1.xpose.msra.mxu0 0.0
        %4348 = vmatprep.subr.mxu0 0.0
        %4349 = vmatpush1.xpose.msra.mxu0 0.0
        %4350 = vmatprep.subr.mxu0 0.0
        %4351 = vmatpush1.xpose.msra.mxu0 0.0
        %4352 = vmatprep.subr.mxu0 0.0
        %4353 = vmatpush1.xpose.msra.mxu0 0.0
        %4354 = vmatprep.subr.mxu0 0.0
        %4355 = vmatpush1.xpose.msra.mxu0 0.0
        %4356 = vmatprep.subr.mxu0 0.0
        %4357 = vmatpush1.xpose.msra.mxu0 0.0
        %4358 = vmatprep.subr.mxu0 0.0
        %4359 = vmatpush1.xpose.msra.mxu0 0.0
        %4360 = vmatprep.subr.mxu0 0.0
        %4361 = vmatpush1.xpose.msra.mxu0 0.0
        %4362 = vmatprep.subr.mxu0 0.0
        %4363 = vmatpush1.xpose.msra.mxu0 0.0
        %4364 = vmatprep.subr.mxu0 0.0
        %4365 = vmatpush1.xpose.msra.mxu0 0.0
        %4366 = vmatprep.subr.mxu0 0.0
        %4367 = vmatpush1.xpose.msra.mxu0 0.0
        %4368 = vmatprep.subr.mxu0 0.0
        %4369 = vmatpush1.xpose.msra.mxu0 0.0
        %4370 = vmatprep.subr.mxu0 0.0
        %4371 = vmatpush1.xpose.msra.mxu0 0.0
        %4372 = vmatprep.subr.mxu0 0.0
        %4373 = vmatpush1.xpose.msra.mxu0 0.0
        %4374 = vmatprep.subr.mxu0 0.0
        %4375 = vmatpush1.xpose.msra.mxu0 0.0
        %4376 = vmatprep.subr.mxu0 0.0
        %4377 = vmatpush1.xpose.msra.mxu0 0.0
        %4378 = vmatprep.subr.mxu0 0.0
        %4379 = vmatpush1.xpose.msra.mxu0 0.0
        %4380 = vmatprep.mubr.f32.mxu0 0.0
        %4381 = vmatmul.mubr.f32.gmra.mrb[0].mxu0 %v4300
        %v4382 = vpop.f32.mrb[0].mxu0
        %v4383 = vadd.f32 %v1565, %v4382
        %v4384 = vpop.f32.mrb[0].mxu0
        %4385 = vmatprep.mubr.f32.mxu0 0.0
        %4386 = vmatmul.mubr.f32.gmra.mrb[0].mxu0 %v4302
        %v4387 = vpop.f32.mrb[0].mxu0
        %v4388 = vadd.f32 %v1566, %v4387
        %v4389 = vpop.f32.mrb[0].mxu0
        %4390 = vmatprep.mubr.f32.mxu0 0.0
        %4391 = vmatmul.mubr.f32.gmra.mrb[0].mxu0 %v4304
        %v4392 = vpop.f32.mrb[0].mxu0
        %v4393 = vadd.f32 %v1567, %v4392
        %v4394 = vpop.f32.mrb[0].mxu0
        %4395 = vmatprep.mubr.f32.mxu0 0.0
        %4396 = vmatmul.mubr.f32.gmra.mrb[0].mxu0 %v4306
        %v4397 = vpop.f32.mrb[0].mxu0
        %v4398 = vadd.f32 %v1568, %v4397
        %v4399 = vpop.f32.mrb[0].mxu0
        %4400 = vdwg.mxu0
        %4401 = vrot.lane.b32.xlu0 %v879, 120
        %v4402 = vpop.permute.xlu0 %4401
        %4403 = vrot.lane.b32.xlu0 %v884, 120
        %v4404 = vpop.permute.xlu0 %4403
        %4405 = vrot.lane.b32.xlu0 %v889, 120
        %v4406 = vpop.permute.xlu0 %4405
        %4407 = vrot.lane.b32.xlu0 %v894, 120
        %v4408 = vpop.permute.xlu0 %4407
        %4409 = vrot.lane.b32.xlu0 %v1211, 120
        %v4410 = vpop.permute.xlu0 %4409
        %4411 = vrot.lane.b32.xlu0 %v1216, 120
        %v4412 = vpop.permute.xlu0 %4411
        %4413 = vrot.lane.b32.xlu0 %v1221, 120
        %v4414 = vpop.permute.xlu0 %4413
        %4415 = vrot.lane.b32.xlu0 %v1226, 120
        %v4416 = vpop.permute.xlu0 %4415
        %v4417 = vsel %vm1581, %v4402, 0
        %v4419 = vsel %vm1581, %v4404, 0
        %v4421 = vsel %vm1581, %v4406, 0
        %v4423 = vsel %vm1581, %v4408, 0
        %v4425 = vsel %vm1581, %v4410, 0
        %v4427 = vsel %vm1581, %v4412, 0
        %v4429 = vsel %vm1581, %v4414, 0
        %v4431 = vsel %vm1581, %v4416, 0
        %4433 = vmatprep.subr.mxu0 0.0
        %4434 = vmatpush1.xpose.msra.mxu0 %v4425
        %4435 = vmatprep.subr.mxu0 0.0
        %4436 = vmatpush1.xpose.msra.mxu0 %v4427
        %4437 = vmatprep.subr.mxu0 0.0
        %4438 = vmatpush1.xpose.msra.mxu0 %v4429
        %4439 = vmatprep.subr.mxu0 0.0
        %4440 = vmatpush1.xpose.msra.mxu0 %v4431
        %4441 = vmatprep.subr.mxu0 0.0
        %4442 = vmatpush1.xpose.msra.mxu0 0.0
        %4443 = vmatprep.subr.mxu0 0.0
        %4444 = vmatpush1.xpose.msra.mxu0 0.0
        %4445 = vmatprep.subr.mxu0 0.0
        %4446 = vmatpush1.xpose.msra.mxu0 0.0
        %4447 = vmatprep.subr.mxu0 0.0
        %4448 = vmatpush1.xpose.msra.mxu0 0.0
        %4449 = vmatprep.subr.mxu0 0.0
        %4450 = vmatpush1.xpose.msra.mxu0 0.0
        %4451 = vmatprep.subr.mxu0 0.0
        %4452 = vmatpush1.xpose.msra.mxu0 0.0
        %4453 = vmatprep.subr.mxu0 0.0
        %4454 = vmatpush1.xpose.msra.mxu0 0.0
        %4455 = vmatprep.subr.mxu0 0.0
        %4456 = vmatpush1.xpose.msra.mxu0 0.0
        %4457 = vmatprep.subr.mxu0 0.0
        %4458 = vmatpush1.xpose.msra.mxu0 0.0
        %4459 = vmatprep.subr.mxu0 0.0
        %4460 = vmatpush1.xpose.msra.mxu0 0.0
        %4461 = vmatprep.subr.mxu0 0.0
        %4462 = vmatpush1.xpose.msra.mxu0 0.0
        %4463 = vmatprep.subr.mxu0 0.0
        %4464 = vmatpush1.xpose.msra.mxu0 0.0
        %4465 = vmatprep.subr.mxu0 0.0
        %4466 = vmatpush1.xpose.msra.mxu0 0.0
        %4467 = vmatprep.subr.mxu0 0.0
        %4468 = vmatpush1.xpose.msra.mxu0 0.0
        %4469 = vmatprep.subr.mxu0 0.0
        %4470 = vmatpush1.xpose.msra.mxu0 0.0
        %4471 = vmatprep.subr.mxu0 0.0
        %4472 = vmatpush1.xpose.msra.mxu0 0.0
        %4473 = vmatprep.subr.mxu0 0.0
        %4474 = vmatpush1.xpose.msra.mxu0 0.0
        %4475 = vmatprep.subr.mxu0 0.0
        %4476 = vmatpush1.xpose.msra.mxu0 0.0
        %4477 = vmatprep.subr.mxu0 0.0
        %4478 = vmatpush1.xpose.msra.mxu0 0.0
        %4479 = vmatprep.subr.mxu0 0.0
        %4480 = vmatpush1.xpose.msra.mxu0 0.0
        %4481 = vmatprep.subr.mxu0 0.0
        %4482 = vmatpush1.xpose.msra.mxu0 0.0
        %4483 = vmatprep.subr.mxu0 0.0
        %4484 = vmatpush1.xpose.msra.mxu0 0.0
        %4485 = vmatprep.subr.mxu0 0.0
        %4486 = vmatpush1.xpose.msra.mxu0 0.0
        %4487 = vmatprep.subr.mxu0 0.0
        %4488 = vmatpush1.xpose.msra.mxu0 0.0
        %4489 = vmatprep.subr.mxu0 0.0
        %4490 = vmatpush1.xpose.msra.mxu0 0.0
        %4491 = vmatprep.subr.mxu0 0.0
        %4492 = vmatpush1.xpose.msra.mxu0 0.0
        %4493 = vmatprep.subr.mxu0 0.0
        %4494 = vmatpush1.xpose.msra.mxu0 0.0
        %4495 = vmatprep.subr.mxu0 0.0
        %4496 = vmatpush1.xpose.msra.mxu0 0.0
        %4497 = vmatprep.mubr.f32.mxu0 0.0
        %4498 = vmatmul.mubr.f32.gmra.mrb[0].mxu0 %v4417
        %v4499 = vpop.f32.mrb[0].mxu0
        %v4500 = vadd.f32 %v1565, %v4499
        %v4501 = vpop.f32.mrb[0].mxu0
        %4502 = vmatprep.mubr.f32.mxu0 0.0
        %4503 = vmatmul.mubr.f32.gmra.mrb[0].mxu0 %v4419
        %v4504 = vpop.f32.mrb[0].mxu0
        %v4505 = vadd.f32 %v1566, %v4504
        %v4506 = vpop.f32.mrb[0].mxu0
        %4507 = vmatprep.mubr.f32.mxu0 0.0
        %4508 = vmatmul.mubr.f32.gmra.mrb[0].mxu0 %v4421
        %v4509 = vpop.f32.mrb[0].mxu0
        %v4510 = vadd.f32 %v1567, %v4509
        %v4511 = vpop.f32.mrb[0].mxu0
        %4512 = vmatprep.mubr.f32.mxu0 0.0
        %4513 = vmatmul.mubr.f32.gmra.mrb[0].mxu0 %v4423
        %v4514 = vpop.f32.mrb[0].mxu0
        %v4515 = vadd.f32 %v1568, %v4514
        %v4516 = vpop.f32.mrb[0].mxu0
        %4517 = vdwg.mxu0
        %v4518 = vsel %vm575, %v3681, -inf
        %4519 = vmax.xlane.f32.xlu0 %v4518
        %v4520 = vpop.xlane.xlu0 %4519
        %v4521 = vsel %vm575, %v3686, -inf
        %4522 = vmax.xlane.f32.xlu0 %v4521
        %v4523 = vpop.xlane.xlu0 %4522
        %v4524 = vsel %vm575, %v3691, -inf
        %4525 = vmax.xlane.f32.xlu0 %v4524
        %v4526 = vpop.xlane.xlu0 %4525
        %v4527 = vsel %vm575, %v3696, -inf
        %4528 = vmax.xlane.f32.xlu0 %v4527
        %v4529 = vpop.xlane.xlu0 %4528
        %v4530 = vsel %vm575, %v3798, -inf
        %4531 = vmax.xlane.f32.xlu0 %v4530
        %v4532 = vpop.xlane.xlu0 %4531
        %v4533 = vsel %vm575, %v3803, -inf
        %4534 = vmax.xlane.f32.xlu0 %v4533
        %v4535 = vpop.xlane.xlu0 %4534
        %v4536 = vsel %vm575, %v3808, -inf
        %4537 = vmax.xlane.f32.xlu0 %v4536
        %v4538 = vpop.xlane.xlu0 %4537
        %v4539 = vsel %vm575, %v3813, -inf
        %4540 = vmax.xlane.f32.xlu0 %v4539
        %v4541 = vpop.xlane.xlu0 %4540
        %v4542 = vsel %vm575, %v3915, -inf
        %4543 = vmax.xlane.f32.xlu0 %v4542
        %v4544 = vpop.xlane.xlu0 %4543
        %v4545 = vsel %vm575, %v3920, -inf
        %4546 = vmax.xlane.f32.xlu0 %v4545
        %v4547 = vpop.xlane.xlu0 %4546
        %v4548 = vsel %vm575, %v3925, -inf
        %4549 = vmax.xlane.f32.xlu0 %v4548
        %v4550 = vpop.xlane.xlu0 %4549
        %v4551 = vsel %vm575, %v3930, -inf
        %4552 = vmax.xlane.f32.xlu0 %v4551
        %v4553 = vpop.xlane.xlu0 %4552
        %v4554 = vsel %vm575, %v4032, -inf
        %4555 = vmax.xlane.f32.xlu0 %v4554
        %v4556 = vpop.xlane.xlu0 %4555
        %v4557 = vsel %vm575, %v4037, -inf
        %4558 = vmax.xlane.f32.xlu0 %v4557
        %v4559 = vpop.xlane.xlu0 %4558
        %v4560 = vsel %vm575, %v4042, -inf
        %4561 = vmax.xlane.f32.xlu0 %v4560
        %v4562 = vpop.xlane.xlu0 %4561
        %v4563 = vsel %vm575, %v4047, -inf
        %4564 = vmax.xlane.f32.xlu0 %v4563
        %v4565 = vpop.xlane.xlu0 %4564
        %v4566 = vsel %vm575, %v4149, -inf
        %4567 = vmax.xlane.f32.xlu0 %v4566
        %v4568 = vpop.xlane.xlu0 %4567
        %v4569 = vsel %vm575, %v4154, -inf
        %4570 = vmax.xlane.f32.xlu0 %v4569
        %v4571 = vpop.xlane.xlu0 %4570
        %v4572 = vsel %vm575, %v4159, -inf
        %4573 = vmax.xlane.f32.xlu0 %v4572
        %v4574 = vpop.xlane.xlu0 %4573
        %v4575 = vsel %vm575, %v4164, -inf
        %4576 = vmax.xlane.f32.xlu0 %v4575
        %v4577 = vpop.xlane.xlu0 %4576
        %v4578 = vsel %vm575, %v4266, -inf
        %4579 = vmax.xlane.f32.xlu0 %v4578
        %v4580 = vpop.xlane.xlu0 %4579
        %v4581 = vsel %vm575, %v4271, -inf
        %4582 = vmax.xlane.f32.xlu0 %v4581
        %v4583 = vpop.xlane.xlu0 %4582
        %v4584 = vsel %vm575, %v4276, -inf
        %4585 = vmax.xlane.f32.xlu0 %v4584
        %v4586 = vpop.xlane.xlu0 %4585
        %v4587 = vsel %vm575, %v4281, -inf
        %4588 = vmax.xlane.f32.xlu0 %v4587
        %v4589 = vpop.xlane.xlu0 %4588
        %v4590 = vsel %vm575, %v4383, -inf
        %4591 = vmax.xlane.f32.xlu0 %v4590
        %v4592 = vpop.xlane.xlu0 %4591
        %v4593 = vsel %vm575, %v4388, -inf
        %4594 = vmax.xlane.f32.xlu0 %v4593
        %v4595 = vpop.xlane.xlu0 %4594
        %v4596 = vsel %vm575, %v4393, -inf
        %4597 = vmax.xlane.f32.xlu0 %v4596
        %v4598 = vpop.xlane.xlu0 %4597
        %v4599 = vsel %vm575, %v4398, -inf
        %4600 = vmax.xlane.f32.xlu0 %v4599
        %v4601 = vpop.xlane.xlu0 %4600
        %v4602 = vsel %vm575, %v4500, -inf
        %4603 = vmax.xlane.f32.xlu0 %v4602
        %v4604 = vpop.xlane.xlu0 %4603
        %v4605 = vsel %vm575, %v4505, -inf
        %4606 = vmax.xlane.f32.xlu0 %v4605
        %v4607 = vpop.xlane.xlu0 %4606
        %v4608 = vsel %vm575, %v4510, -inf
        %4609 = vmax.xlane.f32.xlu0 %v4608
        %v4610 = vpop.xlane.xlu0 %4609
        %v4611 = vsel %vm575, %v4515, -inf
        %4612 = vmax.xlane.f32.xlu0 %v4611
        %v4613 = vpop.xlane.xlu0 %4612
        %v4614 = vsub.f32 %v3681, %v4520
        %v4615 = vsub.f32 %v3686, %v4523
        %v4616 = vsub.f32 %v3691, %v4526
        %v4617 = vsub.f32 %v3696, %v4529
        %v4618 = vsub.f32 %v3798, %v4532
        %v4619 = vsub.f32 %v3803, %v4535
        %v4620 = vsub.f32 %v3808, %v4538
        %v4621 = vsub.f32 %v3813, %v4541
        %v4622 = vsub.f32 %v3915, %v4544
        %v4623 = vsub.f32 %v3920, %v4547
        %v4624 = vsub.f32 %v3925, %v4550
        %v4625 = vsub.f32 %v3930, %v4553
        %v4626 = vsub.f32 %v4032, %v4556
        %v4627 = vsub.f32 %v4037, %v4559
        %v4628 = vsub.f32 %v4042, %v4562
        %v4629 = vsub.f32 %v4047, %v4565
        %v4630 = vsub.f32 %v4149, %v4568
        %v4631 = vsub.f32 %v4154, %v4571
        %v4632 = vsub.f32 %v4159, %v4574
        %v4633 = vsub.f32 %v4164, %v4577
        %v4634 = vsub.f32 %v4266, %v4580
        %v4635 = vsub.f32 %v4271, %v4583
        %v4636 = vsub.f32 %v4276, %v4586
        %v4637 = vsub.f32 %v4281, %v4589
        %v4638 = vsub.f32 %v4383, %v4592
        %v4639 = vsub.f32 %v4388, %v4595
        %v4640 = vsub.f32 %v4393, %v4598
        %v4641 = vsub.f32 %v4398, %v4601
        %v4642 = vsub.f32 %v4500, %v4604
        %v4643 = vsub.f32 %v4505, %v4607
        %v4644 = vsub.f32 %v4510, %v4610
        %v4645 = vsub.f32 %v4515, %v4613
        %v4646 = vmul.f32 %v4614, 1.442695
        %v4647 = vpow.pop %v4646
        %v4648 = vmul.f32 %v4615, 1.442695
        %v4649 = vpow.pop %v4648
        %v4650 = vmul.f32 %v4616, 1.442695
        %v4651 = vpow.pop %v4650
        %v4652 = vmul.f32 %v4617, 1.442695
        %v4653 = vpow.pop %v4652
        %v4654 = vmul.f32 %v4618, 1.442695
        %v4655 = vpow.pop %v4654
        %v4656 = vmul.f32 %v4619, 1.442695
        %v4657 = vpow.pop %v4656
        %v4658 = vmul.f32 %v4620, 1.442695
        %v4659 = vpow.pop %v4658
        %v4660 = vmul.f32 %v4621, 1.442695
        %v4661 = vpow.pop %v4660
        %v4662 = vmul.f32 %v4622, 1.442695
        %v4663 = vpow.pop %v4662
        %v4664 = vmul.f32 %v4623, 1.442695
        %v4665 = vpow.pop %v4664
        %v4666 = vmul.f32 %v4624, 1.442695
        %v4667 = vpow.pop %v4666
        %v4668 = vmul.f32 %v4625, 1.442695
        %v4669 = vpow.pop %v4668
        %v4670 = vmul.f32 %v4626, 1.442695
        %v4671 = vpow.pop %v4670
        %v4672 = vmul.f32 %v4627, 1.442695
        %v4673 = vpow.pop %v4672
        %v4674 = vmul.f32 %v4628, 1.442695
        %v4675 = vpow.pop %v4674
        %v4676 = vmul.f32 %v4629, 1.442695
        %v4677 = vpow.pop %v4676
        %v4678 = vmul.f32 %v4630, 1.442695
        %v4679 = vpow.pop %v4678
        %v4680 = vmul.f32 %v4631, 1.442695
        %v4681 = vpow.pop %v4680
        %v4682 = vmul.f32 %v4632, 1.442695
        %v4683 = vpow.pop %v4682
        %v4684 = vmul.f32 %v4633, 1.442695
        %v4685 = vpow.pop %v4684
        %v4686 = vmul.f32 %v4634, 1.442695
        %v4687 = vpow.pop %v4686
        %v4688 = vmul.f32 %v4635, 1.442695
        %v4689 = vpow.pop %v4688
        %v4690 = vmul.f32 %v4636, 1.442695
        %v4691 = vpow.pop %v4690
        %v4692 = vmul.f32 %v4637, 1.442695
        %v4693 = vpow.pop %v4692
        %v4694 = vmul.f32 %v4638, 1.442695
        %v4695 = vpow.pop %v4694
        %v4696 = vmul.f32 %v4639, 1.442695
        %v4697 = vpow.pop %v4696
        %v4698 = vmul.f32 %v4640, 1.442695
        %v4699 = vpow.pop %v4698
        %v4700 = vmul.f32 %v4641, 1.442695
        %v4701 = vpow.pop %v4700
        %v4702 = vmul.f32 %v4642, 1.442695
        %v4703 = vpow.pop %v4702
        %v4704 = vmul.f32 %v4643, 1.442695
        %v4705 = vpow.pop %v4704
        %v4706 = vmul.f32 %v4644, 1.442695
        %v4707 = vpow.pop %v4706
        %v4708 = vmul.f32 %v4645, 1.442695
        %v4709 = vpow.pop %v4708
        %v4710 = vsel %vm575, %v4647, 0.0
        %4711 = vadd.xlane.f32.xlu0 %v4710
        %v4712 = vpop.xlane.xlu0 %4711
        %v4713 = vsel %vm575, %v4649, 0.0
        %4714 = vadd.xlane.f32.xlu0 %v4713
        %v4715 = vpop.xlane.xlu0 %4714
        %v4716 = vsel %vm575, %v4651, 0.0
        %4717 = vadd.xlane.f32.xlu0 %v4716
        %v4718 = vpop.xlane.xlu0 %4717
        %v4719 = vsel %vm575, %v4653, 0.0
        %4720 = vadd.xlane.f32.xlu0 %v4719
        %v4721 = vpop.xlane.xlu0 %4720
        %v4722 = vsel %vm575, %v4655, 0.0
        %4723 = vadd.xlane.f32.xlu0 %v4722
        %v4724 = vpop.xlane.xlu0 %4723
        %v4725 = vsel %vm575, %v4657, 0.0
        %4726 = vadd.xlane.f32.xlu0 %v4725
        %v4727 = vpop.xlane.xlu0 %4726
        %v4728 = vsel %vm575, %v4659, 0.0
        %4729 = vadd.xlane.f32.xlu0 %v4728
        %v4730 = vpop.xlane.xlu0 %4729
        %v4731 = vsel %vm575, %v4661, 0.0
        %4732 = vadd.xlane.f32.xlu0 %v4731
        %v4733 = vpop.xlane.xlu0 %4732
        %v4734 = vsel %vm575, %v4663, 0.0
        %4735 = vadd.xlane.f32.xlu0 %v4734
        %v4736 = vpop.xlane.xlu0 %4735
        %v4737 = vsel %vm575, %v4665, 0.0
        %4738 = vadd.xlane.f32.xlu0 %v4737
        %v4739 = vpop.xlane.xlu0 %4738
        %v4740 = vsel %vm575, %v4667, 0.0
        %4741 = vadd.xlane.f32.xlu0 %v4740
        %v4742 = vpop.xlane.xlu0 %4741
        %v4743 = vsel %vm575, %v4669, 0.0
        %4744 = vadd.xlane.f32.xlu0 %v4743
        %v4745 = vpop.xlane.xlu0 %4744
        %v4746 = vsel %vm575, %v4671, 0.0
        %4747 = vadd.xlane.f32.xlu0 %v4746
        %v4748 = vpop.xlane.xlu0 %4747
        %v4749 = vsel %vm575, %v4673, 0.0
        %4750 = vadd.xlane.f32.xlu0 %v4749
        %v4751 = vpop.xlane.xlu0 %4750
        %v4752 = vsel %vm575, %v4675, 0.0
        %4753 = vadd.xlane.f32.xlu0 %v4752
        %v4754 = vpop.xlane.xlu0 %4753
        %v4755 = vsel %vm575, %v4677, 0.0
        %4756 = vadd.xlane.f32.xlu0 %v4755
        %v4757 = vpop.xlane.xlu0 %4756
        %v4758 = vsel %vm575, %v4679, 0.0
        %4759 = vadd.xlane.f32.xlu0 %v4758
        %v4760 = vpop.xlane.xlu0 %4759
        %v4761 = vsel %vm575, %v4681, 0.0
        %4762 = vadd.xlane.f32.xlu0 %v4761
        %v4763 = vpop.xlane.xlu0 %4762
        %v4764 = vsel %vm575, %v4683, 0.0
        %4765 = vadd.xlane.f32.xlu0 %v4764
        %v4766 = vpop.xlane.xlu0 %4765
        %v4767 = vsel %vm575, %v4685, 0.0
        %4768 = vadd.xlane.f32.xlu0 %v4767
        %v4769 = vpop.xlane.xlu0 %4768
        %v4770 = vsel %vm575, %v4687, 0.0
        %4771 = vadd.xlane.f32.xlu0 %v4770
        %v4772 = vpop.xlane.xlu0 %4771
        %v4773 = vsel %vm575, %v4689, 0.0
        %4774 = vadd.xlane.f32.xlu0 %v4773
        %v4775 = vpop.xlane.xlu0 %4774
        %v4776 = vsel %vm575, %v4691, 0.0
        %4777 = vadd.xlane.f32.xlu0 %v4776
        %v4778 = vpop.xlane.xlu0 %4777
        %v4779 = vsel %vm575, %v4693, 0.0
        %4780 = vadd.xlane.f32.xlu0 %v4779
        %v4781 = vpop.xlane.xlu0 %4780
        %v4782 = vsel %vm575, %v4695, 0.0
        %4783 = vadd.xlane.f32.xlu0 %v4782
        %v4784 = vpop.xlane.xlu0 %4783
        %v4785 = vsel %vm575, %v4697, 0.0
        %4786 = vadd.xlane.f32.xlu0 %v4785
        %v4787 = vpop.xlane.xlu0 %4786
        %v4788 = vsel %vm575, %v4699, 0.0
        %4789 = vadd.xlane.f32.xlu0 %v4788
        %v4790 = vpop.xlane.xlu0 %4789
        %v4791 = vsel %vm575, %v4701, 0.0
        %4792 = vadd.xlane.f32.xlu0 %v4791
        %v4793 = vpop.xlane.xlu0 %4792
        %v4794 = vsel %vm575, %v4703, 0.0
        %4795 = vadd.xlane.f32.xlu0 %v4794
        %v4796 = vpop.xlane.xlu0 %4795
        %v4797 = vsel %vm575, %v4705, 0.0
        %4798 = vadd.xlane.f32.xlu0 %v4797
        %v4799 = vpop.xlane.xlu0 %4798
        %v4800 = vsel %vm575, %v4707, 0.0
        %4801 = vadd.xlane.f32.xlu0 %v4800
        %v4802 = vpop.xlane.xlu0 %4801
        %v4803 = vsel %vm575, %v4709, 0.0
        %4804 = vadd.xlane.f32.xlu0 %v4803
        %v4805 = vpop.xlane.xlu0 %4804
        %v4806 = vrcp.pop %v4712
        %v4807 = vrcp.pop %v4715
        %v4808 = vrcp.pop %v4718
        %v4809 = vrcp.pop %v4721
        %v4810 = vrcp.pop %v4724
        %v4811 = vrcp.pop %v4727
        %v4812 = vrcp.pop %v4730
        %v4813 = vrcp.pop %v4733
        %v4814 = vrcp.pop %v4736
        %v4815 = vrcp.pop %v4739
        %v4816 = vrcp.pop %v4742
        %v4817 = vrcp.pop %v4745
        %v4818 = vrcp.pop %v4748
        %v4819 = vrcp.pop %v4751
        %v4820 = vrcp.pop %v4754
        %v4821 = vrcp.pop %v4757
        %v4822 = vrcp.pop %v4760
        %v4823 = vrcp.pop %v4763
        %v4824 = vrcp.pop %v4766
        %v4825 = vrcp.pop %v4769
        %v4826 = vrcp.pop %v4772
        %v4827 = vrcp.pop %v4775
        %v4828 = vrcp.pop %v4778
        %v4829 = vrcp.pop %v4781
        %v4830 = vrcp.pop %v4784
        %v4831 = vrcp.pop %v4787
        %v4832 = vrcp.pop %v4790
        %v4833 = vrcp.pop %v4793
        %v4834 = vrcp.pop %v4796
        %v4835 = vrcp.pop %v4799
        %v4836 = vrcp.pop %v4802
        %v4837 = vrcp.pop %v4805
        %v4838 = vmul.f32 %v4647, %v4806
        %v4839 = vmul.f32 %v4649, %v4807
        %v4840 = vmul.f32 %v4651, %v4808
        %v4841 = vmul.f32 %v4653, %v4809
        %v4842 = vmul.f32 %v4655, %v4810
        %v4843 = vmul.f32 %v4657, %v4811
        %v4844 = vmul.f32 %v4659, %v4812
        %v4845 = vmul.f32 %v4661, %v4813
        %v4846 = vmul.f32 %v4663, %v4814
        %v4847 = vmul.f32 %v4665, %v4815
        %v4848 = vmul.f32 %v4667, %v4816
        %v4849 = vmul.f32 %v4669, %v4817
        %v4850 = vmul.f32 %v4671, %v4818
        %v4851 = vmul.f32 %v4673, %v4819
        %v4852 = vmul.f32 %v4675, %v4820
        %v4853 = vmul.f32 %v4677, %v4821
        %v4854 = vmul.f32 %v4679, %v4822
        %v4855 = vmul.f32 %v4681, %v4823
        %v4856 = vmul.f32 %v4683, %v4824
        %v4857 = vmul.f32 %v4685, %v4825
        %v4858 = vmul.f32 %v4687, %v4826
        %v4859 = vmul.f32 %v4689, %v4827
        %v4860 = vmul.f32 %v4691, %v4828
        %v4861 = vmul.f32 %v4693, %v4829
        %v4862 = vmul.f32 %v4695, %v4830
        %v4863 = vmul.f32 %v4697, %v4831
        %v4864 = vmul.f32 %v4699, %v4832
        %v4865 = vmul.f32 %v4701, %v4833
        %v4866 = vmul.f32 %v4703, %v4834
        %v4867 = vmul.f32 %v4705, %v4835
        %v4868 = vmul.f32 %v4707, %v4836
        %v4869 = vmul.f32 %v4709, %v4837
        %4874 = vrot.lane.b32.xlu0 %v1403, 120
        %v4875 = vpop.permute.xlu0 %4874
        %4876 = vrot.lane.b32.xlu0 %v1408, 120
        %v4877 = vpop.permute.xlu0 %4876
        %4878 = vrot.lane.b32.xlu0 %v1413, 120
        %v4879 = vpop.permute.xlu0 %4878
        %4880 = vrot.lane.b32.xlu0 %v1418, 120
        %v4881 = vpop.permute.xlu0 %4880
        %v4887 = vsel %vm575, %v4838, 0
        %v4890 = vsel %vm575, %v4839, 0
        %v4893 = vsel %vm575, %v4840, 0
        %v4896 = vsel %vm575, %v4841, 0
        %4898 = vmatprep.subr.mxu0 0.0
        %4899 = vmatpush1.msra.mxu0 %v4875
        %4900 = vmatprep.subr.mxu0 0.0
        %4901 = vmatpush1.msra.mxu0 %v4877
        %4902 = vmatprep.subr.mxu0 0.0
        %4903 = vmatpush1.msra.mxu0 %v4879
        %4904 = vmatprep.subr.mxu0 0.0
        %4905 = vmatpush1.msra.mxu0 %v4881
        %4906 = vmatprep.subr.mxu0 0.0
        %4907 = vmatpush1.msra.mxu0 0.0
        %4908 = vmatprep.subr.mxu0 0.0
        %4909 = vmatpush1.msra.mxu0 0.0
        %4910 = vmatprep.subr.mxu0 0.0
        %4911 = vmatpush1.msra.mxu0 0.0
        %4912 = vmatprep.subr.mxu0 0.0
        %4913 = vmatpush1.msra.mxu0 0.0
        %4914 = vmatprep.subr.mxu0 0.0
        %4915 = vmatpush1.msra.mxu0 0.0
        %4916 = vmatprep.subr.mxu0 0.0
        %4917 = vmatpush1.msra.mxu0 0.0
        %4918 = vmatprep.subr.mxu0 0.0
        %4919 = vmatpush1.msra.mxu0 0.0
        %4920 = vmatprep.subr.mxu0 0.0
        %4921 = vmatpush1.msra.mxu0 0.0
        %4922 = vmatprep.subr.mxu0 0.0
        %4923 = vmatpush1.msra.mxu0 0.0
        %4924 = vmatprep.subr.mxu0 0.0
        %4925 = vmatpush1.msra.mxu0 0.0
        %4926 = vmatprep.subr.mxu0 0.0
        %4927 = vmatpush1.msra.mxu0 0.0
        %4928 = vmatprep.subr.mxu0 0.0
        %4929 = vmatpush1.msra.mxu0 0.0
        %4930 = vmatprep.subr.mxu0 0.0
        %4931 = vmatpush1.msra.mxu0 0.0
        %4932 = vmatprep.subr.mxu0 0.0
        %4933 = vmatpush1.msra.mxu0 0.0
        %4934 = vmatprep.subr.mxu0 0.0
        %4935 = vmatpush1.msra.mxu0 0.0
        %4936 = vmatprep.subr.mxu0 0.0
        %4937 = vmatpush1.msra.mxu0 0.0
        %4938 = vmatprep.subr.mxu0 0.0
        %4939 = vmatpush1.msra.mxu0 0.0
        %4940 = vmatprep.subr.mxu0 0.0
        %4941 = vmatpush1.msra.mxu0 0.0
        %4942 = vmatprep.subr.mxu0 0.0
        %4943 = vmatpush1.msra.mxu0 0.0
        %4944 = vmatprep.subr.mxu0 0.0
        %4945 = vmatpush1.msra.mxu0 0.0
        %4946 = vmatprep.subr.mxu0 0.0
        %4947 = vmatpush1.msra.mxu0 0.0
        %4948 = vmatprep.subr.mxu0 0.0
        %4949 = vmatpush1.msra.mxu0 0.0
        %4950 = vmatprep.subr.mxu0 0.0
        %4951 = vmatpush1.msra.mxu0 0.0
        %4952 = vmatprep.subr.mxu0 0.0
        %4953 = vmatpush1.msra.mxu0 0.0
        %4954 = vmatprep.subr.mxu0 0.0
        %4955 = vmatpush1.msra.mxu0 0.0
        %4956 = vmatprep.subr.mxu0 0.0
        %4957 = vmatpush1.msra.mxu0 0.0
        %4958 = vmatprep.subr.mxu0 0.0
        %4959 = vmatpush1.msra.mxu0 0.0
        %4960 = vmatprep.subr.mxu0 0.0
        %4961 = vmatpush1.msra.mxu0 0.0
        %4962 = vmatprep.mubr.f32.mxu0 0.0
        %4963 = vmatmul.mubr.f32.gmra.mrb[0].mxu0 %v4887
        %v4964 = vpop.f32.mrb[0].mxu0
        %v4965 = vadd.f32 0.0, %v4964
        %v4966 = vpop.f32.mrb[0].mxu0
        %4967 = vmatprep.mubr.f32.mxu0 0.0
        %4968 = vmatmul.mubr.f32.gmra.mrb[0].mxu0 %v4890
        %v4969 = vpop.f32.mrb[0].mxu0
        %v4970 = vadd.f32 0.0, %v4969
        %v4971 = vpop.f32.mrb[0].mxu0
        %4972 = vmatprep.mubr.f32.mxu0 0.0
        %4973 = vmatmul.mubr.f32.gmra.mrb[0].mxu0 %v4893
        %v4974 = vpop.f32.mrb[0].mxu0
        %v4975 = vadd.f32 0.0, %v4974
        %v4976 = vpop.f32.mrb[0].mxu0
        %4977 = vmatprep.mubr.f32.mxu0 0.0
        %4978 = vmatmul.mubr.f32.gmra.mrb[0].mxu0 %v4896
        %v4979 = vpop.f32.mrb[0].mxu0
        %v4980 = vadd.f32 0.0, %v4979
        %v4981 = vpop.f32.mrb[0].mxu0
        %4982 = vdwg.mxu0
        %4987 = vrot.lane.b32.xlu0 %v1423, 120
        %v4988 = vpop.permute.xlu0 %4987
        %4989 = vrot.lane.b32.xlu0 %v1428, 120
        %v4990 = vpop.permute.xlu0 %4989
        %4991 = vrot.lane.b32.xlu0 %v1433, 120
        %v4992 = vpop.permute.xlu0 %4991
        %4993 = vrot.lane.b32.xlu0 %v1438, 120
        %v4994 = vpop.permute.xlu0 %4993
        %v5000 = vsel %vm575, %v4842, 0
        %v5003 = vsel %vm575, %v4843, 0
        %v5006 = vsel %vm575, %v4844, 0
        %v5009 = vsel %vm575, %v4845, 0
        %5011 = vmatprep.subr.mxu0 0.0
        %5012 = vmatpush1.msra.mxu0 %v4988
        %5013 = vmatprep.subr.mxu0 0.0
        %5014 = vmatpush1.msra.mxu0 %v4990
        %5015 = vmatprep.subr.mxu0 0.0
        %5016 = vmatpush1.msra.mxu0 %v4992
        %5017 = vmatprep.subr.mxu0 0.0
        %5018 = vmatpush1.msra.mxu0 %v4994
        %5019 = vmatprep.subr.mxu0 0.0
        %5020 = vmatpush1.msra.mxu0 0.0
        %5021 = vmatprep.subr.mxu0 0.0
        %5022 = vmatpush1.msra.mxu0 0.0
        %5023 = vmatprep.subr.mxu0 0.0
        %5024 = vmatpush1.msra.mxu0 0.0
        %5025 = vmatprep.subr.mxu0 0.0
        %5026 = vmatpush1.msra.mxu0 0.0
        %5027 = vmatprep.subr.mxu0 0.0
        %5028 = vmatpush1.msra.mxu0 0.0
        %5029 = vmatprep.subr.mxu0 0.0
        %5030 = vmatpush1.msra.mxu0 0.0
        %5031 = vmatprep.subr.mxu0 0.0
        %5032 = vmatpush1.msra.mxu0 0.0
        %5033 = vmatprep.subr.mxu0 0.0
        %5034 = vmatpush1.msra.mxu0 0.0
        %5035 = vmatprep.subr.mxu0 0.0
        %5036 = vmatpush1.msra.mxu0 0.0
        %5037 = vmatprep.subr.mxu0 0.0
        %5038 = vmatpush1.msra.mxu0 0.0
        %5039 = vmatprep.subr.mxu0 0.0
        %5040 = vmatpush1.msra.mxu0 0.0
        %5041 = vmatprep.subr.mxu0 0.0
        %5042 = vmatpush1.msra.mxu0 0.0
        %5043 = vmatprep.subr.mxu0 0.0
        %5044 = vmatpush1.msra.mxu0 0.0
        %5045 = vmatprep.subr.mxu0 0.0
        %5046 = vmatpush1.msra.mxu0 0.0
        %5047 = vmatprep.subr.mxu0 0.0
        %5048 = vmatpush1.msra.mxu0 0.0
        %5049 = vmatprep.subr.mxu0 0.0
        %5050 = vmatpush1.msra.mxu0 0.0
        %5051 = vmatprep.subr.mxu0 0.0
        %5052 = vmatpush1.msra.mxu0 0.0
        %5053 = vmatprep.subr.mxu0 0.0
        %5054 = vmatpush1.msra.mxu0 0.0
        %5055 = vmatprep.subr.mxu0 0.0
        %5056 = vmatpush1.msra.mxu0 0.0
        %5057 = vmatprep.subr.mxu0 0.0
        %5058 = vmatpush1.msra.mxu0 0.0
        %5059 = vmatprep.subr.mxu0 0.0
        %5060 = vmatpush1.msra.mxu0 0.0
        %5061 = vmatprep.subr.mxu0 0.0
        %5062 = vmatpush1.msra.mxu0 0.0
        %5063 = vmatprep.subr.mxu0 0.0
        %5064 = vmatpush1.msra.mxu0 0.0
        %5065 = vmatprep.subr.mxu0 0.0
        %5066 = vmatpush1.msra.mxu0 0.0
        %5067 = vmatprep.subr.mxu0 0.0
        %5068 = vmatpush1.msra.mxu0 0.0
        %5069 = vmatprep.subr.mxu0 0.0
        %5070 = vmatpush1.msra.mxu0 0.0
        %5071 = vmatprep.subr.mxu0 0.0
        %5072 = vmatpush1.msra.mxu0 0.0
        %5073 = vmatprep.subr.mxu0 0.0
        %5074 = vmatpush1.msra.mxu0 0.0
        %5075 = vmatprep.mubr.f32.mxu0 0.0
        %5076 = vmatmul.mubr.f32.gmra.mrb[0].mxu0 %v5000
        %v5077 = vpop.f32.mrb[0].mxu0
        %v5078 = vadd.f32 0.0, %v5077
        %v5079 = vpop.f32.mrb[0].mxu0
        %5080 = vmatprep.mubr.f32.mxu0 0.0
        %5081 = vmatmul.mubr.f32.gmra.mrb[0].mxu0 %v5003
        %v5082 = vpop.f32.mrb[0].mxu0
        %v5083 = vadd.f32 0.0, %v5082
        %v5084 = vpop.f32.mrb[0].mxu0
        %5085 = vmatprep.mubr.f32.mxu0 0.0
        %5086 = vmatmul.mubr.f32.gmra.mrb[0].mxu0 %v5006
        %v5087 = vpop.f32.mrb[0].mxu0
        %v5088 = vadd.f32 0.0, %v5087
        %v5089 = vpop.f32.mrb[0].mxu0
        %5090 = vmatprep.mubr.f32.mxu0 0.0
        %5091 = vmatmul.mubr.f32.gmra.mrb[0].mxu0 %v5009
        %v5092 = vpop.f32.mrb[0].mxu0
        %v5093 = vadd.f32 0.0, %v5092
        %v5094 = vpop.f32.mrb[0].mxu0
        %5095 = vdwg.mxu0
        %5100 = vrot.lane.b32.xlu0 %v1443, 120
        %v5101 = vpop.permute.xlu0 %5100
        %5102 = vrot.lane.b32.xlu0 %v1448, 120
        %v5103 = vpop.permute.xlu0 %5102
        %5104 = vrot.lane.b32.xlu0 %v1453, 120
        %v5105 = vpop.permute.xlu0 %5104
        %5106 = vrot.lane.b32.xlu0 %v1458, 120
        %v5107 = vpop.permute.xlu0 %5106
        %v5113 = vsel %vm575, %v4846, 0
        %v5116 = vsel %vm575, %v4847, 0
        %v5119 = vsel %vm575, %v4848, 0
        %v5122 = vsel %vm575, %v4849, 0
        %5124 = vmatprep.subr.mxu0 0.0
        %5125 = vmatpush1.msra.mxu0 %v5101
        %5126 = vmatprep.subr.mxu0 0.0
        %5127 = vmatpush1.msra.mxu0 %v5103
        %5128 = vmatprep.subr.mxu0 0.0
        %5129 = vmatpush1.msra.mxu0 %v5105
        %5130 = vmatprep.subr.mxu0 0.0
        %5131 = vmatpush1.msra.mxu0 %v5107
        %5132 = vmatprep.subr.mxu0 0.0
        %5133 = vmatpush1.msra.mxu0 0.0
        %5134 = vmatprep.subr.mxu0 0.0
        %5135 = vmatpush1.msra.mxu0 0.0
        %5136 = vmatprep.subr.mxu0 0.0
        %5137 = vmatpush1.msra.mxu0 0.0
        %5138 = vmatprep.subr.mxu0 0.0
        %5139 = vmatpush1.msra.mxu0 0.0
        %5140 = vmatprep.subr.mxu0 0.0
        %5141 = vmatpush1.msra.mxu0 0.0
        %5142 = vmatprep.subr.mxu0 0.0
        %5143 = vmatpush1.msra.mxu0 0.0
        %5144 = vmatprep.subr.mxu0 0.0
        %5145 = vmatpush1.msra.mxu0 0.0
        %5146 = vmatprep.subr.mxu0 0.0
        %5147 = vmatpush1.msra.mxu0 0.0
        %5148 = vmatprep.subr.mxu0 0.0
        %5149 = vmatpush1.msra.mxu0 0.0
        %5150 = vmatprep.subr.mxu0 0.0
        %5151 = vmatpush1.msra.mxu0 0.0
        %5152 = vmatprep.subr.mxu0 0.0
        %5153 = vmatpush1.msra.mxu0 0.0
        %5154 = vmatprep.subr.mxu0 0.0
        %5155 = vmatpush1.msra.mxu0 0.0
        %5156 = vmatprep.subr.mxu0 0.0
        %5157 = vmatpush1.msra.mxu0 0.0
        %5158 = vmatprep.subr.mxu0 0.0
        %5159 = vmatpush1.msra.mxu0 0.0
        %5160 = vmatprep.subr.mxu0 0.0
        %5161 = vmatpush1.msra.mxu0 0.0
        %5162 = vmatprep.subr.mxu0 0.0
        %5163 = vmatpush1.msra.mxu0 0.0
        %5164 = vmatprep.subr.mxu0 0.0
        %5165 = vmatpush1.msra.mxu0 0.0
        %5166 = vmatprep.subr.mxu0 0.0
        %5167 = vmatpush1.msra.mxu0 0.0
        %5168 = vmatprep.subr.mxu0 0.0
        %5169 = vmatpush1.msra.mxu0 0.0
        %5170 = vmatprep.subr.mxu0 0.0
        %5171 = vmatpush1.msra.mxu0 0.0
        %5172 = vmatprep.subr.mxu0 0.0
        %5173 = vmatpush1.msra.mxu0 0.0
        %5174 = vmatprep.subr.mxu0 0.0
        %5175 = vmatpush1.msra.mxu0 0.0
        %5176 = vmatprep.subr.mxu0 0.0
        %5177 = vmatpush1.msra.mxu0 0.0
        %5178 = vmatprep.subr.mxu0 0.0
        %5179 = vmatpush1.msra.mxu0 0.0
        %5180 = vmatprep.subr.mxu0 0.0
        %5181 = vmatpush1.msra.mxu0 0.0
        %5182 = vmatprep.subr.mxu0 0.0
        %5183 = vmatpush1.msra.mxu0 0.0
        %5184 = vmatprep.subr.mxu0 0.0
        %5185 = vmatpush1.msra.mxu0 0.0
        %5186 = vmatprep.subr.mxu0 0.0
        %5187 = vmatpush1.msra.mxu0 0.0
        %5188 = vmatprep.mubr.f32.mxu0 0.0
        %5189 = vmatmul.mubr.f32.gmra.mrb[0].mxu0 %v5113
        %v5190 = vpop.f32.mrb[0].mxu0
        %v5191 = vadd.f32 0.0, %v5190
        %v5192 = vpop.f32.mrb[0].mxu0
        %5193 = vmatprep.mubr.f32.mxu0 0.0
        %5194 = vmatmul.mubr.f32.gmra.mrb[0].mxu0 %v5116
        %v5195 = vpop.f32.mrb[0].mxu0
        %v5196 = vadd.f32 0.0, %v5195
        %v5197 = vpop.f32.mrb[0].mxu0
        %5198 = vmatprep.mubr.f32.mxu0 0.0
        %5199 = vmatmul.mubr.f32.gmra.mrb[0].mxu0 %v5119
        %v5200 = vpop.f32.mrb[0].mxu0
        %v5201 = vadd.f32 0.0, %v5200
        %v5202 = vpop.f32.mrb[0].mxu0
        %5203 = vmatprep.mubr.f32.mxu0 0.0
        %5204 = vmatmul.mubr.f32.gmra.mrb[0].mxu0 %v5122
        %v5205 = vpop.f32.mrb[0].mxu0
        %v5206 = vadd.f32 0.0, %v5205
        %v5207 = vpop.f32.mrb[0].mxu0
        %5208 = vdwg.mxu0
        %5213 = vrot.lane.b32.xlu0 %v1463, 120
        %v5214 = vpop.permute.xlu0 %5213
        %5215 = vrot.lane.b32.xlu0 %v1468, 120
        %v5216 = vpop.permute.xlu0 %5215
        %5217 = vrot.lane.b32.xlu0 %v1473, 120
        %v5218 = vpop.permute.xlu0 %5217
        %5219 = vrot.lane.b32.xlu0 %v1478, 120
        %v5220 = vpop.permute.xlu0 %5219
        %v5226 = vsel %vm575, %v4850, 0
        %v5229 = vsel %vm575, %v4851, 0
        %v5232 = vsel %vm575, %v4852, 0
        %v5235 = vsel %vm575, %v4853, 0
        %5237 = vmatprep.subr.mxu0 0.0
        %5238 = vmatpush1.msra.mxu0 %v5214
        %5239 = vmatprep.subr.mxu0 0.0
        %5240 = vmatpush1.msra.mxu0 %v5216
        %5241 = vmatprep.subr.mxu0 0.0
        %5242 = vmatpush1.msra.mxu0 %v5218
        %5243 = vmatprep.subr.mxu0 0.0
        %5244 = vmatpush1.msra.mxu0 %v5220
        %5245 = vmatprep.subr.mxu0 0.0
        %5246 = vmatpush1.msra.mxu0 0.0
        %5247 = vmatprep.subr.mxu0 0.0
        %5248 = vmatpush1.msra.mxu0 0.0
        %5249 = vmatprep.subr.mxu0 0.0
        %5250 = vmatpush1.msra.mxu0 0.0
        %5251 = vmatprep.subr.mxu0 0.0
        %5252 = vmatpush1.msra.mxu0 0.0
        %5253 = vmatprep.subr.mxu0 0.0
        %5254 = vmatpush1.msra.mxu0 0.0
        %5255 = vmatprep.subr.mxu0 0.0
        %5256 = vmatpush1.msra.mxu0 0.0
        %5257 = vmatprep.subr.mxu0 0.0
        %5258 = vmatpush1.msra.mxu0 0.0
        %5259 = vmatprep.subr.mxu0 0.0
        %5260 = vmatpush1.msra.mxu0 0.0
        %5261 = vmatprep.subr.mxu0 0.0
        %5262 = vmatpush1.msra.mxu0 0.0
        %5263 = vmatprep.subr.mxu0 0.0
        %5264 = vmatpush1.msra.mxu0 0.0
        %5265 = vmatprep.subr.mxu0 0.0
        %5266 = vmatpush1.msra.mxu0 0.0
        %5267 = vmatprep.subr.mxu0 0.0
        %5268 = vmatpush1.msra.mxu0 0.0
        %5269 = vmatprep.subr.mxu0 0.0
        %5270 = vmatpush1.msra.mxu0 0.0
        %5271 = vmatprep.subr.mxu0 0.0
        %5272 = vmatpush1.msra.mxu0 0.0
        %5273 = vmatprep.subr.mxu0 0.0
        %5274 = vmatpush1.msra.mxu0 0.0
        %5275 = vmatprep.subr.mxu0 0.0
        %5276 = vmatpush1.msra.mxu0 0.0
        %5277 = vmatprep.subr.mxu0 0.0
        %5278 = vmatpush1.msra.mxu0 0.0
        %5279 = vmatprep.subr.mxu0 0.0
        %5280 = vmatpush1.msra.mxu0 0.0
        %5281 = vmatprep.subr.mxu0 0.0
        %5282 = vmatpush1.msra.mxu0 0.0
        %5283 = vmatprep.subr.mxu0 0.0
        %5284 = vmatpush1.msra.mxu0 0.0
        %5285 = vmatprep.subr.mxu0 0.0
        %5286 = vmatpush1.msra.mxu0 0.0
        %5287 = vmatprep.subr.mxu0 0.0
        %5288 = vmatpush1.msra.mxu0 0.0
        %5289 = vmatprep.subr.mxu0 0.0
        %5290 = vmatpush1.msra.mxu0 0.0
        %5291 = vmatprep.subr.mxu0 0.0
        %5292 = vmatpush1.msra.mxu0 0.0
        %5293 = vmatprep.subr.mxu0 0.0
        %5294 = vmatpush1.msra.mxu0 0.0
        %5295 = vmatprep.subr.mxu0 0.0
        %5296 = vmatpush1.msra.mxu0 0.0
        %5297 = vmatprep.subr.mxu0 0.0
        %5298 = vmatpush1.msra.mxu0 0.0
        %5299 = vmatprep.subr.mxu0 0.0
        %5300 = vmatpush1.msra.mxu0 0.0
        %5301 = vmatprep.mubr.f32.mxu0 0.0
        %5302 = vmatmul.mubr.f32.gmra.mrb[0].mxu0 %v5226
        %v5303 = vpop.f32.mrb[0].mxu0
        %v5304 = vadd.f32 0.0, %v5303
        %v5305 = vpop.f32.mrb[0].mxu0
        %5306 = vmatprep.mubr.f32.mxu0 0.0
        %5307 = vmatmul.mubr.f32.gmra.mrb[0].mxu0 %v5229
        %v5308 = vpop.f32.mrb[0].mxu0
        %v5309 = vadd.f32 0.0, %v5308
        %v5310 = vpop.f32.mrb[0].mxu0
        %5311 = vmatprep.mubr.f32.mxu0 0.0
        %5312 = vmatmul.mubr.f32.gmra.mrb[0].mxu0 %v5232
        %v5313 = vpop.f32.mrb[0].mxu0
        %v5314 = vadd.f32 0.0, %v5313
        %v5315 = vpop.f32.mrb[0].mxu0
        %5316 = vmatprep.mubr.f32.mxu0 0.0
        %5317 = vmatmul.mubr.f32.gmra.mrb[0].mxu0 %v5235
        %v5318 = vpop.f32.mrb[0].mxu0
        %v5319 = vadd.f32 0.0, %v5318
        %v5320 = vpop.f32.mrb[0].mxu0
        %5321 = vdwg.mxu0
        %5326 = vrot.lane.b32.xlu0 %v1483, 120
        %v5327 = vpop.permute.xlu0 %5326
        %5328 = vrot.lane.b32.xlu0 %v1488, 120
        %v5329 = vpop.permute.xlu0 %5328
        %5330 = vrot.lane.b32.xlu0 %v1493, 120
        %v5331 = vpop.permute.xlu0 %5330
        %5332 = vrot.lane.b32.xlu0 %v1498, 120
        %v5333 = vpop.permute.xlu0 %5332
        %v5339 = vsel %vm575, %v4854, 0
        %v5342 = vsel %vm575, %v4855, 0
        %v5345 = vsel %vm575, %v4856, 0
        %v5348 = vsel %vm575, %v4857, 0
        %5350 = vmatprep.subr.mxu0 0.0
        %5351 = vmatpush1.msra.mxu0 %v5327
        %5352 = vmatprep.subr.mxu0 0.0
        %5353 = vmatpush1.msra.mxu0 %v5329
        %5354 = vmatprep.subr.mxu0 0.0
        %5355 = vmatpush1.msra.mxu0 %v5331
        %5356 = vmatprep.subr.mxu0 0.0
        %5357 = vmatpush1.msra.mxu0 %v5333
        %5358 = vmatprep.subr.mxu0 0.0
        %5359 = vmatpush1.msra.mxu0 0.0
        %5360 = vmatprep.subr.mxu0 0.0
        %5361 = vmatpush1.msra.mxu0 0.0
        %5362 = vmatprep.subr.mxu0 0.0
        %5363 = vmatpush1.msra.mxu0 0.0
        %5364 = vmatprep.subr.mxu0 0.0
        %5365 = vmatpush1.msra.mxu0 0.0
        %5366 = vmatprep.subr.mxu0 0.0
        %5367 = vmatpush1.msra.mxu0 0.0
        %5368 = vmatprep.subr.mxu0 0.0
        %5369 = vmatpush1.msra.mxu0 0.0
        %5370 = vmatprep.subr.mxu0 0.0
        %5371 = vmatpush1.msra.mxu0 0.0
        %5372 = vmatprep.subr.mxu0 0.0
        %5373 = vmatpush1.msra.mxu0 0.0
        %5374 = vmatprep.subr.mxu0 0.0
        %5375 = vmatpush1.msra.mxu0 0.0
        %5376 = vmatprep.subr.mxu0 0.0
        %5377 = vmatpush1.msra.mxu0 0.0
        %5378 = vmatprep.subr.mxu0 0.0
        %5379 = vmatpush1.msra.mxu0 0.0
        %5380 = vmatprep.subr.mxu0 0.0
        %5381 = vmatpush1.msra.mxu0 0.0
        %5382 = vmatprep.subr.mxu0 0.0
        %5383 = vmatpush1.msra.mxu0 0.0
        %5384 = vmatprep.subr.mxu0 0.0
        %5385 = vmatpush1.msra.mxu0 0.0
        %5386 = vmatprep.subr.mxu0 0.0
        %5387 = vmatpush1.msra.mxu0 0.0
        %5388 = vmatprep.subr.mxu0 0.0
        %5389 = vmatpush1.msra.mxu0 0.0
        %5390 = vmatprep.subr.mxu0 0.0
        %5391 = vmatpush1.msra.mxu0 0.0
        %5392 = vmatprep.subr.mxu0 0.0
        %5393 = vmatpush1.msra.mxu0 0.0
        %5394 = vmatprep.subr.mxu0 0.0
        %5395 = vmatpush1.msra.mxu0 0.0
        %5396 = vmatprep.subr.mxu0 0.0
        %5397 = vmatpush1.msra.mxu0 0.0
        %5398 = vmatprep.subr.mxu0 0.0
        %5399 = vmatpush1.msra.mxu0 0.0
        %5400 = vmatprep.subr.mxu0 0.0
        %5401 = vmatpush1.msra.mxu0 0.0
        %5402 = vmatprep.subr.mxu0 0.0
        %5403 = vmatpush1.msra.mxu0 0.0
        %5404 = vmatprep.subr.mxu0 0.0
        %5405 = vmatpush1.msra.mxu0 0.0
        %5406 = vmatprep.subr.mxu0 0.0
        %5407 = vmatpush1.msra.mxu0 0.0
        %5408 = vmatprep.subr.mxu0 0.0
        %5409 = vmatpush1.msra.mxu0 0.0
        %5410 = vmatprep.subr.mxu0 0.0
        %5411 = vmatpush1.msra.mxu0 0.0
        %5412 = vmatprep.subr.mxu0 0.0
        %5413 = vmatpush1.msra.mxu0 0.0
        %5414 = vmatprep.mubr.f32.mxu0 0.0
        %5415 = vmatmul.mubr.f32.gmra.mrb[0].mxu0 %v5339
        %v5416 = vpop.f32.mrb[0].mxu0
        %v5417 = vadd.f32 0.0, %v5416
        %v5418 = vpop.f32.mrb[0].mxu0
        %5419 = vmatprep.mubr.f32.mxu0 0.0
        %5420 = vmatmul.mubr.f32.gmra.mrb[0].mxu0 %v5342
        %v5421 = vpop.f32.mrb[0].mxu0
        %v5422 = vadd.f32 0.0, %v5421
        %v5423 = vpop.f32.mrb[0].mxu0
        %5424 = vmatprep.mubr.f32.mxu0 0.0
        %5425 = vmatmul.mubr.f32.gmra.mrb[0].mxu0 %v5345
        %v5426 = vpop.f32.mrb[0].mxu0
        %v5427 = vadd.f32 0.0, %v5426
        %v5428 = vpop.f32.mrb[0].mxu0
        %5429 = vmatprep.mubr.f32.mxu0 0.0
        %5430 = vmatmul.mubr.f32.gmra.mrb[0].mxu0 %v5348
        %v5431 = vpop.f32.mrb[0].mxu0
        %v5432 = vadd.f32 0.0, %v5431
        %v5433 = vpop.f32.mrb[0].mxu0
        %5434 = vdwg.mxu0
        %5439 = vrot.lane.b32.xlu0 %v1503, 120
        %v5440 = vpop.permute.xlu0 %5439
        %5441 = vrot.lane.b32.xlu0 %v1508, 120
        %v5442 = vpop.permute.xlu0 %5441
        %5443 = vrot.lane.b32.xlu0 %v1513, 120
        %v5444 = vpop.permute.xlu0 %5443
        %5445 = vrot.lane.b32.xlu0 %v1518, 120
        %v5446 = vpop.permute.xlu0 %5445
        %v5452 = vsel %vm575, %v4858, 0
        %v5455 = vsel %vm575, %v4859, 0
        %v5458 = vsel %vm575, %v4860, 0
        %v5461 = vsel %vm575, %v4861, 0
        %5463 = vmatprep.subr.mxu0 0.0
        %5464 = vmatpush1.msra.mxu0 %v5440
        %5465 = vmatprep.subr.mxu0 0.0
        %5466 = vmatpush1.msra.mxu0 %v5442
        %5467 = vmatprep.subr.mxu0 0.0
        %5468 = vmatpush1.msra.mxu0 %v5444
        %5469 = vmatprep.subr.mxu0 0.0
        %5470 = vmatpush1.msra.mxu0 %v5446
        %5471 = vmatprep.subr.mxu0 0.0
        %5472 = vmatpush1.msra.mxu0 0.0
        %5473 = vmatprep.subr.mxu0 0.0
        %5474 = vmatpush1.msra.mxu0 0.0
        %5475 = vmatprep.subr.mxu0 0.0
        %5476 = vmatpush1.msra.mxu0 0.0
        %5477 = vmatprep.subr.mxu0 0.0
        %5478 = vmatpush1.msra.mxu0 0.0
        %5479 = vmatprep.subr.mxu0 0.0
        %5480 = vmatpush1.msra.mxu0 0.0
        %5481 = vmatprep.subr.mxu0 0.0
        %5482 = vmatpush1.msra.mxu0 0.0
        %5483 = vmatprep.subr.mxu0 0.0
        %5484 = vmatpush1.msra.mxu0 0.0
        %5485 = vmatprep.subr.mxu0 0.0
        %5486 = vmatpush1.msra.mxu0 0.0
        %5487 = vmatprep.subr.mxu0 0.0
        %5488 = vmatpush1.msra.mxu0 0.0
        %5489 = vmatprep.subr.mxu0 0.0
        %5490 = vmatpush1.msra.mxu0 0.0
        %5491 = vmatprep.subr.mxu0 0.0
        %5492 = vmatpush1.msra.mxu0 0.0
        %5493 = vmatprep.subr.mxu0 0.0
        %5494 = vmatpush1.msra.mxu0 0.0
        %5495 = vmatprep.subr.mxu0 0.0
        %5496 = vmatpush1.msra.mxu0 0.0
        %5497 = vmatprep.subr.mxu0 0.0
        %5498 = vmatpush1.msra.mxu0 0.0
        %5499 = vmatprep.subr.mxu0 0.0
        %5500 = vmatpush1.msra.mxu0 0.0
        %5501 = vmatprep.subr.mxu0 0.0
        %5502 = vmatpush1.msra.mxu0 0.0
        %5503 = vmatprep.subr.mxu0 0.0
        %5504 = vmatpush1.msra.mxu0 0.0
        %5505 = vmatprep.subr.mxu0 0.0
        %5506 = vmatpush1.msra.mxu0 0.0
        %5507 = vmatprep.subr.mxu0 0.0
        %5508 = vmatpush1.msra.mxu0 0.0
        %5509 = vmatprep.subr.mxu0 0.0
        %5510 = vmatpush1.msra.mxu0 0.0
        %5511 = vmatprep.subr.mxu0 0.0
        %5512 = vmatpush1.msra.mxu0 0.0
        %5513 = vmatprep.subr.mxu0 0.0
        %5514 = vmatpush1.msra.mxu0 0.0
        %5515 = vmatprep.subr.mxu0 0.0
        %5516 = vmatpush1.msra.mxu0 0.0
        %5517 = vmatprep.subr.mxu0 0.0
        %5518 = vmatpush1.msra.mxu0 0.0
        %5519 = vmatprep.subr.mxu0 0.0
        %5520 = vmatpush1.msra.mxu0 0.0
        %5521 = vmatprep.subr.mxu0 0.0
        %5522 = vmatpush1.msra.mxu0 0.0
        %5523 = vmatprep.subr.mxu0 0.0
        %5524 = vmatpush1.msra.mxu0 0.0
        %5525 = vmatprep.subr.mxu0 0.0
        %5526 = vmatpush1.msra.mxu0 0.0
        %5527 = vmatprep.mubr.f32.mxu0 0.0
        %5528 = vmatmul.mubr.f32.gmra.mrb[0].mxu0 %v5452
        %v5529 = vpop.f32.mrb[0].mxu0
        %v5530 = vadd.f32 0.0, %v5529
        %v5531 = vpop.f32.mrb[0].mxu0
        %5532 = vmatprep.mubr.f32.mxu0 0.0
        %5533 = vmatmul.mubr.f32.gmra.mrb[0].mxu0 %v5455
        %v5534 = vpop.f32.mrb[0].mxu0
        %v5535 = vadd.f32 0.0, %v5534
        %v5536 = vpop.f32.mrb[0].mxu0
        %5537 = vmatprep.mubr.f32.mxu0 0.0
        %5538 = vmatmul.mubr.f32.gmra.mrb[0].mxu0 %v5458
        %v5539 = vpop.f32.mrb[0].mxu0
        %v5540 = vadd.f32 0.0, %v5539
        %v5541 = vpop.f32.mrb[0].mxu0
        %5542 = vmatprep.mubr.f32.mxu0 0.0
        %5543 = vmatmul.mubr.f32.gmra.mrb[0].mxu0 %v5461
        %v5544 = vpop.f32.mrb[0].mxu0
        %v5545 = vadd.f32 0.0, %v5544
        %v5546 = vpop.f32.mrb[0].mxu0
        %5547 = vdwg.mxu0
        %5552 = vrot.lane.b32.xlu0 %v1523, 120
        %v5553 = vpop.permute.xlu0 %5552
        %5554 = vrot.lane.b32.xlu0 %v1528, 120
        %v5555 = vpop.permute.xlu0 %5554
        %5556 = vrot.lane.b32.xlu0 %v1533, 120
        %v5557 = vpop.permute.xlu0 %5556
        %5558 = vrot.lane.b32.xlu0 %v1538, 120
        %v5559 = vpop.permute.xlu0 %5558
        %v5565 = vsel %vm575, %v4862, 0
        %v5568 = vsel %vm575, %v4863, 0
        %v5571 = vsel %vm575, %v4864, 0
        %v5574 = vsel %vm575, %v4865, 0
        %5576 = vmatprep.subr.mxu0 0.0
        %5577 = vmatpush1.msra.mxu0 %v5553
        %5578 = vmatprep.subr.mxu0 0.0
        %5579 = vmatpush1.msra.mxu0 %v5555
        %5580 = vmatprep.subr.mxu0 0.0
        %5581 = vmatpush1.msra.mxu0 %v5557
        %5582 = vmatprep.subr.mxu0 0.0
        %5583 = vmatpush1.msra.mxu0 %v5559
        %5584 = vmatprep.subr.mxu0 0.0
        %5585 = vmatpush1.msra.mxu0 0.0
        %5586 = vmatprep.subr.mxu0 0.0
        %5587 = vmatpush1.msra.mxu0 0.0
        %5588 = vmatprep.subr.mxu0 0.0
        %5589 = vmatpush1.msra.mxu0 0.0
        %5590 = vmatprep.subr.mxu0 0.0
        %5591 = vmatpush1.msra.mxu0 0.0
        %5592 = vmatprep.subr.mxu0 0.0
        %5593 = vmatpush1.msra.mxu0 0.0
        %5594 = vmatprep.subr.mxu0 0.0
        %5595 = vmatpush1.msra.mxu0 0.0
        %5596 = vmatprep.subr.mxu0 0.0
        %5597 = vmatpush1.msra.mxu0 0.0
        %5598 = vmatprep.subr.mxu0 0.0
        %5599 = vmatpush1.msra.mxu0 0.0
        %5600 = vmatprep.subr.mxu0 0.0
        %5601 = vmatpush1.msra.mxu0 0.0
        %5602 = vmatprep.subr.mxu0 0.0
        %5603 = vmatpush1.msra.mxu0 0.0
        %5604 = vmatprep.subr.mxu0 0.0
        %5605 = vmatpush1.msra.mxu0 0.0
        %5606 = vmatprep.subr.mxu0 0.0
        %5607 = vmatpush1.msra.mxu0 0.0
        %5608 = vmatprep.subr.mxu0 0.0
        %5609 = vmatpush1.msra.mxu0 0.0
        %5610 = vmatprep.subr.mxu0 0.0
        %5611 = vmatpush1.msra.mxu0 0.0
        %5612 = vmatprep.subr.mxu0 0.0
        %5613 = vmatpush1.msra.mxu0 0.0
        %5614 = vmatprep.subr.mxu0 0.0
        %5615 = vmatpush1.msra.mxu0 0.0
        %5616 = vmatprep.subr.mxu0 0.0
        %5617 = vmatpush1.msra.mxu0 0.0
        %5618 = vmatprep.subr.mxu0 0.0
        %5619 = vmatpush1.msra.mxu0 0.0
        %5620 = vmatprep.subr.mxu0 0.0
        %5621 = vmatpush1.msra.mxu0 0.0
        %5622 = vmatprep.subr.mxu0 0.0
        %5623 = vmatpush1.msra.mxu0 0.0
        %5624 = vmatprep.subr.mxu0 0.0
        %5625 = vmatpush1.msra.mxu0 0.0
        %5626 = vmatprep.subr.mxu0 0.0
        %5627 = vmatpush1.msra.mxu0 0.0
        %5628 = vmatprep.subr.mxu0 0.0
        %5629 = vmatpush1.msra.mxu0 0.0
        %5630 = vmatprep.subr.mxu0 0.0
        %5631 = vmatpush1.msra.mxu0 0.0
        %5632 = vmatprep.subr.mxu0 0.0
        %5633 = vmatpush1.msra.mxu0 0.0
        %5634 = vmatprep.subr.mxu0 0.0
        %5635 = vmatpush1.msra.mxu0 0.0
        %5636 = vmatprep.subr.mxu0 0.0
        %5637 = vmatpush1.msra.mxu0 0.0
        %5638 = vmatprep.subr.mxu0 0.0
        %5639 = vmatpush1.msra.mxu0 0.0
        %5640 = vmatprep.mubr.f32.mxu0 0.0
        %5641 = vmatmul.mubr.f32.gmra.mrb[0].mxu0 %v5565
        %v5642 = vpop.f32.mrb[0].mxu0
        %v5643 = vadd.f32 0.0, %v5642
        %v5644 = vpop.f32.mrb[0].mxu0
        %5645 = vmatprep.mubr.f32.mxu0 0.0
        %5646 = vmatmul.mubr.f32.gmra.mrb[0].mxu0 %v5568
        %v5647 = vpop.f32.mrb[0].mxu0
        %v5648 = vadd.f32 0.0, %v5647
        %v5649 = vpop.f32.mrb[0].mxu0
        %5650 = vmatprep.mubr.f32.mxu0 0.0
        %5651 = vmatmul.mubr.f32.gmra.mrb[0].mxu0 %v5571
        %v5652 = vpop.f32.mrb[0].mxu0
        %v5653 = vadd.f32 0.0, %v5652
        %v5654 = vpop.f32.mrb[0].mxu0
        %5655 = vmatprep.mubr.f32.mxu0 0.0
        %5656 = vmatmul.mubr.f32.gmra.mrb[0].mxu0 %v5574
        %v5657 = vpop.f32.mrb[0].mxu0
        %v5658 = vadd.f32 0.0, %v5657
        %v5659 = vpop.f32.mrb[0].mxu0
        %5660 = vdwg.mxu0
        %5665 = vrot.lane.b32.xlu0 %v1543, 120
        %v5666 = vpop.permute.xlu0 %5665
        %5667 = vrot.lane.b32.xlu0 %v1548, 120
        %v5668 = vpop.permute.xlu0 %5667
        %5669 = vrot.lane.b32.xlu0 %v1553, 120
        %v5670 = vpop.permute.xlu0 %5669
        %5671 = vrot.lane.b32.xlu0 %v1558, 120
        %v5672 = vpop.permute.xlu0 %5671
        %v5678 = vsel %vm575, %v4866, 0
        %v5681 = vsel %vm575, %v4867, 0
        %v5684 = vsel %vm575, %v4868, 0
        %v5687 = vsel %vm575, %v4869, 0
        %5689 = vmatprep.subr.mxu0 0.0
        %5690 = vmatpush1.msra.mxu0 %v5666
        %5691 = vmatprep.subr.mxu0 0.0
        %5692 = vmatpush1.msra.mxu0 %v5668
        %5693 = vmatprep.subr.mxu0 0.0
        %5694 = vmatpush1.msra.mxu0 %v5670
        %5695 = vmatprep.subr.mxu0 0.0
        %5696 = vmatpush1.msra.mxu0 %v5672
        %5697 = vmatprep.subr.mxu0 0.0
        %5698 = vmatpush1.msra.mxu0 0.0
        %5699 = vmatprep.subr.mxu0 0.0
        %5700 = vmatpush1.msra.mxu0 0.0
        %5701 = vmatprep.subr.mxu0 0.0
        %5702 = vmatpush1.msra.mxu0 0.0
        %5703 = vmatprep.subr.mxu0 0.0
        %5704 = vmatpush1.msra.mxu0 0.0
        %5705 = vmatprep.subr.mxu0 0.0
        %5706 = vmatpush1.msra.mxu0 0.0
        %5707 = vmatprep.subr.mxu0 0.0
        %5708 = vmatpush1.msra.mxu0 0.0
        %5709 = vmatprep.subr.mxu0 0.0
        %5710 = vmatpush1.msra.mxu0 0.0
        %5711 = vmatprep.subr.mxu0 0.0
        %5712 = vmatpush1.msra.mxu0 0.0
        %5713 = vmatprep.subr.mxu0 0.0
        %5714 = vmatpush1.msra.mxu0 0.0
        %5715 = vmatprep.subr.mxu0 0.0
        %5716 = vmatpush1.msra.mxu0 0.0
        %5717 = vmatprep.subr.mxu0 0.0
        %5718 = vmatpush1.msra.mxu0 0.0
        %5719 = vmatprep.subr.mxu0 0.0
        %5720 = vmatpush1.msra.mxu0 0.0
        %5721 = vmatprep.subr.mxu0 0.0
        %5722 = vmatpush1.msra.mxu0 0.0
        %5723 = vmatprep.subr.mxu0 0.0
        %5724 = vmatpush1.msra.mxu0 0.0
        %5725 = vmatprep.subr.mxu0 0.0
        %5726 = vmatpush1.msra.mxu0 0.0
        %5727 = vmatprep.subr.mxu0 0.0
        %5728 = vmatpush1.msra.mxu0 0.0
        %5729 = vmatprep.subr.mxu0 0.0
        %5730 = vmatpush1.msra.mxu0 0.0
        %5731 = vmatprep.subr.mxu0 0.0
        %5732 = vmatpush1.msra.mxu0 0.0
        %5733 = vmatprep.subr.mxu0 0.0
        %5734 = vmatpush1.msra.mxu0 0.0
        %5735 = vmatprep.subr.mxu0 0.0
        %5736 = vmatpush1.msra.mxu0 0.0
        %5737 = vmatprep.subr.mxu0 0.0
        %5738 = vmatpush1.msra.mxu0 0.0
        %5739 = vmatprep.subr.mxu0 0.0
        %5740 = vmatpush1.msra.mxu0 0.0
        %5741 = vmatprep.subr.mxu0 0.0
        %5742 = vmatpush1.msra.mxu0 0.0
        %5743 = vmatprep.subr.mxu0 0.0
        %5744 = vmatpush1.msra.mxu0 0.0
        %5745 = vmatprep.subr.mxu0 0.0
        %5746 = vmatpush1.msra.mxu0 0.0
        %5747 = vmatprep.subr.mxu0 0.0
        %5748 = vmatpush1.msra.mxu0 0.0
        %5749 = vmatprep.subr.mxu0 0.0
        %5750 = vmatpush1.msra.mxu0 0.0
        %5751 = vmatprep.subr.mxu0 0.0
        %5752 = vmatpush1.msra.mxu0 0.0
        %5753 = vmatprep.mubr.f32.mxu0 0.0
        %5754 = vmatmul.mubr.f32.gmra.mrb[0].mxu0 %v5678
        %v5755 = vpop.f32.mrb[0].mxu0
        %v5756 = vadd.f32 0.0, %v5755
        %v5757 = vpop.f32.mrb[0].mxu0
        %5758 = vmatprep.mubr.f32.mxu0 0.0
        %5759 = vmatmul.mubr.f32.gmra.mrb[0].mxu0 %v5681
        %v5760 = vpop.f32.mrb[0].mxu0
        %v5761 = vadd.f32 0.0, %v5760
        %v5762 = vpop.f32.mrb[0].mxu0
        %5763 = vmatprep.mubr.f32.mxu0 0.0
        %5764 = vmatmul.mubr.f32.gmra.mrb[0].mxu0 %v5684
        %v5765 = vpop.f32.mrb[0].mxu0
        %v5766 = vadd.f32 0.0, %v5765
        %v5767 = vpop.f32.mrb[0].mxu0
        %5768 = vmatprep.mubr.f32.mxu0 0.0
        %5769 = vmatmul.mubr.f32.gmra.mrb[0].mxu0 %v5687
        %v5770 = vpop.f32.mrb[0].mxu0
        %v5771 = vadd.f32 0.0, %v5770
        %v5772 = vpop.f32.mrb[0].mxu0
        %5773 = vdwg.mxu0
        %v5775 = vsel %vm1581, %v4965, 0
        %v5778 = vsel %vm1581, %v4970, 0
        %v5781 = vsel %vm1581, %v4975, 0
        %v5784 = vsel %vm1581, %v4980, 0
        %v5787 = vsel %vm1581, %v5078, 0
        %v5790 = vsel %vm1581, %v5083, 0
        %v5793 = vsel %vm1581, %v5088, 0
        %v5796 = vsel %vm1581, %v5093, 0
        %v5799 = vsel %vm1581, %v5191, 0
        %v5802 = vsel %vm1581, %v5196, 0
        %v5805 = vsel %vm1581, %v5201, 0
        %v5808 = vsel %vm1581, %v5206, 0
        %v5811 = vsel %vm1581, %v5304, 0
        %v5814 = vsel %vm1581, %v5309, 0
        %v5817 = vsel %vm1581, %v5314, 0
        %v5820 = vsel %vm1581, %v5319, 0
        %v5823 = vsel %vm1581, %v5417, 0
        %v5826 = vsel %vm1581, %v5422, 0
        %v5829 = vsel %vm1581, %v5427, 0
        %v5832 = vsel %vm1581, %v5432, 0
        %v5835 = vsel %vm1581, %v5530, 0
        %v5838 = vsel %vm1581, %v5535, 0
        %v5841 = vsel %vm1581, %v5540, 0
        %v5844 = vsel %vm1581, %v5545, 0
        %v5847 = vsel %vm1581, %v5643, 0
        %v5850 = vsel %vm1581, %v5648, 0
        %v5853 = vsel %vm1581, %v5653, 0
        %v5856 = vsel %vm1581, %v5658, 0
        %v5859 = vsel %vm1581, %v5756, 0
        %v5862 = vsel %vm1581, %v5761, 0
        %v5865 = vsel %vm1581, %v5766, 0
        %v5868 = vsel %vm1581, %v5771, 0
        %5870 = vmatprep.subr.mxu0 0.0
        %5871 = vmatpush1.msra.mxu0 %v1578
        %5872 = vmatprep.subr.mxu0 0.0
        %5873 = vmatpush1.msra.mxu0 0.0
        %5874 = vmatprep.subr.mxu0 0.0
        %5875 = vmatpush1.msra.mxu0 0.0
        %5876 = vmatprep.subr.mxu0 0.0
        %5877 = vmatpush1.msra.mxu0 0.0
        %5878 = vmatprep.subr.mxu0 0.0
        %5879 = vmatpush1.msra.mxu0 0.0
        %5880 = vmatprep.subr.mxu0 0.0
        %5881 = vmatpush1.msra.mxu0 0.0
        %5882 = vmatprep.subr.mxu0 0.0
        %5883 = vmatpush1.msra.mxu0 0.0
        %5884 = vmatprep.subr.mxu0 0.0
        %5885 = vmatpush1.msra.mxu0 0.0
        %5886 = vmatprep.subr.mxu0 0.0
        %5887 = vmatpush1.msra.mxu0 0.0
        %5888 = vmatprep.subr.mxu0 0.0
        %5889 = vmatpush1.msra.mxu0 0.0
        %5890 = vmatprep.subr.mxu0 0.0
        %5891 = vmatpush1.msra.mxu0 0.0
        %5892 = vmatprep.subr.mxu0 0.0
        %5893 = vmatpush1.msra.mxu0 0.0
        %5894 = vmatprep.subr.mxu0 0.0
        %5895 = vmatpush1.msra.mxu0 0.0
        %5896 = vmatprep.subr.mxu0 0.0
        %5897 = vmatpush1.msra.mxu0 0.0
        %5898 = vmatprep.subr.mxu0 0.0
        %5899 = vmatpush1.msra.mxu0 0.0
        %5900 = vmatprep.subr.mxu0 0.0
        %5901 = vmatpush1.msra.mxu0 0.0
        %5902 = vmatprep.subr.mxu0 0.0
        %5903 = vmatpush1.msra.mxu0 0.0
        %5904 = vmatprep.subr.mxu0 0.0
        %5905 = vmatpush1.msra.mxu0 0.0
        %5906 = vmatprep.subr.mxu0 0.0
        %5907 = vmatpush1.msra.mxu0 0.0
        %5908 = vmatprep.subr.mxu0 0.0
        %5909 = vmatpush1.msra.mxu0 0.0
        %5910 = vmatprep.subr.mxu0 0.0
        %5911 = vmatpush1.msra.mxu0 0.0
        %5912 = vmatprep.subr.mxu0 0.0
        %5913 = vmatpush1.msra.mxu0 0.0
        %5914 = vmatprep.subr.mxu0 0.0
        %5915 = vmatpush1.msra.mxu0 0.0
        %5916 = vmatprep.subr.mxu0 0.0
        %5917 = vmatpush1.msra.mxu0 0.0
        %5918 = vmatprep.subr.mxu0 0.0
        %5919 = vmatpush1.msra.mxu0 0.0
        %5920 = vmatprep.subr.mxu0 0.0
        %5921 = vmatpush1.msra.mxu0 0.0
        %5922 = vmatprep.subr.mxu0 0.0
        %5923 = vmatpush1.msra.mxu0 0.0
        %5924 = vmatprep.subr.mxu0 0.0
        %5925 = vmatpush1.msra.mxu0 0.0
        %5926 = vmatprep.subr.mxu0 0.0
        %5927 = vmatpush1.msra.mxu0 0.0
        %5928 = vmatprep.subr.mxu0 0.0
        %5929 = vmatpush1.msra.mxu0 0.0
        %5930 = vmatprep.subr.mxu0 0.0
        %5931 = vmatpush1.msra.mxu0 0.0
        %5932 = vmatprep.subr.mxu0 0.0
        %5933 = vmatpush1.msra.mxu0 0.0
        %5934 = vmatprep.mubr.f32.mxu0 0.0
        %5935 = vmatmul.mubr.f32.gmra.mrb[0].mxu0 %v5775
        %v5936 = vpop.f32.mrb[0].mxu0
        %v5937 = vadd.f32 0.0, %v5936
        %v5938 = vpop.f32.mrb[0].mxu0
        %5939 = vmatprep.mubr.f32.mxu0 0.0
        %5940 = vmatmul.mubr.f32.gmra.mrb[0].mxu0 %v5778
        %v5941 = vpop.f32.mrb[0].mxu0
        %v5942 = vadd.f32 0.0, %v5941
        %v5943 = vpop.f32.mrb[0].mxu0
        %5944 = vmatprep.mubr.f32.mxu0 0.0
        %5945 = vmatmul.mubr.f32.gmra.mrb[0].mxu0 %v5781
        %v5946 = vpop.f32.mrb[0].mxu0
        %v5947 = vadd.f32 0.0, %v5946
        %v5948 = vpop.f32.mrb[0].mxu0
        %5949 = vmatprep.mubr.f32.mxu0 0.0
        %5950 = vmatmul.mubr.f32.gmra.mrb[0].mxu0 %v5784
        %v5951 = vpop.f32.mrb[0].mxu0
        %v5952 = vadd.f32 0.0, %v5951
        %v5953 = vpop.f32.mrb[0].mxu0
        %5954 = vmatprep.mubr.f32.mxu0 0.0
        %5955 = vmatmul.mubr.f32.gmra.mrb[0].mxu0 %v5787
        %v5956 = vpop.f32.mrb[0].mxu0
        %v5957 = vadd.f32 0.0, %v5956
        %v5958 = vpop.f32.mrb[0].mxu0
        %5959 = vmatprep.mubr.f32.mxu0 0.0
        %5960 = vmatmul.mubr.f32.gmra.mrb[0].mxu0 %v5790
        %v5961 = vpop.f32.mrb[0].mxu0
        %v5962 = vadd.f32 0.0, %v5961
        %v5963 = vpop.f32.mrb[0].mxu0
        %5964 = vmatprep.mubr.f32.mxu0 0.0
        %5965 = vmatmul.mubr.f32.gmra.mrb[0].mxu0 %v5793
        %v5966 = vpop.f32.mrb[0].mxu0
        %v5967 = vadd.f32 0.0, %v5966
        %v5968 = vpop.f32.mrb[0].mxu0
        %5969 = vmatprep.mubr.f32.mxu0 0.0
        %5970 = vmatmul.mubr.f32.gmra.mrb[0].mxu0 %v5796
        %v5971 = vpop.f32.mrb[0].mxu0
        %v5972 = vadd.f32 0.0, %v5971
        %v5973 = vpop.f32.mrb[0].mxu0
        %5974 = vmatprep.mubr.f32.mxu0 0.0
        %5975 = vmatmul.mubr.f32.gmra.mrb[0].mxu0 %v5799
        %v5976 = vpop.f32.mrb[0].mxu0
        %v5977 = vadd.f32 0.0, %v5976
        %v5978 = vpop.f32.mrb[0].mxu0
        %5979 = vmatprep.mubr.f32.mxu0 0.0
        %5980 = vmatmul.mubr.f32.gmra.mrb[0].mxu0 %v5802
        %v5981 = vpop.f32.mrb[0].mxu0
        %v5982 = vadd.f32 0.0, %v5981
        %v5983 = vpop.f32.mrb[0].mxu0
        %5984 = vmatprep.mubr.f32.mxu0 0.0
        %5985 = vmatmul.mubr.f32.gmra.mrb[0].mxu0 %v5805
        %v5986 = vpop.f32.mrb[0].mxu0
        %v5987 = vadd.f32 0.0, %v5986
        %v5988 = vpop.f32.mrb[0].mxu0
        %5989 = vmatprep.mubr.f32.mxu0 0.0
        %5990 = vmatmul.mubr.f32.gmra.mrb[0].mxu0 %v5808
        %v5991 = vpop.f32.mrb[0].mxu0
        %v5992 = vadd.f32 0.0, %v5991
        %v5993 = vpop.f32.mrb[0].mxu0
        %5994 = vmatprep.mubr.f32.mxu0 0.0
        %5995 = vmatmul.mubr.f32.gmra.mrb[0].mxu0 %v5811
        %v5996 = vpop.f32.mrb[0].mxu0
        %v5997 = vadd.f32 0.0, %v5996
        %v5998 = vpop.f32.mrb[0].mxu0
        %5999 = vmatprep.mubr.f32.mxu0 0.0
        %6000 = vmatmul.mubr.f32.gmra.mrb[0].mxu0 %v5814
        %v6001 = vpop.f32.mrb[0].mxu0
        %v6002 = vadd.f32 0.0, %v6001
        %v6003 = vpop.f32.mrb[0].mxu0
        %6004 = vmatprep.mubr.f32.mxu0 0.0
        %6005 = vmatmul.mubr.f32.gmra.mrb[0].mxu0 %v5817
        %v6006 = vpop.f32.mrb[0].mxu0
        %v6007 = vadd.f32 0.0, %v6006
        %v6008 = vpop.f32.mrb[0].mxu0
        %6009 = vmatprep.mubr.f32.mxu0 0.0
        %6010 = vmatmul.mubr.f32.gmra.mrb[0].mxu0 %v5820
        %v6011 = vpop.f32.mrb[0].mxu0
        %v6012 = vadd.f32 0.0, %v6011
        %v6013 = vpop.f32.mrb[0].mxu0
        %6014 = vmatprep.mubr.f32.mxu0 0.0
        %6015 = vmatmul.mubr.f32.gmra.mrb[0].mxu0 %v5823
        %v6016 = vpop.f32.mrb[0].mxu0
        %v6017 = vadd.f32 0.0, %v6016
        %v6018 = vpop.f32.mrb[0].mxu0
        %6019 = vmatprep.mubr.f32.mxu0 0.0
        %6020 = vmatmul.mubr.f32.gmra.mrb[0].mxu0 %v5826
        %v6021 = vpop.f32.mrb[0].mxu0
        %v6022 = vadd.f32 0.0, %v6021
        %v6023 = vpop.f32.mrb[0].mxu0
        %6024 = vmatprep.mubr.f32.mxu0 0.0
        %6025 = vmatmul.mubr.f32.gmra.mrb[0].mxu0 %v5829
        %v6026 = vpop.f32.mrb[0].mxu0
        %v6027 = vadd.f32 0.0, %v6026
        %v6028 = vpop.f32.mrb[0].mxu0
        %6029 = vmatprep.mubr.f32.mxu0 0.0
        %6030 = vmatmul.mubr.f32.gmra.mrb[0].mxu0 %v5832
        %v6031 = vpop.f32.mrb[0].mxu0
        %v6032 = vadd.f32 0.0, %v6031
        %v6033 = vpop.f32.mrb[0].mxu0
        %6034 = vmatprep.mubr.f32.mxu0 0.0
        %6035 = vmatmul.mubr.f32.gmra.mrb[0].mxu0 %v5835
        %v6036 = vpop.f32.mrb[0].mxu0
        %v6037 = vadd.f32 0.0, %v6036
        %v6038 = vpop.f32.mrb[0].mxu0
        %6039 = vmatprep.mubr.f32.mxu0 0.0
        %6040 = vmatmul.mubr.f32.gmra.mrb[0].mxu0 %v5838
        %v6041 = vpop.f32.mrb[0].mxu0
        %v6042 = vadd.f32 0.0, %v6041
        %v6043 = vpop.f32.mrb[0].mxu0
        %6044 = vmatprep.mubr.f32.mxu0 0.0
        %6045 = vmatmul.mubr.f32.gmra.mrb[0].mxu0 %v5841
        %v6046 = vpop.f32.mrb[0].mxu0
        %v6047 = vadd.f32 0.0, %v6046
        %v6048 = vpop.f32.mrb[0].mxu0
        %6049 = vmatprep.mubr.f32.mxu0 0.0
        %6050 = vmatmul.mubr.f32.gmra.mrb[0].mxu0 %v5844
        %v6051 = vpop.f32.mrb[0].mxu0
        %v6052 = vadd.f32 0.0, %v6051
        %v6053 = vpop.f32.mrb[0].mxu0
        %6054 = vmatprep.mubr.f32.mxu0 0.0
        %6055 = vmatmul.mubr.f32.gmra.mrb[0].mxu0 %v5847
        %v6056 = vpop.f32.mrb[0].mxu0
        %v6057 = vadd.f32 0.0, %v6056
        %v6058 = vpop.f32.mrb[0].mxu0
        %6059 = vmatprep.mubr.f32.mxu0 0.0
        %6060 = vmatmul.mubr.f32.gmra.mrb[0].mxu0 %v5850
        %v6061 = vpop.f32.mrb[0].mxu0
        %v6062 = vadd.f32 0.0, %v6061
        %v6063 = vpop.f32.mrb[0].mxu0
        %6064 = vmatprep.mubr.f32.mxu0 0.0
        %6065 = vmatmul.mubr.f32.gmra.mrb[0].mxu0 %v5853
        %v6066 = vpop.f32.mrb[0].mxu0
        %v6067 = vadd.f32 0.0, %v6066
        %v6068 = vpop.f32.mrb[0].mxu0
        %6069 = vmatprep.mubr.f32.mxu0 0.0
        %6070 = vmatmul.mubr.f32.gmra.mrb[0].mxu0 %v5856
        %v6071 = vpop.f32.mrb[0].mxu0
        %v6072 = vadd.f32 0.0, %v6071
        %v6073 = vpop.f32.mrb[0].mxu0
        %6074 = vmatprep.mubr.f32.mxu0 0.0
        %6075 = vmatmul.mubr.f32.gmra.mrb[0].mxu0 %v5859
        %v6076 = vpop.f32.mrb[0].mxu0
        %v6077 = vadd.f32 0.0, %v6076
        %v6078 = vpop.f32.mrb[0].mxu0
        %6079 = vmatprep.mubr.f32.mxu0 0.0
        %6080 = vmatmul.mubr.f32.gmra.mrb[0].mxu0 %v5862
        %v6081 = vpop.f32.mrb[0].mxu0
        %v6082 = vadd.f32 0.0, %v6081
        %v6083 = vpop.f32.mrb[0].mxu0
        %6084 = vmatprep.mubr.f32.mxu0 0.0
        %6085 = vmatmul.mubr.f32.gmra.mrb[0].mxu0 %v5865
        %v6086 = vpop.f32.mrb[0].mxu0
        %v6087 = vadd.f32 0.0, %v6086
        %v6088 = vpop.f32.mrb[0].mxu0
        %6089 = vmatprep.mubr.f32.mxu0 0.0
        %6090 = vmatmul.mubr.f32.gmra.mrb[0].mxu0 %v5868
        %v6091 = vpop.f32.mrb[0].mxu0
        %v6092 = vadd.f32 0.0, %v6091
        %v6093 = vpop.f32.mrb[0].mxu0
        %6094 = vdwg.mxu0
        %v6096 = vsel %vm1581, %v2885, 0
        %v6099 = vsel %vm1581, %v2890, 0
        %v6102 = vsel %vm1581, %v2895, 0
        %v6105 = vsel %vm1581, %v2900, 0
        %v6108 = vsel %vm1581, %v2982, 0
        %v6111 = vsel %vm1581, %v2987, 0
        %v6114 = vsel %vm1581, %v2992, 0
        %v6117 = vsel %vm1581, %v2997, 0
        %v6120 = vsel %vm1581, %v3079, 0
        %v6123 = vsel %vm1581, %v3084, 0
        %v6126 = vsel %vm1581, %v3089, 0
        %v6129 = vsel %vm1581, %v3094, 0
        %v6132 = vsel %vm1581, %v3176, 0
        %v6135 = vsel %vm1581, %v3181, 0
        %v6138 = vsel %vm1581, %v3186, 0
        %v6141 = vsel %vm1581, %v3191, 0
        %v6144 = vsel %vm1581, %v3273, 0
        %v6147 = vsel %vm1581, %v3278, 0
        %v6150 = vsel %vm1581, %v3283, 0
        %v6153 = vsel %vm1581, %v3288, 0
        %v6156 = vsel %vm1581, %v3370, 0
        %v6159 = vsel %vm1581, %v3375, 0
        %v6162 = vsel %vm1581, %v3380, 0
        %v6165 = vsel %vm1581, %v3385, 0
        %v6168 = vsel %vm1581, %v3467, 0
        %v6171 = vsel %vm1581, %v3472, 0
        %v6174 = vsel %vm1581, %v3477, 0
        %v6177 = vsel %vm1581, %v3482, 0
        %v6180 = vsel %vm1581, %v3564, 0
        %v6183 = vsel %vm1581, %v3569, 0
        %v6186 = vsel %vm1581, %v3574, 0
        %v6189 = vsel %vm1581, %v3579, 0
        %6191 = vmatprep.subr.mxu0 0.0
        %6192 = vmatpush1.msra.mxu0 %v1577
        %6193 = vmatprep.subr.mxu0 0.0
        %6194 = vmatpush1.msra.mxu0 0.0
        %6195 = vmatprep.subr.mxu0 0.0
        %6196 = vmatpush1.msra.mxu0 0.0
        %6197 = vmatprep.subr.mxu0 0.0
        %6198 = vmatpush1.msra.mxu0 0.0
        %6199 = vmatprep.subr.mxu0 0.0
        %6200 = vmatpush1.msra.mxu0 0.0
        %6201 = vmatprep.subr.mxu0 0.0
        %6202 = vmatpush1.msra.mxu0 0.0
        %6203 = vmatprep.subr.mxu0 0.0
        %6204 = vmatpush1.msra.mxu0 0.0
        %6205 = vmatprep.subr.mxu0 0.0
        %6206 = vmatpush1.msra.mxu0 0.0
        %6207 = vmatprep.subr.mxu0 0.0
        %6208 = vmatpush1.msra.mxu0 0.0
        %6209 = vmatprep.subr.mxu0 0.0
        %6210 = vmatpush1.msra.mxu0 0.0
        %6211 = vmatprep.subr.mxu0 0.0
        %6212 = vmatpush1.msra.mxu0 0.0
        %6213 = vmatprep.subr.mxu0 0.0
        %6214 = vmatpush1.msra.mxu0 0.0
        %6215 = vmatprep.subr.mxu0 0.0
        %6216 = vmatpush1.msra.mxu0 0.0
        %6217 = vmatprep.subr.mxu0 0.0
        %6218 = vmatpush1.msra.mxu0 0.0
        %6219 = vmatprep.subr.mxu0 0.0
        %6220 = vmatpush1.msra.mxu0 0.0
        %6221 = vmatprep.subr.mxu0 0.0
        %6222 = vmatpush1.msra.mxu0 0.0
        %6223 = vmatprep.subr.mxu0 0.0
        %6224 = vmatpush1.msra.mxu0 0.0
        %6225 = vmatprep.subr.mxu0 0.0
        %6226 = vmatpush1.msra.mxu0 0.0
        %6227 = vmatprep.subr.mxu0 0.0
        %6228 = vmatpush1.msra.mxu0 0.0
        %6229 = vmatprep.subr.mxu0 0.0
        %6230 = vmatpush1.msra.mxu0 0.0
        %6231 = vmatprep.subr.mxu0 0.0
        %6232 = vmatpush1.msra.mxu0 0.0
        %6233 = vmatprep.subr.mxu0 0.0
        %6234 = vmatpush1.msra.mxu0 0.0
        %6235 = vmatprep.subr.mxu0 0.0
        %6236 = vmatpush1.msra.mxu0 0.0
        %6237 = vmatprep.subr.mxu0 0.0
        %6238 = vmatpush1.msra.mxu0 0.0
        %6239 = vmatprep.subr.mxu0 0.0
        %6240 = vmatpush1.msra.mxu0 0.0
        %6241 = vmatprep.subr.mxu0 0.0
        %6242 = vmatpush1.msra.mxu0 0.0
        %6243 = vmatprep.subr.mxu0 0.0
        %6244 = vmatpush1.msra.mxu0 0.0
        %6245 = vmatprep.subr.mxu0 0.0
        %6246 = vmatpush1.msra.mxu0 0.0
        %6247 = vmatprep.subr.mxu0 0.0
        %6248 = vmatpush1.msra.mxu0 0.0
        %6249 = vmatprep.subr.mxu0 0.0
        %6250 = vmatpush1.msra.mxu0 0.0
        %6251 = vmatprep.subr.mxu0 0.0
        %6252 = vmatpush1.msra.mxu0 0.0
        %6253 = vmatprep.subr.mxu0 0.0
        %6254 = vmatpush1.msra.mxu0 0.0
        %6255 = vmatprep.mubr.f32.mxu0 0.0
        %6256 = vmatmul.mubr.f32.gmra.mrb[0].mxu0 %v6096
        %v6257 = vpop.f32.mrb[0].mxu0
        %v6258 = vadd.f32 %v5937, %v6257
        %v6259 = vpop.f32.mrb[0].mxu0
        %6260 = vmatprep.mubr.f32.mxu0 0.0
        %6261 = vmatmul.mubr.f32.gmra.mrb[0].mxu0 %v6099
        %v6262 = vpop.f32.mrb[0].mxu0
        %v6263 = vadd.f32 %v5942, %v6262
        %v6264 = vpop.f32.mrb[0].mxu0
        %6265 = vmatprep.mubr.f32.mxu0 0.0
        %6266 = vmatmul.mubr.f32.gmra.mrb[0].mxu0 %v6102
        %v6267 = vpop.f32.mrb[0].mxu0
        %v6268 = vadd.f32 %v5947, %v6267
        %v6269 = vpop.f32.mrb[0].mxu0
        %6270 = vmatprep.mubr.f32.mxu0 0.0
        %6271 = vmatmul.mubr.f32.gmra.mrb[0].mxu0 %v6105
        %v6272 = vpop.f32.mrb[0].mxu0
        %v6273 = vadd.f32 %v5952, %v6272
        %v6274 = vpop.f32.mrb[0].mxu0
        %6275 = vmatprep.mubr.f32.mxu0 0.0
        %6276 = vmatmul.mubr.f32.gmra.mrb[0].mxu0 %v6108
        %v6277 = vpop.f32.mrb[0].mxu0
        %v6278 = vadd.f32 %v5957, %v6277
        %v6279 = vpop.f32.mrb[0].mxu0
        %6280 = vmatprep.mubr.f32.mxu0 0.0
        %6281 = vmatmul.mubr.f32.gmra.mrb[0].mxu0 %v6111
        %v6282 = vpop.f32.mrb[0].mxu0
        %v6283 = vadd.f32 %v5962, %v6282
        %v6284 = vpop.f32.mrb[0].mxu0
        %6285 = vmatprep.mubr.f32.mxu0 0.0
        %6286 = vmatmul.mubr.f32.gmra.mrb[0].mxu0 %v6114
        %v6287 = vpop.f32.mrb[0].mxu0
        %v6288 = vadd.f32 %v5967, %v6287
        %v6289 = vpop.f32.mrb[0].mxu0
        %6290 = vmatprep.mubr.f32.mxu0 0.0
        %6291 = vmatmul.mubr.f32.gmra.mrb[0].mxu0 %v6117
        %v6292 = vpop.f32.mrb[0].mxu0
        %v6293 = vadd.f32 %v5972, %v6292
        %v6294 = vpop.f32.mrb[0].mxu0
        %6295 = vmatprep.mubr.f32.mxu0 0.0
        %6296 = vmatmul.mubr.f32.gmra.mrb[0].mxu0 %v6120
        %v6297 = vpop.f32.mrb[0].mxu0
        %v6298 = vadd.f32 %v5977, %v6297
        %v6299 = vpop.f32.mrb[0].mxu0
        %6300 = vmatprep.mubr.f32.mxu0 0.0
        %6301 = vmatmul.mubr.f32.gmra.mrb[0].mxu0 %v6123
        %v6302 = vpop.f32.mrb[0].mxu0
        %v6303 = vadd.f32 %v5982, %v6302
        %v6304 = vpop.f32.mrb[0].mxu0
        %6305 = vmatprep.mubr.f32.mxu0 0.0
        %6306 = vmatmul.mubr.f32.gmra.mrb[0].mxu0 %v6126
        %v6307 = vpop.f32.mrb[0].mxu0
        %v6308 = vadd.f32 %v5987, %v6307
        %v6309 = vpop.f32.mrb[0].mxu0
        %6310 = vmatprep.mubr.f32.mxu0 0.0
        %6311 = vmatmul.mubr.f32.gmra.mrb[0].mxu0 %v6129
        %v6312 = vpop.f32.mrb[0].mxu0
        %v6313 = vadd.f32 %v5992, %v6312
        %v6314 = vpop.f32.mrb[0].mxu0
        %6315 = vmatprep.mubr.f32.mxu0 0.0
        %6316 = vmatmul.mubr.f32.gmra.mrb[0].mxu0 %v6132
        %v6317 = vpop.f32.mrb[0].mxu0
        %v6318 = vadd.f32 %v5997, %v6317
        %v6319 = vpop.f32.mrb[0].mxu0
        %6320 = vmatprep.mubr.f32.mxu0 0.0
        %6321 = vmatmul.mubr.f32.gmra.mrb[0].mxu0 %v6135
        %v6322 = vpop.f32.mrb[0].mxu0
        %v6323 = vadd.f32 %v6002, %v6322
        %v6324 = vpop.f32.mrb[0].mxu0
        %6325 = vmatprep.mubr.f32.mxu0 0.0
        %6326 = vmatmul.mubr.f32.gmra.mrb[0].mxu0 %v6138
        %v6327 = vpop.f32.mrb[0].mxu0
        %v6328 = vadd.f32 %v6007, %v6327
        %v6329 = vpop.f32.mrb[0].mxu0
        %6330 = vmatprep.mubr.f32.mxu0 0.0
        %6331 = vmatmul.mubr.f32.gmra.mrb[0].mxu0 %v6141
        %v6332 = vpop.f32.mrb[0].mxu0
        %v6333 = vadd.f32 %v6012, %v6332
        %v6334 = vpop.f32.mrb[0].mxu0
        %6335 = vmatprep.mubr.f32.mxu0 0.0
        %6336 = vmatmul.mubr.f32.gmra.mrb[0].mxu0 %v6144
        %v6337 = vpop.f32.mrb[0].mxu0
        %v6338 = vadd.f32 %v6017, %v6337
        %v6339 = vpop.f32.mrb[0].mxu0
        %6340 = vmatprep.mubr.f32.mxu0 0.0
        %6341 = vmatmul.mubr.f32.gmra.mrb[0].mxu0 %v6147
        %v6342 = vpop.f32.mrb[0].mxu0
        %v6343 = vadd.f32 %v6022, %v6342
        %v6344 = vpop.f32.mrb[0].mxu0
        %6345 = vmatprep.mubr.f32.mxu0 0.0
        %6346 = vmatmul.mubr.f32.gmra.mrb[0].mxu0 %v6150
        %v6347 = vpop.f32.mrb[0].mxu0
        %v6348 = vadd.f32 %v6027, %v6347
        %v6349 = vpop.f32.mrb[0].mxu0
        %6350 = vmatprep.mubr.f32.mxu0 0.0
        %6351 = vmatmul.mubr.f32.gmra.mrb[0].mxu0 %v6153
        %v6352 = vpop.f32.mrb[0].mxu0
        %v6353 = vadd.f32 %v6032, %v6352
        %v6354 = vpop.f32.mrb[0].mxu0
        %6355 = vmatprep.mubr.f32.mxu0 0.0
        %6356 = vmatmul.mubr.f32.gmra.mrb[0].mxu0 %v6156
        %v6357 = vpop.f32.mrb[0].mxu0
        %v6358 = vadd.f32 %v6037, %v6357
        %v6359 = vpop.f32.mrb[0].mxu0
        %6360 = vmatprep.mubr.f32.mxu0 0.0
        %6361 = vmatmul.mubr.f32.gmra.mrb[0].mxu0 %v6159
        %v6362 = vpop.f32.mrb[0].mxu0
        %v6363 = vadd.f32 %v6042, %v6362
        %v6364 = vpop.f32.mrb[0].mxu0
        %6365 = vmatprep.mubr.f32.mxu0 0.0
        %6366 = vmatmul.mubr.f32.gmra.mrb[0].mxu0 %v6162
        %v6367 = vpop.f32.mrb[0].mxu0
        %v6368 = vadd.f32 %v6047, %v6367
        %v6369 = vpop.f32.mrb[0].mxu0
        %6370 = vmatprep.mubr.f32.mxu0 0.0
        %6371 = vmatmul.mubr.f32.gmra.mrb[0].mxu0 %v6165
        %v6372 = vpop.f32.mrb[0].mxu0
        %v6373 = vadd.f32 %v6052, %v6372
        %v6374 = vpop.f32.mrb[0].mxu0
        %6375 = vmatprep.mubr.f32.mxu0 0.0
        %6376 = vmatmul.mubr.f32.gmra.mrb[0].mxu0 %v6168
        %v6377 = vpop.f32.mrb[0].mxu0
        %v6378 = vadd.f32 %v6057, %v6377
        %v6379 = vpop.f32.mrb[0].mxu0
        %6380 = vmatprep.mubr.f32.mxu0 0.0
        %6381 = vmatmul.mubr.f32.gmra.mrb[0].mxu0 %v6171
        %v6382 = vpop.f32.mrb[0].mxu0
        %v6383 = vadd.f32 %v6062, %v6382
        %v6384 = vpop.f32.mrb[0].mxu0
        %6385 = vmatprep.mubr.f32.mxu0 0.0
        %6386 = vmatmul.mubr.f32.gmra.mrb[0].mxu0 %v6174
        %v6387 = vpop.f32.mrb[0].mxu0
        %v6388 = vadd.f32 %v6067, %v6387
        %v6389 = vpop.f32.mrb[0].mxu0
        %6390 = vmatprep.mubr.f32.mxu0 0.0
        %6391 = vmatmul.mubr.f32.gmra.mrb[0].mxu0 %v6177
        %v6392 = vpop.f32.mrb[0].mxu0
        %v6393 = vadd.f32 %v6072, %v6392
        %v6394 = vpop.f32.mrb[0].mxu0
        %6395 = vmatprep.mubr.f32.mxu0 0.0
        %6396 = vmatmul.mubr.f32.gmra.mrb[0].mxu0 %v6180
        %v6397 = vpop.f32.mrb[0].mxu0
        %v6398 = vadd.f32 %v6077, %v6397
        %v6399 = vpop.f32.mrb[0].mxu0
        %6400 = vmatprep.mubr.f32.mxu0 0.0
        %6401 = vmatmul.mubr.f32.gmra.mrb[0].mxu0 %v6183
        %v6402 = vpop.f32.mrb[0].mxu0
        %v6403 = vadd.f32 %v6082, %v6402
        %v6404 = vpop.f32.mrb[0].mxu0
        %6405 = vmatprep.mubr.f32.mxu0 0.0
        %6406 = vmatmul.mubr.f32.gmra.mrb[0].mxu0 %v6186
        %v6407 = vpop.f32.mrb[0].mxu0
        %v6408 = vadd.f32 %v6087, %v6407
        %v6409 = vpop.f32.mrb[0].mxu0
        %6410 = vmatprep.mubr.f32.mxu0 0.0
        %6411 = vmatmul.mubr.f32.gmra.mrb[0].mxu0 %v6189
        %v6412 = vpop.f32.mrb[0].mxu0
        %v6413 = vadd.f32 %v6092, %v6412
        %v6414 = vpop.f32.mrb[0].mxu0
        %6415 = vdwg.mxu0
        %6416 = vrot.lane.b32.xlu0 %v739, 112
        %v6417 = vpop.permute.xlu0 %6416
        %6418 = vrot.lane.b32.xlu0 %v744, 112
        %v6419 = vpop.permute.xlu0 %6418
        %6420 = vrot.lane.b32.xlu0 %v749, 112
        %v6421 = vpop.permute.xlu0 %6420
        %6422 = vrot.lane.b32.xlu0 %v754, 112
        %v6423 = vpop.permute.xlu0 %6422
        %6424 = vrot.lane.b32.xlu0 %v1071, 112
        %v6425 = vpop.permute.xlu0 %6424
        %6426 = vrot.lane.b32.xlu0 %v1076, 112
        %v6427 = vpop.permute.xlu0 %6426
        %6428 = vrot.lane.b32.xlu0 %v1081, 112
        %v6429 = vpop.permute.xlu0 %6428
        %6430 = vrot.lane.b32.xlu0 %v1086, 112
        %v6431 = vpop.permute.xlu0 %6430
        %v6432 = vsel %vm1581, %v6417, 0
        %v6434 = vsel %vm1581, %v6419, 0
        %v6436 = vsel %vm1581, %v6421, 0
        %v6438 = vsel %vm1581, %v6423, 0
        %v6440 = vsel %vm1581, %v6425, 0
        %v6442 = vsel %vm1581, %v6427, 0
        %v6444 = vsel %vm1581, %v6429, 0
        %v6446 = vsel %vm1581, %v6431, 0
        %6448 = vmatprep.subr.mxu0 0.0
        %6449 = vmatpush1.xpose.msra.mxu0 %v6440
        %6450 = vmatprep.subr.mxu0 0.0
        %6451 = vmatpush1.xpose.msra.mxu0 %v6442
        %6452 = vmatprep.subr.mxu0 0.0
        %6453 = vmatpush1.xpose.msra.mxu0 %v6444
        %6454 = vmatprep.subr.mxu0 0.0
        %6455 = vmatpush1.xpose.msra.mxu0 %v6446
        %6456 = vmatprep.subr.mxu0 0.0
        %6457 = vmatpush1.xpose.msra.mxu0 0.0
        %6458 = vmatprep.subr.mxu0 0.0
        %6459 = vmatpush1.xpose.msra.mxu0 0.0
        %6460 = vmatprep.subr.mxu0 0.0
        %6461 = vmatpush1.xpose.msra.mxu0 0.0
        %6462 = vmatprep.subr.mxu0 0.0
        %6463 = vmatpush1.xpose.msra.mxu0 0.0
        %6464 = vmatprep.subr.mxu0 0.0
        %6465 = vmatpush1.xpose.msra.mxu0 0.0
        %6466 = vmatprep.subr.mxu0 0.0
        %6467 = vmatpush1.xpose.msra.mxu0 0.0
        %6468 = vmatprep.subr.mxu0 0.0
        %6469 = vmatpush1.xpose.msra.mxu0 0.0
        %6470 = vmatprep.subr.mxu0 0.0
        %6471 = vmatpush1.xpose.msra.mxu0 0.0
        %6472 = vmatprep.subr.mxu0 0.0
        %6473 = vmatpush1.xpose.msra.mxu0 0.0
        %6474 = vmatprep.subr.mxu0 0.0
        %6475 = vmatpush1.xpose.msra.mxu0 0.0
        %6476 = vmatprep.subr.mxu0 0.0
        %6477 = vmatpush1.xpose.msra.mxu0 0.0
        %6478 = vmatprep.subr.mxu0 0.0
        %6479 = vmatpush1.xpose.msra.mxu0 0.0
        %6480 = vmatprep.subr.mxu0 0.0
        %6481 = vmatpush1.xpose.msra.mxu0 0.0
        %6482 = vmatprep.subr.mxu0 0.0
        %6483 = vmatpush1.xpose.msra.mxu0 0.0
        %6484 = vmatprep.subr.mxu0 0.0
        %6485 = vmatpush1.xpose.msra.mxu0 0.0
        %6486 = vmatprep.subr.mxu0 0.0
        %6487 = vmatpush1.xpose.msra.mxu0 0.0
        %6488 = vmatprep.subr.mxu0 0.0
        %6489 = vmatpush1.xpose.msra.mxu0 0.0
        %6490 = vmatprep.subr.mxu0 0.0
        %6491 = vmatpush1.xpose.msra.mxu0 0.0
        %6492 = vmatprep.subr.mxu0 0.0
        %6493 = vmatpush1.xpose.msra.mxu0 0.0
        %6494 = vmatprep.subr.mxu0 0.0
        %6495 = vmatpush1.xpose.msra.mxu0 0.0
        %6496 = vmatprep.subr.mxu0 0.0
        %6497 = vmatpush1.xpose.msra.mxu0 0.0
        %6498 = vmatprep.subr.mxu0 0.0
        %6499 = vmatpush1.xpose.msra.mxu0 0.0
        %6500 = vmatprep.subr.mxu0 0.0
        %6501 = vmatpush1.xpose.msra.mxu0 0.0
        %6502 = vmatprep.subr.mxu0 0.0
        %6503 = vmatpush1.xpose.msra.mxu0 0.0
        %6504 = vmatprep.subr.mxu0 0.0
        %6505 = vmatpush1.xpose.msra.mxu0 0.0
        %6506 = vmatprep.subr.mxu0 0.0
        %6507 = vmatpush1.xpose.msra.mxu0 0.0
        %6508 = vmatprep.subr.mxu0 0.0
        %6509 = vmatpush1.xpose.msra.mxu0 0.0
        %6510 = vmatprep.subr.mxu0 0.0
        %6511 = vmatpush1.xpose.msra.mxu0 0.0
        %6512 = vmatprep.mubr.f32.mxu0 0.0
        %6513 = vmatmul.mubr.f32.gmra.mrb[0].mxu0 %v6432
        %v6514 = vpop.f32.mrb[0].mxu0
        %v6515 = vadd.f32 %v1569, %v6514
        %v6516 = vpop.f32.mrb[0].mxu0
        %6517 = vmatprep.mubr.f32.mxu0 0.0
        %6518 = vmatmul.mubr.f32.gmra.mrb[0].mxu0 %v6434
        %v6519 = vpop.f32.mrb[0].mxu0
        %v6520 = vadd.f32 %v1570, %v6519
        %v6521 = vpop.f32.mrb[0].mxu0
        %6522 = vmatprep.mubr.f32.mxu0 0.0
        %6523 = vmatmul.mubr.f32.gmra.mrb[0].mxu0 %v6436
        %v6524 = vpop.f32.mrb[0].mxu0
        %v6525 = vadd.f32 %v1571, %v6524
        %v6526 = vpop.f32.mrb[0].mxu0
        %6527 = vmatprep.mubr.f32.mxu0 0.0
        %6528 = vmatmul.mubr.f32.gmra.mrb[0].mxu0 %v6438
        %v6529 = vpop.f32.mrb[0].mxu0
        %v6530 = vadd.f32 %v1572, %v6529
        %v6531 = vpop.f32.mrb[0].mxu0
        %6532 = vdwg.mxu0
        %6533 = vrot.lane.b32.xlu0 %v759, 112
        %v6534 = vpop.permute.xlu0 %6533
        %6535 = vrot.lane.b32.xlu0 %v764, 112
        %v6536 = vpop.permute.xlu0 %6535
        %6537 = vrot.lane.b32.xlu0 %v769, 112
        %v6538 = vpop.permute.xlu0 %6537
        %6539 = vrot.lane.b32.xlu0 %v774, 112
        %v6540 = vpop.permute.xlu0 %6539
        %6541 = vrot.lane.b32.xlu0 %v1091, 112
        %v6542 = vpop.permute.xlu0 %6541
        %6543 = vrot.lane.b32.xlu0 %v1096, 112
        %v6544 = vpop.permute.xlu0 %6543
        %6545 = vrot.lane.b32.xlu0 %v1101, 112
        %v6546 = vpop.permute.xlu0 %6545
        %6547 = vrot.lane.b32.xlu0 %v1106, 112
        %v6548 = vpop.permute.xlu0 %6547
        %v6549 = vsel %vm1581, %v6534, 0
        %v6551 = vsel %vm1581, %v6536, 0
        %v6553 = vsel %vm1581, %v6538, 0
        %v6555 = vsel %vm1581, %v6540, 0
        %v6557 = vsel %vm1581, %v6542, 0
        %v6559 = vsel %vm1581, %v6544, 0
        %v6561 = vsel %vm1581, %v6546, 0
        %v6563 = vsel %vm1581, %v6548, 0
        %6565 = vmatprep.subr.mxu0 0.0
        %6566 = vmatpush1.xpose.msra.mxu0 %v6557
        %6567 = vmatprep.subr.mxu0 0.0
        %6568 = vmatpush1.xpose.msra.mxu0 %v6559
        %6569 = vmatprep.subr.mxu0 0.0
        %6570 = vmatpush1.xpose.msra.mxu0 %v6561
        %6571 = vmatprep.subr.mxu0 0.0
        %6572 = vmatpush1.xpose.msra.mxu0 %v6563
        %6573 = vmatprep.subr.mxu0 0.0
        %6574 = vmatpush1.xpose.msra.mxu0 0.0
        %6575 = vmatprep.subr.mxu0 0.0
        %6576 = vmatpush1.xpose.msra.mxu0 0.0
        %6577 = vmatprep.subr.mxu0 0.0
        %6578 = vmatpush1.xpose.msra.mxu0 0.0
        %6579 = vmatprep.subr.mxu0 0.0
        %6580 = vmatpush1.xpose.msra.mxu0 0.0
        %6581 = vmatprep.subr.mxu0 0.0
        %6582 = vmatpush1.xpose.msra.mxu0 0.0
        %6583 = vmatprep.subr.mxu0 0.0
        %6584 = vmatpush1.xpose.msra.mxu0 0.0
        %6585 = vmatprep.subr.mxu0 0.0
        %6586 = vmatpush1.xpose.msra.mxu0 0.0
        %6587 = vmatprep.subr.mxu0 0.0
        %6588 = vmatpush1.xpose.msra.mxu0 0.0
        %6589 = vmatprep.subr.mxu0 0.0
        %6590 = vmatpush1.xpose.msra.mxu0 0.0
        %6591 = vmatprep.subr.mxu0 0.0
        %6592 = vmatpush1.xpose.msra.mxu0 0.0
        %6593 = vmatprep.subr.mxu0 0.0
        %6594 = vmatpush1.xpose.msra.mxu0 0.0
        %6595 = vmatprep.subr.mxu0 0.0
        %6596 = vmatpush1.xpose.msra.mxu0 0.0
        %6597 = vmatprep.subr.mxu0 0.0
        %6598 = vmatpush1.xpose.msra.mxu0 0.0
        %6599 = vmatprep.subr.mxu0 0.0
        %6600 = vmatpush1.xpose.msra.mxu0 0.0
        %6601 = vmatprep.subr.mxu0 0.0
        %6602 = vmatpush1.xpose.msra.mxu0 0.0
        %6603 = vmatprep.subr.mxu0 0.0
        %6604 = vmatpush1.xpose.msra.mxu0 0.0
        %6605 = vmatprep.subr.mxu0 0.0
        %6606 = vmatpush1.xpose.msra.mxu0 0.0
        %6607 = vmatprep.subr.mxu0 0.0
        %6608 = vmatpush1.xpose.msra.mxu0 0.0
        %6609 = vmatprep.subr.mxu0 0.0
        %6610 = vmatpush1.xpose.msra.mxu0 0.0
        %6611 = vmatprep.subr.mxu0 0.0
        %6612 = vmatpush1.xpose.msra.mxu0 0.0
        %6613 = vmatprep.subr.mxu0 0.0
        %6614 = vmatpush1.xpose.msra.mxu0 0.0
        %6615 = vmatprep.subr.mxu0 0.0
        %6616 = vmatpush1.xpose.msra.mxu0 0.0
        %6617 = vmatprep.subr.mxu0 0.0
        %6618 = vmatpush1.xpose.msra.mxu0 0.0
        %6619 = vmatprep.subr.mxu0 0.0
        %6620 = vmatpush1.xpose.msra.mxu0 0.0
        %6621 = vmatprep.subr.mxu0 0.0
        %6622 = vmatpush1.xpose.msra.mxu0 0.0
        %6623 = vmatprep.subr.mxu0 0.0
        %6624 = vmatpush1.xpose.msra.mxu0 0.0
        %6625 = vmatprep.subr.mxu0 0.0
        %6626 = vmatpush1.xpose.msra.mxu0 0.0
        %6627 = vmatprep.subr.mxu0 0.0
        %6628 = vmatpush1.xpose.msra.mxu0 0.0
        %6629 = vmatprep.mubr.f32.mxu0 0.0
        %6630 = vmatmul.mubr.f32.gmra.mrb[0].mxu0 %v6549
        %v6631 = vpop.f32.mrb[0].mxu0
        %v6632 = vadd.f32 %v1569, %v6631
        %v6633 = vpop.f32.mrb[0].mxu0
        %6634 = vmatprep.mubr.f32.mxu0 0.0
        %6635 = vmatmul.mubr.f32.gmra.mrb[0].mxu0 %v6551
        %v6636 = vpop.f32.mrb[0].mxu0
        %v6637 = vadd.f32 %v1570, %v6636
        %v6638 = vpop.f32.mrb[0].mxu0
        %6639 = vmatprep.mubr.f32.mxu0 0.0
        %6640 = vmatmul.mubr.f32.gmra.mrb[0].mxu0 %v6553
        %v6641 = vpop.f32.mrb[0].mxu0
        %v6642 = vadd.f32 %v1571, %v6641
        %v6643 = vpop.f32.mrb[0].mxu0
        %6644 = vmatprep.mubr.f32.mxu0 0.0
        %6645 = vmatmul.mubr.f32.gmra.mrb[0].mxu0 %v6555
        %v6646 = vpop.f32.mrb[0].mxu0
        %v6647 = vadd.f32 %v1572, %v6646
        %v6648 = vpop.f32.mrb[0].mxu0
        %6649 = vdwg.mxu0
        %6650 = vrot.lane.b32.xlu0 %v779, 112
        %v6651 = vpop.permute.xlu0 %6650
        %6652 = vrot.lane.b32.xlu0 %v784, 112
        %v6653 = vpop.permute.xlu0 %6652
        %6654 = vrot.lane.b32.xlu0 %v789, 112
        %v6655 = vpop.permute.xlu0 %6654
        %6656 = vrot.lane.b32.xlu0 %v794, 112
        %v6657 = vpop.permute.xlu0 %6656
        %6658 = vrot.lane.b32.xlu0 %v1111, 112
        %v6659 = vpop.permute.xlu0 %6658
        %6660 = vrot.lane.b32.xlu0 %v1116, 112
        %v6661 = vpop.permute.xlu0 %6660
        %6662 = vrot.lane.b32.xlu0 %v1121, 112
        %v6663 = vpop.permute.xlu0 %6662
        %6664 = vrot.lane.b32.xlu0 %v1126, 112
        %v6665 = vpop.permute.xlu0 %6664
        %v6666 = vsel %vm1581, %v6651, 0
        %v6668 = vsel %vm1581, %v6653, 0
        %v6670 = vsel %vm1581, %v6655, 0
        %v6672 = vsel %vm1581, %v6657, 0
        %v6674 = vsel %vm1581, %v6659, 0
        %v6676 = vsel %vm1581, %v6661, 0
        %v6678 = vsel %vm1581, %v6663, 0
        %v6680 = vsel %vm1581, %v6665, 0
        %6682 = vmatprep.subr.mxu0 0.0
        %6683 = vmatpush1.xpose.msra.mxu0 %v6674
        %6684 = vmatprep.subr.mxu0 0.0
        %6685 = vmatpush1.xpose.msra.mxu0 %v6676
        %6686 = vmatprep.subr.mxu0 0.0
        %6687 = vmatpush1.xpose.msra.mxu0 %v6678
        %6688 = vmatprep.subr.mxu0 0.0
        %6689 = vmatpush1.xpose.msra.mxu0 %v6680
        %6690 = vmatprep.subr.mxu0 0.0
        %6691 = vmatpush1.xpose.msra.mxu0 0.0
        %6692 = vmatprep.subr.mxu0 0.0
        %6693 = vmatpush1.xpose.msra.mxu0 0.0
        %6694 = vmatprep.subr.mxu0 0.0
        %6695 = vmatpush1.xpose.msra.mxu0 0.0
        %6696 = vmatprep.subr.mxu0 0.0
        %6697 = vmatpush1.xpose.msra.mxu0 0.0
        %6698 = vmatprep.subr.mxu0 0.0
        %6699 = vmatpush1.xpose.msra.mxu0 0.0
        %6700 = vmatprep.subr.mxu0 0.0
        %6701 = vmatpush1.xpose.msra.mxu0 0.0
        %6702 = vmatprep.subr.mxu0 0.0
        %6703 = vmatpush1.xpose.msra.mxu0 0.0
        %6704 = vmatprep.subr.mxu0 0.0
        %6705 = vmatpush1.xpose.msra.mxu0 0.0
        %6706 = vmatprep.subr.mxu0 0.0
        %6707 = vmatpush1.xpose.msra.mxu0 0.0
        %6708 = vmatprep.subr.mxu0 0.0
        %6709 = vmatpush1.xpose.msra.mxu0 0.0
        %6710 = vmatprep.subr.mxu0 0.0
        %6711 = vmatpush1.xpose.msra.mxu0 0.0
        %6712 = vmatprep.subr.mxu0 0.0
        %6713 = vmatpush1.xpose.msra.mxu0 0.0
        %6714 = vmatprep.subr.mxu0 0.0
        %6715 = vmatpush1.xpose.msra.mxu0 0.0
        %6716 = vmatprep.subr.mxu0 0.0
        %6717 = vmatpush1.xpose.msra.mxu0 0.0
        %6718 = vmatprep.subr.mxu0 0.0
        %6719 = vmatpush1.xpose.msra.mxu0 0.0
        %6720 = vmatprep.subr.mxu0 0.0
        %6721 = vmatpush1.xpose.msra.mxu0 0.0
        %6722 = vmatprep.subr.mxu0 0.0
        %6723 = vmatpush1.xpose.msra.mxu0 0.0
        %6724 = vmatprep.subr.mxu0 0.0
        %6725 = vmatpush1.xpose.msra.mxu0 0.0
        %6726 = vmatprep.subr.mxu0 0.0
        %6727 = vmatpush1.xpose.msra.mxu0 0.0
        %6728 = vmatprep.subr.mxu0 0.0
        %6729 = vmatpush1.xpose.msra.mxu0 0.0
        %6730 = vmatprep.subr.mxu0 0.0
        %6731 = vmatpush1.xpose.msra.mxu0 0.0
        %6732 = vmatprep.subr.mxu0 0.0
        %6733 = vmatpush1.xpose.msra.mxu0 0.0
        %6734 = vmatprep.subr.mxu0 0.0
        %6735 = vmatpush1.xpose.msra.mxu0 0.0
        %6736 = vmatprep.subr.mxu0 0.0
        %6737 = vmatpush1.xpose.msra.mxu0 0.0
        %6738 = vmatprep.subr.mxu0 0.0
        %6739 = vmatpush1.xpose.msra.mxu0 0.0
        %6740 = vmatprep.subr.mxu0 0.0
        %6741 = vmatpush1.xpose.msra.mxu0 0.0
        %6742 = vmatprep.subr.mxu0 0.0
        %6743 = vmatpush1.xpose.msra.mxu0 0.0
        %6744 = vmatprep.subr.mxu0 0.0
        %6745 = vmatpush1.xpose.msra.mxu0 0.0
        %6746 = vmatprep.mubr.f32.mxu0 0.0
        %6747 = vmatmul.mubr.f32.gmra.mrb[0].mxu0 %v6666
        %v6748 = vpop.f32.mrb[0].mxu0
        %v6749 = vadd.f32 %v1569, %v6748
        %v6750 = vpop.f32.mrb[0].mxu0
        %6751 = vmatprep.mubr.f32.mxu0 0.0
        %6752 = vmatmul.mubr.f32.gmra.mrb[0].mxu0 %v6668
        %v6753 = vpop.f32.mrb[0].mxu0
        %v6754 = vadd.f32 %v1570, %v6753
        %v6755 = vpop.f32.mrb[0].mxu0
        %6756 = vmatprep.mubr.f32.mxu0 0.0
        %6757 = vmatmul.mubr.f32.gmra.mrb[0].mxu0 %v6670
        %v6758 = vpop.f32.mrb[0].mxu0
        %v6759 = vadd.f32 %v1571, %v6758
        %v6760 = vpop.f32.mrb[0].mxu0
        %6761 = vmatprep.mubr.f32.mxu0 0.0
        %6762 = vmatmul.mubr.f32.gmra.mrb[0].mxu0 %v6672
        %v6763 = vpop.f32.mrb[0].mxu0
        %v6764 = vadd.f32 %v1572, %v6763
        %v6765 = vpop.f32.mrb[0].mxu0
        %6766 = vdwg.mxu0
        %6767 = vrot.lane.b32.xlu0 %v799, 112
        %v6768 = vpop.permute.xlu0 %6767
        %6769 = vrot.lane.b32.xlu0 %v804, 112
        %v6770 = vpop.permute.xlu0 %6769
        %6771 = vrot.lane.b32.xlu0 %v809, 112
        %v6772 = vpop.permute.xlu0 %6771
        %6773 = vrot.lane.b32.xlu0 %v814, 112
        %v6774 = vpop.permute.xlu0 %6773
        %6775 = vrot.lane.b32.xlu0 %v1131, 112
        %v6776 = vpop.permute.xlu0 %6775
        %6777 = vrot.lane.b32.xlu0 %v1136, 112
        %v6778 = vpop.permute.xlu0 %6777
        %6779 = vrot.lane.b32.xlu0 %v1141, 112
        %v6780 = vpop.permute.xlu0 %6779
        %6781 = vrot.lane.b32.xlu0 %v1146, 112
        %v6782 = vpop.permute.xlu0 %6781
        %v6783 = vsel %vm1581, %v6768, 0
        %v6785 = vsel %vm1581, %v6770, 0
        %v6787 = vsel %vm1581, %v6772, 0
        %v6789 = vsel %vm1581, %v6774, 0
        %v6791 = vsel %vm1581, %v6776, 0
        %v6793 = vsel %vm1581, %v6778, 0
        %v6795 = vsel %vm1581, %v6780, 0
        %v6797 = vsel %vm1581, %v6782, 0
        %6799 = vmatprep.subr.mxu0 0.0
        %6800 = vmatpush1.xpose.msra.mxu0 %v6791
        %6801 = vmatprep.subr.mxu0 0.0
        %6802 = vmatpush1.xpose.msra.mxu0 %v6793
        %6803 = vmatprep.subr.mxu0 0.0
        %6804 = vmatpush1.xpose.msra.mxu0 %v6795
        %6805 = vmatprep.subr.mxu0 0.0
        %6806 = vmatpush1.xpose.msra.mxu0 %v6797
        %6807 = vmatprep.subr.mxu0 0.0
        %6808 = vmatpush1.xpose.msra.mxu0 0.0
        %6809 = vmatprep.subr.mxu0 0.0
        %6810 = vmatpush1.xpose.msra.mxu0 0.0
        %6811 = vmatprep.subr.mxu0 0.0
        %6812 = vmatpush1.xpose.msra.mxu0 0.0
        %6813 = vmatprep.subr.mxu0 0.0
        %6814 = vmatpush1.xpose.msra.mxu0 0.0
        %6815 = vmatprep.subr.mxu0 0.0
        %6816 = vmatpush1.xpose.msra.mxu0 0.0
        %6817 = vmatprep.subr.mxu0 0.0
        %6818 = vmatpush1.xpose.msra.mxu0 0.0
        %6819 = vmatprep.subr.mxu0 0.0
        %6820 = vmatpush1.xpose.msra.mxu0 0.0
        %6821 = vmatprep.subr.mxu0 0.0
        %6822 = vmatpush1.xpose.msra.mxu0 0.0
        %6823 = vmatprep.subr.mxu0 0.0
        %6824 = vmatpush1.xpose.msra.mxu0 0.0
        %6825 = vmatprep.subr.mxu0 0.0
        %6826 = vmatpush1.xpose.msra.mxu0 0.0
        %6827 = vmatprep.subr.mxu0 0.0
        %6828 = vmatpush1.xpose.msra.mxu0 0.0
        %6829 = vmatprep.subr.mxu0 0.0
        %6830 = vmatpush1.xpose.msra.mxu0 0.0
        %6831 = vmatprep.subr.mxu0 0.0
        %6832 = vmatpush1.xpose.msra.mxu0 0.0
        %6833 = vmatprep.subr.mxu0 0.0
        %6834 = vmatpush1.xpose.msra.mxu0 0.0
        %6835 = vmatprep.subr.mxu0 0.0
        %6836 = vmatpush1.xpose.msra.mxu0 0.0
        %6837 = vmatprep.subr.mxu0 0.0
        %6838 = vmatpush1.xpose.msra.mxu0 0.0
        %6839 = vmatprep.subr.mxu0 0.0
        %6840 = vmatpush1.xpose.msra.mxu0 0.0
        %6841 = vmatprep.subr.mxu0 0.0
        %6842 = vmatpush1.xpose.msra.mxu0 0.0
        %6843 = vmatprep.subr.mxu0 0.0
        %6844 = vmatpush1.xpose.msra.mxu0 0.0
        %6845 = vmatprep.subr.mxu0 0.0
        %6846 = vmatpush1.xpose.msra.mxu0 0.0
        %6847 = vmatprep.subr.mxu0 0.0
        %6848 = vmatpush1.xpose.msra.mxu0 0.0
        %6849 = vmatprep.subr.mxu0 0.0
        %6850 = vmatpush1.xpose.msra.mxu0 0.0
        %6851 = vmatprep.subr.mxu0 0.0
        %6852 = vmatpush1.xpose.msra.mxu0 0.0
        %6853 = vmatprep.subr.mxu0 0.0
        %6854 = vmatpush1.xpose.msra.mxu0 0.0
        %6855 = vmatprep.subr.mxu0 0.0
        %6856 = vmatpush1.xpose.msra.mxu0 0.0
        %6857 = vmatprep.subr.mxu0 0.0
        %6858 = vmatpush1.xpose.msra.mxu0 0.0
        %6859 = vmatprep.subr.mxu0 0.0
        %6860 = vmatpush1.xpose.msra.mxu0 0.0
        %6861 = vmatprep.subr.mxu0 0.0
        %6862 = vmatpush1.xpose.msra.mxu0 0.0
        %6863 = vmatprep.mubr.f32.mxu0 0.0
        %6864 = vmatmul.mubr.f32.gmra.mrb[0].mxu0 %v6783
        %v6865 = vpop.f32.mrb[0].mxu0
        %v6866 = vadd.f32 %v1569, %v6865
        %v6867 = vpop.f32.mrb[0].mxu0
        %6868 = vmatprep.mubr.f32.mxu0 0.0
        %6869 = vmatmul.mubr.f32.gmra.mrb[0].mxu0 %v6785
        %v6870 = vpop.f32.mrb[0].mxu0
        %v6871 = vadd.f32 %v1570, %v6870
        %v6872 = vpop.f32.mrb[0].mxu0
        %6873 = vmatprep.mubr.f32.mxu0 0.0
        %6874 = vmatmul.mubr.f32.gmra.mrb[0].mxu0 %v6787
        %v6875 = vpop.f32.mrb[0].mxu0
        %v6876 = vadd.f32 %v1571, %v6875
        %v6877 = vpop.f32.mrb[0].mxu0
        %6878 = vmatprep.mubr.f32.mxu0 0.0
        %6879 = vmatmul.mubr.f32.gmra.mrb[0].mxu0 %v6789
        %v6880 = vpop.f32.mrb[0].mxu0
        %v6881 = vadd.f32 %v1572, %v6880
        %v6882 = vpop.f32.mrb[0].mxu0
        %6883 = vdwg.mxu0
        %6884 = vrot.lane.b32.xlu0 %v819, 112
        %v6885 = vpop.permute.xlu0 %6884
        %6886 = vrot.lane.b32.xlu0 %v824, 112
        %v6887 = vpop.permute.xlu0 %6886
        %6888 = vrot.lane.b32.xlu0 %v829, 112
        %v6889 = vpop.permute.xlu0 %6888
        %6890 = vrot.lane.b32.xlu0 %v834, 112
        %v6891 = vpop.permute.xlu0 %6890
        %6892 = vrot.lane.b32.xlu0 %v1151, 112
        %v6893 = vpop.permute.xlu0 %6892
        %6894 = vrot.lane.b32.xlu0 %v1156, 112
        %v6895 = vpop.permute.xlu0 %6894
        %6896 = vrot.lane.b32.xlu0 %v1161, 112
        %v6897 = vpop.permute.xlu0 %6896
        %6898 = vrot.lane.b32.xlu0 %v1166, 112
        %v6899 = vpop.permute.xlu0 %6898
        %v6900 = vsel %vm1581, %v6885, 0
        %v6902 = vsel %vm1581, %v6887, 0
        %v6904 = vsel %vm1581, %v6889, 0
        %v6906 = vsel %vm1581, %v6891, 0
        %v6908 = vsel %vm1581, %v6893, 0
        %v6910 = vsel %vm1581, %v6895, 0
        %v6912 = vsel %vm1581, %v6897, 0
        %v6914 = vsel %vm1581, %v6899, 0
        %6916 = vmatprep.subr.mxu0 0.0
        %6917 = vmatpush1.xpose.msra.mxu0 %v6908
        %6918 = vmatprep.subr.mxu0 0.0
        %6919 = vmatpush1.xpose.msra.mxu0 %v6910
        %6920 = vmatprep.subr.mxu0 0.0
        %6921 = vmatpush1.xpose.msra.mxu0 %v6912
        %6922 = vmatprep.subr.mxu0 0.0
        %6923 = vmatpush1.xpose.msra.mxu0 %v6914
        %6924 = vmatprep.subr.mxu0 0.0
        %6925 = vmatpush1.xpose.msra.mxu0 0.0
        %6926 = vmatprep.subr.mxu0 0.0
        %6927 = vmatpush1.xpose.msra.mxu0 0.0
        %6928 = vmatprep.subr.mxu0 0.0
        %6929 = vmatpush1.xpose.msra.mxu0 0.0
        %6930 = vmatprep.subr.mxu0 0.0
        %6931 = vmatpush1.xpose.msra.mxu0 0.0
        %6932 = vmatprep.subr.mxu0 0.0
        %6933 = vmatpush1.xpose.msra.mxu0 0.0
        %6934 = vmatprep.subr.mxu0 0.0
        %6935 = vmatpush1.xpose.msra.mxu0 0.0
        %6936 = vmatprep.subr.mxu0 0.0
        %6937 = vmatpush1.xpose.msra.mxu0 0.0
        %6938 = vmatprep.subr.mxu0 0.0
        %6939 = vmatpush1.xpose.msra.mxu0 0.0
        %6940 = vmatprep.subr.mxu0 0.0
        %6941 = vmatpush1.xpose.msra.mxu0 0.0
        %6942 = vmatprep.subr.mxu0 0.0
        %6943 = vmatpush1.xpose.msra.mxu0 0.0
        %6944 = vmatprep.subr.mxu0 0.0
        %6945 = vmatpush1.xpose.msra.mxu0 0.0
        %6946 = vmatprep.subr.mxu0 0.0
        %6947 = vmatpush1.xpose.msra.mxu0 0.0
        %6948 = vmatprep.subr.mxu0 0.0
        %6949 = vmatpush1.xpose.msra.mxu0 0.0
        %6950 = vmatprep.subr.mxu0 0.0
        %6951 = vmatpush1.xpose.msra.mxu0 0.0
        %6952 = vmatprep.subr.mxu0 0.0
        %6953 = vmatpush1.xpose.msra.mxu0 0.0
        %6954 = vmatprep.subr.mxu0 0.0
        %6955 = vmatpush1.xpose.msra.mxu0 0.0
        %6956 = vmatprep.subr.mxu0 0.0
        %6957 = vmatpush1.xpose.msra.mxu0 0.0
        %6958 = vmatprep.subr.mxu0 0.0
        %6959 = vmatpush1.xpose.msra.mxu0 0.0
        %6960 = vmatprep.subr.mxu0 0.0
        %6961 = vmatpush1.xpose.msra.mxu0 0.0
        %6962 = vmatprep.subr.mxu0 0.0
        %6963 = vmatpush1.xpose.msra.mxu0 0.0
        %6964 = vmatprep.subr.mxu0 0.0
        %6965 = vmatpush1.xpose.msra.mxu0 0.0
        %6966 = vmatprep.subr.mxu0 0.0
        %6967 = vmatpush1.xpose.msra.mxu0 0.0
        %6968 = vmatprep.subr.mxu0 0.0
        %6969 = vmatpush1.xpose.msra.mxu0 0.0
        %6970 = vmatprep.subr.mxu0 0.0
        %6971 = vmatpush1.xpose.msra.mxu0 0.0
        %6972 = vmatprep.subr.mxu0 0.0
        %6973 = vmatpush1.xpose.msra.mxu0 0.0
        %6974 = vmatprep.subr.mxu0 0.0
        %6975 = vmatpush1.xpose.msra.mxu0 0.0
        %6976 = vmatprep.subr.mxu0 0.0
        %6977 = vmatpush1.xpose.msra.mxu0 0.0
        %6978 = vmatprep.subr.mxu0 0.0
        %6979 = vmatpush1.xpose.msra.mxu0 0.0
        %6980 = vmatprep.mubr.f32.mxu0 0.0
        %6981 = vmatmul.mubr.f32.gmra.mrb[0].mxu0 %v6900
        %v6982 = vpop.f32.mrb[0].mxu0
        %v6983 = vadd.f32 %v1569, %v6982
        %v6984 = vpop.f32.mrb[0].mxu0
        %6985 = vmatprep.mubr.f32.mxu0 0.0
        %6986 = vmatmul.mubr.f32.gmra.mrb[0].mxu0 %v6902
        %v6987 = vpop.f32.mrb[0].mxu0
        %v6988 = vadd.f32 %v1570, %v6987
        %v6989 = vpop.f32.mrb[0].mxu0
        %6990 = vmatprep.mubr.f32.mxu0 0.0
        %6991 = vmatmul.mubr.f32.gmra.mrb[0].mxu0 %v6904
        %v6992 = vpop.f32.mrb[0].mxu0
        %v6993 = vadd.f32 %v1571, %v6992
        %v6994 = vpop.f32.mrb[0].mxu0
        %6995 = vmatprep.mubr.f32.mxu0 0.0
        %6996 = vmatmul.mubr.f32.gmra.mrb[0].mxu0 %v6906
        %v6997 = vpop.f32.mrb[0].mxu0
        %v6998 = vadd.f32 %v1572, %v6997
        %v6999 = vpop.f32.mrb[0].mxu0
        %7000 = vdwg.mxu0
        %7001 = vrot.lane.b32.xlu0 %v839, 112
        %v7002 = vpop.permute.xlu0 %7001
        %7003 = vrot.lane.b32.xlu0 %v844, 112
        %v7004 = vpop.permute.xlu0 %7003
        %7005 = vrot.lane.b32.xlu0 %v849, 112
        %v7006 = vpop.permute.xlu0 %7005
        %7007 = vrot.lane.b32.xlu0 %v854, 112
        %v7008 = vpop.permute.xlu0 %7007
        %7009 = vrot.lane.b32.xlu0 %v1171, 112
        %v7010 = vpop.permute.xlu0 %7009
        %7011 = vrot.lane.b32.xlu0 %v1176, 112
        %v7012 = vpop.permute.xlu0 %7011
        %7013 = vrot.lane.b32.xlu0 %v1181, 112
        %v7014 = vpop.permute.xlu0 %7013
        %7015 = vrot.lane.b32.xlu0 %v1186, 112
        %v7016 = vpop.permute.xlu0 %7015
        %v7017 = vsel %vm1581, %v7002, 0
        %v7019 = vsel %vm1581, %v7004, 0
        %v7021 = vsel %vm1581, %v7006, 0
        %v7023 = vsel %vm1581, %v7008, 0
        %v7025 = vsel %vm1581, %v7010, 0
        %v7027 = vsel %vm1581, %v7012, 0
        %v7029 = vsel %vm1581, %v7014, 0
        %v7031 = vsel %vm1581, %v7016, 0
        %7033 = vmatprep.subr.mxu0 0.0
        %7034 = vmatpush1.xpose.msra.mxu0 %v7025
        %7035 = vmatprep.subr.mxu0 0.0
        %7036 = vmatpush1.xpose.msra.mxu0 %v7027
        %7037 = vmatprep.subr.mxu0 0.0
        %7038 = vmatpush1.xpose.msra.mxu0 %v7029
        %7039 = vmatprep.subr.mxu0 0.0
        %7040 = vmatpush1.xpose.msra.mxu0 %v7031
        %7041 = vmatprep.subr.mxu0 0.0
        %7042 = vmatpush1.xpose.msra.mxu0 0.0
        %7043 = vmatprep.subr.mxu0 0.0
        %7044 = vmatpush1.xpose.msra.mxu0 0.0
        %7045 = vmatprep.subr.mxu0 0.0
        %7046 = vmatpush1.xpose.msra.mxu0 0.0
        %7047 = vmatprep.subr.mxu0 0.0
        %7048 = vmatpush1.xpose.msra.mxu0 0.0
        %7049 = vmatprep.subr.mxu0 0.0
        %7050 = vmatpush1.xpose.msra.mxu0 0.0
        %7051 = vmatprep.subr.mxu0 0.0
        %7052 = vmatpush1.xpose.msra.mxu0 0.0
        %7053 = vmatprep.subr.mxu0 0.0
        %7054 = vmatpush1.xpose.msra.mxu0 0.0
        %7055 = vmatprep.subr.mxu0 0.0
        %7056 = vmatpush1.xpose.msra.mxu0 0.0
        %7057 = vmatprep.subr.mxu0 0.0
        %7058 = vmatpush1.xpose.msra.mxu0 0.0
        %7059 = vmatprep.subr.mxu0 0.0
        %7060 = vmatpush1.xpose.msra.mxu0 0.0
        %7061 = vmatprep.subr.mxu0 0.0
        %7062 = vmatpush1.xpose.msra.mxu0 0.0
        %7063 = vmatprep.subr.mxu0 0.0
        %7064 = vmatpush1.xpose.msra.mxu0 0.0
        %7065 = vmatprep.subr.mxu0 0.0
        %7066 = vmatpush1.xpose.msra.mxu0 0.0
        %7067 = vmatprep.subr.mxu0 0.0
        %7068 = vmatpush1.xpose.msra.mxu0 0.0
        %7069 = vmatprep.subr.mxu0 0.0
        %7070 = vmatpush1.xpose.msra.mxu0 0.0
        %7071 = vmatprep.subr.mxu0 0.0
        %7072 = vmatpush1.xpose.msra.mxu0 0.0
        %7073 = vmatprep.subr.mxu0 0.0
        %7074 = vmatpush1.xpose.msra.mxu0 0.0
        %7075 = vmatprep.subr.mxu0 0.0
        %7076 = vmatpush1.xpose.msra.mxu0 0.0
        %7077 = vmatprep.subr.mxu0 0.0
        %7078 = vmatpush1.xpose.msra.mxu0 0.0
        %7079 = vmatprep.subr.mxu0 0.0
        %7080 = vmatpush1.xpose.msra.mxu0 0.0
        %7081 = vmatprep.subr.mxu0 0.0
        %7082 = vmatpush1.xpose.msra.mxu0 0.0
        %7083 = vmatprep.subr.mxu0 0.0
        %7084 = vmatpush1.xpose.msra.mxu0 0.0
        %7085 = vmatprep.subr.mxu0 0.0
        %7086 = vmatpush1.xpose.msra.mxu0 0.0
        %7087 = vmatprep.subr.mxu0 0.0
        %7088 = vmatpush1.xpose.msra.mxu0 0.0
        %7089 = vmatprep.subr.mxu0 0.0
        %7090 = vmatpush1.xpose.msra.mxu0 0.0
        %7091 = vmatprep.subr.mxu0 0.0
        %7092 = vmatpush1.xpose.msra.mxu0 0.0
        %7093 = vmatprep.subr.mxu0 0.0
        %7094 = vmatpush1.xpose.msra.mxu0 0.0
        %7095 = vmatprep.subr.mxu0 0.0
        %7096 = vmatpush1.xpose.msra.mxu0 0.0
        %7097 = vmatprep.mubr.f32.mxu0 0.0
        %7098 = vmatmul.mubr.f32.gmra.mrb[0].mxu0 %v7017
        %v7099 = vpop.f32.mrb[0].mxu0
        %v7100 = vadd.f32 %v1569, %v7099
        %v7101 = vpop.f32.mrb[0].mxu0
        %7102 = vmatprep.mubr.f32.mxu0 0.0
        %7103 = vmatmul.mubr.f32.gmra.mrb[0].mxu0 %v7019
        %v7104 = vpop.f32.mrb[0].mxu0
        %v7105 = vadd.f32 %v1570, %v7104
        %v7106 = vpop.f32.mrb[0].mxu0
        %7107 = vmatprep.mubr.f32.mxu0 0.0
        %7108 = vmatmul.mubr.f32.gmra.mrb[0].mxu0 %v7021
        %v7109 = vpop.f32.mrb[0].mxu0
        %v7110 = vadd.f32 %v1571, %v7109
        %v7111 = vpop.f32.mrb[0].mxu0
        %7112 = vmatprep.mubr.f32.mxu0 0.0
        %7113 = vmatmul.mubr.f32.gmra.mrb[0].mxu0 %v7023
        %v7114 = vpop.f32.mrb[0].mxu0
        %v7115 = vadd.f32 %v1572, %v7114
        %v7116 = vpop.f32.mrb[0].mxu0
        %7117 = vdwg.mxu0
        %7118 = vrot.lane.b32.xlu0 %v859, 112
        %v7119 = vpop.permute.xlu0 %7118
        %7120 = vrot.lane.b32.xlu0 %v864, 112
        %v7121 = vpop.permute.xlu0 %7120
        %7122 = vrot.lane.b32.xlu0 %v869, 112
        %v7123 = vpop.permute.xlu0 %7122
        %7124 = vrot.lane.b32.xlu0 %v874, 112
        %v7125 = vpop.permute.xlu0 %7124
        %7126 = vrot.lane.b32.xlu0 %v1191, 112
        %v7127 = vpop.permute.xlu0 %7126
        %7128 = vrot.lane.b32.xlu0 %v1196, 112
        %v7129 = vpop.permute.xlu0 %7128
        %7130 = vrot.lane.b32.xlu0 %v1201, 112
        %v7131 = vpop.permute.xlu0 %7130
        %7132 = vrot.lane.b32.xlu0 %v1206, 112
        %v7133 = vpop.permute.xlu0 %7132
        %v7134 = vsel %vm1581, %v7119, 0
        %v7136 = vsel %vm1581, %v7121, 0
        %v7138 = vsel %vm1581, %v7123, 0
        %v7140 = vsel %vm1581, %v7125, 0
        %v7142 = vsel %vm1581, %v7127, 0
        %v7144 = vsel %vm1581, %v7129, 0
        %v7146 = vsel %vm1581, %v7131, 0
        %v7148 = vsel %vm1581, %v7133, 0
        %7150 = vmatprep.subr.mxu0 0.0
        %7151 = vmatpush1.xpose.msra.mxu0 %v7142
        %7152 = vmatprep.subr.mxu0 0.0
        %7153 = vmatpush1.xpose.msra.mxu0 %v7144
        %7154 = vmatprep.subr.mxu0 0.0
        %7155 = vmatpush1.xpose.msra.mxu0 %v7146
        %7156 = vmatprep.subr.mxu0 0.0
        %7157 = vmatpush1.xpose.msra.mxu0 %v7148
        %7158 = vmatprep.subr.mxu0 0.0
        %7159 = vmatpush1.xpose.msra.mxu0 0.0
        %7160 = vmatprep.subr.mxu0 0.0
        %7161 = vmatpush1.xpose.msra.mxu0 0.0
        %7162 = vmatprep.subr.mxu0 0.0
        %7163 = vmatpush1.xpose.msra.mxu0 0.0
        %7164 = vmatprep.subr.mxu0 0.0
        %7165 = vmatpush1.xpose.msra.mxu0 0.0
        %7166 = vmatprep.subr.mxu0 0.0
        %7167 = vmatpush1.xpose.msra.mxu0 0.0
        %7168 = vmatprep.subr.mxu0 0.0
        %7169 = vmatpush1.xpose.msra.mxu0 0.0
        %7170 = vmatprep.subr.mxu0 0.0
        %7171 = vmatpush1.xpose.msra.mxu0 0.0
        %7172 = vmatprep.subr.mxu0 0.0
        %7173 = vmatpush1.xpose.msra.mxu0 0.0
        %7174 = vmatprep.subr.mxu0 0.0
        %7175 = vmatpush1.xpose.msra.mxu0 0.0
        %7176 = vmatprep.subr.mxu0 0.0
        %7177 = vmatpush1.xpose.msra.mxu0 0.0
        %7178 = vmatprep.subr.mxu0 0.0
        %7179 = vmatpush1.xpose.msra.mxu0 0.0
        %7180 = vmatprep.subr.mxu0 0.0
        %7181 = vmatpush1.xpose.msra.mxu0 0.0
        %7182 = vmatprep.subr.mxu0 0.0
        %7183 = vmatpush1.xpose.msra.mxu0 0.0
        %7184 = vmatprep.subr.mxu0 0.0
        %7185 = vmatpush1.xpose.msra.mxu0 0.0
        %7186 = vmatprep.subr.mxu0 0.0
        %7187 = vmatpush1.xpose.msra.mxu0 0.0
        %7188 = vmatprep.subr.mxu0 0.0
        %7189 = vmatpush1.xpose.msra.mxu0 0.0
        %7190 = vmatprep.subr.mxu0 0.0
        %7191 = vmatpush1.xpose.msra.mxu0 0.0
        %7192 = vmatprep.subr.mxu0 0.0
        %7193 = vmatpush1.xpose.msra.mxu0 0.0
        %7194 = vmatprep.subr.mxu0 0.0
        %7195 = vmatpush1.xpose.msra.mxu0 0.0
        %7196 = vmatprep.subr.mxu0 0.0
        %7197 = vmatpush1.xpose.msra.mxu0 0.0
        %7198 = vmatprep.subr.mxu0 0.0
        %7199 = vmatpush1.xpose.msra.mxu0 0.0
        %7200 = vmatprep.subr.mxu0 0.0
        %7201 = vmatpush1.xpose.msra.mxu0 0.0
        %7202 = vmatprep.subr.mxu0 0.0
        %7203 = vmatpush1.xpose.msra.mxu0 0.0
        %7204 = vmatprep.subr.mxu0 0.0
        %7205 = vmatpush1.xpose.msra.mxu0 0.0
        %7206 = vmatprep.subr.mxu0 0.0
        %7207 = vmatpush1.xpose.msra.mxu0 0.0
        %7208 = vmatprep.subr.mxu0 0.0
        %7209 = vmatpush1.xpose.msra.mxu0 0.0
        %7210 = vmatprep.subr.mxu0 0.0
        %7211 = vmatpush1.xpose.msra.mxu0 0.0
        %7212 = vmatprep.subr.mxu0 0.0
        %7213 = vmatpush1.xpose.msra.mxu0 0.0
        %7214 = vmatprep.mubr.f32.mxu0 0.0
        %7215 = vmatmul.mubr.f32.gmra.mrb[0].mxu0 %v7134
        %v7216 = vpop.f32.mrb[0].mxu0
        %v7217 = vadd.f32 %v1569, %v7216
        %v7218 = vpop.f32.mrb[0].mxu0
        %7219 = vmatprep.mubr.f32.mxu0 0.0
        %7220 = vmatmul.mubr.f32.gmra.mrb[0].mxu0 %v7136
        %v7221 = vpop.f32.mrb[0].mxu0
        %v7222 = vadd.f32 %v1570, %v7221
        %v7223 = vpop.f32.mrb[0].mxu0
        %7224 = vmatprep.mubr.f32.mxu0 0.0
        %7225 = vmatmul.mubr.f32.gmra.mrb[0].mxu0 %v7138
        %v7226 = vpop.f32.mrb[0].mxu0
        %v7227 = vadd.f32 %v1571, %v7226
        %v7228 = vpop.f32.mrb[0].mxu0
        %7229 = vmatprep.mubr.f32.mxu0 0.0
        %7230 = vmatmul.mubr.f32.gmra.mrb[0].mxu0 %v7140
        %v7231 = vpop.f32.mrb[0].mxu0
        %v7232 = vadd.f32 %v1572, %v7231
        %v7233 = vpop.f32.mrb[0].mxu0
        %7234 = vdwg.mxu0
        %7235 = vrot.lane.b32.xlu0 %v879, 112
        %v7236 = vpop.permute.xlu0 %7235
        %7237 = vrot.lane.b32.xlu0 %v884, 112
        %v7238 = vpop.permute.xlu0 %7237
        %7239 = vrot.lane.b32.xlu0 %v889, 112
        %v7240 = vpop.permute.xlu0 %7239
        %7241 = vrot.lane.b32.xlu0 %v894, 112
        %v7242 = vpop.permute.xlu0 %7241
        %7243 = vrot.lane.b32.xlu0 %v1211, 112
        %v7244 = vpop.permute.xlu0 %7243
        %7245 = vrot.lane.b32.xlu0 %v1216, 112
        %v7246 = vpop.permute.xlu0 %7245
        %7247 = vrot.lane.b32.xlu0 %v1221, 112
        %v7248 = vpop.permute.xlu0 %7247
        %7249 = vrot.lane.b32.xlu0 %v1226, 112
        %v7250 = vpop.permute.xlu0 %7249
        %v7251 = vsel %vm1581, %v7236, 0
        %v7253 = vsel %vm1581, %v7238, 0
        %v7255 = vsel %vm1581, %v7240, 0
        %v7257 = vsel %vm1581, %v7242, 0
        %v7259 = vsel %vm1581, %v7244, 0
        %v7261 = vsel %vm1581, %v7246, 0
        %v7263 = vsel %vm1581, %v7248, 0
        %v7265 = vsel %vm1581, %v7250, 0
        %7267 = vmatprep.subr.mxu0 0.0
        %7268 = vmatpush1.xpose.msra.mxu0 %v7259
        %7269 = vmatprep.subr.mxu0 0.0
        %7270 = vmatpush1.xpose.msra.mxu0 %v7261
        %7271 = vmatprep.subr.mxu0 0.0
        %7272 = vmatpush1.xpose.msra.mxu0 %v7263
        %7273 = vmatprep.subr.mxu0 0.0
        %7274 = vmatpush1.xpose.msra.mxu0 %v7265
        %7275 = vmatprep.subr.mxu0 0.0
        %7276 = vmatpush1.xpose.msra.mxu0 0.0
        %7277 = vmatprep.subr.mxu0 0.0
        %7278 = vmatpush1.xpose.msra.mxu0 0.0
        %7279 = vmatprep.subr.mxu0 0.0
        %7280 = vmatpush1.xpose.msra.mxu0 0.0
        %7281 = vmatprep.subr.mxu0 0.0
        %7282 = vmatpush1.xpose.msra.mxu0 0.0
        %7283 = vmatprep.subr.mxu0 0.0
        %7284 = vmatpush1.xpose.msra.mxu0 0.0
        %7285 = vmatprep.subr.mxu0 0.0
        %7286 = vmatpush1.xpose.msra.mxu0 0.0
        %7287 = vmatprep.subr.mxu0 0.0
        %7288 = vmatpush1.xpose.msra.mxu0 0.0
        %7289 = vmatprep.subr.mxu0 0.0
        %7290 = vmatpush1.xpose.msra.mxu0 0.0
        %7291 = vmatprep.subr.mxu0 0.0
        %7292 = vmatpush1.xpose.msra.mxu0 0.0
        %7293 = vmatprep.subr.mxu0 0.0
        %7294 = vmatpush1.xpose.msra.mxu0 0.0
        %7295 = vmatprep.subr.mxu0 0.0
        %7296 = vmatpush1.xpose.msra.mxu0 0.0
        %7297 = vmatprep.subr.mxu0 0.0
        %7298 = vmatpush1.xpose.msra.mxu0 0.0
        %7299 = vmatprep.subr.mxu0 0.0
        %7300 = vmatpush1.xpose.msra.mxu0 0.0
        %7301 = vmatprep.subr.mxu0 0.0
        %7302 = vmatpush1.xpose.msra.mxu0 0.0
        %7303 = vmatprep.subr.mxu0 0.0
        %7304 = vmatpush1.xpose.msra.mxu0 0.0
        %7305 = vmatprep.subr.mxu0 0.0
        %7306 = vmatpush1.xpose.msra.mxu0 0.0
        %7307 = vmatprep.subr.mxu0 0.0
        %7308 = vmatpush1.xpose.msra.mxu0 0.0
        %7309 = vmatprep.subr.mxu0 0.0
        %7310 = vmatpush1.xpose.msra.mxu0 0.0
        %7311 = vmatprep.subr.mxu0 0.0
        %7312 = vmatpush1.xpose.msra.mxu0 0.0
        %7313 = vmatprep.subr.mxu0 0.0
        %7314 = vmatpush1.xpose.msra.mxu0 0.0
        %7315 = vmatprep.subr.mxu0 0.0
        %7316 = vmatpush1.xpose.msra.mxu0 0.0
        %7317 = vmatprep.subr.mxu0 0.0
        %7318 = vmatpush1.xpose.msra.mxu0 0.0
        %7319 = vmatprep.subr.mxu0 0.0
        %7320 = vmatpush1.xpose.msra.mxu0 0.0
        %7321 = vmatprep.subr.mxu0 0.0
        %7322 = vmatpush1.xpose.msra.mxu0 0.0
        %7323 = vmatprep.subr.mxu0 0.0
        %7324 = vmatpush1.xpose.msra.mxu0 0.0
        %7325 = vmatprep.subr.mxu0 0.0
        %7326 = vmatpush1.xpose.msra.mxu0 0.0
        %7327 = vmatprep.subr.mxu0 0.0
        %7328 = vmatpush1.xpose.msra.mxu0 0.0
        %7329 = vmatprep.subr.mxu0 0.0
        %7330 = vmatpush1.xpose.msra.mxu0 0.0
        %7331 = vmatprep.mubr.f32.mxu0 0.0
        %7332 = vmatmul.mubr.f32.gmra.mrb[0].mxu0 %v7251
        %v7333 = vpop.f32.mrb[0].mxu0
        %v7334 = vadd.f32 %v1569, %v7333
        %v7335 = vpop.f32.mrb[0].mxu0
        %7336 = vmatprep.mubr.f32.mxu0 0.0
        %7337 = vmatmul.mubr.f32.gmra.mrb[0].mxu0 %v7253
        %v7338 = vpop.f32.mrb[0].mxu0
        %v7339 = vadd.f32 %v1570, %v7338
        %v7340 = vpop.f32.mrb[0].mxu0
        %7341 = vmatprep.mubr.f32.mxu0 0.0
        %7342 = vmatmul.mubr.f32.gmra.mrb[0].mxu0 %v7255
        %v7343 = vpop.f32.mrb[0].mxu0
        %v7344 = vadd.f32 %v1571, %v7343
        %v7345 = vpop.f32.mrb[0].mxu0
        %7346 = vmatprep.mubr.f32.mxu0 0.0
        %7347 = vmatmul.mubr.f32.gmra.mrb[0].mxu0 %v7257
        %v7348 = vpop.f32.mrb[0].mxu0
        %v7349 = vadd.f32 %v1572, %v7348
        %v7350 = vpop.f32.mrb[0].mxu0
        %7351 = vdwg.mxu0
        %v7352 = vsel %vm575, %v6515, -inf
        %7353 = vmax.xlane.f32.xlu0 %v7352
        %v7354 = vpop.xlane.xlu0 %7353
        %v7355 = vsel %vm575, %v6520, -inf
        %7356 = vmax.xlane.f32.xlu0 %v7355
        %v7357 = vpop.xlane.xlu0 %7356
        %v7358 = vsel %vm575, %v6525, -inf
        %7359 = vmax.xlane.f32.xlu0 %v7358
        %v7360 = vpop.xlane.xlu0 %7359
        %v7361 = vsel %vm575, %v6530, -inf
        %7362 = vmax.xlane.f32.xlu0 %v7361
        %v7363 = vpop.xlane.xlu0 %7362
        %v7364 = vsel %vm575, %v6632, -inf
        %7365 = vmax.xlane.f32.xlu0 %v7364
        %v7366 = vpop.xlane.xlu0 %7365
        %v7367 = vsel %vm575, %v6637, -inf
        %7368 = vmax.xlane.f32.xlu0 %v7367
        %v7369 = vpop.xlane.xlu0 %7368
        %v7370 = vsel %vm575, %v6642, -inf
        %7371 = vmax.xlane.f32.xlu0 %v7370
        %v7372 = vpop.xlane.xlu0 %7371
        %v7373 = vsel %vm575, %v6647, -inf
        %7374 = vmax.xlane.f32.xlu0 %v7373
        %v7375 = vpop.xlane.xlu0 %7374
        %v7376 = vsel %vm575, %v6749, -inf
        %7377 = vmax.xlane.f32.xlu0 %v7376
        %v7378 = vpop.xlane.xlu0 %7377
        %v7379 = vsel %vm575, %v6754, -inf
        %7380 = vmax.xlane.f32.xlu0 %v7379
        %v7381 = vpop.xlane.xlu0 %7380
        %v7382 = vsel %vm575, %v6759, -inf
        %7383 = vmax.xlane.f32.xlu0 %v7382
        %v7384 = vpop.xlane.xlu0 %7383
        %v7385 = vsel %vm575, %v6764, -inf
        %7386 = vmax.xlane.f32.xlu0 %v7385
        %v7387 = vpop.xlane.xlu0 %7386
        %v7388 = vsel %vm575, %v6866, -inf
        %7389 = vmax.xlane.f32.xlu0 %v7388
        %v7390 = vpop.xlane.xlu0 %7389
        %v7391 = vsel %vm575, %v6871, -inf
        %7392 = vmax.xlane.f32.xlu0 %v7391
        %v7393 = vpop.xlane.xlu0 %7392
        %v7394 = vsel %vm575, %v6876, -inf
        %7395 = vmax.xlane.f32.xlu0 %v7394
        %v7396 = vpop.xlane.xlu0 %7395
        %v7397 = vsel %vm575, %v6881, -inf
        %7398 = vmax.xlane.f32.xlu0 %v7397
        %v7399 = vpop.xlane.xlu0 %7398
        %v7400 = vsel %vm575, %v6983, -inf
        %7401 = vmax.xlane.f32.xlu0 %v7400
        %v7402 = vpop.xlane.xlu0 %7401
        %v7403 = vsel %vm575, %v6988, -inf
        %7404 = vmax.xlane.f32.xlu0 %v7403
        %v7405 = vpop.xlane.xlu0 %7404
        %v7406 = vsel %vm575, %v6993, -inf
        %7407 = vmax.xlane.f32.xlu0 %v7406
        %v7408 = vpop.xlane.xlu0 %7407
        %v7409 = vsel %vm575, %v6998, -inf
        %7410 = vmax.xlane.f32.xlu0 %v7409
        %v7411 = vpop.xlane.xlu0 %7410
        %v7412 = vsel %vm575, %v7100, -inf
        %7413 = vmax.xlane.f32.xlu0 %v7412
        %v7414 = vpop.xlane.xlu0 %7413
        %v7415 = vsel %vm575, %v7105, -inf
        %7416 = vmax.xlane.f32.xlu0 %v7415
        %v7417 = vpop.xlane.xlu0 %7416
        %v7418 = vsel %vm575, %v7110, -inf
        %7419 = vmax.xlane.f32.xlu0 %v7418
        %v7420 = vpop.xlane.xlu0 %7419
        %v7421 = vsel %vm575, %v7115, -inf
        %7422 = vmax.xlane.f32.xlu0 %v7421
        %v7423 = vpop.xlane.xlu0 %7422
        %v7424 = vsel %vm575, %v7217, -inf
        %7425 = vmax.xlane.f32.xlu0 %v7424
        %v7426 = vpop.xlane.xlu0 %7425
        %v7427 = vsel %vm575, %v7222, -inf
        %7428 = vmax.xlane.f32.xlu0 %v7427
        %v7429 = vpop.xlane.xlu0 %7428
        %v7430 = vsel %vm575, %v7227, -inf
        %7431 = vmax.xlane.f32.xlu0 %v7430
        %v7432 = vpop.xlane.xlu0 %7431
        %v7433 = vsel %vm575, %v7232, -inf
        %7434 = vmax.xlane.f32.xlu0 %v7433
        %v7435 = vpop.xlane.xlu0 %7434
        %v7436 = vsel %vm575, %v7334, -inf
        %7437 = vmax.xlane.f32.xlu0 %v7436
        %v7438 = vpop.xlane.xlu0 %7437
        %v7439 = vsel %vm575, %v7339, -inf
        %7440 = vmax.xlane.f32.xlu0 %v7439
        %v7441 = vpop.xlane.xlu0 %7440
        %v7442 = vsel %vm575, %v7344, -inf
        %7443 = vmax.xlane.f32.xlu0 %v7442
        %v7444 = vpop.xlane.xlu0 %7443
        %v7445 = vsel %vm575, %v7349, -inf
        %7446 = vmax.xlane.f32.xlu0 %v7445
        %v7447 = vpop.xlane.xlu0 %7446
        %v7448 = vsub.f32 %v6515, %v7354
        %v7449 = vsub.f32 %v6520, %v7357
        %v7450 = vsub.f32 %v6525, %v7360
        %v7451 = vsub.f32 %v6530, %v7363
        %v7452 = vsub.f32 %v6632, %v7366
        %v7453 = vsub.f32 %v6637, %v7369
        %v7454 = vsub.f32 %v6642, %v7372
        %v7455 = vsub.f32 %v6647, %v7375
        %v7456 = vsub.f32 %v6749, %v7378
        %v7457 = vsub.f32 %v6754, %v7381
        %v7458 = vsub.f32 %v6759, %v7384
        %v7459 = vsub.f32 %v6764, %v7387
        %v7460 = vsub.f32 %v6866, %v7390
        %v7461 = vsub.f32 %v6871, %v7393
        %v7462 = vsub.f32 %v6876, %v7396
        %v7463 = vsub.f32 %v6881, %v7399
        %v7464 = vsub.f32 %v6983, %v7402
        %v7465 = vsub.f32 %v6988, %v7405
        %v7466 = vsub.f32 %v6993, %v7408
        %v7467 = vsub.f32 %v6998, %v7411
        %v7468 = vsub.f32 %v7100, %v7414
        %v7469 = vsub.f32 %v7105, %v7417
        %v7470 = vsub.f32 %v7110, %v7420
        %v7471 = vsub.f32 %v7115, %v7423
        %v7472 = vsub.f32 %v7217, %v7426
        %v7473 = vsub.f32 %v7222, %v7429
        %v7474 = vsub.f32 %v7227, %v7432
        %v7475 = vsub.f32 %v7232, %v7435
        %v7476 = vsub.f32 %v7334, %v7438
        %v7477 = vsub.f32 %v7339, %v7441
        %v7478 = vsub.f32 %v7344, %v7444
        %v7479 = vsub.f32 %v7349, %v7447
        %v7480 = vmul.f32 %v7448, 1.442695
        %v7481 = vpow.pop %v7480
        %v7482 = vmul.f32 %v7449, 1.442695
        %v7483 = vpow.pop %v7482
        %v7484 = vmul.f32 %v7450, 1.442695
        %v7485 = vpow.pop %v7484
        %v7486 = vmul.f32 %v7451, 1.442695
        %v7487 = vpow.pop %v7486
        %v7488 = vmul.f32 %v7452, 1.442695
        %v7489 = vpow.pop %v7488
        %v7490 = vmul.f32 %v7453, 1.442695
        %v7491 = vpow.pop %v7490
        %v7492 = vmul.f32 %v7454, 1.442695
        %v7493 = vpow.pop %v7492
        %v7494 = vmul.f32 %v7455, 1.442695
        %v7495 = vpow.pop %v7494
        %v7496 = vmul.f32 %v7456, 1.442695
        %v7497 = vpow.pop %v7496
        %v7498 = vmul.f32 %v7457, 1.442695
        %v7499 = vpow.pop %v7498
        %v7500 = vmul.f32 %v7458, 1.442695
        %v7501 = vpow.pop %v7500
        %v7502 = vmul.f32 %v7459, 1.442695
        %v7503 = vpow.pop %v7502
        %v7504 = vmul.f32 %v7460, 1.442695
        %v7505 = vpow.pop %v7504
        %v7506 = vmul.f32 %v7461, 1.442695
        %v7507 = vpow.pop %v7506
        %v7508 = vmul.f32 %v7462, 1.442695
        %v7509 = vpow.pop %v7508
        %v7510 = vmul.f32 %v7463, 1.442695
        %v7511 = vpow.pop %v7510
        %v7512 = vmul.f32 %v7464, 1.442695
        %v7513 = vpow.pop %v7512
        %v7514 = vmul.f32 %v7465, 1.442695
        %v7515 = vpow.pop %v7514
        %v7516 = vmul.f32 %v7466, 1.442695
        %v7517 = vpow.pop %v7516
        %v7518 = vmul.f32 %v7467, 1.442695
        %v7519 = vpow.pop %v7518
        %v7520 = vmul.f32 %v7468, 1.442695
        %v7521 = vpow.pop %v7520
        %v7522 = vmul.f32 %v7469, 1.442695
        %v7523 = vpow.pop %v7522
        %v7524 = vmul.f32 %v7470, 1.442695
        %v7525 = vpow.pop %v7524
        %v7526 = vmul.f32 %v7471, 1.442695
        %v7527 = vpow.pop %v7526
        %v7528 = vmul.f32 %v7472, 1.442695
        %v7529 = vpow.pop %v7528
        %v7530 = vmul.f32 %v7473, 1.442695
        %v7531 = vpow.pop %v7530
        %v7532 = vmul.f32 %v7474, 1.442695
        %v7533 = vpow.pop %v7532
        %v7534 = vmul.f32 %v7475, 1.442695
        %v7535 = vpow.pop %v7534
        %v7536 = vmul.f32 %v7476, 1.442695
        %v7537 = vpow.pop %v7536
        %v7538 = vmul.f32 %v7477, 1.442695
        %v7539 = vpow.pop %v7538
        %v7540 = vmul.f32 %v7478, 1.442695
        %v7541 = vpow.pop %v7540
        %v7542 = vmul.f32 %v7479, 1.442695
        %v7543 = vpow.pop %v7542
        %v7544 = vsel %vm575, %v7481, 0.0
        %7545 = vadd.xlane.f32.xlu0 %v7544
        %v7546 = vpop.xlane.xlu0 %7545
        %v7547 = vsel %vm575, %v7483, 0.0
        %7548 = vadd.xlane.f32.xlu0 %v7547
        %v7549 = vpop.xlane.xlu0 %7548
        %v7550 = vsel %vm575, %v7485, 0.0
        %7551 = vadd.xlane.f32.xlu0 %v7550
        %v7552 = vpop.xlane.xlu0 %7551
        %v7553 = vsel %vm575, %v7487, 0.0
        %7554 = vadd.xlane.f32.xlu0 %v7553
        %v7555 = vpop.xlane.xlu0 %7554
        %v7556 = vsel %vm575, %v7489, 0.0
        %7557 = vadd.xlane.f32.xlu0 %v7556
        %v7558 = vpop.xlane.xlu0 %7557
        %v7559 = vsel %vm575, %v7491, 0.0
        %7560 = vadd.xlane.f32.xlu0 %v7559
        %v7561 = vpop.xlane.xlu0 %7560
        %v7562 = vsel %vm575, %v7493, 0.0
        %7563 = vadd.xlane.f32.xlu0 %v7562
        %v7564 = vpop.xlane.xlu0 %7563
        %v7565 = vsel %vm575, %v7495, 0.0
        %7566 = vadd.xlane.f32.xlu0 %v7565
        %v7567 = vpop.xlane.xlu0 %7566
        %v7568 = vsel %vm575, %v7497, 0.0
        %7569 = vadd.xlane.f32.xlu0 %v7568
        %v7570 = vpop.xlane.xlu0 %7569
        %v7571 = vsel %vm575, %v7499, 0.0
        %7572 = vadd.xlane.f32.xlu0 %v7571
        %v7573 = vpop.xlane.xlu0 %7572
        %v7574 = vsel %vm575, %v7501, 0.0
        %7575 = vadd.xlane.f32.xlu0 %v7574
        %v7576 = vpop.xlane.xlu0 %7575
        %v7577 = vsel %vm575, %v7503, 0.0
        %7578 = vadd.xlane.f32.xlu0 %v7577
        %v7579 = vpop.xlane.xlu0 %7578
        %v7580 = vsel %vm575, %v7505, 0.0
        %7581 = vadd.xlane.f32.xlu0 %v7580
        %v7582 = vpop.xlane.xlu0 %7581
        %v7583 = vsel %vm575, %v7507, 0.0
        %7584 = vadd.xlane.f32.xlu0 %v7583
        %v7585 = vpop.xlane.xlu0 %7584
        %v7586 = vsel %vm575, %v7509, 0.0
        %7587 = vadd.xlane.f32.xlu0 %v7586
        %v7588 = vpop.xlane.xlu0 %7587
        %v7589 = vsel %vm575, %v7511, 0.0
        %7590 = vadd.xlane.f32.xlu0 %v7589
        %v7591 = vpop.xlane.xlu0 %7590
        %v7592 = vsel %vm575, %v7513, 0.0
        %7593 = vadd.xlane.f32.xlu0 %v7592
        %v7594 = vpop.xlane.xlu0 %7593
        %v7595 = vsel %vm575, %v7515, 0.0
        %7596 = vadd.xlane.f32.xlu0 %v7595
        %v7597 = vpop.xlane.xlu0 %7596
        %v7598 = vsel %vm575, %v7517, 0.0
        %7599 = vadd.xlane.f32.xlu0 %v7598
        %v7600 = vpop.xlane.xlu0 %7599
        %v7601 = vsel %vm575, %v7519, 0.0
        %7602 = vadd.xlane.f32.xlu0 %v7601
        %v7603 = vpop.xlane.xlu0 %7602
        %v7604 = vsel %vm575, %v7521, 0.0
        %7605 = vadd.xlane.f32.xlu0 %v7604
        %v7606 = vpop.xlane.xlu0 %7605
        %v7607 = vsel %vm575, %v7523, 0.0
        %7608 = vadd.xlane.f32.xlu0 %v7607
        %v7609 = vpop.xlane.xlu0 %7608
        %v7610 = vsel %vm575, %v7525, 0.0
        %7611 = vadd.xlane.f32.xlu0 %v7610
        %v7612 = vpop.xlane.xlu0 %7611
        %v7613 = vsel %vm575, %v7527, 0.0
        %7614 = vadd.xlane.f32.xlu0 %v7613
        %v7615 = vpop.xlane.xlu0 %7614
        %v7616 = vsel %vm575, %v7529, 0.0
        %7617 = vadd.xlane.f32.xlu0 %v7616
        %v7618 = vpop.xlane.xlu0 %7617
        %v7619 = vsel %vm575, %v7531, 0.0
        %7620 = vadd.xlane.f32.xlu0 %v7619
        %v7621 = vpop.xlane.xlu0 %7620
        %v7622 = vsel %vm575, %v7533, 0.0
        %7623 = vadd.xlane.f32.xlu0 %v7622
        %v7624 = vpop.xlane.xlu0 %7623
        %v7625 = vsel %vm575, %v7535, 0.0
        %7626 = vadd.xlane.f32.xlu0 %v7625
        %v7627 = vpop.xlane.xlu0 %7626
        %v7628 = vsel %vm575, %v7537, 0.0
        %7629 = vadd.xlane.f32.xlu0 %v7628
        %v7630 = vpop.xlane.xlu0 %7629
        %v7631 = vsel %vm575, %v7539, 0.0
        %7632 = vadd.xlane.f32.xlu0 %v7631
        %v7633 = vpop.xlane.xlu0 %7632
        %v7634 = vsel %vm575, %v7541, 0.0
        %7635 = vadd.xlane.f32.xlu0 %v7634
        %v7636 = vpop.xlane.xlu0 %7635
        %v7637 = vsel %vm575, %v7543, 0.0
        %7638 = vadd.xlane.f32.xlu0 %v7637
        %v7639 = vpop.xlane.xlu0 %7638
        %v7640 = vrcp.pop %v7546
        %v7641 = vrcp.pop %v7549
        %v7642 = vrcp.pop %v7552
        %v7643 = vrcp.pop %v7555
        %v7644 = vrcp.pop %v7558
        %v7645 = vrcp.pop %v7561
        %v7646 = vrcp.pop %v7564
        %v7647 = vrcp.pop %v7567
        %v7648 = vrcp.pop %v7570
        %v7649 = vrcp.pop %v7573
        %v7650 = vrcp.pop %v7576
        %v7651 = vrcp.pop %v7579
        %v7652 = vrcp.pop %v7582
        %v7653 = vrcp.pop %v7585
        %v7654 = vrcp.pop %v7588
        %v7655 = vrcp.pop %v7591
        %v7656 = vrcp.pop %v7594
        %v7657 = vrcp.pop %v7597
        %v7658 = vrcp.pop %v7600
        %v7659 = vrcp.pop %v7603
        %v7660 = vrcp.pop %v7606
        %v7661 = vrcp.pop %v7609
        %v7662 = vrcp.pop %v7612
        %v7663 = vrcp.pop %v7615
        %v7664 = vrcp.pop %v7618
        %v7665 = vrcp.pop %v7621
        %v7666 = vrcp.pop %v7624
        %v7667 = vrcp.pop %v7627
        %v7668 = vrcp.pop %v7630
        %v7669 = vrcp.pop %v7633
        %v7670 = vrcp.pop %v7636
        %v7671 = vrcp.pop %v7639
        %v7672 = vmul.f32 %v7481, %v7640
        %v7673 = vmul.f32 %v7483, %v7641
        %v7674 = vmul.f32 %v7485, %v7642
        %v7675 = vmul.f32 %v7487, %v7643
        %v7676 = vmul.f32 %v7489, %v7644
        %v7677 = vmul.f32 %v7491, %v7645
        %v7678 = vmul.f32 %v7493, %v7646
        %v7679 = vmul.f32 %v7495, %v7647
        %v7680 = vmul.f32 %v7497, %v7648
        %v7681 = vmul.f32 %v7499, %v7649
        %v7682 = vmul.f32 %v7501, %v7650
        %v7683 = vmul.f32 %v7503, %v7651
        %v7684 = vmul.f32 %v7505, %v7652
        %v7685 = vmul.f32 %v7507, %v7653
        %v7686 = vmul.f32 %v7509, %v7654
        %v7687 = vmul.f32 %v7511, %v7655
        %v7688 = vmul.f32 %v7513, %v7656
        %v7689 = vmul.f32 %v7515, %v7657
        %v7690 = vmul.f32 %v7517, %v7658
        %v7691 = vmul.f32 %v7519, %v7659
        %v7692 = vmul.f32 %v7521, %v7660
        %v7693 = vmul.f32 %v7523, %v7661
        %v7694 = vmul.f32 %v7525, %v7662
        %v7695 = vmul.f32 %v7527, %v7663
        %v7696 = vmul.f32 %v7529, %v7664
        %v7697 = vmul.f32 %v7531, %v7665
        %v7698 = vmul.f32 %v7533, %v7666
        %v7699 = vmul.f32 %v7535, %v7667
        %v7700 = vmul.f32 %v7537, %v7668
        %v7701 = vmul.f32 %v7539, %v7669
        %v7702 = vmul.f32 %v7541, %v7670
        %v7703 = vmul.f32 %v7543, %v7671
        %7704 = vrot.lane.b32.xlu0 %v1403, 112
        %v7705 = vpop.permute.xlu0 %7704
        %7706 = vrot.lane.b32.xlu0 %v1408, 112
        %v7707 = vpop.permute.xlu0 %7706
        %7708 = vrot.lane.b32.xlu0 %v1413, 112
        %v7709 = vpop.permute.xlu0 %7708
        %7710 = vrot.lane.b32.xlu0 %v1418, 112
        %v7711 = vpop.permute.xlu0 %7710
        %v7717 = vsel %vm575, %v7672, 0
        %v7720 = vsel %vm575, %v7673, 0
        %v7723 = vsel %vm575, %v7674, 0
        %v7726 = vsel %vm575, %v7675, 0
        %7728 = vmatprep.subr.mxu0 0.0
        %7729 = vmatpush1.msra.mxu0 %v7705
        %7730 = vmatprep.subr.mxu0 0.0
        %7731 = vmatpush1.msra.mxu0 %v7707
        %7732 = vmatprep.subr.mxu0 0.0
        %7733 = vmatpush1.msra.mxu0 %v7709
        %7734 = vmatprep.subr.mxu0 0.0
        %7735 = vmatpush1.msra.mxu0 %v7711
        %7736 = vmatprep.subr.mxu0 0.0
        %7737 = vmatpush1.msra.mxu0 0.0
        %7738 = vmatprep.subr.mxu0 0.0
        %7739 = vmatpush1.msra.mxu0 0.0
        %7740 = vmatprep.subr.mxu0 0.0
        %7741 = vmatpush1.msra.mxu0 0.0
        %7742 = vmatprep.subr.mxu0 0.0
        %7743 = vmatpush1.msra.mxu0 0.0
        %7744 = vmatprep.subr.mxu0 0.0
        %7745 = vmatpush1.msra.mxu0 0.0
        %7746 = vmatprep.subr.mxu0 0.0
        %7747 = vmatpush1.msra.mxu0 0.0
        %7748 = vmatprep.subr.mxu0 0.0
        %7749 = vmatpush1.msra.mxu0 0.0
        %7750 = vmatprep.subr.mxu0 0.0
        %7751 = vmatpush1.msra.mxu0 0.0
        %7752 = vmatprep.subr.mxu0 0.0
        %7753 = vmatpush1.msra.mxu0 0.0
        %7754 = vmatprep.subr.mxu0 0.0
        %7755 = vmatpush1.msra.mxu0 0.0
        %7756 = vmatprep.subr.mxu0 0.0
        %7757 = vmatpush1.msra.mxu0 0.0
        %7758 = vmatprep.subr.mxu0 0.0
        %7759 = vmatpush1.msra.mxu0 0.0
        %7760 = vmatprep.subr.mxu0 0.0
        %7761 = vmatpush1.msra.mxu0 0.0
        %7762 = vmatprep.subr.mxu0 0.0
        %7763 = vmatpush1.msra.mxu0 0.0
        %7764 = vmatprep.subr.mxu0 0.0
        %7765 = vmatpush1.msra.mxu0 0.0
        %7766 = vmatprep.subr.mxu0 0.0
        %7767 = vmatpush1.msra.mxu0 0.0
        %7768 = vmatprep.subr.mxu0 0.0
        %7769 = vmatpush1.msra.mxu0 0.0
        %7770 = vmatprep.subr.mxu0 0.0
        %7771 = vmatpush1.msra.mxu0 0.0
        %7772 = vmatprep.subr.mxu0 0.0
        %7773 = vmatpush1.msra.mxu0 0.0
        %7774 = vmatprep.subr.mxu0 0.0
        %7775 = vmatpush1.msra.mxu0 0.0
        %7776 = vmatprep.subr.mxu0 0.0
        %7777 = vmatpush1.msra.mxu0 0.0
        %7778 = vmatprep.subr.mxu0 0.0
        %7779 = vmatpush1.msra.mxu0 0.0
        %7780 = vmatprep.subr.mxu0 0.0
        %7781 = vmatpush1.msra.mxu0 0.0
        %7782 = vmatprep.subr.mxu0 0.0
        %7783 = vmatpush1.msra.mxu0 0.0
        %7784 = vmatprep.subr.mxu0 0.0
        %7785 = vmatpush1.msra.mxu0 0.0
        %7786 = vmatprep.subr.mxu0 0.0
        %7787 = vmatpush1.msra.mxu0 0.0
        %7788 = vmatprep.subr.mxu0 0.0
        %7789 = vmatpush1.msra.mxu0 0.0
        %7790 = vmatprep.subr.mxu0 0.0
        %7791 = vmatpush1.msra.mxu0 0.0
        %7792 = vmatprep.mubr.f32.mxu0 0.0
        %7793 = vmatmul.mubr.f32.gmra.mrb[0].mxu0 %v7717
        %v7794 = vpop.f32.mrb[0].mxu0
        %v7795 = vadd.f32 0.0, %v7794
        %v7796 = vpop.f32.mrb[0].mxu0
        %7797 = vmatprep.mubr.f32.mxu0 0.0
        %7798 = vmatmul.mubr.f32.gmra.mrb[0].mxu0 %v7720
        %v7799 = vpop.f32.mrb[0].mxu0
        %v7800 = vadd.f32 0.0, %v7799
        %v7801 = vpop.f32.mrb[0].mxu0
        %7802 = vmatprep.mubr.f32.mxu0 0.0
        %7803 = vmatmul.mubr.f32.gmra.mrb[0].mxu0 %v7723
        %v7804 = vpop.f32.mrb[0].mxu0
        %v7805 = vadd.f32 0.0, %v7804
        %v7806 = vpop.f32.mrb[0].mxu0
        %7807 = vmatprep.mubr.f32.mxu0 0.0
        %7808 = vmatmul.mubr.f32.gmra.mrb[0].mxu0 %v7726
        %v7809 = vpop.f32.mrb[0].mxu0
        %v7810 = vadd.f32 0.0, %v7809
        %v7811 = vpop.f32.mrb[0].mxu0
        %7812 = vdwg.mxu0
        %7813 = vrot.lane.b32.xlu0 %v1423, 112
        %v7814 = vpop.permute.xlu0 %7813
        %7815 = vrot.lane.b32.xlu0 %v1428, 112
        %v7816 = vpop.permute.xlu0 %7815
        %7817 = vrot.lane.b32.xlu0 %v1433, 112
        %v7818 = vpop.permute.xlu0 %7817
        %7819 = vrot.lane.b32.xlu0 %v1438, 112
        %v7820 = vpop.permute.xlu0 %7819
        %v7826 = vsel %vm575, %v7676, 0
        %v7829 = vsel %vm575, %v7677, 0
        %v7832 = vsel %vm575, %v7678, 0
        %v7835 = vsel %vm575, %v7679, 0
        %7837 = vmatprep.subr.mxu0 0.0
        %7838 = vmatpush1.msra.mxu0 %v7814
        %7839 = vmatprep.subr.mxu0 0.0
        %7840 = vmatpush1.msra.mxu0 %v7816
        %7841 = vmatprep.subr.mxu0 0.0
        %7842 = vmatpush1.msra.mxu0 %v7818
        %7843 = vmatprep.subr.mxu0 0.0
        %7844 = vmatpush1.msra.mxu0 %v7820
        %7845 = vmatprep.subr.mxu0 0.0
        %7846 = vmatpush1.msra.mxu0 0.0
        %7847 = vmatprep.subr.mxu0 0.0
        %7848 = vmatpush1.msra.mxu0 0.0
        %7849 = vmatprep.subr.mxu0 0.0
        %7850 = vmatpush1.msra.mxu0 0.0
        %7851 = vmatprep.subr.mxu0 0.0
        %7852 = vmatpush1.msra.mxu0 0.0
        %7853 = vmatprep.subr.mxu0 0.0
        %7854 = vmatpush1.msra.mxu0 0.0
        %7855 = vmatprep.subr.mxu0 0.0
        %7856 = vmatpush1.msra.mxu0 0.0
        %7857 = vmatprep.subr.mxu0 0.0
        %7858 = vmatpush1.msra.mxu0 0.0
        %7859 = vmatprep.subr.mxu0 0.0
        %7860 = vmatpush1.msra.mxu0 0.0
        %7861 = vmatprep.subr.mxu0 0.0
        %7862 = vmatpush1.msra.mxu0 0.0
        %7863 = vmatprep.subr.mxu0 0.0
        %7864 = vmatpush1.msra.mxu0 0.0
        %7865 = vmatprep.subr.mxu0 0.0
        %7866 = vmatpush1.msra.mxu0 0.0
        %7867 = vmatprep.subr.mxu0 0.0
        %7868 = vmatpush1.msra.mxu0 0.0
        %7869 = vmatprep.subr.mxu0 0.0
        %7870 = vmatpush1.msra.mxu0 0.0
        %7871 = vmatprep.subr.mxu0 0.0
        %7872 = vmatpush1.msra.mxu0 0.0
        %7873 = vmatprep.subr.mxu0 0.0
        %7874 = vmatpush1.msra.mxu0 0.0
        %7875 = vmatprep.subr.mxu0 0.0
        %7876 = vmatpush1.msra.mxu0 0.0
        %7877 = vmatprep.subr.mxu0 0.0
        %7878 = vmatpush1.msra.mxu0 0.0
        %7879 = vmatprep.subr.mxu0 0.0
        %7880 = vmatpush1.msra.mxu0 0.0
        %7881 = vmatprep.subr.mxu0 0.0
        %7882 = vmatpush1.msra.mxu0 0.0
        %7883 = vmatprep.subr.mxu0 0.0
        %7884 = vmatpush1.msra.mxu0 0.0
        %7885 = vmatprep.subr.mxu0 0.0
        %7886 = vmatpush1.msra.mxu0 0.0
        %7887 = vmatprep.subr.mxu0 0.0
        %7888 = vmatpush1.msra.mxu0 0.0
        %7889 = vmatprep.subr.mxu0 0.0
        %7890 = vmatpush1.msra.mxu0 0.0
        %7891 = vmatprep.subr.mxu0 0.0
        %7892 = vmatpush1.msra.mxu0 0.0
        %7893 = vmatprep.subr.mxu0 0.0
        %7894 = vmatpush1.msra.mxu0 0.0
        %7895 = vmatprep.subr.mxu0 0.0
        %7896 = vmatpush1.msra.mxu0 0.0
        %7897 = vmatprep.subr.mxu0 0.0
        %7898 = vmatpush1.msra.mxu0 0.0
        %7899 = vmatprep.subr.mxu0 0.0
        %7900 = vmatpush1.msra.mxu0 0.0
        %7901 = vmatprep.mubr.f32.mxu0 0.0
        %7902 = vmatmul.mubr.f32.gmra.mrb[0].mxu0 %v7826
        %v7903 = vpop.f32.mrb[0].mxu0
        %v7904 = vadd.f32 0.0, %v7903
        %v7905 = vpop.f32.mrb[0].mxu0
        %7906 = vmatprep.mubr.f32.mxu0 0.0
        %7907 = vmatmul.mubr.f32.gmra.mrb[0].mxu0 %v7829
        %v7908 = vpop.f32.mrb[0].mxu0
        %v7909 = vadd.f32 0.0, %v7908
        %v7910 = vpop.f32.mrb[0].mxu0
        %7911 = vmatprep.mubr.f32.mxu0 0.0
        %7912 = vmatmul.mubr.f32.gmra.mrb[0].mxu0 %v7832
        %v7913 = vpop.f32.mrb[0].mxu0
        %v7914 = vadd.f32 0.0, %v7913
        %v7915 = vpop.f32.mrb[0].mxu0
        %7916 = vmatprep.mubr.f32.mxu0 0.0
        %7917 = vmatmul.mubr.f32.gmra.mrb[0].mxu0 %v7835
        %v7918 = vpop.f32.mrb[0].mxu0
        %v7919 = vadd.f32 0.0, %v7918
        %v7920 = vpop.f32.mrb[0].mxu0
        %7921 = vdwg.mxu0
        %7922 = vrot.lane.b32.xlu0 %v1443, 112
        %v7923 = vpop.permute.xlu0 %7922
        %7924 = vrot.lane.b32.xlu0 %v1448, 112
        %v7925 = vpop.permute.xlu0 %7924
        %7926 = vrot.lane.b32.xlu0 %v1453, 112
        %v7927 = vpop.permute.xlu0 %7926
        %7928 = vrot.lane.b32.xlu0 %v1458, 112
        %v7929 = vpop.permute.xlu0 %7928
        %v7935 = vsel %vm575, %v7680, 0
        %v7938 = vsel %vm575, %v7681, 0
        %v7941 = vsel %vm575, %v7682, 0
        %v7944 = vsel %vm575, %v7683, 0
        %7946 = vmatprep.subr.mxu0 0.0
        %7947 = vmatpush1.msra.mxu0 %v7923
        %7948 = vmatprep.subr.mxu0 0.0
        %7949 = vmatpush1.msra.mxu0 %v7925
        %7950 = vmatprep.subr.mxu0 0.0
        %7951 = vmatpush1.msra.mxu0 %v7927
        %7952 = vmatprep.subr.mxu0 0.0
        %7953 = vmatpush1.msra.mxu0 %v7929
        %7954 = vmatprep.subr.mxu0 0.0
        %7955 = vmatpush1.msra.mxu0 0.0
        %7956 = vmatprep.subr.mxu0 0.0
        %7957 = vmatpush1.msra.mxu0 0.0
        %7958 = vmatprep.subr.mxu0 0.0
        %7959 = vmatpush1.msra.mxu0 0.0
        %7960 = vmatprep.subr.mxu0 0.0
        %7961 = vmatpush1.msra.mxu0 0.0
        %7962 = vmatprep.subr.mxu0 0.0
        %7963 = vmatpush1.msra.mxu0 0.0
        %7964 = vmatprep.subr.mxu0 0.0
        %7965 = vmatpush1.msra.mxu0 0.0
        %7966 = vmatprep.subr.mxu0 0.0
        %7967 = vmatpush1.msra.mxu0 0.0
        %7968 = vmatprep.subr.mxu0 0.0
        %7969 = vmatpush1.msra.mxu0 0.0
        %7970 = vmatprep.subr.mxu0 0.0
        %7971 = vmatpush1.msra.mxu0 0.0
        %7972 = vmatprep.subr.mxu0 0.0
        %7973 = vmatpush1.msra.mxu0 0.0
        %7974 = vmatprep.subr.mxu0 0.0
        %7975 = vmatpush1.msra.mxu0 0.0
        %7976 = vmatprep.subr.mxu0 0.0
        %7977 = vmatpush1.msra.mxu0 0.0
        %7978 = vmatprep.subr.mxu0 0.0
        %7979 = vmatpush1.msra.mxu0 0.0
        %7980 = vmatprep.subr.mxu0 0.0
        %7981 = vmatpush1.msra.mxu0 0.0
        %7982 = vmatprep.subr.mxu0 0.0
        %7983 = vmatpush1.msra.mxu0 0.0
        %7984 = vmatprep.subr.mxu0 0.0
        %7985 = vmatpush1.msra.mxu0 0.0
        %7986 = vmatprep.subr.mxu0 0.0
        %7987 = vmatpush1.msra.mxu0 0.0
        %7988 = vmatprep.subr.mxu0 0.0
        %7989 = vmatpush1.msra.mxu0 0.0
        %7990 = vmatprep.subr.mxu0 0.0
        %7991 = vmatpush1.msra.mxu0 0.0
        %7992 = vmatprep.subr.mxu0 0.0
        %7993 = vmatpush1.msra.mxu0 0.0
        %7994 = vmatprep.subr.mxu0 0.0
        %7995 = vmatpush1.msra.mxu0 0.0
        %7996 = vmatprep.subr.mxu0 0.0
        %7997 = vmatpush1.msra.mxu0 0.0
        %7998 = vmatprep.subr.mxu0 0.0
        %7999 = vmatpush1.msra.mxu0 0.0
        %8000 = vmatprep.subr.mxu0 0.0
        %8001 = vmatpush1.msra.mxu0 0.0
        %8002 = vmatprep.subr.mxu0 0.0
        %8003 = vmatpush1.msra.mxu0 0.0
        %8004 = vmatprep.subr.mxu0 0.0
        %8005 = vmatpush1.msra.mxu0 0.0
        %8006 = vmatprep.subr.mxu0 0.0
        %8007 = vmatpush1.msra.mxu0 0.0
        %8008 = vmatprep.subr.mxu0 0.0
        %8009 = vmatpush1.msra.mxu0 0.0
        %8010 = vmatprep.mubr.f32.mxu0 0.0
        %8011 = vmatmul.mubr.f32.gmra.mrb[0].mxu0 %v7935
        %v8012 = vpop.f32.mrb[0].mxu0
        %v8013 = vadd.f32 0.0, %v8012
        %v8014 = vpop.f32.mrb[0].mxu0
        %8015 = vmatprep.mubr.f32.mxu0 0.0
        %8016 = vmatmul.mubr.f32.gmra.mrb[0].mxu0 %v7938
        %v8017 = vpop.f32.mrb[0].mxu0
        %v8018 = vadd.f32 0.0, %v8017
        %v8019 = vpop.f32.mrb[0].mxu0
        %8020 = vmatprep.mubr.f32.mxu0 0.0
        %8021 = vmatmul.mubr.f32.gmra.mrb[0].mxu0 %v7941
        %v8022 = vpop.f32.mrb[0].mxu0
        %v8023 = vadd.f32 0.0, %v8022
        %v8024 = vpop.f32.mrb[0].mxu0
        %8025 = vmatprep.mubr.f32.mxu0 0.0
        %8026 = vmatmul.mubr.f32.gmra.mrb[0].mxu0 %v7944
        %v8027 = vpop.f32.mrb[0].mxu0
        %v8028 = vadd.f32 0.0, %v8027
        %v8029 = vpop.f32.mrb[0].mxu0
        %8030 = vdwg.mxu0
        %8031 = vrot.lane.b32.xlu0 %v1463, 112
        %v8032 = vpop.permute.xlu0 %8031
        %8033 = vrot.lane.b32.xlu0 %v1468, 112
        %v8034 = vpop.permute.xlu0 %8033
        %8035 = vrot.lane.b32.xlu0 %v1473, 112
        %v8036 = vpop.permute.xlu0 %8035
        %8037 = vrot.lane.b32.xlu0 %v1478, 112
        %v8038 = vpop.permute.xlu0 %8037
        %v8044 = vsel %vm575, %v7684, 0
        %v8047 = vsel %vm575, %v7685, 0
        %v8050 = vsel %vm575, %v7686, 0
        %v8053 = vsel %vm575, %v7687, 0
        %8055 = vmatprep.subr.mxu0 0.0
        %8056 = vmatpush1.msra.mxu0 %v8032
        %8057 = vmatprep.subr.mxu0 0.0
        %8058 = vmatpush1.msra.mxu0 %v8034
        %8059 = vmatprep.subr.mxu0 0.0
        %8060 = vmatpush1.msra.mxu0 %v8036
        %8061 = vmatprep.subr.mxu0 0.0
        %8062 = vmatpush1.msra.mxu0 %v8038
        %8063 = vmatprep.subr.mxu0 0.0
        %8064 = vmatpush1.msra.mxu0 0.0
        %8065 = vmatprep.subr.mxu0 0.0
        %8066 = vmatpush1.msra.mxu0 0.0
        %8067 = vmatprep.subr.mxu0 0.0
        %8068 = vmatpush1.msra.mxu0 0.0
        %8069 = vmatprep.subr.mxu0 0.0
        %8070 = vmatpush1.msra.mxu0 0.0
        %8071 = vmatprep.subr.mxu0 0.0
        %8072 = vmatpush1.msra.mxu0 0.0
        %8073 = vmatprep.subr.mxu0 0.0
        %8074 = vmatpush1.msra.mxu0 0.0
        %8075 = vmatprep.subr.mxu0 0.0
        %8076 = vmatpush1.msra.mxu0 0.0
        %8077 = vmatprep.subr.mxu0 0.0
        %8078 = vmatpush1.msra.mxu0 0.0
        %8079 = vmatprep.subr.mxu0 0.0
        %8080 = vmatpush1.msra.mxu0 0.0
        %8081 = vmatprep.subr.mxu0 0.0
        %8082 = vmatpush1.msra.mxu0 0.0
        %8083 = vmatprep.subr.mxu0 0.0
        %8084 = vmatpush1.msra.mxu0 0.0
        %8085 = vmatprep.subr.mxu0 0.0
        %8086 = vmatpush1.msra.mxu0 0.0
        %8087 = vmatprep.subr.mxu0 0.0
        %8088 = vmatpush1.msra.mxu0 0.0
        %8089 = vmatprep.subr.mxu0 0.0
        %8090 = vmatpush1.msra.mxu0 0.0
        %8091 = vmatprep.subr.mxu0 0.0
        %8092 = vmatpush1.msra.mxu0 0.0
        %8093 = vmatprep.subr.mxu0 0.0
        %8094 = vmatpush1.msra.mxu0 0.0
        %8095 = vmatprep.subr.mxu0 0.0
        %8096 = vmatpush1.msra.mxu0 0.0
        %8097 = vmatprep.subr.mxu0 0.0
        %8098 = vmatpush1.msra.mxu0 0.0
        %8099 = vmatprep.subr.mxu0 0.0
        %8100 = vmatpush1.msra.mxu0 0.0
        %8101 = vmatprep.subr.mxu0 0.0
        %8102 = vmatpush1.msra.mxu0 0.0
        %8103 = vmatprep.subr.mxu0 0.0
        %8104 = vmatpush1.msra.mxu0 0.0
        %8105 = vmatprep.subr.mxu0 0.0
        %8106 = vmatpush1.msra.mxu0 0.0
        %8107 = vmatprep.subr.mxu0 0.0
        %8108 = vmatpush1.msra.mxu0 0.0
        %8109 = vmatprep.subr.mxu0 0.0
        %8110 = vmatpush1.msra.mxu0 0.0
        %8111 = vmatprep.subr.mxu0 0.0
        %8112 = vmatpush1.msra.mxu0 0.0
        %8113 = vmatprep.subr.mxu0 0.0
        %8114 = vmatpush1.msra.mxu0 0.0
        %8115 = vmatprep.subr.mxu0 0.0
        %8116 = vmatpush1.msra.mxu0 0.0
        %8117 = vmatprep.subr.mxu0 0.0
        %8118 = vmatpush1.msra.mxu0 0.0
        %8119 = vmatprep.mubr.f32.mxu0 0.0
        %8120 = vmatmul.mubr.f32.gmra.mrb[0].mxu0 %v8044
        %v8121 = vpop.f32.mrb[0].mxu0
        %v8122 = vadd.f32 0.0, %v8121
        %v8123 = vpop.f32.mrb[0].mxu0
        %8124 = vmatprep.mubr.f32.mxu0 0.0
        %8125 = vmatmul.mubr.f32.gmra.mrb[0].mxu0 %v8047
        %v8126 = vpop.f32.mrb[0].mxu0
        %v8127 = vadd.f32 0.0, %v8126
        %v8128 = vpop.f32.mrb[0].mxu0
        %8129 = vmatprep.mubr.f32.mxu0 0.0
        %8130 = vmatmul.mubr.f32.gmra.mrb[0].mxu0 %v8050
        %v8131 = vpop.f32.mrb[0].mxu0
        %v8132 = vadd.f32 0.0, %v8131
        %v8133 = vpop.f32.mrb[0].mxu0
        %8134 = vmatprep.mubr.f32.mxu0 0.0
        %8135 = vmatmul.mubr.f32.gmra.mrb[0].mxu0 %v8053
        %v8136 = vpop.f32.mrb[0].mxu0
        %v8137 = vadd.f32 0.0, %v8136
        %v8138 = vpop.f32.mrb[0].mxu0
        %8139 = vdwg.mxu0
        %8140 = vrot.lane.b32.xlu0 %v1483, 112
        %v8141 = vpop.permute.xlu0 %8140
        %8142 = vrot.lane.b32.xlu0 %v1488, 112
        %v8143 = vpop.permute.xlu0 %8142
        %8144 = vrot.lane.b32.xlu0 %v1493, 112
        %v8145 = vpop.permute.xlu0 %8144
        %8146 = vrot.lane.b32.xlu0 %v1498, 112
        %v8147 = vpop.permute.xlu0 %8146
        %v8153 = vsel %vm575, %v7688, 0
        %v8156 = vsel %vm575, %v7689, 0
        %v8159 = vsel %vm575, %v7690, 0
        %v8162 = vsel %vm575, %v7691, 0
        %8164 = vmatprep.subr.mxu0 0.0
        %8165 = vmatpush1.msra.mxu0 %v8141
        %8166 = vmatprep.subr.mxu0 0.0
        %8167 = vmatpush1.msra.mxu0 %v8143
        %8168 = vmatprep.subr.mxu0 0.0
        %8169 = vmatpush1.msra.mxu0 %v8145
        %8170 = vmatprep.subr.mxu0 0.0
        %8171 = vmatpush1.msra.mxu0 %v8147
        %8172 = vmatprep.subr.mxu0 0.0
        %8173 = vmatpush1.msra.mxu0 0.0
        %8174 = vmatprep.subr.mxu0 0.0
        %8175 = vmatpush1.msra.mxu0 0.0
        %8176 = vmatprep.subr.mxu0 0.0
        %8177 = vmatpush1.msra.mxu0 0.0
        %8178 = vmatprep.subr.mxu0 0.0
        %8179 = vmatpush1.msra.mxu0 0.0
        %8180 = vmatprep.subr.mxu0 0.0
        %8181 = vmatpush1.msra.mxu0 0.0
        %8182 = vmatprep.subr.mxu0 0.0
        %8183 = vmatpush1.msra.mxu0 0.0
        %8184 = vmatprep.subr.mxu0 0.0
        %8185 = vmatpush1.msra.mxu0 0.0
        %8186 = vmatprep.subr.mxu0 0.0
        %8187 = vmatpush1.msra.mxu0 0.0
        %8188 = vmatprep.subr.mxu0 0.0
        %8189 = vmatpush1.msra.mxu0 0.0
        %8190 = vmatprep.subr.mxu0 0.0
        %8191 = vmatpush1.msra.mxu0 0.0
        %8192 = vmatprep.subr.mxu0 0.0
        %8193 = vmatpush1.msra.mxu0 0.0
        %8194 = vmatprep.subr.mxu0 0.0
        %8195 = vmatpush1.msra.mxu0 0.0
        %8196 = vmatprep.subr.mxu0 0.0
        %8197 = vmatpush1.msra.mxu0 0.0
        %8198 = vmatprep.subr.mxu0 0.0
        %8199 = vmatpush1.msra.mxu0 0.0
        %8200 = vmatprep.subr.mxu0 0.0
        %8201 = vmatpush1.msra.mxu0 0.0
        %8202 = vmatprep.subr.mxu0 0.0
        %8203 = vmatpush1.msra.mxu0 0.0
        %8204 = vmatprep.subr.mxu0 0.0
        %8205 = vmatpush1.msra.mxu0 0.0
        %8206 = vmatprep.subr.mxu0 0.0
        %8207 = vmatpush1.msra.mxu0 0.0
        %8208 = vmatprep.subr.mxu0 0.0
        %8209 = vmatpush1.msra.mxu0 0.0
        %8210 = vmatprep.subr.mxu0 0.0
        %8211 = vmatpush1.msra.mxu0 0.0
        %8212 = vmatprep.subr.mxu0 0.0
        %8213 = vmatpush1.msra.mxu0 0.0
        %8214 = vmatprep.subr.mxu0 0.0
        %8215 = vmatpush1.msra.mxu0 0.0
        %8216 = vmatprep.subr.mxu0 0.0
        %8217 = vmatpush1.msra.mxu0 0.0
        %8218 = vmatprep.subr.mxu0 0.0
        %8219 = vmatpush1.msra.mxu0 0.0
        %8220 = vmatprep.subr.mxu0 0.0
        %8221 = vmatpush1.msra.mxu0 0.0
        %8222 = vmatprep.subr.mxu0 0.0
        %8223 = vmatpush1.msra.mxu0 0.0
        %8224 = vmatprep.subr.mxu0 0.0
        %8225 = vmatpush1.msra.mxu0 0.0
        %8226 = vmatprep.subr.mxu0 0.0
        %8227 = vmatpush1.msra.mxu0 0.0
        %8228 = vmatprep.mubr.f32.mxu0 0.0
        %8229 = vmatmul.mubr.f32.gmra.mrb[0].mxu0 %v8153
        %v8230 = vpop.f32.mrb[0].mxu0
        %v8231 = vadd.f32 0.0, %v8230
        %v8232 = vpop.f32.mrb[0].mxu0
        %8233 = vmatprep.mubr.f32.mxu0 0.0
        %8234 = vmatmul.mubr.f32.gmra.mrb[0].mxu0 %v8156
        %v8235 = vpop.f32.mrb[0].mxu0
        %v8236 = vadd.f32 0.0, %v8235
        %v8237 = vpop.f32.mrb[0].mxu0
        %8238 = vmatprep.mubr.f32.mxu0 0.0
        %8239 = vmatmul.mubr.f32.gmra.mrb[0].mxu0 %v8159
        %v8240 = vpop.f32.mrb[0].mxu0
        %v8241 = vadd.f32 0.0, %v8240
        %v8242 = vpop.f32.mrb[0].mxu0
        %8243 = vmatprep.mubr.f32.mxu0 0.0
        %8244 = vmatmul.mubr.f32.gmra.mrb[0].mxu0 %v8162
        %v8245 = vpop.f32.mrb[0].mxu0
        %v8246 = vadd.f32 0.0, %v8245
        %v8247 = vpop.f32.mrb[0].mxu0
        %8248 = vdwg.mxu0
        %8249 = vrot.lane.b32.xlu0 %v1503, 112
        %v8250 = vpop.permute.xlu0 %8249
        %8251 = vrot.lane.b32.xlu0 %v1508, 112
        %v8252 = vpop.permute.xlu0 %8251
        %8253 = vrot.lane.b32.xlu0 %v1513, 112
        %v8254 = vpop.permute.xlu0 %8253
        %8255 = vrot.lane.b32.xlu0 %v1518, 112
        %v8256 = vpop.permute.xlu0 %8255
        %v8262 = vsel %vm575, %v7692, 0
        %v8265 = vsel %vm575, %v7693, 0
        %v8268 = vsel %vm575, %v7694, 0
        %v8271 = vsel %vm575, %v7695, 0
        %8273 = vmatprep.subr.mxu0 0.0
        %8274 = vmatpush1.msra.mxu0 %v8250
        %8275 = vmatprep.subr.mxu0 0.0
        %8276 = vmatpush1.msra.mxu0 %v8252
        %8277 = vmatprep.subr.mxu0 0.0
        %8278 = vmatpush1.msra.mxu0 %v8254
        %8279 = vmatprep.subr.mxu0 0.0
        %8280 = vmatpush1.msra.mxu0 %v8256
        %8281 = vmatprep.subr.mxu0 0.0
        %8282 = vmatpush1.msra.mxu0 0.0
        %8283 = vmatprep.subr.mxu0 0.0
        %8284 = vmatpush1.msra.mxu0 0.0
        %8285 = vmatprep.subr.mxu0 0.0
        %8286 = vmatpush1.msra.mxu0 0.0
        %8287 = vmatprep.subr.mxu0 0.0
        %8288 = vmatpush1.msra.mxu0 0.0
        %8289 = vmatprep.subr.mxu0 0.0
        %8290 = vmatpush1.msra.mxu0 0.0
        %8291 = vmatprep.subr.mxu0 0.0
        %8292 = vmatpush1.msra.mxu0 0.0
        %8293 = vmatprep.subr.mxu0 0.0
        %8294 = vmatpush1.msra.mxu0 0.0
        %8295 = vmatprep.subr.mxu0 0.0
        %8296 = vmatpush1.msra.mxu0 0.0
        %8297 = vmatprep.subr.mxu0 0.0
        %8298 = vmatpush1.msra.mxu0 0.0
        %8299 = vmatprep.subr.mxu0 0.0
        %8300 = vmatpush1.msra.mxu0 0.0
        %8301 = vmatprep.subr.mxu0 0.0
        %8302 = vmatpush1.msra.mxu0 0.0
        %8303 = vmatprep.subr.mxu0 0.0
        %8304 = vmatpush1.msra.mxu0 0.0
        %8305 = vmatprep.subr.mxu0 0.0
        %8306 = vmatpush1.msra.mxu0 0.0
        %8307 = vmatprep.subr.mxu0 0.0
        %8308 = vmatpush1.msra.mxu0 0.0
        %8309 = vmatprep.subr.mxu0 0.0
        %8310 = vmatpush1.msra.mxu0 0.0
        %8311 = vmatprep.subr.mxu0 0.0
        %8312 = vmatpush1.msra.mxu0 0.0
        %8313 = vmatprep.subr.mxu0 0.0
        %8314 = vmatpush1.msra.mxu0 0.0
        %8315 = vmatprep.subr.mxu0 0.0
        %8316 = vmatpush1.msra.mxu0 0.0
        %8317 = vmatprep.subr.mxu0 0.0
        %8318 = vmatpush1.msra.mxu0 0.0
        %8319 = vmatprep.subr.mxu0 0.0
        %8320 = vmatpush1.msra.mxu0 0.0
        %8321 = vmatprep.subr.mxu0 0.0
        %8322 = vmatpush1.msra.mxu0 0.0
        %8323 = vmatprep.subr.mxu0 0.0
        %8324 = vmatpush1.msra.mxu0 0.0
        %8325 = vmatprep.subr.mxu0 0.0
        %8326 = vmatpush1.msra.mxu0 0.0
        %8327 = vmatprep.subr.mxu0 0.0
        %8328 = vmatpush1.msra.mxu0 0.0
        %8329 = vmatprep.subr.mxu0 0.0
        %8330 = vmatpush1.msra.mxu0 0.0
        %8331 = vmatprep.subr.mxu0 0.0
        %8332 = vmatpush1.msra.mxu0 0.0
        %8333 = vmatprep.subr.mxu0 0.0
        %8334 = vmatpush1.msra.mxu0 0.0
        %8335 = vmatprep.subr.mxu0 0.0
        %8336 = vmatpush1.msra.mxu0 0.0
        %8337 = vmatprep.mubr.f32.mxu0 0.0
        %8338 = vmatmul.mubr.f32.gmra.mrb[0].mxu0 %v8262
        %v8339 = vpop.f32.mrb[0].mxu0
        %v8340 = vadd.f32 0.0, %v8339
        %v8341 = vpop.f32.mrb[0].mxu0
        %8342 = vmatprep.mubr.f32.mxu0 0.0
        %8343 = vmatmul.mubr.f32.gmra.mrb[0].mxu0 %v8265
        %v8344 = vpop.f32.mrb[0].mxu0
        %v8345 = vadd.f32 0.0, %v8344
        %v8346 = vpop.f32.mrb[0].mxu0
        %8347 = vmatprep.mubr.f32.mxu0 0.0
        %8348 = vmatmul.mubr.f32.gmra.mrb[0].mxu0 %v8268
        %v8349 = vpop.f32.mrb[0].mxu0
        %v8350 = vadd.f32 0.0, %v8349
        %v8351 = vpop.f32.mrb[0].mxu0
        %8352 = vmatprep.mubr.f32.mxu0 0.0
        %8353 = vmatmul.mubr.f32.gmra.mrb[0].mxu0 %v8271
        %v8354 = vpop.f32.mrb[0].mxu0
        %v8355 = vadd.f32 0.0, %v8354
        %v8356 = vpop.f32.mrb[0].mxu0
        %8357 = vdwg.mxu0
        %8358 = vrot.lane.b32.xlu0 %v1523, 112
        %v8359 = vpop.permute.xlu0 %8358
        %8360 = vrot.lane.b32.xlu0 %v1528, 112
        %v8361 = vpop.permute.xlu0 %8360
        %8362 = vrot.lane.b32.xlu0 %v1533, 112
        %v8363 = vpop.permute.xlu0 %8362
        %8364 = vrot.lane.b32.xlu0 %v1538, 112
        %v8365 = vpop.permute.xlu0 %8364
        %v8371 = vsel %vm575, %v7696, 0
        %v8374 = vsel %vm575, %v7697, 0
        %v8377 = vsel %vm575, %v7698, 0
        %v8380 = vsel %vm575, %v7699, 0
        %8382 = vmatprep.subr.mxu0 0.0
        %8383 = vmatpush1.msra.mxu0 %v8359
        %8384 = vmatprep.subr.mxu0 0.0
        %8385 = vmatpush1.msra.mxu0 %v8361
        %8386 = vmatprep.subr.mxu0 0.0
        %8387 = vmatpush1.msra.mxu0 %v8363
        %8388 = vmatprep.subr.mxu0 0.0
        %8389 = vmatpush1.msra.mxu0 %v8365
        %8390 = vmatprep.subr.mxu0 0.0
        %8391 = vmatpush1.msra.mxu0 0.0
        %8392 = vmatprep.subr.mxu0 0.0
        %8393 = vmatpush1.msra.mxu0 0.0
        %8394 = vmatprep.subr.mxu0 0.0
        %8395 = vmatpush1.msra.mxu0 0.0
        %8396 = vmatprep.subr.mxu0 0.0
        %8397 = vmatpush1.msra.mxu0 0.0
        %8398 = vmatprep.subr.mxu0 0.0
        %8399 = vmatpush1.msra.mxu0 0.0
        %8400 = vmatprep.subr.mxu0 0.0
        %8401 = vmatpush1.msra.mxu0 0.0
        %8402 = vmatprep.subr.mxu0 0.0
        %8403 = vmatpush1.msra.mxu0 0.0
        %8404 = vmatprep.subr.mxu0 0.0
        %8405 = vmatpush1.msra.mxu0 0.0
        %8406 = vmatprep.subr.mxu0 0.0
        %8407 = vmatpush1.msra.mxu0 0.0
        %8408 = vmatprep.subr.mxu0 0.0
        %8409 = vmatpush1.msra.mxu0 0.0
        %8410 = vmatprep.subr.mxu0 0.0
        %8411 = vmatpush1.msra.mxu0 0.0
        %8412 = vmatprep.subr.mxu0 0.0
        %8413 = vmatpush1.msra.mxu0 0.0
        %8414 = vmatprep.subr.mxu0 0.0
        %8415 = vmatpush1.msra.mxu0 0.0
        %8416 = vmatprep.subr.mxu0 0.0
        %8417 = vmatpush1.msra.mxu0 0.0
        %8418 = vmatprep.subr.mxu0 0.0
        %8419 = vmatpush1.msra.mxu0 0.0
        %8420 = vmatprep.subr.mxu0 0.0
        %8421 = vmatpush1.msra.mxu0 0.0
        %8422 = vmatprep.subr.mxu0 0.0
        %8423 = vmatpush1.msra.mxu0 0.0
        %8424 = vmatprep.subr.mxu0 0.0
        %8425 = vmatpush1.msra.mxu0 0.0
        %8426 = vmatprep.subr.mxu0 0.0
        %8427 = vmatpush1.msra.mxu0 0.0
        %8428 = vmatprep.subr.mxu0 0.0
        %8429 = vmatpush1.msra.mxu0 0.0
        %8430 = vmatprep.subr.mxu0 0.0
        %8431 = vmatpush1.msra.mxu0 0.0
        %8432 = vmatprep.subr.mxu0 0.0
        %8433 = vmatpush1.msra.mxu0 0.0
        %8434 = vmatprep.subr.mxu0 0.0
        %8435 = vmatpush1.msra.mxu0 0.0
        %8436 = vmatprep.subr.mxu0 0.0
        %8437 = vmatpush1.msra.mxu0 0.0
        %8438 = vmatprep.subr.mxu0 0.0
        %8439 = vmatpush1.msra.mxu0 0.0
        %8440 = vmatprep.subr.mxu0 0.0
        %8441 = vmatpush1.msra.mxu0 0.0
        %8442 = vmatprep.subr.mxu0 0.0
        %8443 = vmatpush1.msra.mxu0 0.0
        %8444 = vmatprep.subr.mxu0 0.0
        %8445 = vmatpush1.msra.mxu0 0.0
        %8446 = vmatprep.mubr.f32.mxu0 0.0
        %8447 = vmatmul.mubr.f32.gmra.mrb[0].mxu0 %v8371
        %v8448 = vpop.f32.mrb[0].mxu0
        %v8449 = vadd.f32 0.0, %v8448
        %v8450 = vpop.f32.mrb[0].mxu0
        %8451 = vmatprep.mubr.f32.mxu0 0.0
        %8452 = vmatmul.mubr.f32.gmra.mrb[0].mxu0 %v8374
        %v8453 = vpop.f32.mrb[0].mxu0
        %v8454 = vadd.f32 0.0, %v8453
        %v8455 = vpop.f32.mrb[0].mxu0
        %8456 = vmatprep.mubr.f32.mxu0 0.0
        %8457 = vmatmul.mubr.f32.gmra.mrb[0].mxu0 %v8377
        %v8458 = vpop.f32.mrb[0].mxu0
        %v8459 = vadd.f32 0.0, %v8458
        %v8460 = vpop.f32.mrb[0].mxu0
        %8461 = vmatprep.mubr.f32.mxu0 0.0
        %8462 = vmatmul.mubr.f32.gmra.mrb[0].mxu0 %v8380
        %v8463 = vpop.f32.mrb[0].mxu0
        %v8464 = vadd.f32 0.0, %v8463
        %v8465 = vpop.f32.mrb[0].mxu0
        %8466 = vdwg.mxu0
        %8467 = vrot.lane.b32.xlu0 %v1543, 112
        %v8468 = vpop.permute.xlu0 %8467
        %8469 = vrot.lane.b32.xlu0 %v1548, 112
        %v8470 = vpop.permute.xlu0 %8469
        %8471 = vrot.lane.b32.xlu0 %v1553, 112
        %v8472 = vpop.permute.xlu0 %8471
        %8473 = vrot.lane.b32.xlu0 %v1558, 112
        %v8474 = vpop.permute.xlu0 %8473
        %v8480 = vsel %vm575, %v7700, 0
        %v8483 = vsel %vm575, %v7701, 0
        %v8486 = vsel %vm575, %v7702, 0
        %v8489 = vsel %vm575, %v7703, 0
        %8491 = vmatprep.subr.mxu0 0.0
        %8492 = vmatpush1.msra.mxu0 %v8468
        %8493 = vmatprep.subr.mxu0 0.0
        %8494 = vmatpush1.msra.mxu0 %v8470
        %8495 = vmatprep.subr.mxu0 0.0
        %8496 = vmatpush1.msra.mxu0 %v8472
        %8497 = vmatprep.subr.mxu0 0.0
        %8498 = vmatpush1.msra.mxu0 %v8474
        %8499 = vmatprep.subr.mxu0 0.0
        %8500 = vmatpush1.msra.mxu0 0.0
        %8501 = vmatprep.subr.mxu0 0.0
        %8502 = vmatpush1.msra.mxu0 0.0
        %8503 = vmatprep.subr.mxu0 0.0
        %8504 = vmatpush1.msra.mxu0 0.0
        %8505 = vmatprep.subr.mxu0 0.0
        %8506 = vmatpush1.msra.mxu0 0.0
        %8507 = vmatprep.subr.mxu0 0.0
        %8508 = vmatpush1.msra.mxu0 0.0
        %8509 = vmatprep.subr.mxu0 0.0
        %8510 = vmatpush1.msra.mxu0 0.0
        %8511 = vmatprep.subr.mxu0 0.0
        %8512 = vmatpush1.msra.mxu0 0.0
        %8513 = vmatprep.subr.mxu0 0.0
        %8514 = vmatpush1.msra.mxu0 0.0
        %8515 = vmatprep.subr.mxu0 0.0
        %8516 = vmatpush1.msra.mxu0 0.0
        %8517 = vmatprep.subr.mxu0 0.0
        %8518 = vmatpush1.msra.mxu0 0.0
        %8519 = vmatprep.subr.mxu0 0.0
        %8520 = vmatpush1.msra.mxu0 0.0
        %8521 = vmatprep.subr.mxu0 0.0
        %8522 = vmatpush1.msra.mxu0 0.0
        %8523 = vmatprep.subr.mxu0 0.0
        %8524 = vmatpush1.msra.mxu0 0.0
        %8525 = vmatprep.subr.mxu0 0.0
        %8526 = vmatpush1.msra.mxu0 0.0
        %8527 = vmatprep.subr.mxu0 0.0
        %8528 = vmatpush1.msra.mxu0 0.0
        %8529 = vmatprep.subr.mxu0 0.0
        %8530 = vmatpush1.msra.mxu0 0.0
        %8531 = vmatprep.subr.mxu0 0.0
        %8532 = vmatpush1.msra.mxu0 0.0
        %8533 = vmatprep.subr.mxu0 0.0
        %8534 = vmatpush1.msra.mxu0 0.0
        %8535 = vmatprep.subr.mxu0 0.0
        %8536 = vmatpush1.msra.mxu0 0.0
        %8537 = vmatprep.subr.mxu0 0.0
        %8538 = vmatpush1.msra.mxu0 0.0
        %8539 = vmatprep.subr.mxu0 0.0
        %8540 = vmatpush1.msra.mxu0 0.0
        %8541 = vmatprep.subr.mxu0 0.0
        %8542 = vmatpush1.msra.mxu0 0.0
        %8543 = vmatprep.subr.mxu0 0.0
        %8544 = vmatpush1.msra.mxu0 0.0
        %8545 = vmatprep.subr.mxu0 0.0
        %8546 = vmatpush1.msra.mxu0 0.0
        %8547 = vmatprep.subr.mxu0 0.0
        %8548 = vmatpush1.msra.mxu0 0.0
        %8549 = vmatprep.subr.mxu0 0.0
        %8550 = vmatpush1.msra.mxu0 0.0
        %8551 = vmatprep.subr.mxu0 0.0
        %8552 = vmatpush1.msra.mxu0 0.0
        %8553 = vmatprep.subr.mxu0 0.0
        %8554 = vmatpush1.msra.mxu0 0.0
        %8555 = vmatprep.mubr.f32.mxu0 0.0
        %8556 = vmatmul.mubr.f32.gmra.mrb[0].mxu0 %v8480
        %v8557 = vpop.f32.mrb[0].mxu0
        %v8558 = vadd.f32 0.0, %v8557
        %v8559 = vpop.f32.mrb[0].mxu0
        %8560 = vmatprep.mubr.f32.mxu0 0.0
        %8561 = vmatmul.mubr.f32.gmra.mrb[0].mxu0 %v8483
        %v8562 = vpop.f32.mrb[0].mxu0
        %v8563 = vadd.f32 0.0, %v8562
        %v8564 = vpop.f32.mrb[0].mxu0
        %8565 = vmatprep.mubr.f32.mxu0 0.0
        %8566 = vmatmul.mubr.f32.gmra.mrb[0].mxu0 %v8486
        %v8567 = vpop.f32.mrb[0].mxu0
        %v8568 = vadd.f32 0.0, %v8567
        %v8569 = vpop.f32.mrb[0].mxu0
        %8570 = vmatprep.mubr.f32.mxu0 0.0
        %8571 = vmatmul.mubr.f32.gmra.mrb[0].mxu0 %v8489
        %v8572 = vpop.f32.mrb[0].mxu0
        %v8573 = vadd.f32 0.0, %v8572
        %v8574 = vpop.f32.mrb[0].mxu0
        %8575 = vdwg.mxu0
        %v8577 = vsel %vm1581, %v7795, 0
        %v8580 = vsel %vm1581, %v7800, 0
        %v8583 = vsel %vm1581, %v7805, 0
        %v8586 = vsel %vm1581, %v7810, 0
        %v8589 = vsel %vm1581, %v7904, 0
        %v8592 = vsel %vm1581, %v7909, 0
        %v8595 = vsel %vm1581, %v7914, 0
        %v8598 = vsel %vm1581, %v7919, 0
        %v8601 = vsel %vm1581, %v8013, 0
        %v8604 = vsel %vm1581, %v8018, 0
        %v8607 = vsel %vm1581, %v8023, 0
        %v8610 = vsel %vm1581, %v8028, 0
        %v8613 = vsel %vm1581, %v8122, 0
        %v8616 = vsel %vm1581, %v8127, 0
        %v8619 = vsel %vm1581, %v8132, 0
        %v8622 = vsel %vm1581, %v8137, 0
        %v8625 = vsel %vm1581, %v8231, 0
        %v8628 = vsel %vm1581, %v8236, 0
        %v8631 = vsel %vm1581, %v8241, 0
        %v8634 = vsel %vm1581, %v8246, 0
        %v8637 = vsel %vm1581, %v8340, 0
        %v8640 = vsel %vm1581, %v8345, 0
        %v8643 = vsel %vm1581, %v8350, 0
        %v8646 = vsel %vm1581, %v8355, 0
        %v8649 = vsel %vm1581, %v8449, 0
        %v8652 = vsel %vm1581, %v8454, 0
        %v8655 = vsel %vm1581, %v8459, 0
        %v8658 = vsel %vm1581, %v8464, 0
        %v8661 = vsel %vm1581, %v8558, 0
        %v8664 = vsel %vm1581, %v8563, 0
        %v8667 = vsel %vm1581, %v8568, 0
        %v8670 = vsel %vm1581, %v8573, 0
        %8672 = vmatprep.subr.mxu0 0.0
        %8673 = vmatpush1.msra.mxu0 %v1579
        %8674 = vmatprep.subr.mxu0 0.0
        %8675 = vmatpush1.msra.mxu0 0.0
        %8676 = vmatprep.subr.mxu0 0.0
        %8677 = vmatpush1.msra.mxu0 0.0
        %8678 = vmatprep.subr.mxu0 0.0
        %8679 = vmatpush1.msra.mxu0 0.0
        %8680 = vmatprep.subr.mxu0 0.0
        %8681 = vmatpush1.msra.mxu0 0.0
        %8682 = vmatprep.subr.mxu0 0.0
        %8683 = vmatpush1.msra.mxu0 0.0
        %8684 = vmatprep.subr.mxu0 0.0
        %8685 = vmatpush1.msra.mxu0 0.0
        %8686 = vmatprep.subr.mxu0 0.0
        %8687 = vmatpush1.msra.mxu0 0.0
        %8688 = vmatprep.subr.mxu0 0.0
        %8689 = vmatpush1.msra.mxu0 0.0
        %8690 = vmatprep.subr.mxu0 0.0
        %8691 = vmatpush1.msra.mxu0 0.0
        %8692 = vmatprep.subr.mxu0 0.0
        %8693 = vmatpush1.msra.mxu0 0.0
        %8694 = vmatprep.subr.mxu0 0.0
        %8695 = vmatpush1.msra.mxu0 0.0
        %8696 = vmatprep.subr.mxu0 0.0
        %8697 = vmatpush1.msra.mxu0 0.0
        %8698 = vmatprep.subr.mxu0 0.0
        %8699 = vmatpush1.msra.mxu0 0.0
        %8700 = vmatprep.subr.mxu0 0.0
        %8701 = vmatpush1.msra.mxu0 0.0
        %8702 = vmatprep.subr.mxu0 0.0
        %8703 = vmatpush1.msra.mxu0 0.0
        %8704 = vmatprep.subr.mxu0 0.0
        %8705 = vmatpush1.msra.mxu0 0.0
        %8706 = vmatprep.subr.mxu0 0.0
        %8707 = vmatpush1.msra.mxu0 0.0
        %8708 = vmatprep.subr.mxu0 0.0
        %8709 = vmatpush1.msra.mxu0 0.0
        %8710 = vmatprep.subr.mxu0 0.0
        %8711 = vmatpush1.msra.mxu0 0.0
        %8712 = vmatprep.subr.mxu0 0.0
        %8713 = vmatpush1.msra.mxu0 0.0
        %8714 = vmatprep.subr.mxu0 0.0
        %8715 = vmatpush1.msra.mxu0 0.0
        %8716 = vmatprep.subr.mxu0 0.0
        %8717 = vmatpush1.msra.mxu0 0.0
        %8718 = vmatprep.subr.mxu0 0.0
        %8719 = vmatpush1.msra.mxu0 0.0
        %8720 = vmatprep.subr.mxu0 0.0
        %8721 = vmatpush1.msra.mxu0 0.0
        %8722 = vmatprep.subr.mxu0 0.0
        %8723 = vmatpush1.msra.mxu0 0.0
        %8724 = vmatprep.subr.mxu0 0.0
        %8725 = vmatpush1.msra.mxu0 0.0
        %8726 = vmatprep.subr.mxu0 0.0
        %8727 = vmatpush1.msra.mxu0 0.0
        %8728 = vmatprep.subr.mxu0 0.0
        %8729 = vmatpush1.msra.mxu0 0.0
        %8730 = vmatprep.subr.mxu0 0.0
        %8731 = vmatpush1.msra.mxu0 0.0
        %8732 = vmatprep.subr.mxu0 0.0
        %8733 = vmatpush1.msra.mxu0 0.0
        %8734 = vmatprep.subr.mxu0 0.0
        %8735 = vmatpush1.msra.mxu0 0.0
        %8736 = vmatprep.mubr.f32.mxu0 0.0
        %8737 = vmatmul.mubr.f32.gmra.mrb[0].mxu0 %v8577
        %v8738 = vpop.f32.mrb[0].mxu0
        %v8739 = vadd.f32 0.0, %v8738
        %v8740 = vpop.f32.mrb[0].mxu0
        %8741 = vmatprep.mubr.f32.mxu0 0.0
        %8742 = vmatmul.mubr.f32.gmra.mrb[0].mxu0 %v8580
        %v8743 = vpop.f32.mrb[0].mxu0
        %v8744 = vadd.f32 0.0, %v8743
        %v8745 = vpop.f32.mrb[0].mxu0
        %8746 = vmatprep.mubr.f32.mxu0 0.0
        %8747 = vmatmul.mubr.f32.gmra.mrb[0].mxu0 %v8583
        %v8748 = vpop.f32.mrb[0].mxu0
        %v8749 = vadd.f32 0.0, %v8748
        %v8750 = vpop.f32.mrb[0].mxu0
        %8751 = vmatprep.mubr.f32.mxu0 0.0
        %8752 = vmatmul.mubr.f32.gmra.mrb[0].mxu0 %v8586
        %v8753 = vpop.f32.mrb[0].mxu0
        %v8754 = vadd.f32 0.0, %v8753
        %v8755 = vpop.f32.mrb[0].mxu0
        %8756 = vmatprep.mubr.f32.mxu0 0.0
        %8757 = vmatmul.mubr.f32.gmra.mrb[0].mxu0 %v8589
        %v8758 = vpop.f32.mrb[0].mxu0
        %v8759 = vadd.f32 0.0, %v8758
        %v8760 = vpop.f32.mrb[0].mxu0
        %8761 = vmatprep.mubr.f32.mxu0 0.0
        %8762 = vmatmul.mubr.f32.gmra.mrb[0].mxu0 %v8592
        %v8763 = vpop.f32.mrb[0].mxu0
        %v8764 = vadd.f32 0.0, %v8763
        %v8765 = vpop.f32.mrb[0].mxu0
        %8766 = vmatprep.mubr.f32.mxu0 0.0
        %8767 = vmatmul.mubr.f32.gmra.mrb[0].mxu0 %v8595
        %v8768 = vpop.f32.mrb[0].mxu0
        %v8769 = vadd.f32 0.0, %v8768
        %v8770 = vpop.f32.mrb[0].mxu0
        %8771 = vmatprep.mubr.f32.mxu0 0.0
        %8772 = vmatmul.mubr.f32.gmra.mrb[0].mxu0 %v8598
        %v8773 = vpop.f32.mrb[0].mxu0
        %v8774 = vadd.f32 0.0, %v8773
        %v8775 = vpop.f32.mrb[0].mxu0
        %8776 = vmatprep.mubr.f32.mxu0 0.0
        %8777 = vmatmul.mubr.f32.gmra.mrb[0].mxu0 %v8601
        %v8778 = vpop.f32.mrb[0].mxu0
        %v8779 = vadd.f32 0.0, %v8778
        %v8780 = vpop.f32.mrb[0].mxu0
        %8781 = vmatprep.mubr.f32.mxu0 0.0
        %8782 = vmatmul.mubr.f32.gmra.mrb[0].mxu0 %v8604
        %v8783 = vpop.f32.mrb[0].mxu0
        %v8784 = vadd.f32 0.0, %v8783
        %v8785 = vpop.f32.mrb[0].mxu0
        %8786 = vmatprep.mubr.f32.mxu0 0.0
        %8787 = vmatmul.mubr.f32.gmra.mrb[0].mxu0 %v8607
        %v8788 = vpop.f32.mrb[0].mxu0
        %v8789 = vadd.f32 0.0, %v8788
        %v8790 = vpop.f32.mrb[0].mxu0
        %8791 = vmatprep.mubr.f32.mxu0 0.0
        %8792 = vmatmul.mubr.f32.gmra.mrb[0].mxu0 %v8610
        %v8793 = vpop.f32.mrb[0].mxu0
        %v8794 = vadd.f32 0.0, %v8793
        %v8795 = vpop.f32.mrb[0].mxu0
        %8796 = vmatprep.mubr.f32.mxu0 0.0
        %8797 = vmatmul.mubr.f32.gmra.mrb[0].mxu0 %v8613
        %v8798 = vpop.f32.mrb[0].mxu0
        %v8799 = vadd.f32 0.0, %v8798
        %v8800 = vpop.f32.mrb[0].mxu0
        %8801 = vmatprep.mubr.f32.mxu0 0.0
        %8802 = vmatmul.mubr.f32.gmra.mrb[0].mxu0 %v8616
        %v8803 = vpop.f32.mrb[0].mxu0
        %v8804 = vadd.f32 0.0, %v8803
        %v8805 = vpop.f32.mrb[0].mxu0
        %8806 = vmatprep.mubr.f32.mxu0 0.0
        %8807 = vmatmul.mubr.f32.gmra.mrb[0].mxu0 %v8619
        %v8808 = vpop.f32.mrb[0].mxu0
        %v8809 = vadd.f32 0.0, %v8808
        %v8810 = vpop.f32.mrb[0].mxu0
        %8811 = vmatprep.mubr.f32.mxu0 0.0
        %8812 = vmatmul.mubr.f32.gmra.mrb[0].mxu0 %v8622
        %v8813 = vpop.f32.mrb[0].mxu0
        %v8814 = vadd.f32 0.0, %v8813
        %v8815 = vpop.f32.mrb[0].mxu0
        %8816 = vmatprep.mubr.f32.mxu0 0.0
        %8817 = vmatmul.mubr.f32.gmra.mrb[0].mxu0 %v8625
        %v8818 = vpop.f32.mrb[0].mxu0
        %v8819 = vadd.f32 0.0, %v8818
        %v8820 = vpop.f32.mrb[0].mxu0
        %8821 = vmatprep.mubr.f32.mxu0 0.0
        %8822 = vmatmul.mubr.f32.gmra.mrb[0].mxu0 %v8628
        %v8823 = vpop.f32.mrb[0].mxu0
        %v8824 = vadd.f32 0.0, %v8823
        %v8825 = vpop.f32.mrb[0].mxu0
        %8826 = vmatprep.mubr.f32.mxu0 0.0
        %8827 = vmatmul.mubr.f32.gmra.mrb[0].mxu0 %v8631
        %v8828 = vpop.f32.mrb[0].mxu0
        %v8829 = vadd.f32 0.0, %v8828
        %v8830 = vpop.f32.mrb[0].mxu0
        %8831 = vmatprep.mubr.f32.mxu0 0.0
        %8832 = vmatmul.mubr.f32.gmra.mrb[0].mxu0 %v8634
        %v8833 = vpop.f32.mrb[0].mxu0
        %v8834 = vadd.f32 0.0, %v8833
        %v8835 = vpop.f32.mrb[0].mxu0
        %8836 = vmatprep.mubr.f32.mxu0 0.0
        %8837 = vmatmul.mubr.f32.gmra.mrb[0].mxu0 %v8637
        %v8838 = vpop.f32.mrb[0].mxu0
        %v8839 = vadd.f32 0.0, %v8838
        %v8840 = vpop.f32.mrb[0].mxu0
        %8841 = vmatprep.mubr.f32.mxu0 0.0
        %8842 = vmatmul.mubr.f32.gmra.mrb[0].mxu0 %v8640
        %v8843 = vpop.f32.mrb[0].mxu0
        %v8844 = vadd.f32 0.0, %v8843
        %v8845 = vpop.f32.mrb[0].mxu0
        %8846 = vmatprep.mubr.f32.mxu0 0.0
        %8847 = vmatmul.mubr.f32.gmra.mrb[0].mxu0 %v8643
        %v8848 = vpop.f32.mrb[0].mxu0
        %v8849 = vadd.f32 0.0, %v8848
        %v8850 = vpop.f32.mrb[0].mxu0
        %8851 = vmatprep.mubr.f32.mxu0 0.0
        %8852 = vmatmul.mubr.f32.gmra.mrb[0].mxu0 %v8646
        %v8853 = vpop.f32.mrb[0].mxu0
        %v8854 = vadd.f32 0.0, %v8853
        %v8855 = vpop.f32.mrb[0].mxu0
        %8856 = vmatprep.mubr.f32.mxu0 0.0
        %8857 = vmatmul.mubr.f32.gmra.mrb[0].mxu0 %v8649
        %v8858 = vpop.f32.mrb[0].mxu0
        %v8859 = vadd.f32 0.0, %v8858
        %v8860 = vpop.f32.mrb[0].mxu0
        %8861 = vmatprep.mubr.f32.mxu0 0.0
        %8862 = vmatmul.mubr.f32.gmra.mrb[0].mxu0 %v8652
        %v8863 = vpop.f32.mrb[0].mxu0
        %v8864 = vadd.f32 0.0, %v8863
        %v8865 = vpop.f32.mrb[0].mxu0
        %8866 = vmatprep.mubr.f32.mxu0 0.0
        %8867 = vmatmul.mubr.f32.gmra.mrb[0].mxu0 %v8655
        %v8868 = vpop.f32.mrb[0].mxu0
        %v8869 = vadd.f32 0.0, %v8868
        %v8870 = vpop.f32.mrb[0].mxu0
        %8871 = vmatprep.mubr.f32.mxu0 0.0
        %8872 = vmatmul.mubr.f32.gmra.mrb[0].mxu0 %v8658
        %v8873 = vpop.f32.mrb[0].mxu0
        %v8874 = vadd.f32 0.0, %v8873
        %v8875 = vpop.f32.mrb[0].mxu0
        %8876 = vmatprep.mubr.f32.mxu0 0.0
        %8877 = vmatmul.mubr.f32.gmra.mrb[0].mxu0 %v8661
        %v8878 = vpop.f32.mrb[0].mxu0
        %v8879 = vadd.f32 0.0, %v8878
        %v8880 = vpop.f32.mrb[0].mxu0
        %8881 = vmatprep.mubr.f32.mxu0 0.0
        %8882 = vmatmul.mubr.f32.gmra.mrb[0].mxu0 %v8664
        %v8883 = vpop.f32.mrb[0].mxu0
        %v8884 = vadd.f32 0.0, %v8883
        %v8885 = vpop.f32.mrb[0].mxu0
        %8886 = vmatprep.mubr.f32.mxu0 0.0
        %8887 = vmatmul.mubr.f32.gmra.mrb[0].mxu0 %v8667
        %v8888 = vpop.f32.mrb[0].mxu0
        %v8889 = vadd.f32 0.0, %v8888
        %v8890 = vpop.f32.mrb[0].mxu0
        %8891 = vmatprep.mubr.f32.mxu0 0.0
        %8892 = vmatmul.mubr.f32.gmra.mrb[0].mxu0 %v8670
        %v8893 = vpop.f32.mrb[0].mxu0
        %v8894 = vadd.f32 0.0, %v8893
        %v8895 = vpop.f32.mrb[0].mxu0
        %8896 = vdwg.mxu0
        %v8897 = vadd.f32 %v6258, %v8739
        %v8898 = vadd.f32 %v6263, %v8744
        %v8899 = vadd.f32 %v6268, %v8749
        %v8900 = vadd.f32 %v6273, %v8754
        %v8901 = vadd.f32 %v6278, %v8759
        %v8902 = vadd.f32 %v6283, %v8764
        %v8903 = vadd.f32 %v6288, %v8769
        %v8904 = vadd.f32 %v6293, %v8774
        %v8905 = vadd.f32 %v6298, %v8779
        %v8906 = vadd.f32 %v6303, %v8784
        %v8907 = vadd.f32 %v6308, %v8789
        %v8908 = vadd.f32 %v6313, %v8794
        %v8909 = vadd.f32 %v6318, %v8799
        %v8910 = vadd.f32 %v6323, %v8804
        %v8911 = vadd.f32 %v6328, %v8809
        %v8912 = vadd.f32 %v6333, %v8814
        %v8913 = vadd.f32 %v6338, %v8819
        %v8914 = vadd.f32 %v6343, %v8824
        %v8915 = vadd.f32 %v6348, %v8829
        %v8916 = vadd.f32 %v6353, %v8834
        %v8917 = vadd.f32 %v6358, %v8839
        %v8918 = vadd.f32 %v6363, %v8844
        %v8919 = vadd.f32 %v6368, %v8849
        %v8920 = vadd.f32 %v6373, %v8854
        %v8921 = vadd.f32 %v6378, %v8859
        %v8922 = vadd.f32 %v6383, %v8864
        %v8923 = vadd.f32 %v6388, %v8869
        %v8924 = vadd.f32 %v6393, %v8874
        %v8925 = vadd.f32 %v6398, %v8879
        %v8926 = vadd.f32 %v6403, %v8884
        %v8927 = vadd.f32 %v6408, %v8889
        %v8928 = vadd.f32 %v6413, %v8894
        %8929 = vrot.lane.b32.xlu0 %v739, 104
        %v8930 = vpop.permute.xlu0 %8929
        %8931 = vrot.lane.b32.xlu0 %v744, 104
        %v8932 = vpop.permute.xlu0 %8931
        %8933 = vrot.lane.b32.xlu0 %v749, 104
        %v8934 = vpop.permute.xlu0 %8933
        %8935 = vrot.lane.b32.xlu0 %v754, 104
        %v8936 = vpop.permute.xlu0 %8935
        %8937 = vrot.lane.b32.xlu0 %v1071, 104
        %v8938 = vpop.permute.xlu0 %8937
        %8939 = vrot.lane.b32.xlu0 %v1076, 104
        %v8940 = vpop.permute.xlu0 %8939
        %8941 = vrot.lane.b32.xlu0 %v1081, 104
        %v8942 = vpop.permute.xlu0 %8941
        %8943 = vrot.lane.b32.xlu0 %v1086, 104
        %v8944 = vpop.permute.xlu0 %8943
        %v8945 = vsel %vm1581, %v8930, 0
        %v8947 = vsel %vm1581, %v8932, 0
        %v8949 = vsel %vm1581, %v8934, 0
        %v8951 = vsel %vm1581, %v8936, 0
        %v8953 = vsel %vm1581, %v8938, 0
        %v8955 = vsel %vm1581, %v8940, 0
        %v8957 = vsel %vm1581, %v8942, 0
        %v8959 = vsel %vm1581, %v8944, 0
        %8961 = vmatprep.subr.mxu0 0.0
        %8962 = vmatpush1.xpose.msra.mxu0 %v8953
        %8963 = vmatprep.subr.mxu0 0.0
        %8964 = vmatpush1.xpose.msra.mxu0 %v8955
        %8965 = vmatprep.subr.mxu0 0.0
        %8966 = vmatpush1.xpose.msra.mxu0 %v8957
        %8967 = vmatprep.subr.mxu0 0.0
        %8968 = vmatpush1.xpose.msra.mxu0 %v8959
        %8969 = vmatprep.subr.mxu0 0.0
        %8970 = vmatpush1.xpose.msra.mxu0 0.0
        %8971 = vmatprep.subr.mxu0 0.0
        %8972 = vmatpush1.xpose.msra.mxu0 0.0
        %8973 = vmatprep.subr.mxu0 0.0
        %8974 = vmatpush1.xpose.msra.mxu0 0.0
        %8975 = vmatprep.subr.mxu0 0.0
        %8976 = vmatpush1.xpose.msra.mxu0 0.0
        %8977 = vmatprep.subr.mxu0 0.0
        %8978 = vmatpush1.xpose.msra.mxu0 0.0
        %8979 = vmatprep.subr.mxu0 0.0
        %8980 = vmatpush1.xpose.msra.mxu0 0.0
        %8981 = vmatprep.subr.mxu0 0.0
        %8982 = vmatpush1.xpose.msra.mxu0 0.0
        %8983 = vmatprep.subr.mxu0 0.0
        %8984 = vmatpush1.xpose.msra.mxu0 0.0
        %8985 = vmatprep.subr.mxu0 0.0
        %8986 = vmatpush1.xpose.msra.mxu0 0.0
        %8987 = vmatprep.subr.mxu0 0.0
        %8988 = vmatpush1.xpose.msra.mxu0 0.0
        %8989 = vmatprep.subr.mxu0 0.0
        %8990 = vmatpush1.xpose.msra.mxu0 0.0
        %8991 = vmatprep.subr.mxu0 0.0
        %8992 = vmatpush1.xpose.msra.mxu0 0.0
        %8993 = vmatprep.subr.mxu0 0.0
        %8994 = vmatpush1.xpose.msra.mxu0 0.0
        %8995 = vmatprep.subr.mxu0 0.0
        %8996 = vmatpush1.xpose.msra.mxu0 0.0
        %8997 = vmatprep.subr.mxu0 0.0
        %8998 = vmatpush1.xpose.msra.mxu0 0.0
        %8999 = vmatprep.subr.mxu0 0.0
        %9000 = vmatpush1.xpose.msra.mxu0 0.0
        %9001 = vmatprep.subr.mxu0 0.0
        %9002 = vmatpush1.xpose.msra.mxu0 0.0
        %9003 = vmatprep.subr.mxu0 0.0
        %9004 = vmatpush1.xpose.msra.mxu0 0.0
        %9005 = vmatprep.subr.mxu0 0.0
        %9006 = vmatpush1.xpose.msra.mxu0 0.0
        %9007 = vmatprep.subr.mxu0 0.0
        %9008 = vmatpush1.xpose.msra.mxu0 0.0
        %9009 = vmatprep.subr.mxu0 0.0
        %9010 = vmatpush1.xpose.msra.mxu0 0.0
        %9011 = vmatprep.subr.mxu0 0.0
        %9012 = vmatpush1.xpose.msra.mxu0 0.0
        %9013 = vmatprep.subr.mxu0 0.0
        %9014 = vmatpush1.xpose.msra.mxu0 0.0
        %9015 = vmatprep.subr.mxu0 0.0
        %9016 = vmatpush1.xpose.msra.mxu0 0.0
        %9017 = vmatprep.subr.mxu0 0.0
        %9018 = vmatpush1.xpose.msra.mxu0 0.0
        %9019 = vmatprep.subr.mxu0 0.0
        %9020 = vmatpush1.xpose.msra.mxu0 0.0
        %9021 = vmatprep.subr.mxu0 0.0
        %9022 = vmatpush1.xpose.msra.mxu0 0.0
        %9023 = vmatprep.subr.mxu0 0.0
        %9024 = vmatpush1.xpose.msra.mxu0 0.0
        %9025 = vmatprep.mubr.f32.mxu0 0.0
        %9026 = vmatmul.mubr.f32.gmra.mrb[0].mxu0 %v8945
        %v9027 = vpop.f32.mrb[0].mxu0
        %v9028 = vadd.f32 %v1573, %v9027
        %v9029 = vpop.f32.mrb[0].mxu0
        %9030 = vmatprep.mubr.f32.mxu0 0.0
        %9031 = vmatmul.mubr.f32.gmra.mrb[0].mxu0 %v8947
        %v9032 = vpop.f32.mrb[0].mxu0
        %v9033 = vadd.f32 %v1574, %v9032
        %v9034 = vpop.f32.mrb[0].mxu0
        %9035 = vmatprep.mubr.f32.mxu0 0.0
        %9036 = vmatmul.mubr.f32.gmra.mrb[0].mxu0 %v8949
        %v9037 = vpop.f32.mrb[0].mxu0
        %v9038 = vadd.f32 %v1575, %v9037
        %v9039 = vpop.f32.mrb[0].mxu0
        %9040 = vmatprep.mubr.f32.mxu0 0.0
        %9041 = vmatmul.mubr.f32.gmra.mrb[0].mxu0 %v8951
        %v9042 = vpop.f32.mrb[0].mxu0
        %v9043 = vadd.f32 %v1576, %v9042
        %v9044 = vpop.f32.mrb[0].mxu0
        %9045 = vdwg.mxu0
        %9046 = vrot.lane.b32.xlu0 %v759, 104
        %v9047 = vpop.permute.xlu0 %9046
        %9048 = vrot.lane.b32.xlu0 %v764, 104
        %v9049 = vpop.permute.xlu0 %9048
        %9050 = vrot.lane.b32.xlu0 %v769, 104
        %v9051 = vpop.permute.xlu0 %9050
        %9052 = vrot.lane.b32.xlu0 %v774, 104
        %v9053 = vpop.permute.xlu0 %9052
        %9054 = vrot.lane.b32.xlu0 %v1091, 104
        %v9055 = vpop.permute.xlu0 %9054
        %9056 = vrot.lane.b32.xlu0 %v1096, 104
        %v9057 = vpop.permute.xlu0 %9056
        %9058 = vrot.lane.b32.xlu0 %v1101, 104
        %v9059 = vpop.permute.xlu0 %9058
        %9060 = vrot.lane.b32.xlu0 %v1106, 104
        %v9061 = vpop.permute.xlu0 %9060
        %v9062 = vsel %vm1581, %v9047, 0
        %v9064 = vsel %vm1581, %v9049, 0
        %v9066 = vsel %vm1581, %v9051, 0
        %v9068 = vsel %vm1581, %v9053, 0
        %v9070 = vsel %vm1581, %v9055, 0
        %v9072 = vsel %vm1581, %v9057, 0
        %v9074 = vsel %vm1581, %v9059, 0
        %v9076 = vsel %vm1581, %v9061, 0
        %9078 = vmatprep.subr.mxu0 0.0
        %9079 = vmatpush1.xpose.msra.mxu0 %v9070
        %9080 = vmatprep.subr.mxu0 0.0
        %9081 = vmatpush1.xpose.msra.mxu0 %v9072
        %9082 = vmatprep.subr.mxu0 0.0
        %9083 = vmatpush1.xpose.msra.mxu0 %v9074
        %9084 = vmatprep.subr.mxu0 0.0
        %9085 = vmatpush1.xpose.msra.mxu0 %v9076
        %9086 = vmatprep.subr.mxu0 0.0
        %9087 = vmatpush1.xpose.msra.mxu0 0.0
        %9088 = vmatprep.subr.mxu0 0.0
        %9089 = vmatpush1.xpose.msra.mxu0 0.0
        %9090 = vmatprep.subr.mxu0 0.0
        %9091 = vmatpush1.xpose.msra.mxu0 0.0
        %9092 = vmatprep.subr.mxu0 0.0
        %9093 = vmatpush1.xpose.msra.mxu0 0.0
        %9094 = vmatprep.subr.mxu0 0.0
        %9095 = vmatpush1.xpose.msra.mxu0 0.0
        %9096 = vmatprep.subr.mxu0 0.0
        %9097 = vmatpush1.xpose.msra.mxu0 0.0
        %9098 = vmatprep.subr.mxu0 0.0
        %9099 = vmatpush1.xpose.msra.mxu0 0.0
        %9100 = vmatprep.subr.mxu0 0.0
        %9101 = vmatpush1.xpose.msra.mxu0 0.0
        %9102 = vmatprep.subr.mxu0 0.0
        %9103 = vmatpush1.xpose.msra.mxu0 0.0
        %9104 = vmatprep.subr.mxu0 0.0
        %9105 = vmatpush1.xpose.msra.mxu0 0.0
        %9106 = vmatprep.subr.mxu0 0.0
        %9107 = vmatpush1.xpose.msra.mxu0 0.0
        %9108 = vmatprep.subr.mxu0 0.0
        %9109 = vmatpush1.xpose.msra.mxu0 0.0
        %9110 = vmatprep.subr.mxu0 0.0
        %9111 = vmatpush1.xpose.msra.mxu0 0.0
        %9112 = vmatprep.subr.mxu0 0.0
        %9113 = vmatpush1.xpose.msra.mxu0 0.0
        %9114 = vmatprep.subr.mxu0 0.0
        %9115 = vmatpush1.xpose.msra.mxu0 0.0
        %9116 = vmatprep.subr.mxu0 0.0
        %9117 = vmatpush1.xpose.msra.mxu0 0.0
        %9118 = vmatprep.subr.mxu0 0.0
        %9119 = vmatpush1.xpose.msra.mxu0 0.0
        %9120 = vmatprep.subr.mxu0 0.0
        %9121 = vmatpush1.xpose.msra.mxu0 0.0
        %9122 = vmatprep.subr.mxu0 0.0
        %9123 = vmatpush1.xpose.msra.mxu0 0.0
        %9124 = vmatprep.subr.mxu0 0.0
        %9125 = vmatpush1.xpose.msra.mxu0 0.0
        %9126 = vmatprep.subr.mxu0 0.0
        %9127 = vmatpush1.xpose.msra.mxu0 0.0
        %9128 = vmatprep.subr.mxu0 0.0
        %9129 = vmatpush1.xpose.msra.mxu0 0.0
        %9130 = vmatprep.subr.mxu0 0.0
        %9131 = vmatpush1.xpose.msra.mxu0 0.0
        %9132 = vmatprep.subr.mxu0 0.0
        %9133 = vmatpush1.xpose.msra.mxu0 0.0
        %9134 = vmatprep.subr.mxu0 0.0
        %9135 = vmatpush1.xpose.msra.mxu0 0.0
        %9136 = vmatprep.subr.mxu0 0.0
        %9137 = vmatpush1.xpose.msra.mxu0 0.0
        %9138 = vmatprep.subr.mxu0 0.0
        %9139 = vmatpush1.xpose.msra.mxu0 0.0
        %9140 = vmatprep.subr.mxu0 0.0
        %9141 = vmatpush1.xpose.msra.mxu0 0.0
        %9142 = vmatprep.mubr.f32.mxu0 0.0
        %9143 = vmatmul.mubr.f32.gmra.mrb[0].mxu0 %v9062
        %v9144 = vpop.f32.mrb[0].mxu0
        %v9145 = vadd.f32 %v1573, %v9144
        %v9146 = vpop.f32.mrb[0].mxu0
        %9147 = vmatprep.mubr.f32.mxu0 0.0
        %9148 = vmatmul.mubr.f32.gmra.mrb[0].mxu0 %v9064
        %v9149 = vpop.f32.mrb[0].mxu0
        %v9150 = vadd.f32 %v1574, %v9149
        %v9151 = vpop.f32.mrb[0].mxu0
        %9152 = vmatprep.mubr.f32.mxu0 0.0
        %9153 = vmatmul.mubr.f32.gmra.mrb[0].mxu0 %v9066
        %v9154 = vpop.f32.mrb[0].mxu0
        %v9155 = vadd.f32 %v1575, %v9154
        %v9156 = vpop.f32.mrb[0].mxu0
        %9157 = vmatprep.mubr.f32.mxu0 0.0
        %9158 = vmatmul.mubr.f32.gmra.mrb[0].mxu0 %v9068
        %v9159 = vpop.f32.mrb[0].mxu0
        %v9160 = vadd.f32 %v1576, %v9159
        %v9161 = vpop.f32.mrb[0].mxu0
        %9162 = vdwg.mxu0
        %9163 = vrot.lane.b32.xlu0 %v779, 104
        %v9164 = vpop.permute.xlu0 %9163
        %9165 = vrot.lane.b32.xlu0 %v784, 104
        %v9166 = vpop.permute.xlu0 %9165
        %9167 = vrot.lane.b32.xlu0 %v789, 104
        %v9168 = vpop.permute.xlu0 %9167
        %9169 = vrot.lane.b32.xlu0 %v794, 104
        %v9170 = vpop.permute.xlu0 %9169
        %9171 = vrot.lane.b32.xlu0 %v1111, 104
        %v9172 = vpop.permute.xlu0 %9171
        %9173 = vrot.lane.b32.xlu0 %v1116, 104
        %v9174 = vpop.permute.xlu0 %9173
        %9175 = vrot.lane.b32.xlu0 %v1121, 104
        %v9176 = vpop.permute.xlu0 %9175
        %9177 = vrot.lane.b32.xlu0 %v1126, 104
        %v9178 = vpop.permute.xlu0 %9177
        %v9179 = vsel %vm1581, %v9164, 0
        %v9181 = vsel %vm1581, %v9166, 0
        %v9183 = vsel %vm1581, %v9168, 0
        %v9185 = vsel %vm1581, %v9170, 0
        %v9187 = vsel %vm1581, %v9172, 0
        %v9189 = vsel %vm1581, %v9174, 0
        %v9191 = vsel %vm1581, %v9176, 0
        %v9193 = vsel %vm1581, %v9178, 0
        %9195 = vmatprep.subr.mxu0 0.0
        %9196 = vmatpush1.xpose.msra.mxu0 %v9187
        %9197 = vmatprep.subr.mxu0 0.0
        %9198 = vmatpush1.xpose.msra.mxu0 %v9189
        %9199 = vmatprep.subr.mxu0 0.0
        %9200 = vmatpush1.xpose.msra.mxu0 %v9191
        %9201 = vmatprep.subr.mxu0 0.0
        %9202 = vmatpush1.xpose.msra.mxu0 %v9193
        %9203 = vmatprep.subr.mxu0 0.0
        %9204 = vmatpush1.xpose.msra.mxu0 0.0
        %9205 = vmatprep.subr.mxu0 0.0
        %9206 = vmatpush1.xpose.msra.mxu0 0.0
        %9207 = vmatprep.subr.mxu0 0.0
        %9208 = vmatpush1.xpose.msra.mxu0 0.0
        %9209 = vmatprep.subr.mxu0 0.0
        %9210 = vmatpush1.xpose.msra.mxu0 0.0
        %9211 = vmatprep.subr.mxu0 0.0
        %9212 = vmatpush1.xpose.msra.mxu0 0.0
        %9213 = vmatprep.subr.mxu0 0.0
        %9214 = vmatpush1.xpose.msra.mxu0 0.0
        %9215 = vmatprep.subr.mxu0 0.0
        %9216 = vmatpush1.xpose.msra.mxu0 0.0
        %9217 = vmatprep.subr.mxu0 0.0
        %9218 = vmatpush1.xpose.msra.mxu0 0.0
        %9219 = vmatprep.subr.mxu0 0.0
        %9220 = vmatpush1.xpose.msra.mxu0 0.0
        %9221 = vmatprep.subr.mxu0 0.0
        %9222 = vmatpush1.xpose.msra.mxu0 0.0
        %9223 = vmatprep.subr.mxu0 0.0
        %9224 = vmatpush1.xpose.msra.mxu0 0.0
        %9225 = vmatprep.subr.mxu0 0.0
        %9226 = vmatpush1.xpose.msra.mxu0 0.0
        %9227 = vmatprep.subr.mxu0 0.0
        %9228 = vmatpush1.xpose.msra.mxu0 0.0
        %9229 = vmatprep.subr.mxu0 0.0
        %9230 = vmatpush1.xpose.msra.mxu0 0.0
        %9231 = vmatprep.subr.mxu0 0.0
        %9232 = vmatpush1.xpose.msra.mxu0 0.0
        %9233 = vmatprep.subr.mxu0 0.0
        %9234 = vmatpush1.xpose.msra.mxu0 0.0
        %9235 = vmatprep.subr.mxu0 0.0
        %9236 = vmatpush1.xpose.msra.mxu0 0.0
        %9237 = vmatprep.subr.mxu0 0.0
        %9238 = vmatpush1.xpose.msra.mxu0 0.0
        %9239 = vmatprep.subr.mxu0 0.0
        %9240 = vmatpush1.xpose.msra.mxu0 0.0
        %9241 = vmatprep.subr.mxu0 0.0
        %9242 = vmatpush1.xpose.msra.mxu0 0.0
        %9243 = vmatprep.subr.mxu0 0.0
        %9244 = vmatpush1.xpose.msra.mxu0 0.0
        %9245 = vmatprep.subr.mxu0 0.0
        %9246 = vmatpush1.xpose.msra.mxu0 0.0
        %9247 = vmatprep.subr.mxu0 0.0
        %9248 = vmatpush1.xpose.msra.mxu0 0.0
        %9249 = vmatprep.subr.mxu0 0.0
        %9250 = vmatpush1.xpose.msra.mxu0 0.0
        %9251 = vmatprep.subr.mxu0 0.0
        %9252 = vmatpush1.xpose.msra.mxu0 0.0
        %9253 = vmatprep.subr.mxu0 0.0
        %9254 = vmatpush1.xpose.msra.mxu0 0.0
        %9255 = vmatprep.subr.mxu0 0.0
        %9256 = vmatpush1.xpose.msra.mxu0 0.0
        %9257 = vmatprep.subr.mxu0 0.0
        %9258 = vmatpush1.xpose.msra.mxu0 0.0
        %9259 = vmatprep.mubr.f32.mxu0 0.0
        %9260 = vmatmul.mubr.f32.gmra.mrb[0].mxu0 %v9179
        %v9261 = vpop.f32.mrb[0].mxu0
        %v9262 = vadd.f32 %v1573, %v9261
        %v9263 = vpop.f32.mrb[0].mxu0
        %9264 = vmatprep.mubr.f32.mxu0 0.0
        %9265 = vmatmul.mubr.f32.gmra.mrb[0].mxu0 %v9181
        %v9266 = vpop.f32.mrb[0].mxu0
        %v9267 = vadd.f32 %v1574, %v9266
        %v9268 = vpop.f32.mrb[0].mxu0
        %9269 = vmatprep.mubr.f32.mxu0 0.0
        %9270 = vmatmul.mubr.f32.gmra.mrb[0].mxu0 %v9183
        %v9271 = vpop.f32.mrb[0].mxu0
        %v9272 = vadd.f32 %v1575, %v9271
        %v9273 = vpop.f32.mrb[0].mxu0
        %9274 = vmatprep.mubr.f32.mxu0 0.0
        %9275 = vmatmul.mubr.f32.gmra.mrb[0].mxu0 %v9185
        %v9276 = vpop.f32.mrb[0].mxu0
        %v9277 = vadd.f32 %v1576, %v9276
        %v9278 = vpop.f32.mrb[0].mxu0
        %9279 = vdwg.mxu0
        %9280 = vrot.lane.b32.xlu0 %v799, 104
        %v9281 = vpop.permute.xlu0 %9280
        %9282 = vrot.lane.b32.xlu0 %v804, 104
        %v9283 = vpop.permute.xlu0 %9282
        %9284 = vrot.lane.b32.xlu0 %v809, 104
        %v9285 = vpop.permute.xlu0 %9284
        %9286 = vrot.lane.b32.xlu0 %v814, 104
        %v9287 = vpop.permute.xlu0 %9286
        %9288 = vrot.lane.b32.xlu0 %v1131, 104
        %v9289 = vpop.permute.xlu0 %9288
        %9290 = vrot.lane.b32.xlu0 %v1136, 104
        %v9291 = vpop.permute.xlu0 %9290
        %9292 = vrot.lane.b32.xlu0 %v1141, 104
        %v9293 = vpop.permute.xlu0 %9292
        %9294 = vrot.lane.b32.xlu0 %v1146, 104
        %v9295 = vpop.permute.xlu0 %9294
        %v9296 = vsel %vm1581, %v9281, 0
        %v9298 = vsel %vm1581, %v9283, 0
        %v9300 = vsel %vm1581, %v9285, 0
        %v9302 = vsel %vm1581, %v9287, 0
        %v9304 = vsel %vm1581, %v9289, 0
        %v9306 = vsel %vm1581, %v9291, 0
        %v9308 = vsel %vm1581, %v9293, 0
        %v9310 = vsel %vm1581, %v9295, 0
        %9312 = vmatprep.subr.mxu0 0.0
        %9313 = vmatpush1.xpose.msra.mxu0 %v9304
        %9314 = vmatprep.subr.mxu0 0.0
        %9315 = vmatpush1.xpose.msra.mxu0 %v9306
        %9316 = vmatprep.subr.mxu0 0.0
        %9317 = vmatpush1.xpose.msra.mxu0 %v9308
        %9318 = vmatprep.subr.mxu0 0.0
        %9319 = vmatpush1.xpose.msra.mxu0 %v9310
        %9320 = vmatprep.subr.mxu0 0.0
        %9321 = vmatpush1.xpose.msra.mxu0 0.0
        %9322 = vmatprep.subr.mxu0 0.0
        %9323 = vmatpush1.xpose.msra.mxu0 0.0
        %9324 = vmatprep.subr.mxu0 0.0
        %9325 = vmatpush1.xpose.msra.mxu0 0.0
        %9326 = vmatprep.subr.mxu0 0.0
        %9327 = vmatpush1.xpose.msra.mxu0 0.0
        %9328 = vmatprep.subr.mxu0 0.0
        %9329 = vmatpush1.xpose.msra.mxu0 0.0
        %9330 = vmatprep.subr.mxu0 0.0
        %9331 = vmatpush1.xpose.msra.mxu0 0.0
        %9332 = vmatprep.subr.mxu0 0.0
        %9333 = vmatpush1.xpose.msra.mxu0 0.0
        %9334 = vmatprep.subr.mxu0 0.0
        %9335 = vmatpush1.xpose.msra.mxu0 0.0
        %9336 = vmatprep.subr.mxu0 0.0
        %9337 = vmatpush1.xpose.msra.mxu0 0.0
        %9338 = vmatprep.subr.mxu0 0.0
        %9339 = vmatpush1.xpose.msra.mxu0 0.0
        %9340 = vmatprep.subr.mxu0 0.0
        %9341 = vmatpush1.xpose.msra.mxu0 0.0
        %9342 = vmatprep.subr.mxu0 0.0
        %9343 = vmatpush1.xpose.msra.mxu0 0.0
        %9344 = vmatprep.subr.mxu0 0.0
        %9345 = vmatpush1.xpose.msra.mxu0 0.0
        %9346 = vmatprep.subr.mxu0 0.0
        %9347 = vmatpush1.xpose.msra.mxu0 0.0
        %9348 = vmatprep.subr.mxu0 0.0
        %9349 = vmatpush1.xpose.msra.mxu0 0.0
        %9350 = vmatprep.subr.mxu0 0.0
        %9351 = vmatpush1.xpose.msra.mxu0 0.0
        %9352 = vmatprep.subr.mxu0 0.0
        %9353 = vmatpush1.xpose.msra.mxu0 0.0
        %9354 = vmatprep.subr.mxu0 0.0
        %9355 = vmatpush1.xpose.msra.mxu0 0.0
        %9356 = vmatprep.subr.mxu0 0.0
        %9357 = vmatpush1.xpose.msra.mxu0 0.0
        %9358 = vmatprep.subr.mxu0 0.0
        %9359 = vmatpush1.xpose.msra.mxu0 0.0
        %9360 = vmatprep.subr.mxu0 0.0
        %9361 = vmatpush1.xpose.msra.mxu0 0.0
        %9362 = vmatprep.subr.mxu0 0.0
        %9363 = vmatpush1.xpose.msra.mxu0 0.0
        %9364 = vmatprep.subr.mxu0 0.0
        %9365 = vmatpush1.xpose.msra.mxu0 0.0
        %9366 = vmatprep.subr.mxu0 0.0
        %9367 = vmatpush1.xpose.msra.mxu0 0.0
        %9368 = vmatprep.subr.mxu0 0.0
        %9369 = vmatpush1.xpose.msra.mxu0 0.0
        %9370 = vmatprep.subr.mxu0 0.0
        %9371 = vmatpush1.xpose.msra.mxu0 0.0
        %9372 = vmatprep.subr.mxu0 0.0
        %9373 = vmatpush1.xpose.msra.mxu0 0.0
        %9374 = vmatprep.subr.mxu0 0.0
        %9375 = vmatpush1.xpose.msra.mxu0 0.0
        %9376 = vmatprep.mubr.f32.mxu0 0.0
        %9377 = vmatmul.mubr.f32.gmra.mrb[0].mxu0 %v9296
        %v9378 = vpop.f32.mrb[0].mxu0
        %v9379 = vadd.f32 %v1573, %v9378
        %v9380 = vpop.f32.mrb[0].mxu0
        %9381 = vmatprep.mubr.f32.mxu0 0.0
        %9382 = vmatmul.mubr.f32.gmra.mrb[0].mxu0 %v9298
        %v9383 = vpop.f32.mrb[0].mxu0
        %v9384 = vadd.f32 %v1574, %v9383
        %v9385 = vpop.f32.mrb[0].mxu0
        %9386 = vmatprep.mubr.f32.mxu0 0.0
        %9387 = vmatmul.mubr.f32.gmra.mrb[0].mxu0 %v9300
        %v9388 = vpop.f32.mrb[0].mxu0
        %v9389 = vadd.f32 %v1575, %v9388
        %v9390 = vpop.f32.mrb[0].mxu0
        %9391 = vmatprep.mubr.f32.mxu0 0.0
        %9392 = vmatmul.mubr.f32.gmra.mrb[0].mxu0 %v9302
        %v9393 = vpop.f32.mrb[0].mxu0
        %v9394 = vadd.f32 %v1576, %v9393
        %v9395 = vpop.f32.mrb[0].mxu0
        %9396 = vdwg.mxu0
        %9397 = vrot.lane.b32.xlu0 %v819, 104
        %v9398 = vpop.permute.xlu0 %9397
        %9399 = vrot.lane.b32.xlu0 %v824, 104
        %v9400 = vpop.permute.xlu0 %9399
        %9401 = vrot.lane.b32.xlu0 %v829, 104
        %v9402 = vpop.permute.xlu0 %9401
        %9403 = vrot.lane.b32.xlu0 %v834, 104
        %v9404 = vpop.permute.xlu0 %9403
        %9405 = vrot.lane.b32.xlu0 %v1151, 104
        %v9406 = vpop.permute.xlu0 %9405
        %9407 = vrot.lane.b32.xlu0 %v1156, 104
        %v9408 = vpop.permute.xlu0 %9407
        %9409 = vrot.lane.b32.xlu0 %v1161, 104
        %v9410 = vpop.permute.xlu0 %9409
        %9411 = vrot.lane.b32.xlu0 %v1166, 104
        %v9412 = vpop.permute.xlu0 %9411
        %v9413 = vsel %vm1581, %v9398, 0
        %v9415 = vsel %vm1581, %v9400, 0
        %v9417 = vsel %vm1581, %v9402, 0
        %v9419 = vsel %vm1581, %v9404, 0
        %v9421 = vsel %vm1581, %v9406, 0
        %v9423 = vsel %vm1581, %v9408, 0
        %v9425 = vsel %vm1581, %v9410, 0
        %v9427 = vsel %vm1581, %v9412, 0
        %9429 = vmatprep.subr.mxu0 0.0
        %9430 = vmatpush1.xpose.msra.mxu0 %v9421
        %9431 = vmatprep.subr.mxu0 0.0
        %9432 = vmatpush1.xpose.msra.mxu0 %v9423
        %9433 = vmatprep.subr.mxu0 0.0
        %9434 = vmatpush1.xpose.msra.mxu0 %v9425
        %9435 = vmatprep.subr.mxu0 0.0
        %9436 = vmatpush1.xpose.msra.mxu0 %v9427
        %9437 = vmatprep.subr.mxu0 0.0
        %9438 = vmatpush1.xpose.msra.mxu0 0.0
        %9439 = vmatprep.subr.mxu0 0.0
        %9440 = vmatpush1.xpose.msra.mxu0 0.0
        %9441 = vmatprep.subr.mxu0 0.0
        %9442 = vmatpush1.xpose.msra.mxu0 0.0
        %9443 = vmatprep.subr.mxu0 0.0
        %9444 = vmatpush1.xpose.msra.mxu0 0.0
        %9445 = vmatprep.subr.mxu0 0.0
        %9446 = vmatpush1.xpose.msra.mxu0 0.0
        %9447 = vmatprep.subr.mxu0 0.0
        %9448 = vmatpush1.xpose.msra.mxu0 0.0
        %9449 = vmatprep.subr.mxu0 0.0
        %9450 = vmatpush1.xpose.msra.mxu0 0.0
        %9451 = vmatprep.subr.mxu0 0.0
        %9452 = vmatpush1.xpose.msra.mxu0 0.0
        %9453 = vmatprep.subr.mxu0 0.0
        %9454 = vmatpush1.xpose.msra.mxu0 0.0
        %9455 = vmatprep.subr.mxu0 0.0
        %9456 = vmatpush1.xpose.msra.mxu0 0.0
        %9457 = vmatprep.subr.mxu0 0.0
        %9458 = vmatpush1.xpose.msra.mxu0 0.0
        %9459 = vmatprep.subr.mxu0 0.0
        %9460 = vmatpush1.xpose.msra.mxu0 0.0
        %9461 = vmatprep.subr.mxu0 0.0
        %9462 = vmatpush1.xpose.msra.mxu0 0.0
        %9463 = vmatprep.subr.mxu0 0.0
        %9464 = vmatpush1.xpose.msra.mxu0 0.0
        %9465 = vmatprep.subr.mxu0 0.0
        %9466 = vmatpush1.xpose.msra.mxu0 0.0
        %9467 = vmatprep.subr.mxu0 0.0
        %9468 = vmatpush1.xpose.msra.mxu0 0.0
        %9469 = vmatprep.subr.mxu0 0.0
        %9470 = vmatpush1.xpose.msra.mxu0 0.0
        %9471 = vmatprep.subr.mxu0 0.0
        %9472 = vmatpush1.xpose.msra.mxu0 0.0
        %9473 = vmatprep.subr.mxu0 0.0
        %9474 = vmatpush1.xpose.msra.mxu0 0.0
        %9475 = vmatprep.subr.mxu0 0.0
        %9476 = vmatpush1.xpose.msra.mxu0 0.0
        %9477 = vmatprep.subr.mxu0 0.0
        %9478 = vmatpush1.xpose.msra.mxu0 0.0
        %9479 = vmatprep.subr.mxu0 0.0
        %9480 = vmatpush1.xpose.msra.mxu0 0.0
        %9481 = vmatprep.subr.mxu0 0.0
        %9482 = vmatpush1.xpose.msra.mxu0 0.0
        %9483 = vmatprep.subr.mxu0 0.0
        %9484 = vmatpush1.xpose.msra.mxu0 0.0
        %9485 = vmatprep.subr.mxu0 0.0
        %9486 = vmatpush1.xpose.msra.mxu0 0.0
        %9487 = vmatprep.subr.mxu0 0.0
        %9488 = vmatpush1.xpose.msra.mxu0 0.0
        %9489 = vmatprep.subr.mxu0 0.0
        %9490 = vmatpush1.xpose.msra.mxu0 0.0
        %9491 = vmatprep.subr.mxu0 0.0
        %9492 = vmatpush1.xpose.msra.mxu0 0.0
        %9493 = vmatprep.mubr.f32.mxu0 0.0
        %9494 = vmatmul.mubr.f32.gmra.mrb[0].mxu0 %v9413
        %v9495 = vpop.f32.mrb[0].mxu0
        %v9496 = vadd.f32 %v1573, %v9495
        %v9497 = vpop.f32.mrb[0].mxu0
        %9498 = vmatprep.mubr.f32.mxu0 0.0
        %9499 = vmatmul.mubr.f32.gmra.mrb[0].mxu0 %v9415
        %v9500 = vpop.f32.mrb[0].mxu0
        %v9501 = vadd.f32 %v1574, %v9500
        %v9502 = vpop.f32.mrb[0].mxu0
        %9503 = vmatprep.mubr.f32.mxu0 0.0
        %9504 = vmatmul.mubr.f32.gmra.mrb[0].mxu0 %v9417
        %v9505 = vpop.f32.mrb[0].mxu0
        %v9506 = vadd.f32 %v1575, %v9505
        %v9507 = vpop.f32.mrb[0].mxu0
        %9508 = vmatprep.mubr.f32.mxu0 0.0
        %9509 = vmatmul.mubr.f32.gmra.mrb[0].mxu0 %v9419
        %v9510 = vpop.f32.mrb[0].mxu0
        %v9511 = vadd.f32 %v1576, %v9510
        %v9512 = vpop.f32.mrb[0].mxu0
        %9513 = vdwg.mxu0
        %9514 = vrot.lane.b32.xlu0 %v839, 104
        %v9515 = vpop.permute.xlu0 %9514
        %9516 = vrot.lane.b32.xlu0 %v844, 104
        %v9517 = vpop.permute.xlu0 %9516
        %9518 = vrot.lane.b32.xlu0 %v849, 104
        %v9519 = vpop.permute.xlu0 %9518
        %9520 = vrot.lane.b32.xlu0 %v854, 104
        %v9521 = vpop.permute.xlu0 %9520
        %9522 = vrot.lane.b32.xlu0 %v1171, 104
        %v9523 = vpop.permute.xlu0 %9522
        %9524 = vrot.lane.b32.xlu0 %v1176, 104
        %v9525 = vpop.permute.xlu0 %9524
        %9526 = vrot.lane.b32.xlu0 %v1181, 104
        %v9527 = vpop.permute.xlu0 %9526
        %9528 = vrot.lane.b32.xlu0 %v1186, 104
        %v9529 = vpop.permute.xlu0 %9528
        %v9530 = vsel %vm1581, %v9515, 0
        %v9532 = vsel %vm1581, %v9517, 0
        %v9534 = vsel %vm1581, %v9519, 0
        %v9536 = vsel %vm1581, %v9521, 0
        %v9538 = vsel %vm1581, %v9523, 0
        %v9540 = vsel %vm1581, %v9525, 0
        %v9542 = vsel %vm1581, %v9527, 0
        %v9544 = vsel %vm1581, %v9529, 0
        %9546 = vmatprep.subr.mxu0 0.0
        %9547 = vmatpush1.xpose.msra.mxu0 %v9538
        %9548 = vmatprep.subr.mxu0 0.0
        %9549 = vmatpush1.xpose.msra.mxu0 %v9540
        %9550 = vmatprep.subr.mxu0 0.0
        %9551 = vmatpush1.xpose.msra.mxu0 %v9542
        %9552 = vmatprep.subr.mxu0 0.0
        %9553 = vmatpush1.xpose.msra.mxu0 %v9544
        %9554 = vmatprep.subr.mxu0 0.0
        %9555 = vmatpush1.xpose.msra.mxu0 0.0
        %9556 = vmatprep.subr.mxu0 0.0
        %9557 = vmatpush1.xpose.msra.mxu0 0.0
        %9558 = vmatprep.subr.mxu0 0.0
        %9559 = vmatpush1.xpose.msra.mxu0 0.0
        %9560 = vmatprep.subr.mxu0 0.0
        %9561 = vmatpush1.xpose.msra.mxu0 0.0
        %9562 = vmatprep.subr.mxu0 0.0
        %9563 = vmatpush1.xpose.msra.mxu0 0.0
        %9564 = vmatprep.subr.mxu0 0.0
        %9565 = vmatpush1.xpose.msra.mxu0 0.0
        %9566 = vmatprep.subr.mxu0 0.0
        %9567 = vmatpush1.xpose.msra.mxu0 0.0
        %9568 = vmatprep.subr.mxu0 0.0
        %9569 = vmatpush1.xpose.msra.mxu0 0.0
        %9570 = vmatprep.subr.mxu0 0.0
        %9571 = vmatpush1.xpose.msra.mxu0 0.0
        %9572 = vmatprep.subr.mxu0 0.0
        %9573 = vmatpush1.xpose.msra.mxu0 0.0
        %9574 = vmatprep.subr.mxu0 0.0
        %9575 = vmatpush1.xpose.msra.mxu0 0.0
        %9576 = vmatprep.subr.mxu0 0.0
        %9577 = vmatpush1.xpose.msra.mxu0 0.0
        %9578 = vmatprep.subr.mxu0 0.0
        %9579 = vmatpush1.xpose.msra.mxu0 0.0
        %9580 = vmatprep.subr.mxu0 0.0
        %9581 = vmatpush1.xpose.msra.mxu0 0.0
        %9582 = vmatprep.subr.mxu0 0.0
        %9583 = vmatpush1.xpose.msra.mxu0 0.0
        %9584 = vmatprep.subr.mxu0 0.0
        %9585 = vmatpush1.xpose.msra.mxu0 0.0
        %9586 = vmatprep.subr.mxu0 0.0
        %9587 = vmatpush1.xpose.msra.mxu0 0.0
        %9588 = vmatprep.subr.mxu0 0.0
        %9589 = vmatpush1.xpose.msra.mxu0 0.0
        %9590 = vmatprep.subr.mxu0 0.0
        %9591 = vmatpush1.xpose.msra.mxu0 0.0
        %9592 = vmatprep.subr.mxu0 0.0
        %9593 = vmatpush1.xpose.msra.mxu0 0.0
        %9594 = vmatprep.subr.mxu0 0.0
        %9595 = vmatpush1.xpose.msra.mxu0 0.0
        %9596 = vmatprep.subr.mxu0 0.0
        %9597 = vmatpush1.xpose.msra.mxu0 0.0
        %9598 = vmatprep.subr.mxu0 0.0
        %9599 = vmatpush1.xpose.msra.mxu0 0.0
        %9600 = vmatprep.subr.mxu0 0.0
        %9601 = vmatpush1.xpose.msra.mxu0 0.0
        %9602 = vmatprep.subr.mxu0 0.0
        %9603 = vmatpush1.xpose.msra.mxu0 0.0
        %9604 = vmatprep.subr.mxu0 0.0
        %9605 = vmatpush1.xpose.msra.mxu0 0.0
        %9606 = vmatprep.subr.mxu0 0.0
        %9607 = vmatpush1.xpose.msra.mxu0 0.0
        %9608 = vmatprep.subr.mxu0 0.0
        %9609 = vmatpush1.xpose.msra.mxu0 0.0
        %9610 = vmatprep.mubr.f32.mxu0 0.0
        %9611 = vmatmul.mubr.f32.gmra.mrb[0].mxu0 %v9530
        %v9612 = vpop.f32.mrb[0].mxu0
        %v9613 = vadd.f32 %v1573, %v9612
        %v9614 = vpop.f32.mrb[0].mxu0
        %9615 = vmatprep.mubr.f32.mxu0 0.0
        %9616 = vmatmul.mubr.f32.gmra.mrb[0].mxu0 %v9532
        %v9617 = vpop.f32.mrb[0].mxu0
        %v9618 = vadd.f32 %v1574, %v9617
        %v9619 = vpop.f32.mrb[0].mxu0
        %9620 = vmatprep.mubr.f32.mxu0 0.0
        %9621 = vmatmul.mubr.f32.gmra.mrb[0].mxu0 %v9534
        %v9622 = vpop.f32.mrb[0].mxu0
        %v9623 = vadd.f32 %v1575, %v9622
        %v9624 = vpop.f32.mrb[0].mxu0
        %9625 = vmatprep.mubr.f32.mxu0 0.0
        %9626 = vmatmul.mubr.f32.gmra.mrb[0].mxu0 %v9536
        %v9627 = vpop.f32.mrb[0].mxu0
        %v9628 = vadd.f32 %v1576, %v9627
        %v9629 = vpop.f32.mrb[0].mxu0
        %9630 = vdwg.mxu0
        %9631 = vrot.lane.b32.xlu0 %v859, 104
        %v9632 = vpop.permute.xlu0 %9631
        %9633 = vrot.lane.b32.xlu0 %v864, 104
        %v9634 = vpop.permute.xlu0 %9633
        %9635 = vrot.lane.b32.xlu0 %v869, 104
        %v9636 = vpop.permute.xlu0 %9635
        %9637 = vrot.lane.b32.xlu0 %v874, 104
        %v9638 = vpop.permute.xlu0 %9637
        %9639 = vrot.lane.b32.xlu0 %v1191, 104
        %v9640 = vpop.permute.xlu0 %9639
        %9641 = vrot.lane.b32.xlu0 %v1196, 104
        %v9642 = vpop.permute.xlu0 %9641
        %9643 = vrot.lane.b32.xlu0 %v1201, 104
        %v9644 = vpop.permute.xlu0 %9643
        %9645 = vrot.lane.b32.xlu0 %v1206, 104
        %v9646 = vpop.permute.xlu0 %9645
        %v9647 = vsel %vm1581, %v9632, 0
        %v9649 = vsel %vm1581, %v9634, 0
        %v9651 = vsel %vm1581, %v9636, 0
        %v9653 = vsel %vm1581, %v9638, 0
        %v9655 = vsel %vm1581, %v9640, 0
        %v9657 = vsel %vm1581, %v9642, 0
        %v9659 = vsel %vm1581, %v9644, 0
        %v9661 = vsel %vm1581, %v9646, 0
        %9663 = vmatprep.subr.mxu0 0.0
        %9664 = vmatpush1.xpose.msra.mxu0 %v9655
        %9665 = vmatprep.subr.mxu0 0.0
        %9666 = vmatpush1.xpose.msra.mxu0 %v9657
        %9667 = vmatprep.subr.mxu0 0.0
        %9668 = vmatpush1.xpose.msra.mxu0 %v9659
        %9669 = vmatprep.subr.mxu0 0.0
        %9670 = vmatpush1.xpose.msra.mxu0 %v9661
        %9671 = vmatprep.subr.mxu0 0.0
        %9672 = vmatpush1.xpose.msra.mxu0 0.0
        %9673 = vmatprep.subr.mxu0 0.0
        %9674 = vmatpush1.xpose.msra.mxu0 0.0
        %9675 = vmatprep.subr.mxu0 0.0
        %9676 = vmatpush1.xpose.msra.mxu0 0.0
        %9677 = vmatprep.subr.mxu0 0.0
        %9678 = vmatpush1.xpose.msra.mxu0 0.0
        %9679 = vmatprep.subr.mxu0 0.0
        %9680 = vmatpush1.xpose.msra.mxu0 0.0
        %9681 = vmatprep.subr.mxu0 0.0
        %9682 = vmatpush1.xpose.msra.mxu0 0.0
        %9683 = vmatprep.subr.mxu0 0.0
        %9684 = vmatpush1.xpose.msra.mxu0 0.0
        %9685 = vmatprep.subr.mxu0 0.0
        %9686 = vmatpush1.xpose.msra.mxu0 0.0
        %9687 = vmatprep.subr.mxu0 0.0
        %9688 = vmatpush1.xpose.msra.mxu0 0.0
        %9689 = vmatprep.subr.mxu0 0.0
        %9690 = vmatpush1.xpose.msra.mxu0 0.0
        %9691 = vmatprep.subr.mxu0 0.0
        %9692 = vmatpush1.xpose.msra.mxu0 0.0
        %9693 = vmatprep.subr.mxu0 0.0
        %9694 = vmatpush1.xpose.msra.mxu0 0.0
        %9695 = vmatprep.subr.mxu0 0.0
        %9696 = vmatpush1.xpose.msra.mxu0 0.0
        %9697 = vmatprep.subr.mxu0 0.0
        %9698 = vmatpush1.xpose.msra.mxu0 0.0
        %9699 = vmatprep.subr.mxu0 0.0
        %9700 = vmatpush1.xpose.msra.mxu0 0.0
        %9701 = vmatprep.subr.mxu0 0.0
        %9702 = vmatpush1.xpose.msra.mxu0 0.0
        %9703 = vmatprep.subr.mxu0 0.0
        %9704 = vmatpush1.xpose.msra.mxu0 0.0
        %9705 = vmatprep.subr.mxu0 0.0
        %9706 = vmatpush1.xpose.msra.mxu0 0.0
        %9707 = vmatprep.subr.mxu0 0.0
        %9708 = vmatpush1.xpose.msra.mxu0 0.0
        %9709 = vmatprep.subr.mxu0 0.0
        %9710 = vmatpush1.xpose.msra.mxu0 0.0
        %9711 = vmatprep.subr.mxu0 0.0
        %9712 = vmatpush1.xpose.msra.mxu0 0.0
        %9713 = vmatprep.subr.mxu0 0.0
        %9714 = vmatpush1.xpose.msra.mxu0 0.0
        %9715 = vmatprep.subr.mxu0 0.0
        %9716 = vmatpush1.xpose.msra.mxu0 0.0
        %9717 = vmatprep.subr.mxu0 0.0
        %9718 = vmatpush1.xpose.msra.mxu0 0.0
        %9719 = vmatprep.subr.mxu0 0.0
        %9720 = vmatpush1.xpose.msra.mxu0 0.0
        %9721 = vmatprep.subr.mxu0 0.0
        %9722 = vmatpush1.xpose.msra.mxu0 0.0
        %9723 = vmatprep.subr.mxu0 0.0
        %9724 = vmatpush1.xpose.msra.mxu0 0.0
        %9725 = vmatprep.subr.mxu0 0.0
        %9726 = vmatpush1.xpose.msra.mxu0 0.0
        %9727 = vmatprep.mubr.f32.mxu0 0.0
        %9728 = vmatmul.mubr.f32.gmra.mrb[0].mxu0 %v9647
        %v9729 = vpop.f32.mrb[0].mxu0
        %v9730 = vadd.f32 %v1573, %v9729
        %v9731 = vpop.f32.mrb[0].mxu0
        %9732 = vmatprep.mubr.f32.mxu0 0.0
        %9733 = vmatmul.mubr.f32.gmra.mrb[0].mxu0 %v9649
        %v9734 = vpop.f32.mrb[0].mxu0
        %v9735 = vadd.f32 %v1574, %v9734
        %v9736 = vpop.f32.mrb[0].mxu0
        %9737 = vmatprep.mubr.f32.mxu0 0.0
        %9738 = vmatmul.mubr.f32.gmra.mrb[0].mxu0 %v9651
        %v9739 = vpop.f32.mrb[0].mxu0
        %v9740 = vadd.f32 %v1575, %v9739
        %v9741 = vpop.f32.mrb[0].mxu0
        %9742 = vmatprep.mubr.f32.mxu0 0.0
        %9743 = vmatmul.mubr.f32.gmra.mrb[0].mxu0 %v9653
        %v9744 = vpop.f32.mrb[0].mxu0
        %v9745 = vadd.f32 %v1576, %v9744
        %v9746 = vpop.f32.mrb[0].mxu0
        %9747 = vdwg.mxu0
        %9748 = vrot.lane.b32.xlu0 %v879, 104
        %v9749 = vpop.permute.xlu0 %9748
        %9750 = vrot.lane.b32.xlu0 %v884, 104
        %v9751 = vpop.permute.xlu0 %9750
        %9752 = vrot.lane.b32.xlu0 %v889, 104
        %v9753 = vpop.permute.xlu0 %9752
        %9754 = vrot.lane.b32.xlu0 %v894, 104
        %v9755 = vpop.permute.xlu0 %9754
        %9756 = vrot.lane.b32.xlu0 %v1211, 104
        %v9757 = vpop.permute.xlu0 %9756
        %9758 = vrot.lane.b32.xlu0 %v1216, 104
        %v9759 = vpop.permute.xlu0 %9758
        %9760 = vrot.lane.b32.xlu0 %v1221, 104
        %v9761 = vpop.permute.xlu0 %9760
        %9762 = vrot.lane.b32.xlu0 %v1226, 104
        %v9763 = vpop.permute.xlu0 %9762
        %v9764 = vsel %vm1581, %v9749, 0
        %v9766 = vsel %vm1581, %v9751, 0
        %v9768 = vsel %vm1581, %v9753, 0
        %v9770 = vsel %vm1581, %v9755, 0
        %v9772 = vsel %vm1581, %v9757, 0
        %v9774 = vsel %vm1581, %v9759, 0
        %v9776 = vsel %vm1581, %v9761, 0
        %v9778 = vsel %vm1581, %v9763, 0
        %9780 = vmatprep.subr.mxu0 0.0
        %9781 = vmatpush1.xpose.msra.mxu0 %v9772
        %9782 = vmatprep.subr.mxu0 0.0
        %9783 = vmatpush1.xpose.msra.mxu0 %v9774
        %9784 = vmatprep.subr.mxu0 0.0
        %9785 = vmatpush1.xpose.msra.mxu0 %v9776
        %9786 = vmatprep.subr.mxu0 0.0
        %9787 = vmatpush1.xpose.msra.mxu0 %v9778
        %9788 = vmatprep.subr.mxu0 0.0
        %9789 = vmatpush1.xpose.msra.mxu0 0.0
        %9790 = vmatprep.subr.mxu0 0.0
        %9791 = vmatpush1.xpose.msra.mxu0 0.0
        %9792 = vmatprep.subr.mxu0 0.0
        %9793 = vmatpush1.xpose.msra.mxu0 0.0
        %9794 = vmatprep.subr.mxu0 0.0
        %9795 = vmatpush1.xpose.msra.mxu0 0.0
        %9796 = vmatprep.subr.mxu0 0.0
        %9797 = vmatpush1.xpose.msra.mxu0 0.0
        %9798 = vmatprep.subr.mxu0 0.0
        %9799 = vmatpush1.xpose.msra.mxu0 0.0
        %9800 = vmatprep.subr.mxu0 0.0
        %9801 = vmatpush1.xpose.msra.mxu0 0.0
        %9802 = vmatprep.subr.mxu0 0.0
        %9803 = vmatpush1.xpose.msra.mxu0 0.0
        %9804 = vmatprep.subr.mxu0 0.0
        %9805 = vmatpush1.xpose.msra.mxu0 0.0
        %9806 = vmatprep.subr.mxu0 0.0
        %9807 = vmatpush1.xpose.msra.mxu0 0.0
        %9808 = vmatprep.subr.mxu0 0.0
        %9809 = vmatpush1.xpose.msra.mxu0 0.0
        %9810 = vmatprep.subr.mxu0 0.0
        %9811 = vmatpush1.xpose.msra.mxu0 0.0
        %9812 = vmatprep.subr.mxu0 0.0
        %9813 = vmatpush1.xpose.msra.mxu0 0.0
        %9814 = vmatprep.subr.mxu0 0.0
        %9815 = vmatpush1.xpose.msra.mxu0 0.0
        %9816 = vmatprep.subr.mxu0 0.0
        %9817 = vmatpush1.xpose.msra.mxu0 0.0
        %9818 = vmatprep.subr.mxu0 0.0
        %9819 = vmatpush1.xpose.msra.mxu0 0.0
        %9820 = vmatprep.subr.mxu0 0.0
        %9821 = vmatpush1.xpose.msra.mxu0 0.0
        %9822 = vmatprep.subr.mxu0 0.0
        %9823 = vmatpush1.xpose.msra.mxu0 0.0
        %9824 = vmatprep.subr.mxu0 0.0
        %9825 = vmatpush1.xpose.msra.mxu0 0.0
        %9826 = vmatprep.subr.mxu0 0.0
        %9827 = vmatpush1.xpose.msra.mxu0 0.0
        %9828 = vmatprep.subr.mxu0 0.0
        %9829 = vmatpush1.xpose.msra.mxu0 0.0
        %9830 = vmatprep.subr.mxu0 0.0
        %9831 = vmatpush1.xpose.msra.mxu0 0.0
        %9832 = vmatprep.subr.mxu0 0.0
        %9833 = vmatpush1.xpose.msra.mxu0 0.0
        %9834 = vmatprep.subr.mxu0 0.0
        %9835 = vmatpush1.xpose.msra.mxu0 0.0
        %9836 = vmatprep.subr.mxu0 0.0
        %9837 = vmatpush1.xpose.msra.mxu0 0.0
        %9838 = vmatprep.subr.mxu0 0.0
        %9839 = vmatpush1.xpose.msra.mxu0 0.0
        %9840 = vmatprep.subr.mxu0 0.0
        %9841 = vmatpush1.xpose.msra.mxu0 0.0
        %9842 = vmatprep.subr.mxu0 0.0
        %9843 = vmatpush1.xpose.msra.mxu0 0.0
        %9844 = vmatprep.mubr.f32.mxu0 0.0
        %9845 = vmatmul.mubr.f32.gmra.mrb[0].mxu0 %v9764
        %v9846 = vpop.f32.mrb[0].mxu0
        %v9847 = vadd.f32 %v1573, %v9846
        %v9848 = vpop.f32.mrb[0].mxu0
        %9849 = vmatprep.mubr.f32.mxu0 0.0
        %9850 = vmatmul.mubr.f32.gmra.mrb[0].mxu0 %v9766
        %v9851 = vpop.f32.mrb[0].mxu0
        %v9852 = vadd.f32 %v1574, %v9851
        %v9853 = vpop.f32.mrb[0].mxu0
        %9854 = vmatprep.mubr.f32.mxu0 0.0
        %9855 = vmatmul.mubr.f32.gmra.mrb[0].mxu0 %v9768
        %v9856 = vpop.f32.mrb[0].mxu0
        %v9857 = vadd.f32 %v1575, %v9856
        %v9858 = vpop.f32.mrb[0].mxu0
        %9859 = vmatprep.mubr.f32.mxu0 0.0
        %9860 = vmatmul.mubr.f32.gmra.mrb[0].mxu0 %v9770
        %v9861 = vpop.f32.mrb[0].mxu0
        %v9862 = vadd.f32 %v1576, %v9861
        %v9863 = vpop.f32.mrb[0].mxu0
        %9864 = vdwg.mxu0
        %v9865 = vsel %vm575, %v9028, -inf
        %9866 = vmax.xlane.f32.xlu0 %v9865
        %v9867 = vpop.xlane.xlu0 %9866
        %v9868 = vsel %vm575, %v9033, -inf
        %9869 = vmax.xlane.f32.xlu0 %v9868
        %v9870 = vpop.xlane.xlu0 %9869
        %v9871 = vsel %vm575, %v9038, -inf
        %9872 = vmax.xlane.f32.xlu0 %v9871
        %v9873 = vpop.xlane.xlu0 %9872
        %v9874 = vsel %vm575, %v9043, -inf
        %9875 = vmax.xlane.f32.xlu0 %v9874
        %v9876 = vpop.xlane.xlu0 %9875
        %v9877 = vsel %vm575, %v9145, -inf
        %9878 = vmax.xlane.f32.xlu0 %v9877
        %v9879 = vpop.xlane.xlu0 %9878
        %v9880 = vsel %vm575, %v9150, -inf
        %9881 = vmax.xlane.f32.xlu0 %v9880
        %v9882 = vpop.xlane.xlu0 %9881
        %v9883 = vsel %vm575, %v9155, -inf
        %9884 = vmax.xlane.f32.xlu0 %v9883
        %v9885 = vpop.xlane.xlu0 %9884
        %v9886 = vsel %vm575, %v9160, -inf
        %9887 = vmax.xlane.f32.xlu0 %v9886
        %v9888 = vpop.xlane.xlu0 %9887
        %v9889 = vsel %vm575, %v9262, -inf
        %9890 = vmax.xlane.f32.xlu0 %v9889
        %v9891 = vpop.xlane.xlu0 %9890
        %v9892 = vsel %vm575, %v9267, -inf
        %9893 = vmax.xlane.f32.xlu0 %v9892
        %v9894 = vpop.xlane.xlu0 %9893
        %v9895 = vsel %vm575, %v9272, -inf
        %9896 = vmax.xlane.f32.xlu0 %v9895
        %v9897 = vpop.xlane.xlu0 %9896
        %v9898 = vsel %vm575, %v9277, -inf
        %9899 = vmax.xlane.f32.xlu0 %v9898
        %v9900 = vpop.xlane.xlu0 %9899
        %v9901 = vsel %vm575, %v9379, -inf
        %9902 = vmax.xlane.f32.xlu0 %v9901
        %v9903 = vpop.xlane.xlu0 %9902
        %v9904 = vsel %vm575, %v9384, -inf
        %9905 = vmax.xlane.f32.xlu0 %v9904
        %v9906 = vpop.xlane.xlu0 %9905
        %v9907 = vsel %vm575, %v9389, -inf
        %9908 = vmax.xlane.f32.xlu0 %v9907
        %v9909 = vpop.xlane.xlu0 %9908
        %v9910 = vsel %vm575, %v9394, -inf
        %9911 = vmax.xlane.f32.xlu0 %v9910
        %v9912 = vpop.xlane.xlu0 %9911
        %v9913 = vsel %vm575, %v9496, -inf
        %9914 = vmax.xlane.f32.xlu0 %v9913
        %v9915 = vpop.xlane.xlu0 %9914
        %v9916 = vsel %vm575, %v9501, -inf
        %9917 = vmax.xlane.f32.xlu0 %v9916
        %v9918 = vpop.xlane.xlu0 %9917
        %v9919 = vsel %vm575, %v9506, -inf
        %9920 = vmax.xlane.f32.xlu0 %v9919
        %v9921 = vpop.xlane.xlu0 %9920
        %v9922 = vsel %vm575, %v9511, -inf
        %9923 = vmax.xlane.f32.xlu0 %v9922
        %v9924 = vpop.xlane.xlu0 %9923
        %v9925 = vsel %vm575, %v9613, -inf
        %9926 = vmax.xlane.f32.xlu0 %v9925
        %v9927 = vpop.xlane.xlu0 %9926
        %v9928 = vsel %vm575, %v9618, -inf
        %9929 = vmax.xlane.f32.xlu0 %v9928
        %v9930 = vpop.xlane.xlu0 %9929
        %v9931 = vsel %vm575, %v9623, -inf
        %9932 = vmax.xlane.f32.xlu0 %v9931
        %v9933 = vpop.xlane.xlu0 %9932
        %v9934 = vsel %vm575, %v9628, -inf
        %9935 = vmax.xlane.f32.xlu0 %v9934
        %v9936 = vpop.xlane.xlu0 %9935
        %v9937 = vsel %vm575, %v9730, -inf
        %9938 = vmax.xlane.f32.xlu0 %v9937
        %v9939 = vpop.xlane.xlu0 %9938
        %v9940 = vsel %vm575, %v9735, -inf
        %9941 = vmax.xlane.f32.xlu0 %v9940
        %v9942 = vpop.xlane.xlu0 %9941
        %v9943 = vsel %vm575, %v9740, -inf
        %9944 = vmax.xlane.f32.xlu0 %v9943
        %v9945 = vpop.xlane.xlu0 %9944
        %v9946 = vsel %vm575, %v9745, -inf
        %9947 = vmax.xlane.f32.xlu0 %v9946
        %v9948 = vpop.xlane.xlu0 %9947
        %v9949 = vsel %vm575, %v9847, -inf
        %9950 = vmax.xlane.f32.xlu0 %v9949
        %v9951 = vpop.xlane.xlu0 %9950
        %v9952 = vsel %vm575, %v9852, -inf
        %9953 = vmax.xlane.f32.xlu0 %v9952
        %v9954 = vpop.xlane.xlu0 %9953
        %v9955 = vsel %vm575, %v9857, -inf
        %9956 = vmax.xlane.f32.xlu0 %v9955
        %v9957 = vpop.xlane.xlu0 %9956
        %v9958 = vsel %vm575, %v9862, -inf
        %9959 = vmax.xlane.f32.xlu0 %v9958
        %v9960 = vpop.xlane.xlu0 %9959
        %v9961 = vsub.f32 %v9028, %v9867
        %v9962 = vsub.f32 %v9033, %v9870
        %v9963 = vsub.f32 %v9038, %v9873
        %v9964 = vsub.f32 %v9043, %v9876
        %v9965 = vsub.f32 %v9145, %v9879
        %v9966 = vsub.f32 %v9150, %v9882
        %v9967 = vsub.f32 %v9155, %v9885
        %v9968 = vsub.f32 %v9160, %v9888
        %v9969 = vsub.f32 %v9262, %v9891
        %v9970 = vsub.f32 %v9267, %v9894
        %v9971 = vsub.f32 %v9272, %v9897
        %v9972 = vsub.f32 %v9277, %v9900
        %v9973 = vsub.f32 %v9379, %v9903
        %v9974 = vsub.f32 %v9384, %v9906
        %v9975 = vsub.f32 %v9389, %v9909
        %v9976 = vsub.f32 %v9394, %v9912
        %v9977 = vsub.f32 %v9496, %v9915
        %v9978 = vsub.f32 %v9501, %v9918
        %v9979 = vsub.f32 %v9506, %v9921
        %v9980 = vsub.f32 %v9511, %v9924
        %v9981 = vsub.f32 %v9613, %v9927
        %v9982 = vsub.f32 %v9618, %v9930
        %v9983 = vsub.f32 %v9623, %v9933
        %v9984 = vsub.f32 %v9628, %v9936
        %v9985 = vsub.f32 %v9730, %v9939
        %v9986 = vsub.f32 %v9735, %v9942
        %v9987 = vsub.f32 %v9740, %v9945
        %v9988 = vsub.f32 %v9745, %v9948
        %v9989 = vsub.f32 %v9847, %v9951
        %v9990 = vsub.f32 %v9852, %v9954
        %v9991 = vsub.f32 %v9857, %v9957
        %v9992 = vsub.f32 %v9862, %v9960
        %v9993 = vmul.f32 %v9961, 1.442695
        %v9994 = vpow.pop %v9993
        %v9995 = vmul.f32 %v9962, 1.442695
        %v9996 = vpow.pop %v9995
        %v9997 = vmul.f32 %v9963, 1.442695
        %v9998 = vpow.pop %v9997
        %v9999 = vmul.f32 %v9964, 1.442695
        %v10000 = vpow.pop %v9999
        %v10001 = vmul.f32 %v9965, 1.442695
        %v10002 = vpow.pop %v10001
        %v10003 = vmul.f32 %v9966, 1.442695
        %v10004 = vpow.pop %v10003
        %v10005 = vmul.f32 %v9967, 1.442695
        %v10006 = vpow.pop %v10005
        %v10007 = vmul.f32 %v9968, 1.442695
        %v10008 = vpow.pop %v10007
        %v10009 = vmul.f32 %v9969, 1.442695
        %v10010 = vpow.pop %v10009
        %v10011 = vmul.f32 %v9970, 1.442695
        %v10012 = vpow.pop %v10011
        %v10013 = vmul.f32 %v9971, 1.442695
        %v10014 = vpow.pop %v10013
        %v10015 = vmul.f32 %v9972, 1.442695
        %v10016 = vpow.pop %v10015
        %v10017 = vmul.f32 %v9973, 1.442695
        %v10018 = vpow.pop %v10017
        %v10019 = vmul.f32 %v9974, 1.442695
        %v10020 = vpow.pop %v10019
        %v10021 = vmul.f32 %v9975, 1.442695
        %v10022 = vpow.pop %v10021
        %v10023 = vmul.f32 %v9976, 1.442695
        %v10024 = vpow.pop %v10023
        %v10025 = vmul.f32 %v9977, 1.442695
        %v10026 = vpow.pop %v10025
        %v10027 = vmul.f32 %v9978, 1.442695
        %v10028 = vpow.pop %v10027
        %v10029 = vmul.f32 %v9979, 1.442695
        %v10030 = vpow.pop %v10029
        %v10031 = vmul.f32 %v9980, 1.442695
        %v10032 = vpow.pop %v10031
        %v10033 = vmul.f32 %v9981, 1.442695
        %v10034 = vpow.pop %v10033
        %v10035 = vmul.f32 %v9982, 1.442695
        %v10036 = vpow.pop %v10035
        %v10037 = vmul.f32 %v9983, 1.442695
        %v10038 = vpow.pop %v10037
        %v10039 = vmul.f32 %v9984, 1.442695
        %v10040 = vpow.pop %v10039
        %v10041 = vmul.f32 %v9985, 1.442695
        %v10042 = vpow.pop %v10041
        %v10043 = vmul.f32 %v9986, 1.442695
        %v10044 = vpow.pop %v10043
        %v10045 = vmul.f32 %v9987, 1.442695
        %v10046 = vpow.pop %v10045
        %v10047 = vmul.f32 %v9988, 1.442695
        %v10048 = vpow.pop %v10047
        %v10049 = vmul.f32 %v9989, 1.442695
        %v10050 = vpow.pop %v10049
        %v10051 = vmul.f32 %v9990, 1.442695
        %v10052 = vpow.pop %v10051
        %v10053 = vmul.f32 %v9991, 1.442695
        %v10054 = vpow.pop %v10053
        %v10055 = vmul.f32 %v9992, 1.442695
        %v10056 = vpow.pop %v10055
        %v10057 = vsel %vm575, %v9994, 0.0
        %10058 = vadd.xlane.f32.xlu0 %v10057
        %v10059 = vpop.xlane.xlu0 %10058
        %v10060 = vsel %vm575, %v9996, 0.0
        %10061 = vadd.xlane.f32.xlu0 %v10060
        %v10062 = vpop.xlane.xlu0 %10061
        %v10063 = vsel %vm575, %v9998, 0.0
        %10064 = vadd.xlane.f32.xlu0 %v10063
        %v10065 = vpop.xlane.xlu0 %10064
        %v10066 = vsel %vm575, %v10000, 0.0
        %10067 = vadd.xlane.f32.xlu0 %v10066
        %v10068 = vpop.xlane.xlu0 %10067
        %v10069 = vsel %vm575, %v10002, 0.0
        %10070 = vadd.xlane.f32.xlu0 %v10069
        %v10071 = vpop.xlane.xlu0 %10070
        %v10072 = vsel %vm575, %v10004, 0.0
        %10073 = vadd.xlane.f32.xlu0 %v10072
        %v10074 = vpop.xlane.xlu0 %10073
        %v10075 = vsel %vm575, %v10006, 0.0
        %10076 = vadd.xlane.f32.xlu0 %v10075
        %v10077 = vpop.xlane.xlu0 %10076
        %v10078 = vsel %vm575, %v10008, 0.0
        %10079 = vadd.xlane.f32.xlu0 %v10078
        %v10080 = vpop.xlane.xlu0 %10079
        %v10081 = vsel %vm575, %v10010, 0.0
        %10082 = vadd.xlane.f32.xlu0 %v10081
        %v10083 = vpop.xlane.xlu0 %10082
        %v10084 = vsel %vm575, %v10012, 0.0
        %10085 = vadd.xlane.f32.xlu0 %v10084
        %v10086 = vpop.xlane.xlu0 %10085
        %v10087 = vsel %vm575, %v10014, 0.0
        %10088 = vadd.xlane.f32.xlu0 %v10087
        %v10089 = vpop.xlane.xlu0 %10088
        %v10090 = vsel %vm575, %v10016, 0.0
        %10091 = vadd.xlane.f32.xlu0 %v10090
        %v10092 = vpop.xlane.xlu0 %10091
        %v10093 = vsel %vm575, %v10018, 0.0
        %10094 = vadd.xlane.f32.xlu0 %v10093
        %v10095 = vpop.xlane.xlu0 %10094
        %v10096 = vsel %vm575, %v10020, 0.0
        %10097 = vadd.xlane.f32.xlu0 %v10096
        %v10098 = vpop.xlane.xlu0 %10097
        %v10099 = vsel %vm575, %v10022, 0.0
        %10100 = vadd.xlane.f32.xlu0 %v10099
        %v10101 = vpop.xlane.xlu0 %10100
        %v10102 = vsel %vm575, %v10024, 0.0
        %10103 = vadd.xlane.f32.xlu0 %v10102
        %v10104 = vpop.xlane.xlu0 %10103
        %v10105 = vsel %vm575, %v10026, 0.0
        %10106 = vadd.xlane.f32.xlu0 %v10105
        %v10107 = vpop.xlane.xlu0 %10106
        %v10108 = vsel %vm575, %v10028, 0.0
        %10109 = vadd.xlane.f32.xlu0 %v10108
        %v10110 = vpop.xlane.xlu0 %10109
        %v10111 = vsel %vm575, %v10030, 0.0
        %10112 = vadd.xlane.f32.xlu0 %v10111
        %v10113 = vpop.xlane.xlu0 %10112
        %v10114 = vsel %vm575, %v10032, 0.0
        %10115 = vadd.xlane.f32.xlu0 %v10114
        %v10116 = vpop.xlane.xlu0 %10115
        %v10117 = vsel %vm575, %v10034, 0.0
        %10118 = vadd.xlane.f32.xlu0 %v10117
        %v10119 = vpop.xlane.xlu0 %10118
        %v10120 = vsel %vm575, %v10036, 0.0
        %10121 = vadd.xlane.f32.xlu0 %v10120
        %v10122 = vpop.xlane.xlu0 %10121
        %v10123 = vsel %vm575, %v10038, 0.0
        %10124 = vadd.xlane.f32.xlu0 %v10123
        %v10125 = vpop.xlane.xlu0 %10124
        %v10126 = vsel %vm575, %v10040, 0.0
        %10127 = vadd.xlane.f32.xlu0 %v10126
        %v10128 = vpop.xlane.xlu0 %10127
        %v10129 = vsel %vm575, %v10042, 0.0
        %10130 = vadd.xlane.f32.xlu0 %v10129
        %v10131 = vpop.xlane.xlu0 %10130
        %v10132 = vsel %vm575, %v10044, 0.0
        %10133 = vadd.xlane.f32.xlu0 %v10132
        %v10134 = vpop.xlane.xlu0 %10133
        %v10135 = vsel %vm575, %v10046, 0.0
        %10136 = vadd.xlane.f32.xlu0 %v10135
        %v10137 = vpop.xlane.xlu0 %10136
        %v10138 = vsel %vm575, %v10048, 0.0
        %10139 = vadd.xlane.f32.xlu0 %v10138
        %v10140 = vpop.xlane.xlu0 %10139
        %v10141 = vsel %vm575, %v10050, 0.0
        %10142 = vadd.xlane.f32.xlu0 %v10141
        %v10143 = vpop.xlane.xlu0 %10142
        %v10144 = vsel %vm575, %v10052, 0.0
        %10145 = vadd.xlane.f32.xlu0 %v10144
        %v10146 = vpop.xlane.xlu0 %10145
        %v10147 = vsel %vm575, %v10054, 0.0
        %10148 = vadd.xlane.f32.xlu0 %v10147
        %v10149 = vpop.xlane.xlu0 %10148
        %v10150 = vsel %vm575, %v10056, 0.0
        %10151 = vadd.xlane.f32.xlu0 %v10150
        %v10152 = vpop.xlane.xlu0 %10151
        %v10153 = vrcp.pop %v10059
        %v10154 = vrcp.pop %v10062
        %v10155 = vrcp.pop %v10065
        %v10156 = vrcp.pop %v10068
        %v10157 = vrcp.pop %v10071
        %v10158 = vrcp.pop %v10074
        %v10159 = vrcp.pop %v10077
        %v10160 = vrcp.pop %v10080
        %v10161 = vrcp.pop %v10083
        %v10162 = vrcp.pop %v10086
        %v10163 = vrcp.pop %v10089
        %v10164 = vrcp.pop %v10092
        %v10165 = vrcp.pop %v10095
        %v10166 = vrcp.pop %v10098
        %v10167 = vrcp.pop %v10101
        %v10168 = vrcp.pop %v10104
        %v10169 = vrcp.pop %v10107
        %v10170 = vrcp.pop %v10110
        %v10171 = vrcp.pop %v10113
        %v10172 = vrcp.pop %v10116
        %v10173 = vrcp.pop %v10119
        %v10174 = vrcp.pop %v10122
        %v10175 = vrcp.pop %v10125
        %v10176 = vrcp.pop %v10128
        %v10177 = vrcp.pop %v10131
        %v10178 = vrcp.pop %v10134
        %v10179 = vrcp.pop %v10137
        %v10180 = vrcp.pop %v10140
        %v10181 = vrcp.pop %v10143
        %v10182 = vrcp.pop %v10146
        %v10183 = vrcp.pop %v10149
        %v10184 = vrcp.pop %v10152
        %v10185 = vmul.f32 %v9994, %v10153
        %v10186 = vmul.f32 %v9996, %v10154
        %v10187 = vmul.f32 %v9998, %v10155
        %v10188 = vmul.f32 %v10000, %v10156
        %v10189 = vmul.f32 %v10002, %v10157
        %v10190 = vmul.f32 %v10004, %v10158
        %v10191 = vmul.f32 %v10006, %v10159
        %v10192 = vmul.f32 %v10008, %v10160
        %v10193 = vmul.f32 %v10010, %v10161
        %v10194 = vmul.f32 %v10012, %v10162
        %v10195 = vmul.f32 %v10014, %v10163
        %v10196 = vmul.f32 %v10016, %v10164
        %v10197 = vmul.f32 %v10018, %v10165
        %v10198 = vmul.f32 %v10020, %v10166
        %v10199 = vmul.f32 %v10022, %v10167
        %v10200 = vmul.f32 %v10024, %v10168
        %v10201 = vmul.f32 %v10026, %v10169
        %v10202 = vmul.f32 %v10028, %v10170
        %v10203 = vmul.f32 %v10030, %v10171
        %v10204 = vmul.f32 %v10032, %v10172
        %v10205 = vmul.f32 %v10034, %v10173
        %v10206 = vmul.f32 %v10036, %v10174
        %v10207 = vmul.f32 %v10038, %v10175
        %v10208 = vmul.f32 %v10040, %v10176
        %v10209 = vmul.f32 %v10042, %v10177
        %v10210 = vmul.f32 %v10044, %v10178
        %v10211 = vmul.f32 %v10046, %v10179
        %v10212 = vmul.f32 %v10048, %v10180
        %v10213 = vmul.f32 %v10050, %v10181
        %v10214 = vmul.f32 %v10052, %v10182
        %v10215 = vmul.f32 %v10054, %v10183
        %v10216 = vmul.f32 %v10056, %v10184
        %10217 = vrot.lane.b32.xlu0 %v1403, 104
        %v10218 = vpop.permute.xlu0 %10217
        %10219 = vrot.lane.b32.xlu0 %v1408, 104
        %v10220 = vpop.permute.xlu0 %10219
        %10221 = vrot.lane.b32.xlu0 %v1413, 104
        %v10222 = vpop.permute.xlu0 %10221
        %10223 = vrot.lane.b32.xlu0 %v1418, 104
        %v10224 = vpop.permute.xlu0 %10223
        %v10230 = vsel %vm575, %v10185, 0
        %v10233 = vsel %vm575, %v10186, 0
        %v10236 = vsel %vm575, %v10187, 0
        %v10239 = vsel %vm575, %v10188, 0
        %10241 = vmatprep.subr.mxu0 0.0
        %10242 = vmatpush1.msra.mxu0 %v10218
        %10243 = vmatprep.subr.mxu0 0.0
        %10244 = vmatpush1.msra.mxu0 %v10220
        %10245 = vmatprep.subr.mxu0 0.0
        %10246 = vmatpush1.msra.mxu0 %v10222
        %10247 = vmatprep.subr.mxu0 0.0
        %10248 = vmatpush1.msra.mxu0 %v10224
        %10249 = vmatprep.subr.mxu0 0.0
        %10250 = vmatpush1.msra.mxu0 0.0
        %10251 = vmatprep.subr.mxu0 0.0
        %10252 = vmatpush1.msra.mxu0 0.0
        %10253 = vmatprep.subr.mxu0 0.0
        %10254 = vmatpush1.msra.mxu0 0.0
        %10255 = vmatprep.subr.mxu0 0.0
        %10256 = vmatpush1.msra.mxu0 0.0
        %10257 = vmatprep.subr.mxu0 0.0
        %10258 = vmatpush1.msra.mxu0 0.0
        %10259 = vmatprep.subr.mxu0 0.0
        %10260 = vmatpush1.msra.mxu0 0.0
        %10261 = vmatprep.subr.mxu0 0.0
        %10262 = vmatpush1.msra.mxu0 0.0
        %10263 = vmatprep.subr.mxu0 0.0
        %10264 = vmatpush1.msra.mxu0 0.0
        %10265 = vmatprep.subr.mxu0 0.0
        %10266 = vmatpush1.msra.mxu0 0.0
        %10267 = vmatprep.subr.mxu0 0.0
        %10268 = vmatpush1.msra.mxu0 0.0
        %10269 = vmatprep.subr.mxu0 0.0
        %10270 = vmatpush1.msra.mxu0 0.0
        %10271 = vmatprep.subr.mxu0 0.0
        %10272 = vmatpush1.msra.mxu0 0.0
        %10273 = vmatprep.subr.mxu0 0.0
        %10274 = vmatpush1.msra.mxu0 0.0
        %10275 = vmatprep.subr.mxu0 0.0
        %10276 = vmatpush1.msra.mxu0 0.0
        %10277 = vmatprep.subr.mxu0 0.0
        %10278 = vmatpush1.msra.mxu0 0.0
        %10279 = vmatprep.subr.mxu0 0.0
        %10280 = vmatpush1.msra.mxu0 0.0
        %10281 = vmatprep.subr.mxu0 0.0
        %10282 = vmatpush1.msra.mxu0 0.0
        %10283 = vmatprep.subr.mxu0 0.0
        %10284 = vmatpush1.msra.mxu0 0.0
        %10285 = vmatprep.subr.mxu0 0.0
        %10286 = vmatpush1.msra.mxu0 0.0
        %10287 = vmatprep.subr.mxu0 0.0
        %10288 = vmatpush1.msra.mxu0 0.0
        %10289 = vmatprep.subr.mxu0 0.0
        %10290 = vmatpush1.msra.mxu0 0.0
        %10291 = vmatprep.subr.mxu0 0.0
        %10292 = vmatpush1.msra.mxu0 0.0
        %10293 = vmatprep.subr.mxu0 0.0
        %10294 = vmatpush1.msra.mxu0 0.0
        %10295 = vmatprep.subr.mxu0 0.0
        %10296 = vmatpush1.msra.mxu0 0.0
        %10297 = vmatprep.subr.mxu0 0.0
        %10298 = vmatpush1.msra.mxu0 0.0
        %10299 = vmatprep.subr.mxu0 0.0
        %10300 = vmatpush1.msra.mxu0 0.0
        %10301 = vmatprep.subr.mxu0 0.0
        %10302 = vmatpush1.msra.mxu0 0.0
        %10303 = vmatprep.subr.mxu0 0.0
        %10304 = vmatpush1.msra.mxu0 0.0
        %10305 = vmatprep.mubr.f32.mxu0 0.0
        %10306 = vmatmul.mubr.f32.gmra.mrb[0].mxu0 %v10230
        %v10307 = vpop.f32.mrb[0].mxu0
        %v10308 = vadd.f32 0.0, %v10307
        %v10309 = vpop.f32.mrb[0].mxu0
        %10310 = vmatprep.mubr.f32.mxu0 0.0
        %10311 = vmatmul.mubr.f32.gmra.mrb[0].mxu0 %v10233
        %v10312 = vpop.f32.mrb[0].mxu0
        %v10313 = vadd.f32 0.0, %v10312
        %v10314 = vpop.f32.mrb[0].mxu0
        %10315 = vmatprep.mubr.f32.mxu0 0.0
        %10316 = vmatmul.mubr.f32.gmra.mrb[0].mxu0 %v10236
        %v10317 = vpop.f32.mrb[0].mxu0
        %v10318 = vadd.f32 0.0, %v10317
        %v10319 = vpop.f32.mrb[0].mxu0
        %10320 = vmatprep.mubr.f32.mxu0 0.0
        %10321 = vmatmul.mubr.f32.gmra.mrb[0].mxu0 %v10239
        %v10322 = vpop.f32.mrb[0].mxu0
        %v10323 = vadd.f32 0.0, %v10322
        %v10324 = vpop.f32.mrb[0].mxu0
        %10325 = vdwg.mxu0
        %10326 = vrot.lane.b32.xlu0 %v1423, 104
        %v10327 = vpop.permute.xlu0 %10326
        %10328 = vrot.lane.b32.xlu0 %v1428, 104
        %v10329 = vpop.permute.xlu0 %10328
        %10330 = vrot.lane.b32.xlu0 %v1433, 104
        %v10331 = vpop.permute.xlu0 %10330
        %10332 = vrot.lane.b32.xlu0 %v1438, 104
        %v10333 = vpop.permute.xlu0 %10332
        %v10339 = vsel %vm575, %v10189, 0
        %v10342 = vsel %vm575, %v10190, 0
        %v10345 = vsel %vm575, %v10191, 0
        %v10348 = vsel %vm575, %v10192, 0
        %10350 = vmatprep.subr.mxu0 0.0
        %10351 = vmatpush1.msra.mxu0 %v10327
        %10352 = vmatprep.subr.mxu0 0.0
        %10353 = vmatpush1.msra.mxu0 %v10329
        %10354 = vmatprep.subr.mxu0 0.0
        %10355 = vmatpush1.msra.mxu0 %v10331
        %10356 = vmatprep.subr.mxu0 0.0
        %10357 = vmatpush1.msra.mxu0 %v10333
        %10358 = vmatprep.subr.mxu0 0.0
        %10359 = vmatpush1.msra.mxu0 0.0
        %10360 = vmatprep.subr.mxu0 0.0
        %10361 = vmatpush1.msra.mxu0 0.0
        %10362 = vmatprep.subr.mxu0 0.0
        %10363 = vmatpush1.msra.mxu0 0.0
        %10364 = vmatprep.subr.mxu0 0.0
        %10365 = vmatpush1.msra.mxu0 0.0
        %10366 = vmatprep.subr.mxu0 0.0
        %10367 = vmatpush1.msra.mxu0 0.0
        %10368 = vmatprep.subr.mxu0 0.0
        %10369 = vmatpush1.msra.mxu0 0.0
        %10370 = vmatprep.subr.mxu0 0.0
        %10371 = vmatpush1.msra.mxu0 0.0
        %10372 = vmatprep.subr.mxu0 0.0
        %10373 = vmatpush1.msra.mxu0 0.0
        %10374 = vmatprep.subr.mxu0 0.0
        %10375 = vmatpush1.msra.mxu0 0.0
        %10376 = vmatprep.subr.mxu0 0.0
        %10377 = vmatpush1.msra.mxu0 0.0
        %10378 = vmatprep.subr.mxu0 0.0
        %10379 = vmatpush1.msra.mxu0 0.0
        %10380 = vmatprep.subr.mxu0 0.0
        %10381 = vmatpush1.msra.mxu0 0.0
        %10382 = vmatprep.subr.mxu0 0.0
        %10383 = vmatpush1.msra.mxu0 0.0
        %10384 = vmatprep.subr.mxu0 0.0
        %10385 = vmatpush1.msra.mxu0 0.0
        %10386 = vmatprep.subr.mxu0 0.0
        %10387 = vmatpush1.msra.mxu0 0.0
        %10388 = vmatprep.subr.mxu0 0.0
        %10389 = vmatpush1.msra.mxu0 0.0
        %10390 = vmatprep.subr.mxu0 0.0
        %10391 = vmatpush1.msra.mxu0 0.0
        %10392 = vmatprep.subr.mxu0 0.0
        %10393 = vmatpush1.msra.mxu0 0.0
        %10394 = vmatprep.subr.mxu0 0.0
        %10395 = vmatpush1.msra.mxu0 0.0
        %10396 = vmatprep.subr.mxu0 0.0
        %10397 = vmatpush1.msra.mxu0 0.0
        %10398 = vmatprep.subr.mxu0 0.0
        %10399 = vmatpush1.msra.mxu0 0.0
        %10400 = vmatprep.subr.mxu0 0.0
        %10401 = vmatpush1.msra.mxu0 0.0
        %10402 = vmatprep.subr.mxu0 0.0
        %10403 = vmatpush1.msra.mxu0 0.0
        %10404 = vmatprep.subr.mxu0 0.0
        %10405 = vmatpush1.msra.mxu0 0.0
        %10406 = vmatprep.subr.mxu0 0.0
        %10407 = vmatpush1.msra.mxu0 0.0
        %10408 = vmatprep.subr.mxu0 0.0
        %10409 = vmatpush1.msra.mxu0 0.0
        %10410 = vmatprep.subr.mxu0 0.0
        %10411 = vmatpush1.msra.mxu0 0.0
        %10412 = vmatprep.subr.mxu0 0.0
        %10413 = vmatpush1.msra.mxu0 0.0
        %10414 = vmatprep.mubr.f32.mxu0 0.0
        %10415 = vmatmul.mubr.f32.gmra.mrb[0].mxu0 %v10339
        %v10416 = vpop.f32.mrb[0].mxu0
        %v10417 = vadd.f32 0.0, %v10416
        %v10418 = vpop.f32.mrb[0].mxu0
        %10419 = vmatprep.mubr.f32.mxu0 0.0
        %10420 = vmatmul.mubr.f32.gmra.mrb[0].mxu0 %v10342
        %v10421 = vpop.f32.mrb[0].mxu0
        %v10422 = vadd.f32 0.0, %v10421
        %v10423 = vpop.f32.mrb[0].mxu0
        %10424 = vmatprep.mubr.f32.mxu0 0.0
        %10425 = vmatmul.mubr.f32.gmra.mrb[0].mxu0 %v10345
        %v10426 = vpop.f32.mrb[0].mxu0
        %v10427 = vadd.f32 0.0, %v10426
        %v10428 = vpop.f32.mrb[0].mxu0
        %10429 = vmatprep.mubr.f32.mxu0 0.0
        %10430 = vmatmul.mubr.f32.gmra.mrb[0].mxu0 %v10348
        %v10431 = vpop.f32.mrb[0].mxu0
        %v10432 = vadd.f32 0.0, %v10431
        %v10433 = vpop.f32.mrb[0].mxu0
        %10434 = vdwg.mxu0
        %10435 = vrot.lane.b32.xlu0 %v1443, 104
        %v10436 = vpop.permute.xlu0 %10435
        %10437 = vrot.lane.b32.xlu0 %v1448, 104
        %v10438 = vpop.permute.xlu0 %10437
        %10439 = vrot.lane.b32.xlu0 %v1453, 104
        %v10440 = vpop.permute.xlu0 %10439
        %10441 = vrot.lane.b32.xlu0 %v1458, 104
        %v10442 = vpop.permute.xlu0 %10441
        %v10448 = vsel %vm575, %v10193, 0
        %v10451 = vsel %vm575, %v10194, 0
        %v10454 = vsel %vm575, %v10195, 0
        %v10457 = vsel %vm575, %v10196, 0
        %10459 = vmatprep.subr.mxu0 0.0
        %10460 = vmatpush1.msra.mxu0 %v10436
        %10461 = vmatprep.subr.mxu0 0.0
        %10462 = vmatpush1.msra.mxu0 %v10438
        %10463 = vmatprep.subr.mxu0 0.0
        %10464 = vmatpush1.msra.mxu0 %v10440
        %10465 = vmatprep.subr.mxu0 0.0
        %10466 = vmatpush1.msra.mxu0 %v10442
        %10467 = vmatprep.subr.mxu0 0.0
        %10468 = vmatpush1.msra.mxu0 0.0
        %10469 = vmatprep.subr.mxu0 0.0
        %10470 = vmatpush1.msra.mxu0 0.0
        %10471 = vmatprep.subr.mxu0 0.0
        %10472 = vmatpush1.msra.mxu0 0.0
        %10473 = vmatprep.subr.mxu0 0.0
        %10474 = vmatpush1.msra.mxu0 0.0
        %10475 = vmatprep.subr.mxu0 0.0
        %10476 = vmatpush1.msra.mxu0 0.0
        %10477 = vmatprep.subr.mxu0 0.0
        %10478 = vmatpush1.msra.mxu0 0.0
        %10479 = vmatprep.subr.mxu0 0.0
        %10480 = vmatpush1.msra.mxu0 0.0
        %10481 = vmatprep.subr.mxu0 0.0
        %10482 = vmatpush1.msra.mxu0 0.0
        %10483 = vmatprep.subr.mxu0 0.0
        %10484 = vmatpush1.msra.mxu0 0.0
        %10485 = vmatprep.subr.mxu0 0.0
        %10486 = vmatpush1.msra.mxu0 0.0
        %10487 = vmatprep.subr.mxu0 0.0
        %10488 = vmatpush1.msra.mxu0 0.0
        %10489 = vmatprep.subr.mxu0 0.0
        %10490 = vmatpush1.msra.mxu0 0.0
        %10491 = vmatprep.subr.mxu0 0.0
        %10492 = vmatpush1.msra.mxu0 0.0
        %10493 = vmatprep.subr.mxu0 0.0
        %10494 = vmatpush1.msra.mxu0 0.0
        %10495 = vmatprep.subr.mxu0 0.0
        %10496 = vmatpush1.msra.mxu0 0.0
        %10497 = vmatprep.subr.mxu0 0.0
        %10498 = vmatpush1.msra.mxu0 0.0
        %10499 = vmatprep.subr.mxu0 0.0
        %10500 = vmatpush1.msra.mxu0 0.0
        %10501 = vmatprep.subr.mxu0 0.0
        %10502 = vmatpush1.msra.mxu0 0.0
        %10503 = vmatprep.subr.mxu0 0.0
        %10504 = vmatpush1.msra.mxu0 0.0
        %10505 = vmatprep.subr.mxu0 0.0
        %10506 = vmatpush1.msra.mxu0 0.0
        %10507 = vmatprep.subr.mxu0 0.0
        %10508 = vmatpush1.msra.mxu0 0.0
        %10509 = vmatprep.subr.mxu0 0.0
        %10510 = vmatpush1.msra.mxu0 0.0
        %10511 = vmatprep.subr.mxu0 0.0
        %10512 = vmatpush1.msra.mxu0 0.0
        %10513 = vmatprep.subr.mxu0 0.0
        %10514 = vmatpush1.msra.mxu0 0.0
        %10515 = vmatprep.subr.mxu0 0.0
        %10516 = vmatpush1.msra.mxu0 0.0
        %10517 = vmatprep.subr.mxu0 0.0
        %10518 = vmatpush1.msra.mxu0 0.0
        %10519 = vmatprep.subr.mxu0 0.0
        %10520 = vmatpush1.msra.mxu0 0.0
        %10521 = vmatprep.subr.mxu0 0.0
        %10522 = vmatpush1.msra.mxu0 0.0
        %10523 = vmatprep.mubr.f32.mxu0 0.0
        %10524 = vmatmul.mubr.f32.gmra.mrb[0].mxu0 %v10448
        %v10525 = vpop.f32.mrb[0].mxu0
        %v10526 = vadd.f32 0.0, %v10525
        %v10527 = vpop.f32.mrb[0].mxu0
        %10528 = vmatprep.mubr.f32.mxu0 0.0
        %10529 = vmatmul.mubr.f32.gmra.mrb[0].mxu0 %v10451
        %v10530 = vpop.f32.mrb[0].mxu0
        %v10531 = vadd.f32 0.0, %v10530
        %v10532 = vpop.f32.mrb[0].mxu0
        %10533 = vmatprep.mubr.f32.mxu0 0.0
        %10534 = vmatmul.mubr.f32.gmra.mrb[0].mxu0 %v10454
        %v10535 = vpop.f32.mrb[0].mxu0
        %v10536 = vadd.f32 0.0, %v10535
        %v10537 = vpop.f32.mrb[0].mxu0
        %10538 = vmatprep.mubr.f32.mxu0 0.0
        %10539 = vmatmul.mubr.f32.gmra.mrb[0].mxu0 %v10457
        %v10540 = vpop.f32.mrb[0].mxu0
        %v10541 = vadd.f32 0.0, %v10540
        %v10542 = vpop.f32.mrb[0].mxu0
        %10543 = vdwg.mxu0
        %10544 = vrot.lane.b32.xlu0 %v1463, 104
        %v10545 = vpop.permute.xlu0 %10544
        %10546 = vrot.lane.b32.xlu0 %v1468, 104
        %v10547 = vpop.permute.xlu0 %10546
        %10548 = vrot.lane.b32.xlu0 %v1473, 104
        %v10549 = vpop.permute.xlu0 %10548
        %10550 = vrot.lane.b32.xlu0 %v1478, 104
        %v10551 = vpop.permute.xlu0 %10550
        %v10557 = vsel %vm575, %v10197, 0
        %v10560 = vsel %vm575, %v10198, 0
        %v10563 = vsel %vm575, %v10199, 0
        %v10566 = vsel %vm575, %v10200, 0
        %10568 = vmatprep.subr.mxu0 0.0
        %10569 = vmatpush1.msra.mxu0 %v10545
        %10570 = vmatprep.subr.mxu0 0.0
        %10571 = vmatpush1.msra.mxu0 %v10547
        %10572 = vmatprep.subr.mxu0 0.0
        %10573 = vmatpush1.msra.mxu0 %v10549
        %10574 = vmatprep.subr.mxu0 0.0
        %10575 = vmatpush1.msra.mxu0 %v10551
        %10576 = vmatprep.subr.mxu0 0.0
        %10577 = vmatpush1.msra.mxu0 0.0
        %10578 = vmatprep.subr.mxu0 0.0
        %10579 = vmatpush1.msra.mxu0 0.0
        %10580 = vmatprep.subr.mxu0 0.0
        %10581 = vmatpush1.msra.mxu0 0.0
        %10582 = vmatprep.subr.mxu0 0.0
        %10583 = vmatpush1.msra.mxu0 0.0
        %10584 = vmatprep.subr.mxu0 0.0
        %10585 = vmatpush1.msra.mxu0 0.0
        %10586 = vmatprep.subr.mxu0 0.0
        %10587 = vmatpush1.msra.mxu0 0.0
        %10588 = vmatprep.subr.mxu0 0.0
        %10589 = vmatpush1.msra.mxu0 0.0
        %10590 = vmatprep.subr.mxu0 0.0
        %10591 = vmatpush1.msra.mxu0 0.0
        %10592 = vmatprep.subr.mxu0 0.0
        %10593 = vmatpush1.msra.mxu0 0.0
        %10594 = vmatprep.subr.mxu0 0.0
        %10595 = vmatpush1.msra.mxu0 0.0
        %10596 = vmatprep.subr.mxu0 0.0
        %10597 = vmatpush1.msra.mxu0 0.0
        %10598 = vmatprep.subr.mxu0 0.0
        %10599 = vmatpush1.msra.mxu0 0.0
        %10600 = vmatprep.subr.mxu0 0.0
        %10601 = vmatpush1.msra.mxu0 0.0
        %10602 = vmatprep.subr.mxu0 0.0
        %10603 = vmatpush1.msra.mxu0 0.0
        %10604 = vmatprep.subr.mxu0 0.0
        %10605 = vmatpush1.msra.mxu0 0.0
        %10606 = vmatprep.subr.mxu0 0.0
        %10607 = vmatpush1.msra.mxu0 0.0
        %10608 = vmatprep.subr.mxu0 0.0
        %10609 = vmatpush1.msra.mxu0 0.0
        %10610 = vmatprep.subr.mxu0 0.0
        %10611 = vmatpush1.msra.mxu0 0.0
        %10612 = vmatprep.subr.mxu0 0.0
        %10613 = vmatpush1.msra.mxu0 0.0
        %10614 = vmatprep.subr.mxu0 0.0
        %10615 = vmatpush1.msra.mxu0 0.0
        %10616 = vmatprep.subr.mxu0 0.0
        %10617 = vmatpush1.msra.mxu0 0.0
        %10618 = vmatprep.subr.mxu0 0.0
        %10619 = vmatpush1.msra.mxu0 0.0
        %10620 = vmatprep.subr.mxu0 0.0
        %10621 = vmatpush1.msra.mxu0 0.0
        %10622 = vmatprep.subr.mxu0 0.0
        %10623 = vmatpush1.msra.mxu0 0.0
        %10624 = vmatprep.subr.mxu0 0.0
        %10625 = vmatpush1.msra.mxu0 0.0
        %10626 = vmatprep.subr.mxu0 0.0
        %10627 = vmatpush1.msra.mxu0 0.0
        %10628 = vmatprep.subr.mxu0 0.0
        %10629 = vmatpush1.msra.mxu0 0.0
        %10630 = vmatprep.subr.mxu0 0.0
        %10631 = vmatpush1.msra.mxu0 0.0
        %10632 = vmatprep.mubr.f32.mxu0 0.0
        %10633 = vmatmul.mubr.f32.gmra.mrb[0].mxu0 %v10557
        %v10634 = vpop.f32.mrb[0].mxu0
        %v10635 = vadd.f32 0.0, %v10634
        %v10636 = vpop.f32.mrb[0].mxu0
        %10637 = vmatprep.mubr.f32.mxu0 0.0
        %10638 = vmatmul.mubr.f32.gmra.mrb[0].mxu0 %v10560
        %v10639 = vpop.f32.mrb[0].mxu0
        %v10640 = vadd.f32 0.0, %v10639
        %v10641 = vpop.f32.mrb[0].mxu0
        %10642 = vmatprep.mubr.f32.mxu0 0.0
        %10643 = vmatmul.mubr.f32.gmra.mrb[0].mxu0 %v10563
        %v10644 = vpop.f32.mrb[0].mxu0
        %v10645 = vadd.f32 0.0, %v10644
        %v10646 = vpop.f32.mrb[0].mxu0
        %10647 = vmatprep.mubr.f32.mxu0 0.0
        %10648 = vmatmul.mubr.f32.gmra.mrb[0].mxu0 %v10566
        %v10649 = vpop.f32.mrb[0].mxu0
        %v10650 = vadd.f32 0.0, %v10649
        %v10651 = vpop.f32.mrb[0].mxu0
        %10652 = vdwg.mxu0
        %10653 = vrot.lane.b32.xlu0 %v1483, 104
        %v10654 = vpop.permute.xlu0 %10653
        %10655 = vrot.lane.b32.xlu0 %v1488, 104
        %v10656 = vpop.permute.xlu0 %10655
        %10657 = vrot.lane.b32.xlu0 %v1493, 104
        %v10658 = vpop.permute.xlu0 %10657
        %10659 = vrot.lane.b32.xlu0 %v1498, 104
        %v10660 = vpop.permute.xlu0 %10659
        %v10666 = vsel %vm575, %v10201, 0
        %v10669 = vsel %vm575, %v10202, 0
        %v10672 = vsel %vm575, %v10203, 0
        %v10675 = vsel %vm575, %v10204, 0
        %10677 = vmatprep.subr.mxu0 0.0
        %10678 = vmatpush1.msra.mxu0 %v10654
        %10679 = vmatprep.subr.mxu0 0.0
        %10680 = vmatpush1.msra.mxu0 %v10656
        %10681 = vmatprep.subr.mxu0 0.0
        %10682 = vmatpush1.msra.mxu0 %v10658
        %10683 = vmatprep.subr.mxu0 0.0
        %10684 = vmatpush1.msra.mxu0 %v10660
        %10685 = vmatprep.subr.mxu0 0.0
        %10686 = vmatpush1.msra.mxu0 0.0
        %10687 = vmatprep.subr.mxu0 0.0
        %10688 = vmatpush1.msra.mxu0 0.0
        %10689 = vmatprep.subr.mxu0 0.0
        %10690 = vmatpush1.msra.mxu0 0.0
        %10691 = vmatprep.subr.mxu0 0.0
        %10692 = vmatpush1.msra.mxu0 0.0
        %10693 = vmatprep.subr.mxu0 0.0
        %10694 = vmatpush1.msra.mxu0 0.0
        %10695 = vmatprep.subr.mxu0 0.0
        %10696 = vmatpush1.msra.mxu0 0.0
        %10697 = vmatprep.subr.mxu0 0.0
        %10698 = vmatpush1.msra.mxu0 0.0
        %10699 = vmatprep.subr.mxu0 0.0
        %10700 = vmatpush1.msra.mxu0 0.0
        %10701 = vmatprep.subr.mxu0 0.0
        %10702 = vmatpush1.msra.mxu0 0.0
        %10703 = vmatprep.subr.mxu0 0.0
        %10704 = vmatpush1.msra.mxu0 0.0
        %10705 = vmatprep.subr.mxu0 0.0
        %10706 = vmatpush1.msra.mxu0 0.0
        %10707 = vmatprep.subr.mxu0 0.0
        %10708 = vmatpush1.msra.mxu0 0.0
        %10709 = vmatprep.subr.mxu0 0.0
        %10710 = vmatpush1.msra.mxu0 0.0
        %10711 = vmatprep.subr.mxu0 0.0
        %10712 = vmatpush1.msra.mxu0 0.0
        %10713 = vmatprep.subr.mxu0 0.0
        %10714 = vmatpush1.msra.mxu0 0.0
        %10715 = vmatprep.subr.mxu0 0.0
        %10716 = vmatpush1.msra.mxu0 0.0
        %10717 = vmatprep.subr.mxu0 0.0
        %10718 = vmatpush1.msra.mxu0 0.0
        %10719 = vmatprep.subr.mxu0 0.0
        %10720 = vmatpush1.msra.mxu0 0.0
        %10721 = vmatprep.subr.mxu0 0.0
        %10722 = vmatpush1.msra.mxu0 0.0
        %10723 = vmatprep.subr.mxu0 0.0
        %10724 = vmatpush1.msra.mxu0 0.0
        %10725 = vmatprep.subr.mxu0 0.0
        %10726 = vmatpush1.msra.mxu0 0.0
        %10727 = vmatprep.subr.mxu0 0.0
        %10728 = vmatpush1.msra.mxu0 0.0
        %10729 = vmatprep.subr.mxu0 0.0
        %10730 = vmatpush1.msra.mxu0 0.0
        %10731 = vmatprep.subr.mxu0 0.0
        %10732 = vmatpush1.msra.mxu0 0.0
        %10733 = vmatprep.subr.mxu0 0.0
        %10734 = vmatpush1.msra.mxu0 0.0
        %10735 = vmatprep.subr.mxu0 0.0
        %10736 = vmatpush1.msra.mxu0 0.0
        %10737 = vmatprep.subr.mxu0 0.0
        %10738 = vmatpush1.msra.mxu0 0.0
        %10739 = vmatprep.subr.mxu0 0.0
        %10740 = vmatpush1.msra.mxu0 0.0
        %10741 = vmatprep.mubr.f32.mxu0 0.0
        %10742 = vmatmul.mubr.f32.gmra.mrb[0].mxu0 %v10666
        %v10743 = vpop.f32.mrb[0].mxu0
        %v10744 = vadd.f32 0.0, %v10743
        %v10745 = vpop.f32.mrb[0].mxu0
        %10746 = vmatprep.mubr.f32.mxu0 0.0
        %10747 = vmatmul.mubr.f32.gmra.mrb[0].mxu0 %v10669
        %v10748 = vpop.f32.mrb[0].mxu0
        %v10749 = vadd.f32 0.0, %v10748
        %v10750 = vpop.f32.mrb[0].mxu0
        %10751 = vmatprep.mubr.f32.mxu0 0.0
        %10752 = vmatmul.mubr.f32.gmra.mrb[0].mxu0 %v10672
        %v10753 = vpop.f32.mrb[0].mxu0
        %v10754 = vadd.f32 0.0, %v10753
        %v10755 = vpop.f32.mrb[0].mxu0
        %10756 = vmatprep.mubr.f32.mxu0 0.0
        %10757 = vmatmul.mubr.f32.gmra.mrb[0].mxu0 %v10675
        %v10758 = vpop.f32.mrb[0].mxu0
        %v10759 = vadd.f32 0.0, %v10758
        %v10760 = vpop.f32.mrb[0].mxu0
        %10761 = vdwg.mxu0
        %10762 = vrot.lane.b32.xlu0 %v1503, 104
        %v10763 = vpop.permute.xlu0 %10762
        %10764 = vrot.lane.b32.xlu0 %v1508, 104
        %v10765 = vpop.permute.xlu0 %10764
        %10766 = vrot.lane.b32.xlu0 %v1513, 104
        %v10767 = vpop.permute.xlu0 %10766
        %10768 = vrot.lane.b32.xlu0 %v1518, 104
        %v10769 = vpop.permute.xlu0 %10768
        %v10775 = vsel %vm575, %v10205, 0
        %v10778 = vsel %vm575, %v10206, 0
        %v10781 = vsel %vm575, %v10207, 0
        %v10784 = vsel %vm575, %v10208, 0
        %10786 = vmatprep.subr.mxu0 0.0
        %10787 = vmatpush1.msra.mxu0 %v10763
        %10788 = vmatprep.subr.mxu0 0.0
        %10789 = vmatpush1.msra.mxu0 %v10765
        %10790 = vmatprep.subr.mxu0 0.0
        %10791 = vmatpush1.msra.mxu0 %v10767
        %10792 = vmatprep.subr.mxu0 0.0
        %10793 = vmatpush1.msra.mxu0 %v10769
        %10794 = vmatprep.subr.mxu0 0.0
        %10795 = vmatpush1.msra.mxu0 0.0
        %10796 = vmatprep.subr.mxu0 0.0
        %10797 = vmatpush1.msra.mxu0 0.0
        %10798 = vmatprep.subr.mxu0 0.0
        %10799 = vmatpush1.msra.mxu0 0.0
        %10800 = vmatprep.subr.mxu0 0.0
        %10801 = vmatpush1.msra.mxu0 0.0
        %10802 = vmatprep.subr.mxu0 0.0
        %10803 = vmatpush1.msra.mxu0 0.0
        %10804 = vmatprep.subr.mxu0 0.0
        %10805 = vmatpush1.msra.mxu0 0.0
        %10806 = vmatprep.subr.mxu0 0.0
        %10807 = vmatpush1.msra.mxu0 0.0
        %10808 = vmatprep.subr.mxu0 0.0
        %10809 = vmatpush1.msra.mxu0 0.0
        %10810 = vmatprep.subr.mxu0 0.0
        %10811 = vmatpush1.msra.mxu0 0.0
        %10812 = vmatprep.subr.mxu0 0.0
        %10813 = vmatpush1.msra.mxu0 0.0
        %10814 = vmatprep.subr.mxu0 0.0
        %10815 = vmatpush1.msra.mxu0 0.0
        %10816 = vmatprep.subr.mxu0 0.0
        %10817 = vmatpush1.msra.mxu0 0.0
        %10818 = vmatprep.subr.mxu0 0.0
        %10819 = vmatpush1.msra.mxu0 0.0
        %10820 = vmatprep.subr.mxu0 0.0
        %10821 = vmatpush1.msra.mxu0 0.0
        %10822 = vmatprep.subr.mxu0 0.0
        %10823 = vmatpush1.msra.mxu0 0.0
        %10824 = vmatprep.subr.mxu0 0.0
        %10825 = vmatpush1.msra.mxu0 0.0
        %10826 = vmatprep.subr.mxu0 0.0
        %10827 = vmatpush1.msra.mxu0 0.0
        %10828 = vmatprep.subr.mxu0 0.0
        %10829 = vmatpush1.msra.mxu0 0.0
        %10830 = vmatprep.subr.mxu0 0.0
        %10831 = vmatpush1.msra.mxu0 0.0
        %10832 = vmatprep.subr.mxu0 0.0
        %10833 = vmatpush1.msra.mxu0 0.0
        %10834 = vmatprep.subr.mxu0 0.0
        %10835 = vmatpush1.msra.mxu0 0.0
        %10836 = vmatprep.subr.mxu0 0.0
        %10837 = vmatpush1.msra.mxu0 0.0
        %10838 = vmatprep.subr.mxu0 0.0
        %10839 = vmatpush1.msra.mxu0 0.0
        %10840 = vmatprep.subr.mxu0 0.0
        %10841 = vmatpush1.msra.mxu0 0.0
        %10842 = vmatprep.subr.mxu0 0.0
        %10843 = vmatpush1.msra.mxu0 0.0
        %10844 = vmatprep.subr.mxu0 0.0
        %10845 = vmatpush1.msra.mxu0 0.0
        %10846 = vmatprep.subr.mxu0 0.0
        %10847 = vmatpush1.msra.mxu0 0.0
        %10848 = vmatprep.subr.mxu0 0.0
        %10849 = vmatpush1.msra.mxu0 0.0
        %10850 = vmatprep.mubr.f32.mxu0 0.0
        %10851 = vmatmul.mubr.f32.gmra.mrb[0].mxu0 %v10775
        %v10852 = vpop.f32.mrb[0].mxu0
        %v10853 = vadd.f32 0.0, %v10852
        %v10854 = vpop.f32.mrb[0].mxu0
        %10855 = vmatprep.mubr.f32.mxu0 0.0
        %10856 = vmatmul.mubr.f32.gmra.mrb[0].mxu0 %v10778
        %v10857 = vpop.f32.mrb[0].mxu0
        %v10858 = vadd.f32 0.0, %v10857
        %v10859 = vpop.f32.mrb[0].mxu0
        %10860 = vmatprep.mubr.f32.mxu0 0.0
        %10861 = vmatmul.mubr.f32.gmra.mrb[0].mxu0 %v10781
        %v10862 = vpop.f32.mrb[0].mxu0
        %v10863 = vadd.f32 0.0, %v10862
        %v10864 = vpop.f32.mrb[0].mxu0
        %10865 = vmatprep.mubr.f32.mxu0 0.0
        %10866 = vmatmul.mubr.f32.gmra.mrb[0].mxu0 %v10784
        %v10867 = vpop.f32.mrb[0].mxu0
        %v10868 = vadd.f32 0.0, %v10867
        %v10869 = vpop.f32.mrb[0].mxu0
        %10870 = vdwg.mxu0
        %10871 = vrot.lane.b32.xlu0 %v1523, 104
        %v10872 = vpop.permute.xlu0 %10871
        %10873 = vrot.lane.b32.xlu0 %v1528, 104
        %v10874 = vpop.permute.xlu0 %10873
        %10875 = vrot.lane.b32.xlu0 %v1533, 104
        %v10876 = vpop.permute.xlu0 %10875
        %10877 = vrot.lane.b32.xlu0 %v1538, 104
        %v10878 = vpop.permute.xlu0 %10877
        %v10884 = vsel %vm575, %v10209, 0
        %v10887 = vsel %vm575, %v10210, 0
        %v10890 = vsel %vm575, %v10211, 0
        %v10893 = vsel %vm575, %v10212, 0
        %10895 = vmatprep.subr.mxu0 0.0
        %10896 = vmatpush1.msra.mxu0 %v10872
        %10897 = vmatprep.subr.mxu0 0.0
        %10898 = vmatpush1.msra.mxu0 %v10874
        %10899 = vmatprep.subr.mxu0 0.0
        %10900 = vmatpush1.msra.mxu0 %v10876
        %10901 = vmatprep.subr.mxu0 0.0
        %10902 = vmatpush1.msra.mxu0 %v10878
        %10903 = vmatprep.subr.mxu0 0.0
        %10904 = vmatpush1.msra.mxu0 0.0
        %10905 = vmatprep.subr.mxu0 0.0
        %10906 = vmatpush1.msra.mxu0 0.0
        %10907 = vmatprep.subr.mxu0 0.0
        %10908 = vmatpush1.msra.mxu0 0.0
        %10909 = vmatprep.subr.mxu0 0.0
        %10910 = vmatpush1.msra.mxu0 0.0
        %10911 = vmatprep.subr.mxu0 0.0
        %10912 = vmatpush1.msra.mxu0 0.0
        %10913 = vmatprep.subr.mxu0 0.0
        %10914 = vmatpush1.msra.mxu0 0.0
        %10915 = vmatprep.subr.mxu0 0.0
        %10916 = vmatpush1.msra.mxu0 0.0
        %10917 = vmatprep.subr.mxu0 0.0
        %10918 = vmatpush1.msra.mxu0 0.0
        %10919 = vmatprep.subr.mxu0 0.0
        %10920 = vmatpush1.msra.mxu0 0.0
        %10921 = vmatprep.subr.mxu0 0.0
        %10922 = vmatpush1.msra.mxu0 0.0
        %10923 = vmatprep.subr.mxu0 0.0
        %10924 = vmatpush1.msra.mxu0 0.0
        %10925 = vmatprep.subr.mxu0 0.0
        %10926 = vmatpush1.msra.mxu0 0.0
        %10927 = vmatprep.subr.mxu0 0.0
        %10928 = vmatpush1.msra.mxu0 0.0
        %10929 = vmatprep.subr.mxu0 0.0
        %10930 = vmatpush1.msra.mxu0 0.0
        %10931 = vmatprep.subr.mxu0 0.0
        %10932 = vmatpush1.msra.mxu0 0.0
        %10933 = vmatprep.subr.mxu0 0.0
        %10934 = vmatpush1.msra.mxu0 0.0
        %10935 = vmatprep.subr.mxu0 0.0
        %10936 = vmatpush1.msra.mxu0 0.0
        %10937 = vmatprep.subr.mxu0 0.0
        %10938 = vmatpush1.msra.mxu0 0.0
        %10939 = vmatprep.subr.mxu0 0.0
        %10940 = vmatpush1.msra.mxu0 0.0
        %10941 = vmatprep.subr.mxu0 0.0
        %10942 = vmatpush1.msra.mxu0 0.0
        %10943 = vmatprep.subr.mxu0 0.0
        %10944 = vmatpush1.msra.mxu0 0.0
        %10945 = vmatprep.subr.mxu0 0.0
        %10946 = vmatpush1.msra.mxu0 0.0
        %10947 = vmatprep.subr.mxu0 0.0
        %10948 = vmatpush1.msra.mxu0 0.0
        %10949 = vmatprep.subr.mxu0 0.0
        %10950 = vmatpush1.msra.mxu0 0.0
        %10951 = vmatprep.subr.mxu0 0.0
        %10952 = vmatpush1.msra.mxu0 0.0
        %10953 = vmatprep.subr.mxu0 0.0
        %10954 = vmatpush1.msra.mxu0 0.0
        %10955 = vmatprep.subr.mxu0 0.0
        %10956 = vmatpush1.msra.mxu0 0.0
        %10957 = vmatprep.subr.mxu0 0.0
        %10958 = vmatpush1.msra.mxu0 0.0
        %10959 = vmatprep.mubr.f32.mxu0 0.0
        %10960 = vmatmul.mubr.f32.gmra.mrb[0].mxu0 %v10884
        %v10961 = vpop.f32.mrb[0].mxu0
        %v10962 = vadd.f32 0.0, %v10961
        %v10963 = vpop.f32.mrb[0].mxu0
        %10964 = vmatprep.mubr.f32.mxu0 0.0
        %10965 = vmatmul.mubr.f32.gmra.mrb[0].mxu0 %v10887
        %v10966 = vpop.f32.mrb[0].mxu0
        %v10967 = vadd.f32 0.0, %v10966
        %v10968 = vpop.f32.mrb[0].mxu0
        %10969 = vmatprep.mubr.f32.mxu0 0.0
        %10970 = vmatmul.mubr.f32.gmra.mrb[0].mxu0 %v10890
        %v10971 = vpop.f32.mrb[0].mxu0
        %v10972 = vadd.f32 0.0, %v10971
        %v10973 = vpop.f32.mrb[0].mxu0
        %10974 = vmatprep.mubr.f32.mxu0 0.0
        %10975 = vmatmul.mubr.f32.gmra.mrb[0].mxu0 %v10893
        %v10976 = vpop.f32.mrb[0].mxu0
        %v10977 = vadd.f32 0.0, %v10976
        %v10978 = vpop.f32.mrb[0].mxu0
        %10979 = vdwg.mxu0
        %10980 = vrot.lane.b32.xlu0 %v1543, 104
        %v10981 = vpop.permute.xlu0 %10980
        %10982 = vrot.lane.b32.xlu0 %v1548, 104
        %v10983 = vpop.permute.xlu0 %10982
        %10984 = vrot.lane.b32.xlu0 %v1553, 104
        %v10985 = vpop.permute.xlu0 %10984
        %10986 = vrot.lane.b32.xlu0 %v1558, 104
        %v10987 = vpop.permute.xlu0 %10986
        %v10993 = vsel %vm575, %v10213, 0
        %v10996 = vsel %vm575, %v10214, 0
        %v10999 = vsel %vm575, %v10215, 0
        %v11002 = vsel %vm575, %v10216, 0
        %11004 = vmatprep.subr.mxu0 0.0
        %11005 = vmatpush1.msra.mxu0 %v10981
        %11006 = vmatprep.subr.mxu0 0.0
        %11007 = vmatpush1.msra.mxu0 %v10983
        %11008 = vmatprep.subr.mxu0 0.0
        %11009 = vmatpush1.msra.mxu0 %v10985
        %11010 = vmatprep.subr.mxu0 0.0
        %11011 = vmatpush1.msra.mxu0 %v10987
        %11012 = vmatprep.subr.mxu0 0.0
        %11013 = vmatpush1.msra.mxu0 0.0
        %11014 = vmatprep.subr.mxu0 0.0
        %11015 = vmatpush1.msra.mxu0 0.0
        %11016 = vmatprep.subr.mxu0 0.0
        %11017 = vmatpush1.msra.mxu0 0.0
        %11018 = vmatprep.subr.mxu0 0.0
        %11019 = vmatpush1.msra.mxu0 0.0
        %11020 = vmatprep.subr.mxu0 0.0
        %11021 = vmatpush1.msra.mxu0 0.0
        %11022 = vmatprep.subr.mxu0 0.0
        %11023 = vmatpush1.msra.mxu0 0.0
        %11024 = vmatprep.subr.mxu0 0.0
        %11025 = vmatpush1.msra.mxu0 0.0
        %11026 = vmatprep.subr.mxu0 0.0
        %11027 = vmatpush1.msra.mxu0 0.0
        %11028 = vmatprep.subr.mxu0 0.0
        %11029 = vmatpush1.msra.mxu0 0.0
        %11030 = vmatprep.subr.mxu0 0.0
        %11031 = vmatpush1.msra.mxu0 0.0
        %11032 = vmatprep.subr.mxu0 0.0
        %11033 = vmatpush1.msra.mxu0 0.0
        %11034 = vmatprep.subr.mxu0 0.0
        %11035 = vmatpush1.msra.mxu0 0.0
        %11036 = vmatprep.subr.mxu0 0.0
        %11037 = vmatpush1.msra.mxu0 0.0
        %11038 = vmatprep.subr.mxu0 0.0
        %11039 = vmatpush1.msra.mxu0 0.0
        %11040 = vmatprep.subr.mxu0 0.0
        %11041 = vmatpush1.msra.mxu0 0.0
        %11042 = vmatprep.subr.mxu0 0.0
        %11043 = vmatpush1.msra.mxu0 0.0
        %11044 = vmatprep.subr.mxu0 0.0
        %11045 = vmatpush1.msra.mxu0 0.0
        %11046 = vmatprep.subr.mxu0 0.0
        %11047 = vmatpush1.msra.mxu0 0.0
        %11048 = vmatprep.subr.mxu0 0.0
        %11049 = vmatpush1.msra.mxu0 0.0
        %11050 = vmatprep.subr.mxu0 0.0
        %11051 = vmatpush1.msra.mxu0 0.0
        %11052 = vmatprep.subr.mxu0 0.0
        %11053 = vmatpush1.msra.mxu0 0.0
        %11054 = vmatprep.subr.mxu0 0.0
        %11055 = vmatpush1.msra.mxu0 0.0
        %11056 = vmatprep.subr.mxu0 0.0
        %11057 = vmatpush1.msra.mxu0 0.0
        %11058 = vmatprep.subr.mxu0 0.0
        %11059 = vmatpush1.msra.mxu0 0.0
        %11060 = vmatprep.subr.mxu0 0.0
        %11061 = vmatpush1.msra.mxu0 0.0
        %11062 = vmatprep.subr.mxu0 0.0
        %11063 = vmatpush1.msra.mxu0 0.0
        %11064 = vmatprep.subr.mxu0 0.0
        %11065 = vmatpush1.msra.mxu0 0.0
        %11066 = vmatprep.subr.mxu0 0.0
        %11067 = vmatpush1.msra.mxu0 0.0
        %11068 = vmatprep.mubr.f32.mxu0 0.0
        %11069 = vmatmul.mubr.f32.gmra.mrb[0].mxu0 %v10993
        %v11070 = vpop.f32.mrb[0].mxu0
        %v11071 = vadd.f32 0.0, %v11070
        %v11072 = vpop.f32.mrb[0].mxu0
        %11073 = vmatprep.mubr.f32.mxu0 0.0
        %11074 = vmatmul.mubr.f32.gmra.mrb[0].mxu0 %v10996
        %v11075 = vpop.f32.mrb[0].mxu0
        %v11076 = vadd.f32 0.0, %v11075
        %v11077 = vpop.f32.mrb[0].mxu0
        %11078 = vmatprep.mubr.f32.mxu0 0.0
        %11079 = vmatmul.mubr.f32.gmra.mrb[0].mxu0 %v10999
        %v11080 = vpop.f32.mrb[0].mxu0
        %v11081 = vadd.f32 0.0, %v11080
        %v11082 = vpop.f32.mrb[0].mxu0
        %11083 = vmatprep.mubr.f32.mxu0 0.0
        %11084 = vmatmul.mubr.f32.gmra.mrb[0].mxu0 %v11002
        %v11085 = vpop.f32.mrb[0].mxu0
        %v11086 = vadd.f32 0.0, %v11085
        %v11087 = vpop.f32.mrb[0].mxu0
        %11088 = vdwg.mxu0
        %v11090 = vsel %vm1581, %v10308, 0
        %v11093 = vsel %vm1581, %v10313, 0
        %v11096 = vsel %vm1581, %v10318, 0
        %v11099 = vsel %vm1581, %v10323, 0
        %v11102 = vsel %vm1581, %v10417, 0
        %v11105 = vsel %vm1581, %v10422, 0
        %v11108 = vsel %vm1581, %v10427, 0
        %v11111 = vsel %vm1581, %v10432, 0
        %v11114 = vsel %vm1581, %v10526, 0
        %v11117 = vsel %vm1581, %v10531, 0
        %v11120 = vsel %vm1581, %v10536, 0
        %v11123 = vsel %vm1581, %v10541, 0
        %v11126 = vsel %vm1581, %v10635, 0
        %v11129 = vsel %vm1581, %v10640, 0
        %v11132 = vsel %vm1581, %v10645, 0
        %v11135 = vsel %vm1581, %v10650, 0
        %v11138 = vsel %vm1581, %v10744, 0
        %v11141 = vsel %vm1581, %v10749, 0
        %v11144 = vsel %vm1581, %v10754, 0
        %v11147 = vsel %vm1581, %v10759, 0
        %v11150 = vsel %vm1581, %v10853, 0
        %v11153 = vsel %vm1581, %v10858, 0
        %v11156 = vsel %vm1581, %v10863, 0
        %v11159 = vsel %vm1581, %v10868, 0
        %v11162 = vsel %vm1581, %v10962, 0
        %v11165 = vsel %vm1581, %v10967, 0
        %v11168 = vsel %vm1581, %v10972, 0
        %v11171 = vsel %vm1581, %v10977, 0
        %v11174 = vsel %vm1581, %v11071, 0
        %v11177 = vsel %vm1581, %v11076, 0
        %v11180 = vsel %vm1581, %v11081, 0
        %v11183 = vsel %vm1581, %v11086, 0
        %11185 = vmatprep.subr.mxu0 0.0
        %11186 = vmatpush1.msra.mxu0 %v1580
        %11187 = vmatprep.subr.mxu0 0.0
        %11188 = vmatpush1.msra.mxu0 0.0
        %11189 = vmatprep.subr.mxu0 0.0
        %11190 = vmatpush1.msra.mxu0 0.0
        %11191 = vmatprep.subr.mxu0 0.0
        %11192 = vmatpush1.msra.mxu0 0.0
        %11193 = vmatprep.subr.mxu0 0.0
        %11194 = vmatpush1.msra.mxu0 0.0
        %11195 = vmatprep.subr.mxu0 0.0
        %11196 = vmatpush1.msra.mxu0 0.0
        %11197 = vmatprep.subr.mxu0 0.0
        %11198 = vmatpush1.msra.mxu0 0.0
        %11199 = vmatprep.subr.mxu0 0.0
        %11200 = vmatpush1.msra.mxu0 0.0
        %11201 = vmatprep.subr.mxu0 0.0
        %11202 = vmatpush1.msra.mxu0 0.0
        %11203 = vmatprep.subr.mxu0 0.0
        %11204 = vmatpush1.msra.mxu0 0.0
        %11205 = vmatprep.subr.mxu0 0.0
        %11206 = vmatpush1.msra.mxu0 0.0
        %11207 = vmatprep.subr.mxu0 0.0
        %11208 = vmatpush1.msra.mxu0 0.0
        %11209 = vmatprep.subr.mxu0 0.0
        %11210 = vmatpush1.msra.mxu0 0.0
        %11211 = vmatprep.subr.mxu0 0.0
        %11212 = vmatpush1.msra.mxu0 0.0
        %11213 = vmatprep.subr.mxu0 0.0
        %11214 = vmatpush1.msra.mxu0 0.0
        %11215 = vmatprep.subr.mxu0 0.0
        %11216 = vmatpush1.msra.mxu0 0.0
        %11217 = vmatprep.subr.mxu0 0.0
        %11218 = vmatpush1.msra.mxu0 0.0
        %11219 = vmatprep.subr.mxu0 0.0
        %11220 = vmatpush1.msra.mxu0 0.0
        %11221 = vmatprep.subr.mxu0 0.0
        %11222 = vmatpush1.msra.mxu0 0.0
        %11223 = vmatprep.subr.mxu0 0.0
        %11224 = vmatpush1.msra.mxu0 0.0
        %11225 = vmatprep.subr.mxu0 0.0
        %11226 = vmatpush1.msra.mxu0 0.0
        %11227 = vmatprep.subr.mxu0 0.0
        %11228 = vmatpush1.msra.mxu0 0.0
        %11229 = vmatprep.subr.mxu0 0.0
        %11230 = vmatpush1.msra.mxu0 0.0
        %11231 = vmatprep.subr.mxu0 0.0
        %11232 = vmatpush1.msra.mxu0 0.0
        %11233 = vmatprep.subr.mxu0 0.0
        %11234 = vmatpush1.msra.mxu0 0.0
        %11235 = vmatprep.subr.mxu0 0.0
        %11236 = vmatpush1.msra.mxu0 0.0
        %11237 = vmatprep.subr.mxu0 0.0
        %11238 = vmatpush1.msra.mxu0 0.0
        %11239 = vmatprep.subr.mxu0 0.0
        %11240 = vmatpush1.msra.mxu0 0.0
        %11241 = vmatprep.subr.mxu0 0.0
        %11242 = vmatpush1.msra.mxu0 0.0
        %11243 = vmatprep.subr.mxu0 0.0
        %11244 = vmatpush1.msra.mxu0 0.0
        %11245 = vmatprep.subr.mxu0 0.0
        %11246 = vmatpush1.msra.mxu0 0.0
        %11247 = vmatprep.subr.mxu0 0.0
        %11248 = vmatpush1.msra.mxu0 0.0
        %11249 = vmatprep.mubr.f32.mxu0 0.0
        %11250 = vmatmul.mubr.f32.gmra.mrb[0].mxu0 %v11090
        %v11251 = vpop.f32.mrb[0].mxu0
        %v11252 = vadd.f32 0.0, %v11251
        %v11253 = vpop.f32.mrb[0].mxu0
        %11254 = vmatprep.mubr.f32.mxu0 0.0
        %11255 = vmatmul.mubr.f32.gmra.mrb[0].mxu0 %v11093
        %v11256 = vpop.f32.mrb[0].mxu0
        %v11257 = vadd.f32 0.0, %v11256
        %v11258 = vpop.f32.mrb[0].mxu0
        %11259 = vmatprep.mubr.f32.mxu0 0.0
        %11260 = vmatmul.mubr.f32.gmra.mrb[0].mxu0 %v11096
        %v11261 = vpop.f32.mrb[0].mxu0
        %v11262 = vadd.f32 0.0, %v11261
        %v11263 = vpop.f32.mrb[0].mxu0
        %11264 = vmatprep.mubr.f32.mxu0 0.0
        %11265 = vmatmul.mubr.f32.gmra.mrb[0].mxu0 %v11099
        %v11266 = vpop.f32.mrb[0].mxu0
        %v11267 = vadd.f32 0.0, %v11266
        %v11268 = vpop.f32.mrb[0].mxu0
        %11269 = vmatprep.mubr.f32.mxu0 0.0
        %11270 = vmatmul.mubr.f32.gmra.mrb[0].mxu0 %v11102
        %v11271 = vpop.f32.mrb[0].mxu0
        %v11272 = vadd.f32 0.0, %v11271
        %v11273 = vpop.f32.mrb[0].mxu0
        %11274 = vmatprep.mubr.f32.mxu0 0.0
        %11275 = vmatmul.mubr.f32.gmra.mrb[0].mxu0 %v11105
        %v11276 = vpop.f32.mrb[0].mxu0
        %v11277 = vadd.f32 0.0, %v11276
        %v11278 = vpop.f32.mrb[0].mxu0
        %11279 = vmatprep.mubr.f32.mxu0 0.0
        %11280 = vmatmul.mubr.f32.gmra.mrb[0].mxu0 %v11108
        %v11281 = vpop.f32.mrb[0].mxu0
        %v11282 = vadd.f32 0.0, %v11281
        %v11283 = vpop.f32.mrb[0].mxu0
        %11284 = vmatprep.mubr.f32.mxu0 0.0
        %11285 = vmatmul.mubr.f32.gmra.mrb[0].mxu0 %v11111
        %v11286 = vpop.f32.mrb[0].mxu0
        %v11287 = vadd.f32 0.0, %v11286
        %v11288 = vpop.f32.mrb[0].mxu0
        %11289 = vmatprep.mubr.f32.mxu0 0.0
        %11290 = vmatmul.mubr.f32.gmra.mrb[0].mxu0 %v11114
        %v11291 = vpop.f32.mrb[0].mxu0
        %v11292 = vadd.f32 0.0, %v11291
        %v11293 = vpop.f32.mrb[0].mxu0
        %11294 = vmatprep.mubr.f32.mxu0 0.0
        %11295 = vmatmul.mubr.f32.gmra.mrb[0].mxu0 %v11117
        %v11296 = vpop.f32.mrb[0].mxu0
        %v11297 = vadd.f32 0.0, %v11296
        %v11298 = vpop.f32.mrb[0].mxu0
        %11299 = vmatprep.mubr.f32.mxu0 0.0
        %11300 = vmatmul.mubr.f32.gmra.mrb[0].mxu0 %v11120
        %v11301 = vpop.f32.mrb[0].mxu0
        %v11302 = vadd.f32 0.0, %v11301
        %v11303 = vpop.f32.mrb[0].mxu0
        %11304 = vmatprep.mubr.f32.mxu0 0.0
        %11305 = vmatmul.mubr.f32.gmra.mrb[0].mxu0 %v11123
        %v11306 = vpop.f32.mrb[0].mxu0
        %v11307 = vadd.f32 0.0, %v11306
        %v11308 = vpop.f32.mrb[0].mxu0
        %11309 = vmatprep.mubr.f32.mxu0 0.0
        %11310 = vmatmul.mubr.f32.gmra.mrb[0].mxu0 %v11126
        %v11311 = vpop.f32.mrb[0].mxu0
        %v11312 = vadd.f32 0.0, %v11311
        %v11313 = vpop.f32.mrb[0].mxu0
        %11314 = vmatprep.mubr.f32.mxu0 0.0
        %11315 = vmatmul.mubr.f32.gmra.mrb[0].mxu0 %v11129
        %v11316 = vpop.f32.mrb[0].mxu0
        %v11317 = vadd.f32 0.0, %v11316
        %v11318 = vpop.f32.mrb[0].mxu0
        %11319 = vmatprep.mubr.f32.mxu0 0.0
        %11320 = vmatmul.mubr.f32.gmra.mrb[0].mxu0 %v11132
        %v11321 = vpop.f32.mrb[0].mxu0
        %v11322 = vadd.f32 0.0, %v11321
        %v11323 = vpop.f32.mrb[0].mxu0
        %11324 = vmatprep.mubr.f32.mxu0 0.0
        %11325 = vmatmul.mubr.f32.gmra.mrb[0].mxu0 %v11135
        %v11326 = vpop.f32.mrb[0].mxu0
        %v11327 = vadd.f32 0.0, %v11326
        %v11328 = vpop.f32.mrb[0].mxu0
        %11329 = vmatprep.mubr.f32.mxu0 0.0
        %11330 = vmatmul.mubr.f32.gmra.mrb[0].mxu0 %v11138
        %v11331 = vpop.f32.mrb[0].mxu0
        %v11332 = vadd.f32 0.0, %v11331
        %v11333 = vpop.f32.mrb[0].mxu0
        %11334 = vmatprep.mubr.f32.mxu0 0.0
        %11335 = vmatmul.mubr.f32.gmra.mrb[0].mxu0 %v11141
        %v11336 = vpop.f32.mrb[0].mxu0
        %v11337 = vadd.f32 0.0, %v11336
        %v11338 = vpop.f32.mrb[0].mxu0
        %11339 = vmatprep.mubr.f32.mxu0 0.0
        %11340 = vmatmul.mubr.f32.gmra.mrb[0].mxu0 %v11144
        %v11341 = vpop.f32.mrb[0].mxu0
        %v11342 = vadd.f32 0.0, %v11341
        %v11343 = vpop.f32.mrb[0].mxu0
        %11344 = vmatprep.mubr.f32.mxu0 0.0
        %11345 = vmatmul.mubr.f32.gmra.mrb[0].mxu0 %v11147
        %v11346 = vpop.f32.mrb[0].mxu0
        %v11347 = vadd.f32 0.0, %v11346
        %v11348 = vpop.f32.mrb[0].mxu0
        %11349 = vmatprep.mubr.f32.mxu0 0.0
        %11350 = vmatmul.mubr.f32.gmra.mrb[0].mxu0 %v11150
        %v11351 = vpop.f32.mrb[0].mxu0
        %v11352 = vadd.f32 0.0, %v11351
        %v11353 = vpop.f32.mrb[0].mxu0
        %11354 = vmatprep.mubr.f32.mxu0 0.0
        %11355 = vmatmul.mubr.f32.gmra.mrb[0].mxu0 %v11153
        %v11356 = vpop.f32.mrb[0].mxu0
        %v11357 = vadd.f32 0.0, %v11356
        %v11358 = vpop.f32.mrb[0].mxu0
        %11359 = vmatprep.mubr.f32.mxu0 0.0
        %11360 = vmatmul.mubr.f32.gmra.mrb[0].mxu0 %v11156
        %v11361 = vpop.f32.mrb[0].mxu0
        %v11362 = vadd.f32 0.0, %v11361
        %v11363 = vpop.f32.mrb[0].mxu0
        %11364 = vmatprep.mubr.f32.mxu0 0.0
        %11365 = vmatmul.mubr.f32.gmra.mrb[0].mxu0 %v11159
        %v11366 = vpop.f32.mrb[0].mxu0
        %v11367 = vadd.f32 0.0, %v11366
        %v11368 = vpop.f32.mrb[0].mxu0
        %11369 = vmatprep.mubr.f32.mxu0 0.0
        %11370 = vmatmul.mubr.f32.gmra.mrb[0].mxu0 %v11162
        %v11371 = vpop.f32.mrb[0].mxu0
        %v11372 = vadd.f32 0.0, %v11371
        %v11373 = vpop.f32.mrb[0].mxu0
        %11374 = vmatprep.mubr.f32.mxu0 0.0
        %11375 = vmatmul.mubr.f32.gmra.mrb[0].mxu0 %v11165
        %v11376 = vpop.f32.mrb[0].mxu0
        %v11377 = vadd.f32 0.0, %v11376
        %v11378 = vpop.f32.mrb[0].mxu0
        %11379 = vmatprep.mubr.f32.mxu0 0.0
        %11380 = vmatmul.mubr.f32.gmra.mrb[0].mxu0 %v11168
        %v11381 = vpop.f32.mrb[0].mxu0
        %v11382 = vadd.f32 0.0, %v11381
        %v11383 = vpop.f32.mrb[0].mxu0
        %11384 = vmatprep.mubr.f32.mxu0 0.0
        %11385 = vmatmul.mubr.f32.gmra.mrb[0].mxu0 %v11171
        %v11386 = vpop.f32.mrb[0].mxu0
        %v11387 = vadd.f32 0.0, %v11386
        %v11388 = vpop.f32.mrb[0].mxu0
        %11389 = vmatprep.mubr.f32.mxu0 0.0
        %11390 = vmatmul.mubr.f32.gmra.mrb[0].mxu0 %v11174
        %v11391 = vpop.f32.mrb[0].mxu0
        %v11392 = vadd.f32 0.0, %v11391
        %v11393 = vpop.f32.mrb[0].mxu0
        %11394 = vmatprep.mubr.f32.mxu0 0.0
        %11395 = vmatmul.mubr.f32.gmra.mrb[0].mxu0 %v11177
        %v11396 = vpop.f32.mrb[0].mxu0
        %v11397 = vadd.f32 0.0, %v11396
        %v11398 = vpop.f32.mrb[0].mxu0
        %11399 = vmatprep.mubr.f32.mxu0 0.0
        %11400 = vmatmul.mubr.f32.gmra.mrb[0].mxu0 %v11180
        %v11401 = vpop.f32.mrb[0].mxu0
        %v11402 = vadd.f32 0.0, %v11401
        %v11403 = vpop.f32.mrb[0].mxu0
        %11404 = vmatprep.mubr.f32.mxu0 0.0
        %11405 = vmatmul.mubr.f32.gmra.mrb[0].mxu0 %v11183
        %v11406 = vpop.f32.mrb[0].mxu0
        %v11407 = vadd.f32 0.0, %v11406
        %v11408 = vpop.f32.mrb[0].mxu0
        %11409 = vdwg.mxu0
        %v11410 = vadd.f32 %v8897, %v11252
        %v11411 = vadd.f32 %v8898, %v11257
        %v11412 = vadd.f32 %v8899, %v11262
        %v11413 = vadd.f32 %v8900, %v11267
        %v11414 = vadd.f32 %v8901, %v11272
        %v11415 = vadd.f32 %v8902, %v11277
        %v11416 = vadd.f32 %v8903, %v11282
        %v11417 = vadd.f32 %v8904, %v11287
        %v11418 = vadd.f32 %v8905, %v11292
        %v11419 = vadd.f32 %v8906, %v11297
        %v11420 = vadd.f32 %v8907, %v11302
        %v11421 = vadd.f32 %v8908, %v11307
        %v11422 = vadd.f32 %v8909, %v11312
        %v11423 = vadd.f32 %v8910, %v11317
        %v11424 = vadd.f32 %v8911, %v11322
        %v11425 = vadd.f32 %v8912, %v11327
        %v11426 = vadd.f32 %v8913, %v11332
        %v11427 = vadd.f32 %v8914, %v11337
        %v11428 = vadd.f32 %v8915, %v11342
        %v11429 = vadd.f32 %v8916, %v11347
        %v11430 = vadd.f32 %v8917, %v11352
        %v11431 = vadd.f32 %v8918, %v11357
        %v11432 = vadd.f32 %v8919, %v11362
        %v11433 = vadd.f32 %v8920, %v11367
        %v11434 = vadd.f32 %v8921, %v11372
        %v11435 = vadd.f32 %v8922, %v11377
        %v11436 = vadd.f32 %v8923, %v11382
        %v11437 = vadd.f32 %v8924, %v11387
        %v11438 = vadd.f32 %v8925, %v11392
        %v11439 = vadd.f32 %v8926, %v11397
        %v11440 = vadd.f32 %v8927, %v11402
        %v11441 = vadd.f32 %v8928, %v11407
        %v11442 = vld [vmem:[%s10] sm:$0x1]
        %v11444 = vlaneseq
        %v11445 = vshrl.u32 %v11444, 7
        %v11446 = vsub.s32 0, %v11445
        %v11447 = vrot.slane %v11442, %v11446
        %v11449 = vadd.f32 %v11410, %v11447
        %v11450 = vadd.f32 %v11411, %v11447
        %v11451 = vadd.f32 %v11412, %v11447
        %v11452 = vadd.f32 %v11413, %v11447
        %v11453 = vadd.f32 %v11414, %v11447
        %v11454 = vadd.f32 %v11415, %v11447
        %v11455 = vadd.f32 %v11416, %v11447
        %v11456 = vadd.f32 %v11417, %v11447
        %v11457 = vadd.f32 %v11418, %v11447
        %v11458 = vadd.f32 %v11419, %v11447
        %v11459 = vadd.f32 %v11420, %v11447
        %v11460 = vadd.f32 %v11421, %v11447
        %v11461 = vadd.f32 %v11422, %v11447
        %v11462 = vadd.f32 %v11423, %v11447
        %v11463 = vadd.f32 %v11424, %v11447
        %v11464 = vadd.f32 %v11425, %v11447
        %v11465 = vadd.f32 %v11426, %v11447
        %v11466 = vadd.f32 %v11427, %v11447
        %v11467 = vadd.f32 %v11428, %v11447
        %v11468 = vadd.f32 %v11429, %v11447
        %v11469 = vadd.f32 %v11430, %v11447
        %v11470 = vadd.f32 %v11431, %v11447
        %v11471 = vadd.f32 %v11432, %v11447
        %v11472 = vadd.f32 %v11433, %v11447
        %v11473 = vadd.f32 %v11434, %v11447
        %v11474 = vadd.f32 %v11435, %v11447
        %v11475 = vadd.f32 %v11436, %v11447
        %v11476 = vadd.f32 %v11437, %v11447
        %v11477 = vadd.f32 %v11438, %v11447
        %v11478 = vadd.f32 %v11439, %v11447
        %v11479 = vadd.f32 %v11440, %v11447
        %v11480 = vadd.f32 %v11441, %v11447
        %11481 = vst.msk [vmem:[%s445] sm:$0xff] %vm575, %v11449
        %11482 = vst.msk [vmem:[%s445 + $0x8] sm:$0xff] %vm575, %v11450
        %11483 = vst.msk [vmem:[%s445 + $0x10] sm:$0xff] %vm575, %v11451
        %11484 = vst.msk [vmem:[%s445 + $0x18] sm:$0xff] %vm575, %v11452
        %11485 = vst.msk [vmem:[%s445 + $0x20] sm:$0xff] %vm575, %v11453
        %11486 = vst.msk [vmem:[%s445 + $0x28] sm:$0xff] %vm575, %v11454
        %11487 = vst.msk [vmem:[%s445 + $0x30] sm:$0xff] %vm575, %v11455
        %11488 = vst.msk [vmem:[%s445 + $0x38] sm:$0xff] %vm575, %v11456
        %11489 = vst.msk [vmem:[%s445 + $0x40] sm:$0xff] %vm575, %v11457
        %11490 = vst.msk [vmem:[%s445 + $0x48] sm:$0xff] %vm575, %v11458
        %11491 = vst.msk [vmem:[%s445 + $0x50] sm:$0xff] %vm575, %v11459
        %11492 = vst.msk [vmem:[%s445 + $0x58] sm:$0xff] %vm575, %v11460
        %11493 = vst.msk [vmem:[%s445 + $0x60] sm:$0xff] %vm575, %v11461
        %11494 = vst.msk [vmem:[%s445 + $0x68] sm:$0xff] %vm575, %v11462
        %11495 = vst.msk [vmem:[%s445 + $0x70] sm:$0xff] %vm575, %v11463
        %11496 = vst.msk [vmem:[%s445 + $0x78] sm:$0xff] %vm575, %v11464
        %11497 = vst.msk [vmem:[%s445 + $0x80] sm:$0xff] %vm575, %v11465
        %11498 = vst.msk [vmem:[%s445 + $0x88] sm:$0xff] %vm575, %v11466
        %11499 = vst.msk [vmem:[%s445 + $0x90] sm:$0xff] %vm575, %v11467
        %11500 = vst.msk [vmem:[%s445 + $0x98] sm:$0xff] %vm575, %v11468
        %11501 = vst.msk [vmem:[%s445 + $0xa0] sm:$0xff] %vm575, %v11469
        %11502 = vst.msk [vmem:[%s445 + $0xa8] sm:$0xff] %vm575, %v11470
        %11503 = vst.msk [vmem:[%s445 + $0xb0] sm:$0xff] %vm575, %v11471
        %11504 = vst.msk [vmem:[%s445 + $0xb8] sm:$0xff] %vm575, %v11472
        %11505 = vst.msk [vmem:[%s445 + $0xc0] sm:$0xff] %vm575, %v11473
        %11506 = vst.msk [vmem:[%s445 + $0xc8] sm:$0xff] %vm575, %v11474
        %11507 = vst.msk [vmem:[%s445 + $0xd0] sm:$0xff] %vm575, %v11475
        %11508 = vst.msk [vmem:[%s445 + $0xd8] sm:$0xff] %vm575, %v11476
        %11509 = vst.msk [vmem:[%s445 + $0xe0] sm:$0xff] %vm575, %v11477
        %11510 = vst.msk [vmem:[%s445 + $0xe8] sm:$0xff] %vm575, %v11478
        %11511 = vst.msk [vmem:[%s445 + $0xf0] sm:$0xff] %vm575, %v11479
        %11512 = vst.msk [vmem:[%s445 + $0xf8] sm:$0xff] %vm575, %v11480
        %s11513 = sand.u32 %s301, 1
        %s11514 = scalar_lea.sflag [#allocation3], %s11513
        %s11515 = sand.u32 %s301, 1
        %s11516 = smul.addr %s11515, 256
        %s11517 = scalar_lea.vmem [#allocation2], %s11516
        // Predicated region
        $region69: #{window_attention_pallas.1} parent=67 // pred_check
          %p11518 = pneg %p311
        $region70: #{window_attention_pallas.1} parent=67 // pred_check_branch
          %11520 = sbr.rel (%p11518) target = $region72
        $region71: #{window_attention_pallas.1} parent=67 // pred_region
          %s11521 = smul.u32 8, %s26
          %s11523 = ssub.s32 4096, 4096
          %11524 = vsyncadd %s11514, %s11523
          %s11525 = smul.addr %s11521, 4
          %s11526 = smul.addr %s11525, 128
          %s11527 = scalar_lea.hbm %s12, %s11526
          %s11528 = sshll.u32 %s11517, 4
          %s11529 = int_to_ptr.vmem [resolvable:$true] %s11528
          %11534 = dma.vmem_to_hbm [thread:$0]  %s11529, 4096, %s11527, %s11514, 128, 128, 8
        $region72: #{window_attention_pallas.1} parent=67 // pred_fallthru
          _
      $region68: #{window_attention_pallas.1} parent=5 // pred_fallthru
        _
      %p11535 = scmp.le.s32.totalorder 2, %s21
      // Predicated region
      $region73: #{window_attention_pallas.1} parent=5 // pred_check
        %p11536 = pneg %p11535
      $region74: #{window_attention_pallas.1} parent=5 // pred_check_branch
        %11538 = sbr.rel (%p11536) target = $region76
      $region75: #{window_attention_pallas.1} parent=5 // pred_region
        %s11539 = ssub.s32 %s21, 2
        // Predicated region
        $region77: #{window_attention_pallas.1} parent=75 // pred_check
          %p11540 = pneg %p317
        $region78: #{window_attention_pallas.1} parent=75 // pred_check_branch
          %11542 = sbr.rel (%p11540) target = $region80
        $region79: #{window_attention_pallas.1} parent=75 // pred_region
          %s11543 = sand.u32 %s302, 1
          %s11544 = scalar_lea.sflag [#allocation3], %s11543
          %s11545 = sand.u32 %s302, 1
          %s11546 = smul.addr %s11545, 256
          %s11547 = scalar_lea.vmem [#allocation2], %s11546
          %11548 = dma.done %s11544, 4096
        $region80: #{window_attention_pallas.1} parent=75 // pred_fallthru
          _
      $region76: #{window_attention_pallas.1} parent=5 // pred_fallthru
        _
    $region6: #{window_attention_pallas.1} parent=1 // loop_footer
      %s25 = sadd.s32 1, %s21
    $region7: #{window_attention_pallas.1} parent=1 // loop_footer_branch
      %20 = sbr.rel target = $region3
    $region8: #{window_attention_pallas.1} parent=1 // loop_exit
      _
    %11549 = vsyncpa [#allocation3], 1
    %s11550 = scalar_lea.sflag [#allocation3], 1
    %11551 = vsyncpa %s11550, 1

</llo_original>
